<compile_context>
chip_gen: v6e
topology: v6e:2x2x1
jax: 0.10.0
libtpu: 0.0.40
codegen_flags: <defaults>
</compile_context>

<pallas_src>
import jax
import jax.numpy as jnp
from jax.experimental import pallas as pl
from jax.experimental.pallas import tpu as pltpu


# ----------------------------------------------------------------------------
# Fused forward kernel factory.
# ----------------------------------------------------------------------------
def _build_kernel(dims, n_conv, pool_after, batch_block):
    """dims[i] = (H_in, W_in, Cin, Cout) of conv layer i (3x3, stride 1, pad 1)."""
    B = batch_block

    def kernel(*refs):
        x_ref = refs[0]                       # (B, H0, W0, C0)  NHWC input block
        w_refs = refs[1:1 + n_conv]           # (9*Cin_i, Cout_i) flattened conv weights
        lw_ref = refs[1 + n_conv]             # (C_last, classes), 1/HW pre-folded
        lb_ref = refs[2 + n_conv]             # (1, classes)
        o_ref = refs[3 + n_conv]              # (B, classes)
        scratch = refs[4 + n_conv:]           # per layer: padded image, im2col slab
        pool_ref = scratch[2 * n_conv] if pool_after is not None else None

        y = x_ref[...]                        # (B, H0, W0, C0), stays in VMEM
        for i in range(n_conv):
            h, w, ci, co = dims[i]
            p_ref = scratch[2 * i]            # (B, h+2, w+2, ci)  zero-padded input
            col_ref = scratch[2 * i + 1]      # (B*h*w, 9*ci)      im2col slab

            # Conv2d padding=1, 'zeros': only the 1-pixel border is zeroed
            # (interior is fully overwritten below).  No full-buffer memset.
            p_ref[:, 0:1, :, :] = jnp.zeros((B, 1, w + 2, ci), jnp.float32)
            p_ref[:, h + 1:h + 2, :, :] = jnp.zeros((B, 1, w + 2, ci), jnp.float32)
            p_ref[:, :, 0:1, :] = jnp.zeros((B, h + 2, 1, ci), jnp.float32)
            p_ref[:, :, w + 1:w + 2, :] = jnp.zeros((B, h + 2, 1, ci), jnp.float32)
            p_ref[:, 1:h + 1, 1:w + 1, :] = y

            # im2col: 9 shifted taps packed along K so the conv is ONE MXU
            # matmul with K = 9*Cin and M = B*h*w.
            # (Further lane-density / roll-based packing left as a follow-up.)
            for kh in range(3):
                for kw in range(3):
                    t = kh * 3 + kw
                    col_ref[:, t * ci:(t + 1) * ci] = (
                        p_ref[:, kh:kh + h, kw:kw + w, :].reshape(B * h * w, ci))

            # Conv (single matmul) + fused ReLU.
            acc = jnp.dot(col_ref[...], w_refs[i][...],
                          preferred_element_type=jnp.float32)
            acc = jnp.maximum(acc, 0.0)                      # (B*h*w, co)

            if i == pool_after:
                # Fused MaxPool2d((2,2)) on the VPU (no selection matmuls):
                #   h direction: leading-dim split + elementwise max,
                #   w direction: scratch + stride-2 sublane reads.
                hp, wp = h // 2, w // 2
                y5 = acc.reshape(B, hp, 2, w, co)
                a = jnp.maximum(y5[:, :, 0], y5[:, :, 1])    # (B, hp, w, co)
                pool_ref[...] = a
                y = jnp.maximum(
                    pool_ref[:, :, pl.ds(0, wp, stride=2), :],
                    pool_ref[:, :, pl.ds(1, wp, stride=2), :])   # (B, hp, wp, co)
            else:
                y = acc.reshape(B, h, w, co)                 # next layer's input

        # Classifier: AdaptiveAvgPool2d((1,1)) + Flatten + Linear.
        # The 1/HW average scale is pre-folded into lw_ref, so this is a plain
        # spatial sum followed by one (B, C_last) x (C_last, classes) matmul.
        hf, wf, cf = y.shape[1], y.shape[2], y.shape[3]
        feat = jnp.sum(y.reshape(B, hf * wf, cf), axis=1)    # (B, C_last)
        logits = jnp.dot(feat, lw_ref[...],
                         preferred_element_type=jnp.float32) + lb_ref[...]
        o_ref[...] = logits.astype(o_ref.dtype)              # (B, classes)

    return kernel


# ----------------------------------------------------------------------------
# Wrapper: one pallas_call for the whole forward, grid over batch blocks.
# ----------------------------------------------------------------------------
def tiny_cnn_forward(x_nchw, params, batch_block=16):
    # batch_block: images per grid step.  16 is safe on v7x (64 MiB VMEM);
    # v5e/v6e (128 MiB) can go higher (32-64) for extra throughput.
    conv_w_flat = params["conv_w_flat"]          # list of (9*Cin_i, Cout_i) f32
    lin_w_t = params["lin_w_t"]                  # (C_last, classes)
    lin_b = params["lin_b"]                      # (1, classes)

    N, C0, H0, W0 = x_nchw.shape
    classes = lin_w_t.shape[1]
    n_conv = len(conv_w_flat)
    pool_after = 1                               # MaxPool2d((2,2)) after conv i == 1

    # Per-layer (input H, input W, Cin, Cout); spatial halves after the pool.
    dims = []
    h, w, cin = H0, W0, C0
    for i, wf in enumerate(conv_w_flat):
        cout = wf.shape[1]
        assert wf.shape[0] == 9 * cin
        dims.append((h, w, cin, cout))
        cin = cout
        if i == pool_after:
            assert h % 2 == 0 and w % 2 == 0, "MaxPool2d((2,2)) needs even H, W"
            h, w = h // 2, w // 2
    c_last = cin
    assert lin_w_t.shape[0] == c_last
    has_pool = n_conv > pool_after

    # Fold AdaptiveAvgPool2d's 1/HW scale into the linear weight (free).
    lw_scaled = (lin_w_t * (1.0 / float(h * w))).astype(jnp.float32)

    # Batch blocking: pad N up to a multiple of B, slice the pad rows off after.
    B = max(1, min(batch_block, N))
    n_blocks = -(-N // B)
    N_pad = n_blocks * B

    # Only wrapper-side layout op: NCHW -> NHWC (channels on the lane axis).
    x_nhwc = jnp.transpose(x_nchw, (0, 2, 3, 1)).astype(jnp.float32)
    if N_pad != N:
        x_nhwc = jnp.pad(x_nhwc, ((0, N_pad - N), (0, 0), (0, 0), (0, 0)))

    scratch_shapes = []
    for (hh, ww, ci, _co) in dims:
        scratch_shapes.append(pltpu.VMEM((B, hh + 2, ww + 2, ci), jnp.float32))
        scratch_shapes.append(pltpu.VMEM((B * hh * ww, 9 * ci), jnp.float32))
    if has_pool:
        hh, ww, _ci, co = dims[pool_after]
        scratch_shapes.append(pltpu.VMEM((B, hh // 2, ww, co), jnp.float32))

    in_specs = [pl.BlockSpec((B, H0, W0, C0), lambda n: (n, 0, 0, 0))]
    for wf in conv_w_flat:
        in_specs.append(pl.BlockSpec(wf.shape, lambda n: (0, 0)))
    in_specs.append(pl.BlockSpec(lw_scaled.shape, lambda n: (0, 0)))
    in_specs.append(pl.BlockSpec(lin_b.shape, lambda n: (0, 0)))

    kernel = _build_kernel(tuple(dims), n_conv,
                           pool_after if has_pool else None, B)

    out = pl.pallas_call(
        kernel,
        out_shape=jax.ShapeDtypeStruct((N_pad, classes), x_nchw.dtype),
        grid=(n_blocks,),
        in_specs=in_specs,
        out_specs=pl.BlockSpec((B, classes), lambda n: (n, 0)),
        scratch_shapes=scratch_shapes,
        compiler_params=pltpu.CompilerParams(
            dimension_semantics=("parallel",),
            vmem_limit_bytes=48 * 1024 * 1024),
    )(x_nhwc, *conv_w_flat, lw_scaled, lin_b)
    return out[:N]


# ----------------------------------------------------------------------------
# Parameter setup (PyTorch layouts at the boundary) and pure-JAX reference.
# ----------------------------------------------------------------------------
def init_params(layer_channels, classes, key):
    n_layers = len(layer_channels)
    keys = jax.random.split(key, n_layers + 1)
    conv_w_hwio, conv_w_flat = [], []
    for i in range(n_layers - 1):
        cin, cout = layer_channels[i], layer_channels[i + 1]
        # PyTorch Conv2d weight layout is OIHW; build it that way, then -> HWIO.
        w_oihw = 0.1 * jax.random.normal(keys[i], (cout, cin, 3, 3), jnp.float32)
        w_hwio = jnp.transpose(w_oihw, (2, 3, 1, 0))          # (3, 3, Cin, Cout)
        conv_w_hwio.append(w_hwio)
        # K ordering (kh, kw, cin) matches the in-kernel im2col packing.
        conv_w_flat.append(w_hwio.reshape(9 * cin, cout))
    k_w, k_b = jax.random.split(keys[-1])
    lin_w = 0.1 * jax.random.normal(k_w, (classes, layer_channels[-1]), jnp.float32)
    lin_b = 0.1 * jax.random.normal(k_b, (classes,), jnp.float32)
    return {
        "conv_w_hwio": conv_w_hwio,
        "conv_w_flat": conv_w_flat,
        "lin_w_t": jnp.transpose(lin_w),                      # (C_last, classes)
        "lin_b": lin_b.reshape(1, classes),
    }


def reference_forward(x_nchw, params):
    y = jnp.transpose(x_nchw, (0, 2, 3, 1))
    for i, w in enumerate(params["conv_w_hwio"]):
        y = jax.lax.conv_general_dilated(
            y, w, window_strides=(1, 1), padding=((1, 1), (1, 1)),
            dimension_numbers=("NHWC", "HWIO", "NHWC"),
            precision=jax.lax.Precision.HIGHEST)
        y = jnp.maximum(y, 0.0)
        if i == 1:
            y = jax.lax.reduce_window(y, -jnp.inf, jax.lax.max,
                                      (1, 2, 2, 1), (1, 2, 2, 1), "VALID")
    pooled = jnp.mean(y, axis=(1, 2))
    return jnp.dot(pooled, params["lin_w_t"],
                   precision=jax.lax.Precision.HIGHEST) + params["lin_b"]


if __name__ == "__main__":
    layer_channels = [4, 8, 16, 32]
    classes = 10

    key = jax.random.PRNGKey(0)
    kx, kp = jax.random.split(key)
    # Input as the PyTorch module would see it: NCHW, C = layer_channels[0].
    x = jax.random.normal(kx, (2, layer_channels[0], 16, 16), jnp.float32)
    params = init_params(layer_channels, classes, kp)

    fwd = jax.jit(tiny_cnn_forward)
    out = jax.block_until_ready(fwd(x, params))
    ref = jax.block_until_ready(reference_forward(x, params))

    assert out.shape == (2, classes), out.shape
    if not bool(jnp.allclose(out, ref, atol=2e-3, rtol=2e-3)):
        raise AssertionError(
            f"Pallas output mismatch vs reference: max abs err "
            f"{float(jnp.max(jnp.abs(out - ref)))}")

    print("KERNEL_OK")
</pallas_src>

<mosaic_0001>
module attributes {stable_mosaic.version = 11 : i64} {
  func.func @kernel(%arg0: i32, %arg1: memref<2x16x16x4xf32, #tpu.memory_space<vmem>>, %arg2: memref<36x8xf32, #tpu.memory_space<vmem>>, %arg3: memref<72x16xf32, #tpu.memory_space<vmem>>, %arg4: memref<144x32xf32, #tpu.memory_space<vmem>>, %arg5: memref<32x10xf32, #tpu.memory_space<vmem>>, %arg6: memref<1x10xf32, #tpu.memory_space<vmem>>, %arg7: memref<2x10xf32, #tpu.memory_space<vmem>>, %arg8: memref<2x18x18x4xf32, #tpu.memory_space<vmem>>, %arg9: memref<512x36xf32, #tpu.memory_space<vmem>>, %arg10: memref<2x18x18x8xf32, #tpu.memory_space<vmem>>, %arg11: memref<512x72xf32, #tpu.memory_space<vmem>>, %arg12: memref<2x10x10x16xf32, #tpu.memory_space<vmem>>, %arg13: memref<128x144xf32, #tpu.memory_space<vmem>>, %arg14: memref<2x8x16x16xf32, #tpu.memory_space<vmem>>) attributes {dimension_semantics = [#tpu.dimension_semantics<parallel>], iteration_bounds = array<i64: 1>, scalar_prefetch = 0 : i64, scratch_operands = 7 : i64, tpu.core_type = #tpu.core_type<tc>, window_params = [{transform_indices = @transform_0, window_bounds = array<i64: 2, 16, 16, 4>}, {pipeline_mode = #tpu.pipeline_mode<synchronous>, transform_indices = @transform_1, window_bounds = array<i64: 36, 8>}, {pipeline_mode = #tpu.pipeline_mode<synchronous>, transform_indices = @transform_2, window_bounds = array<i64: 72, 16>}, {pipeline_mode = #tpu.pipeline_mode<synchronous>, transform_indices = @transform_3, window_bounds = array<i64: 144, 32>}, {pipeline_mode = #tpu.pipeline_mode<synchronous>, transform_indices = @transform_4, window_bounds = array<i64: 32, 10>}, {pipeline_mode = #tpu.pipeline_mode<synchronous>, transform_indices = @transform_5, window_bounds = array<i64: 1, 10>}, {transform_indices = @transform_6, window_bounds = array<i64: 2, 10>}]} {
    %c0 = arith.constant 0 : index
    %c0_0 = arith.constant 0 : index
    %c0_1 = arith.constant 0 : index
    %c0_2 = arith.constant 0 : index
    %0 = vector.load %arg1[%c0, %c0_0, %c0_1, %c0_2] : memref<2x16x16x4xf32, #tpu.memory_space<vmem>>, vector<2x16x16x4xf32>
    %cst = arith.constant 0.000000e+00 : f32
    %1 = vector.broadcast %cst : f32 to vector<2x1x18x4xf32>
    %c0_3 = arith.constant 0 : index
    %c0_4 = arith.constant 0 : index
    %c0_5 = arith.constant 0 : index
    %c0_6 = arith.constant 0 : index
    %2 = vector.load %arg8[%c0_3, %c0_4, %c0_5, %c0_6] : memref<2x18x18x4xf32, #tpu.memory_space<vmem>>, vector<2x1x18x4xf32>
    tpu.vector_store %arg8[%c0_3, %c0_4, %c0_5, %c0_6], %1 {strides = array<i32>} : memref<2x18x18x4xf32, #tpu.memory_space<vmem>>, vector<2x1x18x4xf32>,
    %cst_7 = arith.constant 0.000000e+00 : f32
    %3 = vector.broadcast %cst_7 : f32 to vector<2x1x18x4xf32>
    %c0_8 = arith.constant 0 : index
    %c17 = arith.constant 17 : index
    %c0_9 = arith.constant 0 : index
    %c0_10 = arith.constant 0 : index
    %4 = vector.load %arg8[%c0_8, %c17, %c0_9, %c0_10] : memref<2x18x18x4xf32, #tpu.memory_space<vmem>>, vector<2x1x18x4xf32>
    tpu.vector_store %arg8[%c0_8, %c17, %c0_9, %c0_10], %3 {strides = array<i32>} : memref<2x18x18x4xf32, #tpu.memory_space<vmem>>, vector<2x1x18x4xf32>,
    %cst_11 = arith.constant 0.000000e+00 : f32
    %5 = vector.broadcast %cst_11 : f32 to vector<2x18x1x4xf32>
    %c0_12 = arith.constant 0 : index
    %c0_13 = arith.constant 0 : index
    %c0_14 = arith.constant 0 : index
    %c0_15 = arith.constant 0 : index
    %6 = vector.load %arg8[%c0_12, %c0_13, %c0_14, %c0_15] : memref<2x18x18x4xf32, #tpu.memory_space<vmem>>, vector<2x18x1x4xf32>
    tpu.vector_store %arg8[%c0_12, %c0_13, %c0_14, %c0_15], %5 {strides = array<i32>} : memref<2x18x18x4xf32, #tpu.memory_space<vmem>>, vector<2x18x1x4xf32>,
    %cst_16 = arith.constant 0.000000e+00 : f32
    %7 = vector.broadcast %cst_16 : f32 to vector<2x18x1x4xf32>
    %c0_17 = arith.constant 0 : index
    %c0_18 = arith.constant 0 : index
    %c17_19 = arith.constant 17 : index
    %c0_20 = arith.constant 0 : index
    %8 = vector.load %arg8[%c0_17, %c0_18, %c17_19, %c0_20] : memref<2x18x18x4xf32, #tpu.memory_space<vmem>>, vector<2x18x1x4xf32>
    tpu.vector_store %arg8[%c0_17, %c0_18, %c17_19, %c0_20], %7 {strides = array<i32>} : memref<2x18x18x4xf32, #tpu.memory_space<vmem>>, vector<2x18x1x4xf32>,
    %c0_21 = arith.constant 0 : index
    %c1 = arith.constant 1 : index
    %c1_22 = arith.constant 1 : index
    %c0_23 = arith.constant 0 : index
    %9 = vector.load %arg8[%c0_21, %c1, %c1_22, %c0_23] : memref<2x18x18x4xf32, #tpu.memory_space<vmem>>, vector<2x16x16x4xf32>
    tpu.vector_store %arg8[%c0_21, %c1, %c1_22, %c0_23], %0 {strides = array<i32>} : memref<2x18x18x4xf32, #tpu.memory_space<vmem>>, vector<2x16x16x4xf32>,
    %c0_24 = arith.constant 0 : index
    %c0_25 = arith.constant 0 : index
    %c0_26 = arith.constant 0 : index
    %c0_27 = arith.constant 0 : index
    %10 = vector.load %arg8[%c0_24, %c0_25, %c0_26, %c0_27] : memref<2x18x18x4xf32, #tpu.memory_space<vmem>>, vector<2x16x16x4xf32>
    %11 = vector.shape_cast %10 : vector<2x16x16x4xf32> to vector<512x4xf32>
    %c0_28 = arith.constant 0 : index
    %c0_29 = arith.constant 0 : index
    %12 = vector.load %arg9[%c0_28, %c0_29] : memref<512x36xf32, #tpu.memory_space<vmem>>, vector<512x4xf32>
    tpu.vector_store %arg9[%c0_28, %c0_29], %11 {strides = array<i32>} : memref<512x36xf32, #tpu.memory_space<vmem>>, vector<512x4xf32>,
    %c0_30 = arith.constant 0 : index
    %c0_31 = arith.constant 0 : index
    %c1_32 = arith.constant 1 : index
    %c0_33 = arith.constant 0 : index
    %13 = vector.load %arg8[%c0_30, %c0_31, %c1_32, %c0_33] : memref<2x18x18x4xf32, #tpu.memory_space<vmem>>, vector<2x16x16x4xf32>
    %14 = vector.shape_cast %13 : vector<2x16x16x4xf32> to vector<512x4xf32>
    %c0_34 = arith.constant 0 : index
    %c4 = arith.constant 4 : index
    %15 = vector.load %arg9[%c0_34, %c4] : memref<512x36xf32, #tpu.memory_space<vmem>>, vector<512x4xf32>
    tpu.vector_store %arg9[%c0_34, %c4], %14 {strides = array<i32>} : memref<512x36xf32, #tpu.memory_space<vmem>>, vector<512x4xf32>,
    %c0_35 = arith.constant 0 : index
    %c0_36 = arith.constant 0 : index
    %c2 = arith.constant 2 : index
    %c0_37 = arith.constant 0 : index
    %16 = vector.load %arg8[%c0_35, %c0_36, %c2, %c0_37] : memref<2x18x18x4xf32, #tpu.memory_space<vmem>>, vector<2x16x16x4xf32>
    %17 = vector.shape_cast %16 : vector<2x16x16x4xf32> to vector<512x4xf32>
    %c0_38 = arith.constant 0 : index
    %c8 = arith.constant 8 : index
    %18 = vector.load %arg9[%c0_38, %c8] : memref<512x36xf32, #tpu.memory_space<vmem>>, vector<512x4xf32>
    tpu.vector_store %arg9[%c0_38, %c8], %17 {strides = array<i32>} : memref<512x36xf32, #tpu.memory_space<vmem>>, vector<512x4xf32>,
    %c0_39 = arith.constant 0 : index
    %c1_40 = arith.constant 1 : index
    %c0_41 = arith.constant 0 : index
    %c0_42 = arith.constant 0 : index
    %19 = vector.load %arg8[%c0_39, %c1_40, %c0_41, %c0_42] : memref<2x18x18x4xf32, #tpu.memory_space<vmem>>, vector<2x16x16x4xf32>
    %20 = vector.shape_cast %19 : vector<2x16x16x4xf32> to vector<512x4xf32>
    %c0_43 = arith.constant 0 : index
    %c12 = arith.constant 12 : index
    %21 = vector.load %arg9[%c0_43, %c12] : memref<512x36xf32, #tpu.memory_space<vmem>>, vector<512x4xf32>
    tpu.vector_store %arg9[%c0_43, %c12], %20 {strides = array<i32>} : memref<512x36xf32, #tpu.memory_space<vmem>>, vector<512x4xf32>,
    %c0_44 = arith.constant 0 : index
    %c1_45 = arith.constant 1 : index
    %c1_46 = arith.constant 1 : index
    %c0_47 = arith.constant 0 : index
    %22 = vector.load %arg8[%c0_44, %c1_45, %c1_46, %c0_47] : memref<2x18x18x4xf32, #tpu.memory_space<vmem>>, vector<2x16x16x4xf32>
    %23 = vector.shape_cast %22 : vector<2x16x16x4xf32> to vector<512x4xf32>
    %c0_48 = arith.constant 0 : index
    %c16 = arith.constant 16 : index
    %24 = vector.load %arg9[%c0_48, %c16] : memref<512x36xf32, #tpu.memory_space<vmem>>, vector<512x4xf32>
    tpu.vector_store %arg9[%c0_48, %c16], %23 {strides = array<i32>} : memref<512x36xf32, #tpu.memory_space<vmem>>, vector<512x4xf32>,
    %c0_49 = arith.constant 0 : index
    %c1_50 = arith.constant 1 : index
    %c2_51 = arith.constant 2 : index
    %c0_52 = arith.constant 0 : index
    %25 = vector.load %arg8[%c0_49, %c1_50, %c2_51, %c0_52] : memref<2x18x18x4xf32, #tpu.memory_space<vmem>>, vector<2x16x16x4xf32>
    %26 = vector.shape_cast %25 : vector<2x16x16x4xf32> to vector<512x4xf32>
    %c0_53 = arith.constant 0 : index
    %c20 = arith.constant 20 : index
    %27 = vector.load %arg9[%c0_53, %c20] : memref<512x36xf32, #tpu.memory_space<vmem>>, vector<512x4xf32>
    tpu.vector_store %arg9[%c0_53, %c20], %26 {strides = array<i32>} : memref<512x36xf32, #tpu.memory_space<vmem>>, vector<512x4xf32>,
    %c0_54 = arith.constant 0 : index
    %c2_55 = arith.constant 2 : index
    %c0_56 = arith.constant 0 : index
    %c0_57 = arith.constant 0 : index
    %28 = vector.load %arg8[%c0_54, %c2_55, %c0_56, %c0_57] : memref<2x18x18x4xf32, #tpu.memory_space<vmem>>, vector<2x16x16x4xf32>
    %29 = vector.shape_cast %28 : vector<2x16x16x4xf32> to vector<512x4xf32>
    %c0_58 = arith.constant 0 : index
    %c24 = arith.constant 24 : index
    %30 = vector.load %arg9[%c0_58, %c24] : memref<512x36xf32, #tpu.memory_space<vmem>>, vector<512x4xf32>
    tpu.vector_store %arg9[%c0_58, %c24], %29 {strides = array<i32>} : memref<512x36xf32, #tpu.memory_space<vmem>>, vector<512x4xf32>,
    %c0_59 = arith.constant 0 : index
    %c2_60 = arith.constant 2 : index
    %c1_61 = arith.constant 1 : index
    %c0_62 = arith.constant 0 : index
    %31 = vector.load %arg8[%c0_59, %c2_60, %c1_61, %c0_62] : memref<2x18x18x4xf32, #tpu.memory_space<vmem>>, vector<2x16x16x4xf32>
    %32 = vector.shape_cast %31 : vector<2x16x16x4xf32> to vector<512x4xf32>
    %c0_63 = arith.constant 0 : index
    %c28 = arith.constant 28 : index
    %33 = vector.load %arg9[%c0_63, %c28] : memref<512x36xf32, #tpu.memory_space<vmem>>, vector<512x4xf32>
    tpu.vector_store %arg9[%c0_63, %c28], %32 {strides = array<i32>} : memref<512x36xf32, #tpu.memory_space<vmem>>, vector<512x4xf32>,
    %c0_64 = arith.constant 0 : index
    %c2_65 = arith.constant 2 : index
    %c2_66 = arith.constant 2 : index
    %c0_67 = arith.constant 0 : index
    %34 = vector.load %arg8[%c0_64, %c2_65, %c2_66, %c0_67] : memref<2x18x18x4xf32, #tpu.memory_space<vmem>>, vector<2x16x16x4xf32>
    %35 = vector.shape_cast %34 : vector<2x16x16x4xf32> to vector<512x4xf32>
    %c0_68 = arith.constant 0 : index
    %c32 = arith.constant 32 : index
    %36 = vector.load %arg9[%c0_68, %c32] : memref<512x36xf32, #tpu.memory_space<vmem>>, vector<512x4xf32>
    tpu.vector_store %arg9[%c0_68, %c32], %35 {strides = array<i32>} : memref<512x36xf32, #tpu.memory_space<vmem>>, vector<512x4xf32>,
    %c0_69 = arith.constant 0 : index
    %c0_70 = arith.constant 0 : index
    %37 = vector.load %arg9[%c0_69, %c0_70] : memref<512x36xf32, #tpu.memory_space<vmem>>, vector<512x36xf32>
    %c0_71 = arith.constant 0 : index
    %c0_72 = arith.constant 0 : index
    %38 = vector.load %arg2[%c0_71, %c0_72] : memref<36x8xf32, #tpu.memory_space<vmem>>, vector<36x8xf32>
    %cst_73 = arith.constant dense<0.000000e+00> : vector<512x8xf32>
    %39 = tpu.matmul %37, %38, %cst_73 {dimension_numbers = #tpu.dot_dimension_numbers<[1], [0], [0], [1], [0, 0, 1, 1], [], []>} : vector<512x36xf32>, vector<36x8xf32>, vector<512x8xf32> -> vector<512x8xf32>
    %cst_74 = arith.constant 0.000000e+00 : f32
    %40 = vector.broadcast %cst_74 : f32 to vector<512x8xf32>
    %41 = arith.maximumf %39, %40 : vector<512x8xf32>
    %42 = vector.shape_cast %41 : vector<512x8xf32> to vector<2x16x16x8xf32>
    %cst_75 = arith.constant 0.000000e+00 : f32
    %43 = vector.broadcast %cst_75 : f32 to vector<2x1x18x8xf32>
    %c0_76 = arith.constant 0 : index
    %c0_77 = arith.constant 0 : index
    %c0_78 = arith.constant 0 : index
    %c0_79 = arith.constant 0 : index
    %44 = vector.load %arg10[%c0_76, %c0_77, %c0_78, %c0_79] : memref<2x18x18x8xf32, #tpu.memory_space<vmem>>, vector<2x1x18x8xf32>
    tpu.vector_store %arg10[%c0_76, %c0_77, %c0_78, %c0_79], %43 {strides = array<i32>} : memref<2x18x18x8xf32, #tpu.memory_space<vmem>>, vector<2x1x18x8xf32>,
    %cst_80 = arith.constant 0.000000e+00 : f32
    %45 = vector.broadcast %cst_80 : f32 to vector<2x1x18x8xf32>
    %c0_81 = arith.constant 0 : index
    %c17_82 = arith.constant 17 : index
    %c0_83 = arith.constant 0 : index
    %c0_84 = arith.constant 0 : index
    %46 = vector.load %arg10[%c0_81, %c17_82, %c0_83, %c0_84] : memref<2x18x18x8xf32, #tpu.memory_space<vmem>>, vector<2x1x18x8xf32>
    tpu.vector_store %arg10[%c0_81, %c17_82, %c0_83, %c0_84], %45 {strides = array<i32>} : memref<2x18x18x8xf32, #tpu.memory_space<vmem>>, vector<2x1x18x8xf32>,
    %cst_85 = arith.constant 0.000000e+00 : f32
    %47 = vector.broadcast %cst_85 : f32 to vector<2x18x1x8xf32>
    %c0_86 = arith.constant 0 : index
    %c0_87 = arith.constant 0 : index
    %c0_88 = arith.constant 0 : index
    %c0_89 = arith.constant 0 : index
    %48 = vector.load %arg10[%c0_86, %c0_87, %c0_88, %c0_89] : memref<2x18x18x8xf32, #tpu.memory_space<vmem>>, vector<2x18x1x8xf32>
    tpu.vector_store %arg10[%c0_86, %c0_87, %c0_88, %c0_89], %47 {strides = array<i32>} : memref<2x18x18x8xf32, #tpu.memory_space<vmem>>, vector<2x18x1x8xf32>,
    %cst_90 = arith.constant 0.000000e+00 : f32
    %49 = vector.broadcast %cst_90 : f32 to vector<2x18x1x8xf32>
    %c0_91 = arith.constant 0 : index
    %c0_92 = arith.constant 0 : index
    %c17_93 = arith.constant 17 : index
    %c0_94 = arith.constant 0 : index
    %50 = vector.load %arg10[%c0_91, %c0_92, %c17_93, %c0_94] : memref<2x18x18x8xf32, #tpu.memory_space<vmem>>, vector<2x18x1x8xf32>
    tpu.vector_store %arg10[%c0_91, %c0_92, %c17_93, %c0_94], %49 {strides = array<i32>} : memref<2x18x18x8xf32, #tpu.memory_space<vmem>>, vector<2x18x1x8xf32>,
    %c0_95 = arith.constant 0 : index
    %c1_96 = arith.constant 1 : index
    %c1_97 = arith.constant 1 : index
    %c0_98 = arith.constant 0 : index
    %51 = vector.load %arg10[%c0_95, %c1_96, %c1_97, %c0_98] : memref<2x18x18x8xf32, #tpu.memory_space<vmem>>, vector<2x16x16x8xf32>
    tpu.vector_store %arg10[%c0_95, %c1_96, %c1_97, %c0_98], %42 {strides = array<i32>} : memref<2x18x18x8xf32, #tpu.memory_space<vmem>>, vector<2x16x16x8xf32>,
    %c0_99 = arith.constant 0 : index
    %c0_100 = arith.constant 0 : index
    %c0_101 = arith.constant 0 : index
    %c0_102 = arith.constant 0 : index
    %52 = vector.load %arg10[%c0_99, %c0_100, %c0_101, %c0_102] : memref<2x18x18x8xf32, #tpu.memory_space<vmem>>, vector<2x16x16x8xf32>
    %53 = vector.shape_cast %52 : vector<2x16x16x8xf32> to vector<512x8xf32>
    %c0_103 = arith.constant 0 : index
    %c0_104 = arith.constant 0 : index
    %54 = vector.load %arg11[%c0_103, %c0_104] : memref<512x72xf32, #tpu.memory_space<vmem>>, vector<512x8xf32>
    tpu.vector_store %arg11[%c0_103, %c0_104], %53 {strides = array<i32>} : memref<512x72xf32, #tpu.memory_space<vmem>>, vector<512x8xf32>,
    %c0_105 = arith.constant 0 : index
    %c0_106 = arith.constant 0 : index
    %c1_107 = arith.constant 1 : index
    %c0_108 = arith.constant 0 : index
    %55 = vector.load %arg10[%c0_105, %c0_106, %c1_107, %c0_108] : memref<2x18x18x8xf32, #tpu.memory_space<vmem>>, vector<2x16x16x8xf32>
    %56 = vector.shape_cast %55 : vector<2x16x16x8xf32> to vector<512x8xf32>
    %c0_109 = arith.constant 0 : index
    %c8_110 = arith.constant 8 : index
    %57 = vector.load %arg11[%c0_109, %c8_110] : memref<512x72xf32, #tpu.memory_space<vmem>>, vector<512x8xf32>
    tpu.vector_store %arg11[%c0_109, %c8_110], %56 {strides = array<i32>} : memref<512x72xf32, #tpu.memory_space<vmem>>, vector<512x8xf32>,
    %c0_111 = arith.constant 0 : index
    %c0_112 = arith.constant 0 : index
    %c2_113 = arith.constant 2 : index
    %c0_114 = arith.constant 0 : index
    %58 = vector.load %arg10[%c0_111, %c0_112, %c2_113, %c0_114] : memref<2x18x18x8xf32, #tpu.memory_space<vmem>>, vector<2x16x16x8xf32>
    %59 = vector.shape_cast %58 : vector<2x16x16x8xf32> to vector<512x8xf32>
    %c0_115 = arith.constant 0 : index
    %c16_116 = arith.constant 16 : index
    %60 = vector.load %arg11[%c0_115, %c16_116] : memref<512x72xf32, #tpu.memory_space<vmem>>, vector<512x8xf32>
    tpu.vector_store %arg11[%c0_115, %c16_116], %59 {strides = array<i32>} : memref<512x72xf32, #tpu.memory_space<vmem>>, vector<512x8xf32>,
    %c0_117 = arith.constant 0 : index
    %c1_118 = arith.constant 1 : index
    %c0_119 = arith.constant 0 : index
    %c0_120 = arith.constant 0 : index
    %61 = vector.load %arg10[%c0_117, %c1_118, %c0_119, %c0_120] : memref<2x18x18x8xf32, #tpu.memory_space<vmem>>, vector<2x16x16x8xf32>
    %62 = vector.shape_cast %61 : vector<2x16x16x8xf32> to vector<512x8xf32>
    %c0_121 = arith.constant 0 : index
    %c24_122 = arith.constant 24 : index
    %63 = vector.load %arg11[%c0_121, %c24_122] : memref<512x72xf32, #tpu.memory_space<vmem>>, vector<512x8xf32>
    tpu.vector_store %arg11[%c0_121, %c24_122], %62 {strides = array<i32>} : memref<512x72xf32, #tpu.memory_space<vmem>>, vector<512x8xf32>,
    %c0_123 = arith.constant 0 : index
    %c1_124 = arith.constant 1 : index
    %c1_125 = arith.constant 1 : index
    %c0_126 = arith.constant 0 : index
    %64 = vector.load %arg10[%c0_123, %c1_124, %c1_125, %c0_126] : memref<2x18x18x8xf32, #tpu.memory_space<vmem>>, vector<2x16x16x8xf32>
    %65 = vector.shape_cast %64 : vector<2x16x16x8xf32> to vector<512x8xf32>
    %c0_127 = arith.constant 0 : index
    %c32_128 = arith.constant 32 : index
    %66 = vector.load %arg11[%c0_127, %c32_128] : memref<512x72xf32, #tpu.memory_space<vmem>>, vector<512x8xf32>
    tpu.vector_store %arg11[%c0_127, %c32_128], %65 {strides = array<i32>} : memref<512x72xf32, #tpu.memory_space<vmem>>, vector<512x8xf32>,
    %c0_129 = arith.constant 0 : index
    %c1_130 = arith.constant 1 : index
    %c2_131 = arith.constant 2 : index
    %c0_132 = arith.constant 0 : index
    %67 = vector.load %arg10[%c0_129, %c1_130, %c2_131, %c0_132] : memref<2x18x18x8xf32, #tpu.memory_space<vmem>>, vector<2x16x16x8xf32>
    %68 = vector.shape_cast %67 : vector<2x16x16x8xf32> to vector<512x8xf32>
    %c0_133 = arith.constant 0 : index
    %c40 = arith.constant 40 : index
    %69 = vector.load %arg11[%c0_133, %c40] : memref<512x72xf32, #tpu.memory_space<vmem>>, vector<512x8xf32>
    tpu.vector_store %arg11[%c0_133, %c40], %68 {strides = array<i32>} : memref<512x72xf32, #tpu.memory_space<vmem>>, vector<512x8xf32>,
    %c0_134 = arith.constant 0 : index
    %c2_135 = arith.constant 2 : index
    %c0_136 = arith.constant 0 : index
    %c0_137 = arith.constant 0 : index
    %70 = vector.load %arg10[%c0_134, %c2_135, %c0_136, %c0_137] : memref<2x18x18x8xf32, #tpu.memory_space<vmem>>, vector<2x16x16x8xf32>
    %71 = vector.shape_cast %70 : vector<2x16x16x8xf32> to vector<512x8xf32>
    %c0_138 = arith.constant 0 : index
    %c48 = arith.constant 48 : index
    %72 = vector.load %arg11[%c0_138, %c48] : memref<512x72xf32, #tpu.memory_space<vmem>>, vector<512x8xf32>
    tpu.vector_store %arg11[%c0_138, %c48], %71 {strides = array<i32>} : memref<512x72xf32, #tpu.memory_space<vmem>>, vector<512x8xf32>,
    %c0_139 = arith.constant 0 : index
    %c2_140 = arith.constant 2 : index
    %c1_141 = arith.constant 1 : index
    %c0_142 = arith.constant 0 : index
    %73 = vector.load %arg10[%c0_139, %c2_140, %c1_141, %c0_142] : memref<2x18x18x8xf32, #tpu.memory_space<vmem>>, vector<2x16x16x8xf32>
    %74 = vector.shape_cast %73 : vector<2x16x16x8xf32> to vector<512x8xf32>
    %c0_143 = arith.constant 0 : index
    %c56 = arith.constant 56 : index
    %75 = vector.load %arg11[%c0_143, %c56] : memref<512x72xf32, #tpu.memory_space<vmem>>, vector<512x8xf32>
    tpu.vector_store %arg11[%c0_143, %c56], %74 {strides = array<i32>} : memref<512x72xf32, #tpu.memory_space<vmem>>, vector<512x8xf32>,
    %c0_144 = arith.constant 0 : index
    %c2_145 = arith.constant 2 : index
    %c2_146 = arith.constant 2 : index
    %c0_147 = arith.constant 0 : index
    %76 = vector.load %arg10[%c0_144, %c2_145, %c2_146, %c0_147] : memref<2x18x18x8xf32, #tpu.memory_space<vmem>>, vector<2x16x16x8xf32>
    %77 = vector.shape_cast %76 : vector<2x16x16x8xf32> to vector<512x8xf32>
    %c0_148 = arith.constant 0 : index
    %c64 = arith.constant 64 : index
    %78 = vector.load %arg11[%c0_148, %c64] : memref<512x72xf32, #tpu.memory_space<vmem>>, vector<512x8xf32>
    tpu.vector_store %arg11[%c0_148, %c64], %77 {strides = array<i32>} : memref<512x72xf32, #tpu.memory_space<vmem>>, vector<512x8xf32>,
    %c0_149 = arith.constant 0 : index
    %c0_150 = arith.constant 0 : index
    %79 = vector.load %arg11[%c0_149, %c0_150] : memref<512x72xf32, #tpu.memory_space<vmem>>, vector<512x72xf32>
    %c0_151 = arith.constant 0 : index
    %c0_152 = arith.constant 0 : index
    %80 = vector.load %arg3[%c0_151, %c0_152] : memref<72x16xf32, #tpu.memory_space<vmem>>, vector<72x16xf32>
    %cst_153 = arith.constant dense<0.000000e+00> : vector<512x16xf32>
    %81 = tpu.matmul %79, %80, %cst_153 {dimension_numbers = #tpu.dot_dimension_numbers<[1], [0], [0], [1], [0, 0, 1, 1], [], []>} : vector<512x72xf32>, vector<72x16xf32>, vector<512x16xf32> -> vector<512x16xf32>
    %cst_154 = arith.constant 0.000000e+00 : f32
    %82 = vector.broadcast %cst_154 : f32 to vector<512x16xf32>
    %83 = arith.maximumf %81, %82 : vector<512x16xf32>
    %84 = vector.shape_cast %83 : vector<512x16xf32> to vector<2x8x2x16x16xf32>
    %85 = vector.extract_strided_slice %84 {offsets = [0, 0, 0, 0, 0], sizes = [2, 8, 1, 16, 16], strides = [1, 1, 1, 1, 1]} : vector<2x8x2x16x16xf32> to vector<2x8x1x16x16xf32>
    %86 = vector.shape_cast %85 : vector<2x8x1x16x16xf32> to vector<2x8x16x16xf32>
    %87 = vector.extract_strided_slice %84 {offsets = [0, 0, 1, 0, 0], sizes = [2, 8, 1, 16, 16], strides = [1, 1, 1, 1, 1]} : vector<2x8x2x16x16xf32> to vector<2x8x1x16x16xf32>
    %88 = vector.shape_cast %87 : vector<2x8x1x16x16xf32> to vector<2x8x16x16xf32>
    %89 = arith.maximumf %86, %88 : vector<2x8x16x16xf32>
    %c0_155 = arith.constant 0 : index
    %c0_156 = arith.constant 0 : index
    %c0_157 = arith.constant 0 : index
    %c0_158 = arith.constant 0 : index
    %90 = vector.load %arg14[%c0_155, %c0_156, %c0_157, %c0_158] : memref<2x8x16x16xf32, #tpu.memory_space<vmem>>, vector<2x8x16x16xf32>
    tpu.vector_store %arg14[%c0_155, %c0_156, %c0_157, %c0_158], %89 {strides = array<i32>} : memref<2x8x16x16xf32, #tpu.memory_space<vmem>>, vector<2x8x16x16xf32>,
    %c0_159 = arith.constant 0 : index
    %c0_160 = arith.constant 0 : index
    %c0_161 = arith.constant 0 : index
    %c0_162 = arith.constant 0 : index
    %91 = tpu.strided_load %arg14[%c0_159, %c0_160, %c0_161, %c0_162] {strides = array<i32: 1, 1, 2, 1>} : memref<2x8x16x16xf32, #tpu.memory_space<vmem>>, vector<2x8x8x16xf32>
    %c0_163 = arith.constant 0 : index
    %c0_164 = arith.constant 0 : index
    %c1_165 = arith.constant 1 : index
    %c0_166 = arith.constant 0 : index
    %92 = tpu.strided_load %arg14[%c0_163, %c0_164, %c1_165, %c0_166] {strides = array<i32: 1, 1, 2, 1>} : memref<2x8x16x16xf32, #tpu.memory_space<vmem>>, vector<2x8x8x16xf32>
    %93 = arith.maximumf %91, %92 : vector<2x8x8x16xf32>
    %cst_167 = arith.constant 0.000000e+00 : f32
    %94 = vector.broadcast %cst_167 : f32 to vector<2x1x10x16xf32>
    %c0_168 = arith.constant 0 : index
    %c0_169 = arith.constant 0 : index
    %c0_170 = arith.constant 0 : index
    %c0_171 = arith.constant 0 : index
    %95 = vector.load %arg12[%c0_168, %c0_169, %c0_170, %c0_171] : memref<2x10x10x16xf32, #tpu.memory_space<vmem>>, vector<2x1x10x16xf32>
    tpu.vector_store %arg12[%c0_168, %c0_169, %c0_170, %c0_171], %94 {strides = array<i32>} : memref<2x10x10x16xf32, #tpu.memory_space<vmem>>, vector<2x1x10x16xf32>,
    %cst_172 = arith.constant 0.000000e+00 : f32
    %96 = vector.broadcast %cst_172 : f32 to vector<2x1x10x16xf32>
    %c0_173 = arith.constant 0 : index
    %c9 = arith.constant 9 : index
    %c0_174 = arith.constant 0 : index
    %c0_175 = arith.constant 0 : index
    %97 = vector.load %arg12[%c0_173, %c9, %c0_174, %c0_175] : memref<2x10x10x16xf32, #tpu.memory_space<vmem>>, vector<2x1x10x16xf32>
    tpu.vector_store %arg12[%c0_173, %c9, %c0_174, %c0_175], %96 {strides = array<i32>} : memref<2x10x10x16xf32, #tpu.memory_space<vmem>>, vector<2x1x10x16xf32>,
    %cst_176 = arith.constant 0.000000e+00 : f32
    %98 = vector.broadcast %cst_176 : f32 to vector<2x10x1x16xf32>
    %c0_177 = arith.constant 0 : index
    %c0_178 = arith.constant 0 : index
    %c0_179 = arith.constant 0 : index
    %c0_180 = arith.constant 0 : index
    %99 = vector.load %arg12[%c0_177, %c0_178, %c0_179, %c0_180] : memref<2x10x10x16xf32, #tpu.memory_space<vmem>>, vector<2x10x1x16xf32>
    tpu.vector_store %arg12[%c0_177, %c0_178, %c0_179, %c0_180], %98 {strides = array<i32>} : memref<2x10x10x16xf32, #tpu.memory_space<vmem>>, vector<2x10x1x16xf32>,
    %cst_181 = arith.constant 0.000000e+00 : f32
    %100 = vector.broadcast %cst_181 : f32 to vector<2x10x1x16xf32>
    %c0_182 = arith.constant 0 : index
    %c0_183 = arith.constant 0 : index
    %c9_184 = arith.constant 9 : index
    %c0_185 = arith.constant 0 : index
    %101 = vector.load %arg12[%c0_182, %c0_183, %c9_184, %c0_185] : memref<2x10x10x16xf32, #tpu.memory_space<vmem>>, vector<2x10x1x16xf32>
    tpu.vector_store %arg12[%c0_182, %c0_183, %c9_184, %c0_185], %100 {strides = array<i32>} : memref<2x10x10x16xf32, #tpu.memory_space<vmem>>, vector<2x10x1x16xf32>,
    %c0_186 = arith.constant 0 : index
    %c1_187 = arith.constant 1 : index
    %c1_188 = arith.constant 1 : index
    %c0_189 = arith.constant 0 : index
    %102 = vector.load %arg12[%c0_186, %c1_187, %c1_188, %c0_189] : memref<2x10x10x16xf32, #tpu.memory_space<vmem>>, vector<2x8x8x16xf32>
    tpu.vector_store %arg12[%c0_186, %c1_187, %c1_188, %c0_189], %93 {strides = array<i32>} : memref<2x10x10x16xf32, #tpu.memory_space<vmem>>, vector<2x8x8x16xf32>,
    %c0_190 = arith.constant 0 : index
    %c0_191 = arith.constant 0 : index
    %c0_192 = arith.constant 0 : index
    %c0_193 = arith.constant 0 : index
    %103 = vector.load %arg12[%c0_190, %c0_191, %c0_192, %c0_193] : memref<2x10x10x16xf32, #tpu.memory_space<vmem>>, vector<2x8x8x16xf32>
    %104 = vector.shape_cast %103 : vector<2x8x8x16xf32> to vector<128x16xf32>
    %c0_194 = arith.constant 0 : index
    %c0_195 = arith.constant 0 : index
    %105 = vector.load %arg13[%c0_194, %c0_195] : memref<128x144xf32, #tpu.memory_space<vmem>>, vector<128x16xf32>
    tpu.vector_store %arg13[%c0_194, %c0_195], %104 {strides = array<i32>} : memref<128x144xf32, #tpu.memory_space<vmem>>, vector<128x16xf32>,
    %c0_196 = arith.constant 0 : index
    %c0_197 = arith.constant 0 : index
    %c1_198 = arith.constant 1 : index
    %c0_199 = arith.constant 0 : index
    %106 = vector.load %arg12[%c0_196, %c0_197, %c1_198, %c0_199] : memref<2x10x10x16xf32, #tpu.memory_space<vmem>>, vector<2x8x8x16xf32>
    %107 = vector.shape_cast %106 : vector<2x8x8x16xf32> to vector<128x16xf32>
    %c0_200 = arith.constant 0 : index
    %c16_201 = arith.constant 16 : index
    %108 = vector.load %arg13[%c0_200, %c16_201] : memref<128x144xf32, #tpu.memory_space<vmem>>, vector<128x16xf32>
    tpu.vector_store %arg13[%c0_200, %c16_201], %107 {strides = array<i32>} : memref<128x144xf32, #tpu.memory_space<vmem>>, vector<128x16xf32>,
    %c0_202 = arith.constant 0 : index
    %c0_203 = arith.constant 0 : index
    %c2_204 = arith.constant 2 : index
    %c0_205 = arith.constant 0 : index
    %109 = vector.load %arg12[%c0_202, %c0_203, %c2_204, %c0_205] : memref<2x10x10x16xf32, #tpu.memory_space<vmem>>, vector<2x8x8x16xf32>
    %110 = vector.shape_cast %109 : vector<2x8x8x16xf32> to vector<128x16xf32>
    %c0_206 = arith.constant 0 : index
    %c32_207 = arith.constant 32 : index
    %111 = vector.load %arg13[%c0_206, %c32_207] : memref<128x144xf32, #tpu.memory_space<vmem>>, vector<128x16xf32>
    tpu.vector_store %arg13[%c0_206, %c32_207], %110 {strides = array<i32>} : memref<128x144xf32, #tpu.memory_space<vmem>>, vector<128x16xf32>,
    %c0_208 = arith.constant 0 : index
    %c1_209 = arith.constant 1 : index
    %c0_210 = arith.constant 0 : index
    %c0_211 = arith.constant 0 : index
    %112 = vector.load %arg12[%c0_208, %c1_209, %c0_210, %c0_211] : memref<2x10x10x16xf32, #tpu.memory_space<vmem>>, vector<2x8x8x16xf32>
    %113 = vector.shape_cast %112 : vector<2x8x8x16xf32> to vector<128x16xf32>
    %c0_212 = arith.constant 0 : index
    %c48_213 = arith.constant 48 : index
    %114 = vector.load %arg13[%c0_212, %c48_213] : memref<128x144xf32, #tpu.memory_space<vmem>>, vector<128x16xf32>
    tpu.vector_store %arg13[%c0_212, %c48_213], %113 {strides = array<i32>} : memref<128x144xf32, #tpu.memory_space<vmem>>, vector<128x16xf32>,
    %c0_214 = arith.constant 0 : index
    %c1_215 = arith.constant 1 : index
    %c1_216 = arith.constant 1 : index
    %c0_217 = arith.constant 0 : index
    %115 = vector.load %arg12[%c0_214, %c1_215, %c1_216, %c0_217] : memref<2x10x10x16xf32, #tpu.memory_space<vmem>>, vector<2x8x8x16xf32>
    %116 = vector.shape_cast %115 : vector<2x8x8x16xf32> to vector<128x16xf32>
    %c0_218 = arith.constant 0 : index
    %c64_219 = arith.constant 64 : index
    %117 = vector.load %arg13[%c0_218, %c64_219] : memref<128x144xf32, #tpu.memory_space<vmem>>, vector<128x16xf32>
    tpu.vector_store %arg13[%c0_218, %c64_219], %116 {strides = array<i32>} : memref<128x144xf32, #tpu.memory_space<vmem>>, vector<128x16xf32>,
    %c0_220 = arith.constant 0 : index
    %c1_221 = arith.constant 1 : index
    %c2_222 = arith.constant 2 : index
    %c0_223 = arith.constant 0 : index
    %118 = vector.load %arg12[%c0_220, %c1_221, %c2_222, %c0_223] : memref<2x10x10x16xf32, #tpu.memory_space<vmem>>, vector<2x8x8x16xf32>
    %119 = vector.shape_cast %118 : vector<2x8x8x16xf32> to vector<128x16xf32>
    %c0_224 = arith.constant 0 : index
    %c80 = arith.constant 80 : index
    %120 = vector.load %arg13[%c0_224, %c80] : memref<128x144xf32, #tpu.memory_space<vmem>>, vector<128x16xf32>
    tpu.vector_store %arg13[%c0_224, %c80], %119 {strides = array<i32>} : memref<128x144xf32, #tpu.memory_space<vmem>>, vector<128x16xf32>,
    %c0_225 = arith.constant 0 : index
    %c2_226 = arith.constant 2 : index
    %c0_227 = arith.constant 0 : index
    %c0_228 = arith.constant 0 : index
    %121 = vector.load %arg12[%c0_225, %c2_226, %c0_227, %c0_228] : memref<2x10x10x16xf32, #tpu.memory_space<vmem>>, vector<2x8x8x16xf32>
    %122 = vector.shape_cast %121 : vector<2x8x8x16xf32> to vector<128x16xf32>
    %c0_229 = arith.constant 0 : index
    %c96 = arith.constant 96 : index
    %123 = vector.load %arg13[%c0_229, %c96] : memref<128x144xf32, #tpu.memory_space<vmem>>, vector<128x16xf32>
    tpu.vector_store %arg13[%c0_229, %c96], %122 {strides = array<i32>} : memref<128x144xf32, #tpu.memory_space<vmem>>, vector<128x16xf32>,
    %c0_230 = arith.constant 0 : index
    %c2_231 = arith.constant 2 : index
    %c1_232 = arith.constant 1 : index
    %c0_233 = arith.constant 0 : index
    %124 = vector.load %arg12[%c0_230, %c2_231, %c1_232, %c0_233] : memref<2x10x10x16xf32, #tpu.memory_space<vmem>>, vector<2x8x8x16xf32>
    %125 = vector.shape_cast %124 : vector<2x8x8x16xf32> to vector<128x16xf32>
    %c0_234 = arith.constant 0 : index
    %c112 = arith.constant 112 : index
    %126 = vector.load %arg13[%c0_234, %c112] : memref<128x144xf32, #tpu.memory_space<vmem>>, vector<128x16xf32>
    tpu.vector_store %arg13[%c0_234, %c112], %125 {strides = array<i32>} : memref<128x144xf32, #tpu.memory_space<vmem>>, vector<128x16xf32>,
    %c0_235 = arith.constant 0 : index
    %c2_236 = arith.constant 2 : index
    %c2_237 = arith.constant 2 : index
    %c0_238 = arith.constant 0 : index
    %127 = vector.load %arg12[%c0_235, %c2_236, %c2_237, %c0_238] : memref<2x10x10x16xf32, #tpu.memory_space<vmem>>, vector<2x8x8x16xf32>
    %128 = vector.shape_cast %127 : vector<2x8x8x16xf32> to vector<128x16xf32>
    %c0_239 = arith.constant 0 : index
    %c128 = arith.constant 128 : index
    %129 = vector.load %arg13[%c0_239, %c128] : memref<128x144xf32, #tpu.memory_space<vmem>>, vector<128x16xf32>
    tpu.vector_store %arg13[%c0_239, %c128], %128 {strides = array<i32>} : memref<128x144xf32, #tpu.memory_space<vmem>>, vector<128x16xf32>,
    %c0_240 = arith.constant 0 : index
    %c0_241 = arith.constant 0 : index
    %130 = vector.load %arg13[%c0_240, %c0_241] : memref<128x144xf32, #tpu.memory_space<vmem>>, vector<128x144xf32>
    %c0_242 = arith.constant 0 : index
    %c0_243 = arith.constant 0 : index
    %131 = vector.load %arg4[%c0_242, %c0_243] : memref<144x32xf32, #tpu.memory_space<vmem>>, vector<144x32xf32>
    %cst_244 = arith.constant dense<0.000000e+00> : vector<128x32xf32>
    %132 = tpu.matmul %130, %131, %cst_244 {dimension_numbers = #tpu.dot_dimension_numbers<[1], [0], [0], [1], [0, 0, 1, 1], [], []>} : vector<128x144xf32>, vector<144x32xf32>, vector<128x32xf32> -> vector<128x32xf32>
    %cst_245 = arith.constant 0.000000e+00 : f32
    %133 = vector.broadcast %cst_245 : f32 to vector<128x32xf32>
    %134 = arith.maximumf %132, %133 : vector<128x32xf32>
    %135 = vector.shape_cast %134 : vector<128x32xf32> to vector<2x8x8x32xf32>
    %136 = vector.shape_cast %135 : vector<2x8x8x32xf32> to vector<2x64x32xf32>
    %cst_246 = arith.constant dense<0.000000e+00> : vector<2x32xf32>
    %137 = vector.multi_reduction <add>, %136, %cst_246 [1] : vector<2x64x32xf32> to vector<2x32xf32>
    %c0_247 = arith.constant 0 : index
    %c0_248 = arith.constant 0 : index
    %138 = vector.load %arg5[%c0_247, %c0_248] : memref<32x10xf32, #tpu.memory_space<vmem>>, vector<32x10xf32>
    %cst_249 = arith.constant dense<0.000000e+00> : vector<2x10xf32>
    %139 = tpu.matmul %137, %138, %cst_249 {dimension_numbers = #tpu.dot_dimension_numbers<[1], [0], [0], [1], [0, 0, 1, 1], [], []>} : vector<2x32xf32>, vector<32x10xf32>, vector<2x10xf32> -> vector<2x10xf32>
    %c0_250 = arith.constant 0 : index
    %c0_251 = arith.constant 0 : index
    %140 = vector.load %arg6[%c0_250, %c0_251] : memref<1x10xf32, #tpu.memory_space<vmem>>, vector<1x10xf32>
    %141 = vector.broadcast %140 : vector<1x10xf32> to vector<2x10xf32>
    %142 = arith.addf %139, %141 : vector<2x10xf32>
    %c0_252 = arith.constant 0 : index
    %c0_253 = arith.constant 0 : index
    %143 = vector.load %arg7[%c0_252, %c0_253] : memref<2x10xf32, #tpu.memory_space<vmem>>, vector<2x10xf32>
    tpu.vector_store %arg7[%c0_252, %c0_253], %142 {strides = array<i32>} : memref<2x10xf32, #tpu.memory_space<vmem>>, vector<2x10xf32>,
    return
  }
  func.func @transform_0(%arg0: i32) -> (i32, i32, i32, i32) {
    %c0_i32 = arith.constant 0 : i32
    %c0_i32_0 = arith.constant 0 : i32
    %c0_i32_1 = arith.constant 0 : i32
    %c0_i32_2 = arith.constant 0 : i32
    return %arg0, %c0_i32, %c0_i32_0, %c0_i32_1 : i32, i32, i32, i32
  }
  func.func @transform_1(%arg0: i32) -> (i32, i32) {
    %c0_i32 = arith.constant 0 : i32
    %c0_i32_0 = arith.constant 0 : i32
    %c0_i32_1 = arith.constant 0 : i32
    return %c0_i32, %c0_i32_0 : i32, i32
  }
  func.func @transform_2(%arg0: i32) -> (i32, i32) {
    %c0_i32 = arith.constant 0 : i32
    %c0_i32_0 = arith.constant 0 : i32
    %c0_i32_1 = arith.constant 0 : i32
    return %c0_i32, %c0_i32_0 : i32, i32
  }
  func.func @transform_3(%arg0: i32) -> (i32, i32) {
    %c0_i32 = arith.constant 0 : i32
    %c0_i32_0 = arith.constant 0 : i32
    %c0_i32_1 = arith.constant 0 : i32
    return %c0_i32, %c0_i32_0 : i32, i32
  }
  func.func @transform_4(%arg0: i32) -> (i32, i32) {
    %c0_i32 = arith.constant 0 : i32
    %c0_i32_0 = arith.constant 0 : i32
    %c0_i32_1 = arith.constant 0 : i32
    return %c0_i32, %c0_i32_0 : i32, i32
  }
  func.func @transform_5(%arg0: i32) -> (i32, i32) {
    %c0_i32 = arith.constant 0 : i32
    %c0_i32_0 = arith.constant 0 : i32
    %c0_i32_1 = arith.constant 0 : i32
    return %c0_i32, %c0_i32_0 : i32, i32
  }
  func.func @transform_6(%arg0: i32) -> (i32, i32) {
    %c0_i32 = arith.constant 0 : i32
    %c0_i32_0 = arith.constant 0 : i32
    return %arg0, %c0_i32 : i32, i32
  }
}

</mosaic_0001>

<llo_original>
// kernel: tiny_cnn_forward.1
$region0: #{tiny_cnn_forward.1}
  #allocation0 [shape = 'u32[]', space=smem, size = 0x4, offset = 0x4, fixed_abs, tag = 'smem constant byte address 0x4 - core index']
  #allocation1 [shape = 'u32[144,128]{1,0:T(1,128)}', space=vmem, size = 0x12000, scoped, tag = 'internal scratch']
  #allocation2 [shape = 'f32[2,18,18,4]{3,2,1,0:T(8,128)}', space=vmem, size = 0x6c000, scoped, tag = 'scratch operand']
  #allocation3 [shape = 'f32[512,36]{1,0:T(8,128)}', space=vmem, size = 0x40000, scoped, tag = 'scratch operand']
  #allocation4 [shape = 'f32[2,18,18,8]{3,2,1,0:T(8,128)}', space=vmem, size = 0x6c000, scoped, tag = 'scratch operand']
  #allocation5 [shape = 'f32[512,72]{1,0:T(8,128)}', space=vmem, size = 0x40000, scoped, tag = 'scratch operand']
  #allocation6 [shape = 'f32[2,10,10,16]{3,2,1,0:T(8,128)}', space=vmem, size = 0x28000, scoped, tag = 'scratch operand']
  #allocation7 [shape = 'f32[128,144]{1,0:T(8,128)}', space=vmem, size = 0x20000, scoped, tag = 'scratch operand']
  #allocation8 [shape = 'f32[2,8,16,16]{3,2,1,0:T(8,128)}', space=vmem, size = 0x20000, scoped, tag = 'scratch operand']
  %s0 = inlined_call_operand.vmem [shape: f32[2,16,16,4], index: 0, kind: input, shape index: {}]
  %s1 = inlined_call_operand.vmem [shape: f32[36,8], index: 1, kind: input, shape index: {}]
  %s2 = inlined_call_operand.vmem [shape: f32[72,16], index: 2, kind: input, shape index: {}]
  %s3 = inlined_call_operand.vmem [shape: f32[144,32], index: 3, kind: input, shape index: {}]
  %s4 = inlined_call_operand.vmem [shape: f32[32,10], index: 4, kind: input, shape index: {}]
  %s5 = inlined_call_operand.vmem [shape: f32[1,10], index: 5, kind: input, shape index: {}]
  %s6 = inlined_call_operand.hbm [shape: f32[2,10], index: 6, kind: output, shape index: {}]
  %s7 = sld [smem:[#allocation0]]
  $region34: #{tiny_cnn_forward.1} parent=0
    _
  %s9 = ssub.s32 1, %s7
  %s10 = scalar_select 0, %s9, %s7
  $region1: #{tiny_cnn_forward.1} parent=0
    #allocation9 [shape = 'u8[1024]{0}', space=vmem, size = 0x400, scoped, tag = 'output window, operand 0, single buffered']
    #allocation10 [shape = 's32[1]{0}', space=sflag, size = 0x4, scoped, tag = 'scoped memory for tiny_cnn_forward.1']
    %11 = vsyncpa [#allocation10], 0
    // Predicated region
    $region2: #{tiny_cnn_forward.1} parent=1 // pred_check
      _
    $region3: #{tiny_cnn_forward.1} parent=1 // pred_check_branch
      %13 = sbr.rel (0) target = $region5
    $region4: #{tiny_cnn_forward.1} parent=1 // pred_region
      _
    $region5: #{tiny_cnn_forward.1} parent=1 // pred_fallthru
      _
    // Predicated region
    $region6: #{tiny_cnn_forward.1} parent=1 // pred_check
      _
    $region7: #{tiny_cnn_forward.1} parent=1 // pred_check_branch
      %15 = sbr.rel (0) target = $region9
    $region8: #{tiny_cnn_forward.1} parent=1 // pred_region
      _
    $region9: #{tiny_cnn_forward.1} parent=1 // pred_fallthru
      _
    // Predicated region
    $region10: #{tiny_cnn_forward.1} parent=1 // pred_check
      _
    $region11: #{tiny_cnn_forward.1} parent=1 // pred_check_branch
      %17 = sbr.rel (0) target = $region13
    $region12: #{tiny_cnn_forward.1} parent=1 // pred_region
      _
    $region13: #{tiny_cnn_forward.1} parent=1 // pred_fallthru
      _
    // Predicated region
    $region14: #{tiny_cnn_forward.1} parent=1 // pred_check
      _
    $region15: #{tiny_cnn_forward.1} parent=1 // pred_check_branch
      %19 = sbr.rel (0) target = $region17
    $region16: #{tiny_cnn_forward.1} parent=1 // pred_region
      _
    $region17: #{tiny_cnn_forward.1} parent=1 // pred_fallthru
      _
    // Predicated region
    $region18: #{tiny_cnn_forward.1} parent=1 // pred_check
      _
    $region19: #{tiny_cnn_forward.1} parent=1 // pred_check_branch
      %21 = sbr.rel (0) target = $region21
    $region20: #{tiny_cnn_forward.1} parent=1 // pred_region
      _
    $region21: #{tiny_cnn_forward.1} parent=1 // pred_fallthru
      _
    // Predicated region
    $region22: #{tiny_cnn_forward.1} parent=1 // pred_check
      _
    $region23: #{tiny_cnn_forward.1} parent=1 // pred_check_branch
      %23 = sbr.rel (0) target = $region25
    $region24: #{tiny_cnn_forward.1} parent=1 // pred_region
      _
    $region25: #{tiny_cnn_forward.1} parent=1 // pred_fallthru
      _
    %v24 = vld [vmem:[%s0] sm:$0xff]
    %v25 = vld [vmem:[%s0 + $0x8] sm:$0xff]
    %v26 = vld [vmem:[%s0 + $0x10] sm:$0xff]
    %v27 = vld [vmem:[%s0 + $0x18] sm:$0xff]
    %v28 = vld [vmem:[%s0 + $0x20] sm:$0xff]
    %v29 = vld [vmem:[%s0 + $0x28] sm:$0xff]
    %v30 = vld [vmem:[%s0 + $0x30] sm:$0xff]
    %v31 = vld [vmem:[%s0 + $0x38] sm:$0xff]
    %v32 = vld [vmem:[%s0 + $0x40] sm:$0xff]
    %v33 = vld [vmem:[%s0 + $0x48] sm:$0xff]
    %v34 = vld [vmem:[%s0 + $0x50] sm:$0xff]
    %v35 = vld [vmem:[%s0 + $0x58] sm:$0xff]
    %v36 = vld [vmem:[%s0 + $0x60] sm:$0xff]
    %v37 = vld [vmem:[%s0 + $0x68] sm:$0xff]
    %v38 = vld [vmem:[%s0 + $0x70] sm:$0xff]
    %v39 = vld [vmem:[%s0 + $0x78] sm:$0xff]
    %v40 = vld [vmem:[%s0 + $0x80] sm:$0xff]
    %v41 = vld [vmem:[%s0 + $0x88] sm:$0xff]
    %v42 = vld [vmem:[%s0 + $0x90] sm:$0xff]
    %v43 = vld [vmem:[%s0 + $0x98] sm:$0xff]
    %v44 = vld [vmem:[%s0 + $0xa0] sm:$0xff]
    %v45 = vld [vmem:[%s0 + $0xa8] sm:$0xff]
    %v46 = vld [vmem:[%s0 + $0xb0] sm:$0xff]
    %v47 = vld [vmem:[%s0 + $0xb8] sm:$0xff]
    %v48 = vld [vmem:[%s0 + $0xc0] sm:$0xff]
    %v49 = vld [vmem:[%s0 + $0xc8] sm:$0xff]
    %v50 = vld [vmem:[%s0 + $0xd0] sm:$0xff]
    %v51 = vld [vmem:[%s0 + $0xd8] sm:$0xff]
    %v52 = vld [vmem:[%s0 + $0xe0] sm:$0xff]
    %v53 = vld [vmem:[%s0 + $0xe8] sm:$0xff]
    %v54 = vld [vmem:[%s0 + $0xf0] sm:$0xff]
    %v55 = vld [vmem:[%s0 + $0xf8] sm:$0xff]
    %v56 = vld [vmem:[%s0 + $0x100] sm:$0xff]
    %v57 = vld [vmem:[%s0 + $0x108] sm:$0xff]
    %v58 = vld [vmem:[%s0 + $0x110] sm:$0xff]
    %v59 = vld [vmem:[%s0 + $0x118] sm:$0xff]
    %v60 = vld [vmem:[%s0 + $0x120] sm:$0xff]
    %v61 = vld [vmem:[%s0 + $0x128] sm:$0xff]
    %v62 = vld [vmem:[%s0 + $0x130] sm:$0xff]
    %v63 = vld [vmem:[%s0 + $0x138] sm:$0xff]
    %v64 = vld [vmem:[%s0 + $0x140] sm:$0xff]
    %v65 = vld [vmem:[%s0 + $0x148] sm:$0xff]
    %v66 = vld [vmem:[%s0 + $0x150] sm:$0xff]
    %v67 = vld [vmem:[%s0 + $0x158] sm:$0xff]
    %v68 = vld [vmem:[%s0 + $0x160] sm:$0xff]
    %v69 = vld [vmem:[%s0 + $0x168] sm:$0xff]
    %v70 = vld [vmem:[%s0 + $0x170] sm:$0xff]
    %v71 = vld [vmem:[%s0 + $0x178] sm:$0xff]
    %v72 = vld [vmem:[%s0 + $0x180] sm:$0xff]
    %v73 = vld [vmem:[%s0 + $0x188] sm:$0xff]
    %v74 = vld [vmem:[%s0 + $0x190] sm:$0xff]
    %v75 = vld [vmem:[%s0 + $0x198] sm:$0xff]
    %v76 = vld [vmem:[%s0 + $0x1a0] sm:$0xff]
    %v77 = vld [vmem:[%s0 + $0x1a8] sm:$0xff]
    %v78 = vld [vmem:[%s0 + $0x1b0] sm:$0xff]
    %v79 = vld [vmem:[%s0 + $0x1b8] sm:$0xff]
    %v80 = vld [vmem:[%s0 + $0x1c0] sm:$0xff]
    %v81 = vld [vmem:[%s0 + $0x1c8] sm:$0xff]
    %v82 = vld [vmem:[%s0 + $0x1d0] sm:$0xff]
    %v83 = vld [vmem:[%s0 + $0x1d8] sm:$0xff]
    %v84 = vld [vmem:[%s0 + $0x1e0] sm:$0xff]
    %v85 = vld [vmem:[%s0 + $0x1e8] sm:$0xff]
    %v86 = vld [vmem:[%s0 + $0x1f0] sm:$0xff]
    %v87 = vld [vmem:[%s0 + $0x1f8] sm:$0xff]
    %vm88 = vcmask 31744
    %89 = vst.msk [vmem:[#allocation2] sm:$0xff] %vm88, 0.0
    %90 = vst.msk [vmem:[#allocation2 + $0x8] sm:$0xff] %vm88, 0.0
    %vm91 = vcmask 25600
    %92 = vst.msk [vmem:[#allocation2 + $0x10] sm:$0x3] %vm91, 0.0
    %93 = vst.msk [vmem:[#allocation2 + $0x1b0] sm:$0xff] %vm88, 0.0
    %94 = vst.msk [vmem:[#allocation2 + $0x1b8] sm:$0xff] %vm88, 0.0
    %95 = vst.msk [vmem:[#allocation2 + $0x1c0] sm:$0x3] %vm91, 0.0
    %s96 = scalar_lea.vmem [#allocation2], 408
    %97 = vst.msk [vmem:[%s96] sm:$0xff] %vm88, 0.0
    %98 = vst.msk [vmem:[%s96 + $0x8] sm:$0xff] %vm88, 0.0
    %99 = vst.msk [vmem:[%s96 + $0x10] sm:$0x3] %vm91, 0.0
    %100 = vst.msk [vmem:[%s96 + $0x1b0] sm:$0xff] %vm88, 0.0
    %101 = vst.msk [vmem:[%s96 + $0x1b8] sm:$0xff] %vm88, 0.0
    %102 = vst.msk [vmem:[%s96 + $0x1c0] sm:$0x3] %vm91, 0.0
    %vm103 = vcmask 24576
    %104 = vst.msk [vmem:[#allocation2] sm:$0x1] %vm103, 0.0
    %105 = vst.msk [vmem:[#allocation2 + $0x18] sm:$0x1] %vm103, 0.0
    %106 = vst.msk [vmem:[#allocation2 + $0x30] sm:$0x1] %vm103, 0.0
    %107 = vst.msk [vmem:[#allocation2 + $0x48] sm:$0x1] %vm103, 0.0
    %108 = vst.msk [vmem:[#allocation2 + $0x60] sm:$0x1] %vm103, 0.0
    %109 = vst.msk [vmem:[#allocation2 + $0x78] sm:$0x1] %vm103, 0.0
    %110 = vst.msk [vmem:[#allocation2 + $0x90] sm:$0x1] %vm103, 0.0
    %111 = vst.msk [vmem:[#allocation2 + $0xa8] sm:$0x1] %vm103, 0.0
    %112 = vst.msk [vmem:[#allocation2 + $0xc0] sm:$0x1] %vm103, 0.0
    %113 = vst.msk [vmem:[#allocation2 + $0xd8] sm:$0x1] %vm103, 0.0
    %114 = vst.msk [vmem:[#allocation2 + $0xf0] sm:$0x1] %vm103, 0.0
    %115 = vst.msk [vmem:[#allocation2 + $0x108] sm:$0x1] %vm103, 0.0
    %116 = vst.msk [vmem:[#allocation2 + $0x120] sm:$0x1] %vm103, 0.0
    %117 = vst.msk [vmem:[#allocation2 + $0x138] sm:$0x1] %vm103, 0.0
    %118 = vst.msk [vmem:[#allocation2 + $0x150] sm:$0x1] %vm103, 0.0
    %119 = vst.msk [vmem:[#allocation2 + $0x168] sm:$0x1] %vm103, 0.0
    %120 = vst.msk [vmem:[#allocation2 + $0x180] sm:$0x1] %vm103, 0.0
    %121 = vst.msk [vmem:[#allocation2 + $0x198] sm:$0x1] %vm103, 0.0
    %122 = vst.msk [vmem:[#allocation2 + $0x1b0] sm:$0x1] %vm103, 0.0
    %123 = vst.msk [vmem:[#allocation2 + $0x1c8] sm:$0x1] %vm103, 0.0
    %124 = vst.msk [vmem:[#allocation2 + $0x1e0] sm:$0x1] %vm103, 0.0
    %125 = vst.msk [vmem:[#allocation2 + $0x1f8] sm:$0x1] %vm103, 0.0
    %126 = vst.msk [vmem:[#allocation2 + $0x210] sm:$0x1] %vm103, 0.0
    %127 = vst.msk [vmem:[#allocation2 + $0x228] sm:$0x1] %vm103, 0.0
    %128 = vst.msk [vmem:[#allocation2 + $0x240] sm:$0x1] %vm103, 0.0
    %129 = vst.msk [vmem:[#allocation2 + $0x258] sm:$0x1] %vm103, 0.0
    %130 = vst.msk [vmem:[#allocation2 + $0x270] sm:$0x1] %vm103, 0.0
    %131 = vst.msk [vmem:[#allocation2 + $0x288] sm:$0x1] %vm103, 0.0
    %132 = vst.msk [vmem:[#allocation2 + $0x2a0] sm:$0x1] %vm103, 0.0
    %133 = vst.msk [vmem:[#allocation2 + $0x2b8] sm:$0x1] %vm103, 0.0
    %134 = vst.msk [vmem:[#allocation2 + $0x2d0] sm:$0x1] %vm103, 0.0
    %135 = vst.msk [vmem:[#allocation2 + $0x2e8] sm:$0x1] %vm103, 0.0
    %136 = vst.msk [vmem:[#allocation2 + $0x300] sm:$0x1] %vm103, 0.0
    %137 = vst.msk [vmem:[#allocation2 + $0x318] sm:$0x1] %vm103, 0.0
    %138 = vst.msk [vmem:[#allocation2 + $0x330] sm:$0x1] %vm103, 0.0
    %139 = vst.msk [vmem:[#allocation2 + $0x348] sm:$0x1] %vm103, 0.0
    %140 = vst.msk [vmem:[#allocation2 + $0x11] sm:$0x1] %vm103, 0.0
    %141 = vst.msk [vmem:[#allocation2 + $0x29] sm:$0x1] %vm103, 0.0
    %142 = vst.msk [vmem:[#allocation2 + $0x41] sm:$0x1] %vm103, 0.0
    %143 = vst.msk [vmem:[#allocation2 + $0x59] sm:$0x1] %vm103, 0.0
    %144 = vst.msk [vmem:[#allocation2 + $0x71] sm:$0x1] %vm103, 0.0
    %145 = vst.msk [vmem:[#allocation2 + $0x89] sm:$0x1] %vm103, 0.0
    %146 = vst.msk [vmem:[#allocation2 + $0xa1] sm:$0x1] %vm103, 0.0
    %147 = vst.msk [vmem:[#allocation2 + $0xb9] sm:$0x1] %vm103, 0.0
    %148 = vst.msk [vmem:[#allocation2 + $0xd1] sm:$0x1] %vm103, 0.0
    %149 = vst.msk [vmem:[#allocation2 + $0xe9] sm:$0x1] %vm103, 0.0
    %150 = vst.msk [vmem:[#allocation2 + $0x101] sm:$0x1] %vm103, 0.0
    %151 = vst.msk [vmem:[#allocation2 + $0x119] sm:$0x1] %vm103, 0.0
    %152 = vst.msk [vmem:[#allocation2 + $0x131] sm:$0x1] %vm103, 0.0
    %153 = vst.msk [vmem:[#allocation2 + $0x149] sm:$0x1] %vm103, 0.0
    %154 = vst.msk [vmem:[#allocation2 + $0x161] sm:$0x1] %vm103, 0.0
    %155 = vst.msk [vmem:[#allocation2 + $0x179] sm:$0x1] %vm103, 0.0
    %156 = vst.msk [vmem:[#allocation2 + $0x191] sm:$0x1] %vm103, 0.0
    %157 = vst.msk [vmem:[#allocation2 + $0x1a9] sm:$0x1] %vm103, 0.0
    %158 = vst.msk [vmem:[#allocation2 + $0x1c1] sm:$0x1] %vm103, 0.0
    %159 = vst.msk [vmem:[#allocation2 + $0x1d9] sm:$0x1] %vm103, 0.0
    %160 = vst.msk [vmem:[#allocation2 + $0x1f1] sm:$0x1] %vm103, 0.0
    %161 = vst.msk [vmem:[#allocation2 + $0x209] sm:$0x1] %vm103, 0.0
    %162 = vst.msk [vmem:[#allocation2 + $0x221] sm:$0x1] %vm103, 0.0
    %163 = vst.msk [vmem:[#allocation2 + $0x239] sm:$0x1] %vm103, 0.0
    %164 = vst.msk [vmem:[#allocation2 + $0x251] sm:$0x1] %vm103, 0.0
    %165 = vst.msk [vmem:[#allocation2 + $0x269] sm:$0x1] %vm103, 0.0
    %166 = vst.msk [vmem:[#allocation2 + $0x281] sm:$0x1] %vm103, 0.0
    %167 = vst.msk [vmem:[#allocation2 + $0x299] sm:$0x1] %vm103, 0.0
    %168 = vst.msk [vmem:[#allocation2 + $0x2b1] sm:$0x1] %vm103, 0.0
    %169 = vst.msk [vmem:[#allocation2 + $0x2c9] sm:$0x1] %vm103, 0.0
    %170 = vst.msk [vmem:[#allocation2 + $0x2e1] sm:$0x1] %vm103, 0.0
    %171 = vst.msk [vmem:[#allocation2 + $0x2f9] sm:$0x1] %vm103, 0.0
    %172 = vst.msk [vmem:[#allocation2 + $0x311] sm:$0x1] %vm103, 0.0
    %173 = vst.msk [vmem:[#allocation2 + $0x329] sm:$0x1] %vm103, 0.0
    %174 = vst.msk [vmem:[#allocation2 + $0x341] sm:$0x1] %vm103, 0.0
    %175 = vst.msk [vmem:[#allocation2 + $0x359] sm:$0x1] %vm103, 0.0
    %s176 = scalar_lea.vmem [#allocation2], 24
    %177 = vst.msk [vmem:[%s176 + $0x1] sm:$0xff] %vm88, %v24
    %178 = vst.msk [vmem:[%s176 + $0x9] sm:$0xff] %vm88, %v25
    %179 = vst.msk [vmem:[%s176 + $0x19] sm:$0xff] %vm88, %v26
    %180 = vst.msk [vmem:[%s176 + $0x21] sm:$0xff] %vm88, %v27
    %181 = vst.msk [vmem:[%s176 + $0x31] sm:$0xff] %vm88, %v28
    %182 = vst.msk [vmem:[%s176 + $0x39] sm:$0xff] %vm88, %v29
    %183 = vst.msk [vmem:[%s176 + $0x49] sm:$0xff] %vm88, %v30
    %184 = vst.msk [vmem:[%s176 + $0x51] sm:$0xff] %vm88, %v31
    %185 = vst.msk [vmem:[%s176 + $0x61] sm:$0xff] %vm88, %v32
    %186 = vst.msk [vmem:[%s176 + $0x69] sm:$0xff] %vm88, %v33
    %187 = vst.msk [vmem:[%s176 + $0x79] sm:$0xff] %vm88, %v34
    %188 = vst.msk [vmem:[%s176 + $0x81] sm:$0xff] %vm88, %v35
    %189 = vst.msk [vmem:[%s176 + $0x91] sm:$0xff] %vm88, %v36
    %190 = vst.msk [vmem:[%s176 + $0x99] sm:$0xff] %vm88, %v37
    %191 = vst.msk [vmem:[%s176 + $0xa9] sm:$0xff] %vm88, %v38
    %192 = vst.msk [vmem:[%s176 + $0xb1] sm:$0xff] %vm88, %v39
    %193 = vst.msk [vmem:[%s176 + $0xc1] sm:$0xff] %vm88, %v40
    %194 = vst.msk [vmem:[%s176 + $0xc9] sm:$0xff] %vm88, %v41
    %195 = vst.msk [vmem:[%s176 + $0xd9] sm:$0xff] %vm88, %v42
    %196 = vst.msk [vmem:[%s176 + $0xe1] sm:$0xff] %vm88, %v43
    %197 = vst.msk [vmem:[%s176 + $0xf1] sm:$0xff] %vm88, %v44
    %198 = vst.msk [vmem:[%s176 + $0xf9] sm:$0xff] %vm88, %v45
    %199 = vst.msk [vmem:[%s176 + $0x109] sm:$0xff] %vm88, %v46
    %200 = vst.msk [vmem:[%s176 + $0x111] sm:$0xff] %vm88, %v47
    %201 = vst.msk [vmem:[%s176 + $0x121] sm:$0xff] %vm88, %v48
    %202 = vst.msk [vmem:[%s176 + $0x129] sm:$0xff] %vm88, %v49
    %203 = vst.msk [vmem:[%s176 + $0x139] sm:$0xff] %vm88, %v50
    %204 = vst.msk [vmem:[%s176 + $0x141] sm:$0xff] %vm88, %v51
    %205 = vst.msk [vmem:[%s176 + $0x151] sm:$0xff] %vm88, %v52
    %206 = vst.msk [vmem:[%s176 + $0x159] sm:$0xff] %vm88, %v53
    %207 = vst.msk [vmem:[%s176 + $0x169] sm:$0xff] %vm88, %v54
    %208 = vst.msk [vmem:[%s176 + $0x171] sm:$0xff] %vm88, %v55
    %209 = vst.msk [vmem:[%s176 + $0x1b1] sm:$0xff] %vm88, %v56
    %210 = vst.msk [vmem:[%s176 + $0x1b9] sm:$0xff] %vm88, %v57
    %211 = vst.msk [vmem:[%s176 + $0x1c9] sm:$0xff] %vm88, %v58
    %212 = vst.msk [vmem:[%s176 + $0x1d1] sm:$0xff] %vm88, %v59
    %213 = vst.msk [vmem:[%s176 + $0x1e1] sm:$0xff] %vm88, %v60
    %214 = vst.msk [vmem:[%s176 + $0x1e9] sm:$0xff] %vm88, %v61
    %215 = vst.msk [vmem:[%s176 + $0x1f9] sm:$0xff] %vm88, %v62
    %216 = vst.msk [vmem:[%s176 + $0x201] sm:$0xff] %vm88, %v63
    %217 = vst.msk [vmem:[%s176 + $0x211] sm:$0xff] %vm88, %v64
    %218 = vst.msk [vmem:[%s176 + $0x219] sm:$0xff] %vm88, %v65
    %219 = vst.msk [vmem:[%s176 + $0x229] sm:$0xff] %vm88, %v66
    %220 = vst.msk [vmem:[%s176 + $0x231] sm:$0xff] %vm88, %v67
    %221 = vst.msk [vmem:[%s176 + $0x241] sm:$0xff] %vm88, %v68
    %222 = vst.msk [vmem:[%s176 + $0x249] sm:$0xff] %vm88, %v69
    %223 = vst.msk [vmem:[%s176 + $0x259] sm:$0xff] %vm88, %v70
    %224 = vst.msk [vmem:[%s176 + $0x261] sm:$0xff] %vm88, %v71
    %225 = vst.msk [vmem:[%s176 + $0x271] sm:$0xff] %vm88, %v72
    %226 = vst.msk [vmem:[%s176 + $0x279] sm:$0xff] %vm88, %v73
    %227 = vst.msk [vmem:[%s176 + $0x289] sm:$0xff] %vm88, %v74
    %228 = vst.msk [vmem:[%s176 + $0x291] sm:$0xff] %vm88, %v75
    %229 = vst.msk [vmem:[%s176 + $0x2a1] sm:$0xff] %vm88, %v76
    %230 = vst.msk [vmem:[%s176 + $0x2a9] sm:$0xff] %vm88, %v77
    %231 = vst.msk [vmem:[%s176 + $0x2b9] sm:$0xff] %vm88, %v78
    %232 = vst.msk [vmem:[%s176 + $0x2c1] sm:$0xff] %vm88, %v79
    %233 = vst.msk [vmem:[%s176 + $0x2d1] sm:$0xff] %vm88, %v80
    %234 = vst.msk [vmem:[%s176 + $0x2d9] sm:$0xff] %vm88, %v81
    %235 = vst.msk [vmem:[%s176 + $0x2e9] sm:$0xff] %vm88, %v82
    %236 = vst.msk [vmem:[%s176 + $0x2f1] sm:$0xff] %vm88, %v83
    %237 = vst.msk [vmem:[%s176 + $0x301] sm:$0xff] %vm88, %v84
    %238 = vst.msk [vmem:[%s176 + $0x309] sm:$0xff] %vm88, %v85
    %239 = vst.msk [vmem:[%s176 + $0x319] sm:$0xff] %vm88, %v86
    %240 = vst.msk [vmem:[%s176 + $0x321] sm:$0xff] %vm88, %v87
    %v241 = vld [vmem:[#allocation2] sm:$0xff]
    %v242 = vld [vmem:[#allocation2 + $0x8] sm:$0xff]
    %v243 = vld [vmem:[#allocation2 + $0x18] sm:$0xff]
    %v244 = vld [vmem:[#allocation2 + $0x20] sm:$0xff]
    %v245 = vld [vmem:[#allocation2 + $0x30] sm:$0xff]
    %v246 = vld [vmem:[#allocation2 + $0x38] sm:$0xff]
    %v247 = vld [vmem:[#allocation2 + $0x48] sm:$0xff]
    %v248 = vld [vmem:[#allocation2 + $0x50] sm:$0xff]
    %v249 = vld [vmem:[#allocation2 + $0x60] sm:$0xff]
    %v250 = vld [vmem:[#allocation2 + $0x68] sm:$0xff]
    %v251 = vld [vmem:[#allocation2 + $0x78] sm:$0xff]
    %v252 = vld [vmem:[#allocation2 + $0x80] sm:$0xff]
    %v253 = vld [vmem:[#allocation2 + $0x90] sm:$0xff]
    %v254 = vld [vmem:[#allocation2 + $0x98] sm:$0xff]
    %v255 = vld [vmem:[#allocation2 + $0xa8] sm:$0xff]
    %v256 = vld [vmem:[#allocation2 + $0xb0] sm:$0xff]
    %v257 = vld [vmem:[#allocation2 + $0xc0] sm:$0xff]
    %v258 = vld [vmem:[#allocation2 + $0xc8] sm:$0xff]
    %v259 = vld [vmem:[#allocation2 + $0xd8] sm:$0xff]
    %v260 = vld [vmem:[#allocation2 + $0xe0] sm:$0xff]
    %v261 = vld [vmem:[#allocation2 + $0xf0] sm:$0xff]
    %v262 = vld [vmem:[#allocation2 + $0xf8] sm:$0xff]
    %v263 = vld [vmem:[#allocation2 + $0x108] sm:$0xff]
    %v264 = vld [vmem:[#allocation2 + $0x110] sm:$0xff]
    %v265 = vld [vmem:[#allocation2 + $0x120] sm:$0xff]
    %v266 = vld [vmem:[#allocation2 + $0x128] sm:$0xff]
    %v267 = vld [vmem:[#allocation2 + $0x138] sm:$0xff]
    %v268 = vld [vmem:[#allocation2 + $0x140] sm:$0xff]
    %v269 = vld [vmem:[#allocation2 + $0x150] sm:$0xff]
    %v270 = vld [vmem:[#allocation2 + $0x158] sm:$0xff]
    %v271 = vld [vmem:[#allocation2 + $0x168] sm:$0xff]
    %v272 = vld [vmem:[#allocation2 + $0x170] sm:$0xff]
    %v273 = vld [vmem:[#allocation2 + $0x1b0] sm:$0xff]
    %v274 = vld [vmem:[#allocation2 + $0x1b8] sm:$0xff]
    %v275 = vld [vmem:[#allocation2 + $0x1c8] sm:$0xff]
    %v276 = vld [vmem:[#allocation2 + $0x1d0] sm:$0xff]
    %v277 = vld [vmem:[#allocation2 + $0x1e0] sm:$0xff]
    %v278 = vld [vmem:[#allocation2 + $0x1e8] sm:$0xff]
    %v279 = vld [vmem:[#allocation2 + $0x1f8] sm:$0xff]
    %v280 = vld [vmem:[#allocation2 + $0x200] sm:$0xff]
    %v281 = vld [vmem:[#allocation2 + $0x210] sm:$0xff]
    %v282 = vld [vmem:[#allocation2 + $0x218] sm:$0xff]
    %v283 = vld [vmem:[#allocation2 + $0x228] sm:$0xff]
    %v284 = vld [vmem:[#allocation2 + $0x230] sm:$0xff]
    %v285 = vld [vmem:[#allocation2 + $0x240] sm:$0xff]
    %v286 = vld [vmem:[#allocation2 + $0x248] sm:$0xff]
    %v287 = vld [vmem:[#allocation2 + $0x258] sm:$0xff]
    %v288 = vld [vmem:[#allocation2 + $0x260] sm:$0xff]
    %v289 = vld [vmem:[#allocation2 + $0x270] sm:$0xff]
    %v290 = vld [vmem:[#allocation2 + $0x278] sm:$0xff]
    %v291 = vld [vmem:[#allocation2 + $0x288] sm:$0xff]
    %v292 = vld [vmem:[#allocation2 + $0x290] sm:$0xff]
    %v293 = vld [vmem:[#allocation2 + $0x2a0] sm:$0xff]
    %v294 = vld [vmem:[#allocation2 + $0x2a8] sm:$0xff]
    %v295 = vld [vmem:[#allocation2 + $0x2b8] sm:$0xff]
    %v296 = vld [vmem:[#allocation2 + $0x2c0] sm:$0xff]
    %v297 = vld [vmem:[#allocation2 + $0x2d0] sm:$0xff]
    %v298 = vld [vmem:[#allocation2 + $0x2d8] sm:$0xff]
    %v299 = vld [vmem:[#allocation2 + $0x2e8] sm:$0xff]
    %v300 = vld [vmem:[#allocation2 + $0x2f0] sm:$0xff]
    %v301 = vld [vmem:[#allocation2 + $0x300] sm:$0xff]
    %v302 = vld [vmem:[#allocation2 + $0x308] sm:$0xff]
    %v303 = vld [vmem:[#allocation2 + $0x318] sm:$0xff]
    %v304 = vld [vmem:[#allocation2 + $0x320] sm:$0xff]
    %305 = vst.msk [vmem:[#allocation3] sm:$0xff] %vm88, %v241
    %306 = vst.msk [vmem:[#allocation3 + $0x8] sm:$0xff] %vm88, %v242
    %307 = vst.msk [vmem:[#allocation3 + $0x10] sm:$0xff] %vm88, %v243
    %308 = vst.msk [vmem:[#allocation3 + $0x18] sm:$0xff] %vm88, %v244
    %309 = vst.msk [vmem:[#allocation3 + $0x20] sm:$0xff] %vm88, %v245
    %310 = vst.msk [vmem:[#allocation3 + $0x28] sm:$0xff] %vm88, %v246
    %311 = vst.msk [vmem:[#allocation3 + $0x30] sm:$0xff] %vm88, %v247
    %312 = vst.msk [vmem:[#allocation3 + $0x38] sm:$0xff] %vm88, %v248
    %313 = vst.msk [vmem:[#allocation3 + $0x40] sm:$0xff] %vm88, %v249
    %314 = vst.msk [vmem:[#allocation3 + $0x48] sm:$0xff] %vm88, %v250
    %315 = vst.msk [vmem:[#allocation3 + $0x50] sm:$0xff] %vm88, %v251
    %316 = vst.msk [vmem:[#allocation3 + $0x58] sm:$0xff] %vm88, %v252
    %317 = vst.msk [vmem:[#allocation3 + $0x60] sm:$0xff] %vm88, %v253
    %318 = vst.msk [vmem:[#allocation3 + $0x68] sm:$0xff] %vm88, %v254
    %319 = vst.msk [vmem:[#allocation3 + $0x70] sm:$0xff] %vm88, %v255
    %320 = vst.msk [vmem:[#allocation3 + $0x78] sm:$0xff] %vm88, %v256
    %321 = vst.msk [vmem:[#allocation3 + $0x80] sm:$0xff] %vm88, %v257
    %322 = vst.msk [vmem:[#allocation3 + $0x88] sm:$0xff] %vm88, %v258
    %323 = vst.msk [vmem:[#allocation3 + $0x90] sm:$0xff] %vm88, %v259
    %324 = vst.msk [vmem:[#allocation3 + $0x98] sm:$0xff] %vm88, %v260
    %325 = vst.msk [vmem:[#allocation3 + $0xa0] sm:$0xff] %vm88, %v261
    %326 = vst.msk [vmem:[#allocation3 + $0xa8] sm:$0xff] %vm88, %v262
    %327 = vst.msk [vmem:[#allocation3 + $0xb0] sm:$0xff] %vm88, %v263
    %328 = vst.msk [vmem:[#allocation3 + $0xb8] sm:$0xff] %vm88, %v264
    %329 = vst.msk [vmem:[#allocation3 + $0xc0] sm:$0xff] %vm88, %v265
    %330 = vst.msk [vmem:[#allocation3 + $0xc8] sm:$0xff] %vm88, %v266
    %331 = vst.msk [vmem:[#allocation3 + $0xd0] sm:$0xff] %vm88, %v267
    %332 = vst.msk [vmem:[#allocation3 + $0xd8] sm:$0xff] %vm88, %v268
    %333 = vst.msk [vmem:[#allocation3 + $0xe0] sm:$0xff] %vm88, %v269
    %334 = vst.msk [vmem:[#allocation3 + $0xe8] sm:$0xff] %vm88, %v270
    %335 = vst.msk [vmem:[#allocation3 + $0xf0] sm:$0xff] %vm88, %v271
    %336 = vst.msk [vmem:[#allocation3 + $0xf8] sm:$0xff] %vm88, %v272
    %337 = vst.msk [vmem:[#allocation3 + $0x100] sm:$0xff] %vm88, %v273
    %338 = vst.msk [vmem:[#allocation3 + $0x108] sm:$0xff] %vm88, %v274
    %339 = vst.msk [vmem:[#allocation3 + $0x110] sm:$0xff] %vm88, %v275
    %340 = vst.msk [vmem:[#allocation3 + $0x118] sm:$0xff] %vm88, %v276
    %341 = vst.msk [vmem:[#allocation3 + $0x120] sm:$0xff] %vm88, %v277
    %342 = vst.msk [vmem:[#allocation3 + $0x128] sm:$0xff] %vm88, %v278
    %343 = vst.msk [vmem:[#allocation3 + $0x130] sm:$0xff] %vm88, %v279
    %344 = vst.msk [vmem:[#allocation3 + $0x138] sm:$0xff] %vm88, %v280
    %345 = vst.msk [vmem:[#allocation3 + $0x140] sm:$0xff] %vm88, %v281
    %346 = vst.msk [vmem:[#allocation3 + $0x148] sm:$0xff] %vm88, %v282
    %347 = vst.msk [vmem:[#allocation3 + $0x150] sm:$0xff] %vm88, %v283
    %348 = vst.msk [vmem:[#allocation3 + $0x158] sm:$0xff] %vm88, %v284
    %349 = vst.msk [vmem:[#allocation3 + $0x160] sm:$0xff] %vm88, %v285
    %350 = vst.msk [vmem:[#allocation3 + $0x168] sm:$0xff] %vm88, %v286
    %351 = vst.msk [vmem:[#allocation3 + $0x170] sm:$0xff] %vm88, %v287
    %352 = vst.msk [vmem:[#allocation3 + $0x178] sm:$0xff] %vm88, %v288
    %353 = vst.msk [vmem:[#allocation3 + $0x180] sm:$0xff] %vm88, %v289
    %354 = vst.msk [vmem:[#allocation3 + $0x188] sm:$0xff] %vm88, %v290
    %355 = vst.msk [vmem:[#allocation3 + $0x190] sm:$0xff] %vm88, %v291
    %356 = vst.msk [vmem:[#allocation3 + $0x198] sm:$0xff] %vm88, %v292
    %357 = vst.msk [vmem:[#allocation3 + $0x1a0] sm:$0xff] %vm88, %v293
    %358 = vst.msk [vmem:[#allocation3 + $0x1a8] sm:$0xff] %vm88, %v294
    %359 = vst.msk [vmem:[#allocation3 + $0x1b0] sm:$0xff] %vm88, %v295
    %360 = vst.msk [vmem:[#allocation3 + $0x1b8] sm:$0xff] %vm88, %v296
    %361 = vst.msk [vmem:[#allocation3 + $0x1c0] sm:$0xff] %vm88, %v297
    %362 = vst.msk [vmem:[#allocation3 + $0x1c8] sm:$0xff] %vm88, %v298
    %363 = vst.msk [vmem:[#allocation3 + $0x1d0] sm:$0xff] %vm88, %v299
    %364 = vst.msk [vmem:[#allocation3 + $0x1d8] sm:$0xff] %vm88, %v300
    %365 = vst.msk [vmem:[#allocation3 + $0x1e0] sm:$0xff] %vm88, %v301
    %366 = vst.msk [vmem:[#allocation3 + $0x1e8] sm:$0xff] %vm88, %v302
    %367 = vst.msk [vmem:[#allocation3 + $0x1f0] sm:$0xff] %vm88, %v303
    %368 = vst.msk [vmem:[#allocation3 + $0x1f8] sm:$0xff] %vm88, %v304
    %v369 = vld [vmem:[#allocation2 + $0x1] sm:$0xff]
    %v370 = vld [vmem:[#allocation2 + $0x9] sm:$0xff]
    %v371 = vld [vmem:[#allocation2 + $0x19] sm:$0xff]
    %v372 = vld [vmem:[#allocation2 + $0x21] sm:$0xff]
    %v373 = vld [vmem:[#allocation2 + $0x31] sm:$0xff]
    %v374 = vld [vmem:[#allocation2 + $0x39] sm:$0xff]
    %v375 = vld [vmem:[#allocation2 + $0x49] sm:$0xff]
    %v376 = vld [vmem:[#allocation2 + $0x51] sm:$0xff]
    %v377 = vld [vmem:[#allocation2 + $0x61] sm:$0xff]
    %v378 = vld [vmem:[#allocation2 + $0x69] sm:$0xff]
    %v379 = vld [vmem:[#allocation2 + $0x79] sm:$0xff]
    %v380 = vld [vmem:[#allocation2 + $0x81] sm:$0xff]
    %v381 = vld [vmem:[#allocation2 + $0x91] sm:$0xff]
    %v382 = vld [vmem:[#allocation2 + $0x99] sm:$0xff]
    %v383 = vld [vmem:[#allocation2 + $0xa9] sm:$0xff]
    %v384 = vld [vmem:[#allocation2 + $0xb1] sm:$0xff]
    %v385 = vld [vmem:[#allocation2 + $0xc1] sm:$0xff]
    %v386 = vld [vmem:[#allocation2 + $0xc9] sm:$0xff]
    %v387 = vld [vmem:[#allocation2 + $0xd9] sm:$0xff]
    %v388 = vld [vmem:[#allocation2 + $0xe1] sm:$0xff]
    %v389 = vld [vmem:[#allocation2 + $0xf1] sm:$0xff]
    %v390 = vld [vmem:[#allocation2 + $0xf9] sm:$0xff]
    %v391 = vld [vmem:[#allocation2 + $0x109] sm:$0xff]
    %v392 = vld [vmem:[#allocation2 + $0x111] sm:$0xff]
    %v393 = vld [vmem:[#allocation2 + $0x121] sm:$0xff]
    %v394 = vld [vmem:[#allocation2 + $0x129] sm:$0xff]
    %v395 = vld [vmem:[#allocation2 + $0x139] sm:$0xff]
    %v396 = vld [vmem:[#allocation2 + $0x141] sm:$0xff]
    %v397 = vld [vmem:[#allocation2 + $0x151] sm:$0xff]
    %v398 = vld [vmem:[#allocation2 + $0x159] sm:$0xff]
    %v399 = vld [vmem:[#allocation2 + $0x169] sm:$0xff]
    %v400 = vld [vmem:[#allocation2 + $0x171] sm:$0xff]
    %v401 = vld [vmem:[#allocation2 + $0x1b1] sm:$0xff]
    %v402 = vld [vmem:[#allocation2 + $0x1b9] sm:$0xff]
    %v403 = vld [vmem:[#allocation2 + $0x1c9] sm:$0xff]
    %v404 = vld [vmem:[#allocation2 + $0x1d1] sm:$0xff]
    %v405 = vld [vmem:[#allocation2 + $0x1e1] sm:$0xff]
    %v406 = vld [vmem:[#allocation2 + $0x1e9] sm:$0xff]
    %v407 = vld [vmem:[#allocation2 + $0x1f9] sm:$0xff]
    %v408 = vld [vmem:[#allocation2 + $0x201] sm:$0xff]
    %v409 = vld [vmem:[#allocation2 + $0x211] sm:$0xff]
    %v410 = vld [vmem:[#allocation2 + $0x219] sm:$0xff]
    %v411 = vld [vmem:[#allocation2 + $0x229] sm:$0xff]
    %v412 = vld [vmem:[#allocation2 + $0x231] sm:$0xff]
    %v413 = vld [vmem:[#allocation2 + $0x241] sm:$0xff]
    %v414 = vld [vmem:[#allocation2 + $0x249] sm:$0xff]
    %v415 = vld [vmem:[#allocation2 + $0x259] sm:$0xff]
    %v416 = vld [vmem:[#allocation2 + $0x261] sm:$0xff]
    %v417 = vld [vmem:[#allocation2 + $0x271] sm:$0xff]
    %v418 = vld [vmem:[#allocation2 + $0x279] sm:$0xff]
    %v419 = vld [vmem:[#allocation2 + $0x289] sm:$0xff]
    %v420 = vld [vmem:[#allocation2 + $0x291] sm:$0xff]
    %v421 = vld [vmem:[#allocation2 + $0x2a1] sm:$0xff]
    %v422 = vld [vmem:[#allocation2 + $0x2a9] sm:$0xff]
    %v423 = vld [vmem:[#allocation2 + $0x2b9] sm:$0xff]
    %v424 = vld [vmem:[#allocation2 + $0x2c1] sm:$0xff]
    %v425 = vld [vmem:[#allocation2 + $0x2d1] sm:$0xff]
    %v426 = vld [vmem:[#allocation2 + $0x2d9] sm:$0xff]
    %v427 = vld [vmem:[#allocation2 + $0x2e9] sm:$0xff]
    %v428 = vld [vmem:[#allocation2 + $0x2f1] sm:$0xff]
    %v429 = vld [vmem:[#allocation2 + $0x301] sm:$0xff]
    %v430 = vld [vmem:[#allocation2 + $0x309] sm:$0xff]
    %v431 = vld [vmem:[#allocation2 + $0x319] sm:$0xff]
    %v432 = vld [vmem:[#allocation2 + $0x321] sm:$0xff]
    %497 = vrot.lane.b32.xlu0 %v369, 4
    %v498 = vpop.permute.xlu0 %497
    %499 = vrot.lane.b32.xlu0 %v370, 4
    %v500 = vpop.permute.xlu0 %499
    %501 = vrot.lane.b32.xlu0 %v371, 4
    %v502 = vpop.permute.xlu0 %501
    %503 = vrot.lane.b32.xlu0 %v372, 4
    %v504 = vpop.permute.xlu0 %503
    %505 = vrot.lane.b32.xlu0 %v373, 4
    %v506 = vpop.permute.xlu0 %505
    %507 = vrot.lane.b32.xlu0 %v374, 4
    %v508 = vpop.permute.xlu0 %507
    %509 = vrot.lane.b32.xlu0 %v375, 4
    %v510 = vpop.permute.xlu0 %509
    %511 = vrot.lane.b32.xlu0 %v376, 4
    %v512 = vpop.permute.xlu0 %511
    %513 = vrot.lane.b32.xlu0 %v377, 4
    %v514 = vpop.permute.xlu0 %513
    %515 = vrot.lane.b32.xlu0 %v378, 4
    %v516 = vpop.permute.xlu0 %515
    %517 = vrot.lane.b32.xlu0 %v379, 4
    %v518 = vpop.permute.xlu0 %517
    %519 = vrot.lane.b32.xlu0 %v380, 4
    %v520 = vpop.permute.xlu0 %519
    %521 = vrot.lane.b32.xlu0 %v381, 4
    %v522 = vpop.permute.xlu0 %521
    %523 = vrot.lane.b32.xlu0 %v382, 4
    %v524 = vpop.permute.xlu0 %523
    %525 = vrot.lane.b32.xlu0 %v383, 4
    %v526 = vpop.permute.xlu0 %525
    %527 = vrot.lane.b32.xlu0 %v384, 4
    %v528 = vpop.permute.xlu0 %527
    %529 = vrot.lane.b32.xlu0 %v385, 4
    %v530 = vpop.permute.xlu0 %529
    %531 = vrot.lane.b32.xlu0 %v386, 4
    %v532 = vpop.permute.xlu0 %531
    %533 = vrot.lane.b32.xlu0 %v387, 4
    %v534 = vpop.permute.xlu0 %533
    %535 = vrot.lane.b32.xlu0 %v388, 4
    %v536 = vpop.permute.xlu0 %535
    %537 = vrot.lane.b32.xlu0 %v389, 4
    %v538 = vpop.permute.xlu0 %537
    %539 = vrot.lane.b32.xlu0 %v390, 4
    %v540 = vpop.permute.xlu0 %539
    %541 = vrot.lane.b32.xlu0 %v391, 4
    %v542 = vpop.permute.xlu0 %541
    %543 = vrot.lane.b32.xlu0 %v392, 4
    %v544 = vpop.permute.xlu0 %543
    %545 = vrot.lane.b32.xlu0 %v393, 4
    %v546 = vpop.permute.xlu0 %545
    %547 = vrot.lane.b32.xlu0 %v394, 4
    %v548 = vpop.permute.xlu0 %547
    %549 = vrot.lane.b32.xlu0 %v395, 4
    %v550 = vpop.permute.xlu0 %549
    %551 = vrot.lane.b32.xlu0 %v396, 4
    %v552 = vpop.permute.xlu0 %551
    %553 = vrot.lane.b32.xlu0 %v397, 4
    %v554 = vpop.permute.xlu0 %553
    %555 = vrot.lane.b32.xlu0 %v398, 4
    %v556 = vpop.permute.xlu0 %555
    %557 = vrot.lane.b32.xlu0 %v399, 4
    %v558 = vpop.permute.xlu0 %557
    %559 = vrot.lane.b32.xlu0 %v400, 4
    %v560 = vpop.permute.xlu0 %559
    %561 = vrot.lane.b32.xlu0 %v401, 4
    %v562 = vpop.permute.xlu0 %561
    %563 = vrot.lane.b32.xlu0 %v402, 4
    %v564 = vpop.permute.xlu0 %563
    %565 = vrot.lane.b32.xlu0 %v403, 4
    %v566 = vpop.permute.xlu0 %565
    %567 = vrot.lane.b32.xlu0 %v404, 4
    %v568 = vpop.permute.xlu0 %567
    %569 = vrot.lane.b32.xlu0 %v405, 4
    %v570 = vpop.permute.xlu0 %569
    %571 = vrot.lane.b32.xlu0 %v406, 4
    %v572 = vpop.permute.xlu0 %571
    %573 = vrot.lane.b32.xlu0 %v407, 4
    %v574 = vpop.permute.xlu0 %573
    %575 = vrot.lane.b32.xlu0 %v408, 4
    %v576 = vpop.permute.xlu0 %575
    %577 = vrot.lane.b32.xlu0 %v409, 4
    %v578 = vpop.permute.xlu0 %577
    %579 = vrot.lane.b32.xlu0 %v410, 4
    %v580 = vpop.permute.xlu0 %579
    %581 = vrot.lane.b32.xlu0 %v411, 4
    %v582 = vpop.permute.xlu0 %581
    %583 = vrot.lane.b32.xlu0 %v412, 4
    %v584 = vpop.permute.xlu0 %583
    %585 = vrot.lane.b32.xlu0 %v413, 4
    %v586 = vpop.permute.xlu0 %585
    %587 = vrot.lane.b32.xlu0 %v414, 4
    %v588 = vpop.permute.xlu0 %587
    %589 = vrot.lane.b32.xlu0 %v415, 4
    %v590 = vpop.permute.xlu0 %589
    %591 = vrot.lane.b32.xlu0 %v416, 4
    %v592 = vpop.permute.xlu0 %591
    %593 = vrot.lane.b32.xlu0 %v417, 4
    %v594 = vpop.permute.xlu0 %593
    %595 = vrot.lane.b32.xlu0 %v418, 4
    %v596 = vpop.permute.xlu0 %595
    %597 = vrot.lane.b32.xlu0 %v419, 4
    %v598 = vpop.permute.xlu0 %597
    %599 = vrot.lane.b32.xlu0 %v420, 4
    %v600 = vpop.permute.xlu0 %599
    %601 = vrot.lane.b32.xlu0 %v421, 4
    %v602 = vpop.permute.xlu0 %601
    %603 = vrot.lane.b32.xlu0 %v422, 4
    %v604 = vpop.permute.xlu0 %603
    %605 = vrot.lane.b32.xlu0 %v423, 4
    %v606 = vpop.permute.xlu0 %605
    %607 = vrot.lane.b32.xlu0 %v424, 4
    %v608 = vpop.permute.xlu0 %607
    %609 = vrot.lane.b32.xlu0 %v425, 4
    %v610 = vpop.permute.xlu0 %609
    %611 = vrot.lane.b32.xlu0 %v426, 4
    %v612 = vpop.permute.xlu0 %611
    %613 = vrot.lane.b32.xlu0 %v427, 4
    %v614 = vpop.permute.xlu0 %613
    %615 = vrot.lane.b32.xlu0 %v428, 4
    %v616 = vpop.permute.xlu0 %615
    %617 = vrot.lane.b32.xlu0 %v429, 4
    %v618 = vpop.permute.xlu0 %617
    %619 = vrot.lane.b32.xlu0 %v430, 4
    %v620 = vpop.permute.xlu0 %619
    %621 = vrot.lane.b32.xlu0 %v431, 4
    %v622 = vpop.permute.xlu0 %621
    %623 = vrot.lane.b32.xlu0 %v432, 4
    %v624 = vpop.permute.xlu0 %623
    %vm689 = vcmask 64544
    %690 = vst.msk [vmem:[#allocation3] sm:$0xff] %vm689, %v498
    %691 = vst.msk [vmem:[#allocation3 + $0x8] sm:$0xff] %vm689, %v500
    %692 = vst.msk [vmem:[#allocation3 + $0x10] sm:$0xff] %vm689, %v502
    %693 = vst.msk [vmem:[#allocation3 + $0x18] sm:$0xff] %vm689, %v504
    %694 = vst.msk [vmem:[#allocation3 + $0x20] sm:$0xff] %vm689, %v506
    %695 = vst.msk [vmem:[#allocation3 + $0x28] sm:$0xff] %vm689, %v508
    %696 = vst.msk [vmem:[#allocation3 + $0x30] sm:$0xff] %vm689, %v510
    %697 = vst.msk [vmem:[#allocation3 + $0x38] sm:$0xff] %vm689, %v512
    %698 = vst.msk [vmem:[#allocation3 + $0x40] sm:$0xff] %vm689, %v514
    %699 = vst.msk [vmem:[#allocation3 + $0x48] sm:$0xff] %vm689, %v516
    %700 = vst.msk [vmem:[#allocation3 + $0x50] sm:$0xff] %vm689, %v518
    %701 = vst.msk [vmem:[#allocation3 + $0x58] sm:$0xff] %vm689, %v520
    %702 = vst.msk [vmem:[#allocation3 + $0x60] sm:$0xff] %vm689, %v522
    %703 = vst.msk [vmem:[#allocation3 + $0x68] sm:$0xff] %vm689, %v524
    %704 = vst.msk [vmem:[#allocation3 + $0x70] sm:$0xff] %vm689, %v526
    %705 = vst.msk [vmem:[#allocation3 + $0x78] sm:$0xff] %vm689, %v528
    %706 = vst.msk [vmem:[#allocation3 + $0x80] sm:$0xff] %vm689, %v530
    %707 = vst.msk [vmem:[#allocation3 + $0x88] sm:$0xff] %vm689, %v532
    %708 = vst.msk [vmem:[#allocation3 + $0x90] sm:$0xff] %vm689, %v534
    %709 = vst.msk [vmem:[#allocation3 + $0x98] sm:$0xff] %vm689, %v536
    %710 = vst.msk [vmem:[#allocation3 + $0xa0] sm:$0xff] %vm689, %v538
    %711 = vst.msk [vmem:[#allocation3 + $0xa8] sm:$0xff] %vm689, %v540
    %712 = vst.msk [vmem:[#allocation3 + $0xb0] sm:$0xff] %vm689, %v542
    %713 = vst.msk [vmem:[#allocation3 + $0xb8] sm:$0xff] %vm689, %v544
    %714 = vst.msk [vmem:[#allocation3 + $0xc0] sm:$0xff] %vm689, %v546
    %715 = vst.msk [vmem:[#allocation3 + $0xc8] sm:$0xff] %vm689, %v548
    %716 = vst.msk [vmem:[#allocation3 + $0xd0] sm:$0xff] %vm689, %v550
    %717 = vst.msk [vmem:[#allocation3 + $0xd8] sm:$0xff] %vm689, %v552
    %718 = vst.msk [vmem:[#allocation3 + $0xe0] sm:$0xff] %vm689, %v554
    %719 = vst.msk [vmem:[#allocation3 + $0xe8] sm:$0xff] %vm689, %v556
    %720 = vst.msk [vmem:[#allocation3 + $0xf0] sm:$0xff] %vm689, %v558
    %721 = vst.msk [vmem:[#allocation3 + $0xf8] sm:$0xff] %vm689, %v560
    %722 = vst.msk [vmem:[#allocation3 + $0x100] sm:$0xff] %vm689, %v562
    %723 = vst.msk [vmem:[#allocation3 + $0x108] sm:$0xff] %vm689, %v564
    %724 = vst.msk [vmem:[#allocation3 + $0x110] sm:$0xff] %vm689, %v566
    %725 = vst.msk [vmem:[#allocation3 + $0x118] sm:$0xff] %vm689, %v568
    %726 = vst.msk [vmem:[#allocation3 + $0x120] sm:$0xff] %vm689, %v570
    %727 = vst.msk [vmem:[#allocation3 + $0x128] sm:$0xff] %vm689, %v572
    %728 = vst.msk [vmem:[#allocation3 + $0x130] sm:$0xff] %vm689, %v574
    %729 = vst.msk [vmem:[#allocation3 + $0x138] sm:$0xff] %vm689, %v576
    %730 = vst.msk [vmem:[#allocation3 + $0x140] sm:$0xff] %vm689, %v578
    %731 = vst.msk [vmem:[#allocation3 + $0x148] sm:$0xff] %vm689, %v580
    %732 = vst.msk [vmem:[#allocation3 + $0x150] sm:$0xff] %vm689, %v582
    %733 = vst.msk [vmem:[#allocation3 + $0x158] sm:$0xff] %vm689, %v584
    %734 = vst.msk [vmem:[#allocation3 + $0x160] sm:$0xff] %vm689, %v586
    %735 = vst.msk [vmem:[#allocation3 + $0x168] sm:$0xff] %vm689, %v588
    %736 = vst.msk [vmem:[#allocation3 + $0x170] sm:$0xff] %vm689, %v590
    %737 = vst.msk [vmem:[#allocation3 + $0x178] sm:$0xff] %vm689, %v592
    %738 = vst.msk [vmem:[#allocation3 + $0x180] sm:$0xff] %vm689, %v594
    %739 = vst.msk [vmem:[#allocation3 + $0x188] sm:$0xff] %vm689, %v596
    %740 = vst.msk [vmem:[#allocation3 + $0x190] sm:$0xff] %vm689, %v598
    %741 = vst.msk [vmem:[#allocation3 + $0x198] sm:$0xff] %vm689, %v600
    %742 = vst.msk [vmem:[#allocation3 + $0x1a0] sm:$0xff] %vm689, %v602
    %743 = vst.msk [vmem:[#allocation3 + $0x1a8] sm:$0xff] %vm689, %v604
    %744 = vst.msk [vmem:[#allocation3 + $0x1b0] sm:$0xff] %vm689, %v606
    %745 = vst.msk [vmem:[#allocation3 + $0x1b8] sm:$0xff] %vm689, %v608
    %746 = vst.msk [vmem:[#allocation3 + $0x1c0] sm:$0xff] %vm689, %v610
    %747 = vst.msk [vmem:[#allocation3 + $0x1c8] sm:$0xff] %vm689, %v612
    %748 = vst.msk [vmem:[#allocation3 + $0x1d0] sm:$0xff] %vm689, %v614
    %749 = vst.msk [vmem:[#allocation3 + $0x1d8] sm:$0xff] %vm689, %v616
    %750 = vst.msk [vmem:[#allocation3 + $0x1e0] sm:$0xff] %vm689, %v618
    %751 = vst.msk [vmem:[#allocation3 + $0x1e8] sm:$0xff] %vm689, %v620
    %752 = vst.msk [vmem:[#allocation3 + $0x1f0] sm:$0xff] %vm689, %v622
    %753 = vst.msk [vmem:[#allocation3 + $0x1f8] sm:$0xff] %vm689, %v624
    %v754 = vld [vmem:[#allocation2 + $0x2] sm:$0xff]
    %v755 = vld [vmem:[#allocation2 + $0xa] sm:$0xff]
    %v756 = vld [vmem:[#allocation2 + $0x1a] sm:$0xff]
    %v757 = vld [vmem:[#allocation2 + $0x22] sm:$0xff]
    %v758 = vld [vmem:[#allocation2 + $0x32] sm:$0xff]
    %v759 = vld [vmem:[#allocation2 + $0x3a] sm:$0xff]
    %v760 = vld [vmem:[#allocation2 + $0x4a] sm:$0xff]
    %v761 = vld [vmem:[#allocation2 + $0x52] sm:$0xff]
    %v762 = vld [vmem:[#allocation2 + $0x62] sm:$0xff]
    %v763 = vld [vmem:[#allocation2 + $0x6a] sm:$0xff]
    %v764 = vld [vmem:[#allocation2 + $0x7a] sm:$0xff]
    %v765 = vld [vmem:[#allocation2 + $0x82] sm:$0xff]
    %v766 = vld [vmem:[#allocation2 + $0x92] sm:$0xff]
    %v767 = vld [vmem:[#allocation2 + $0x9a] sm:$0xff]
    %v768 = vld [vmem:[#allocation2 + $0xaa] sm:$0xff]
    %v769 = vld [vmem:[#allocation2 + $0xb2] sm:$0xff]
    %v770 = vld [vmem:[#allocation2 + $0xc2] sm:$0xff]
    %v771 = vld [vmem:[#allocation2 + $0xca] sm:$0xff]
    %v772 = vld [vmem:[#allocation2 + $0xda] sm:$0xff]
    %v773 = vld [vmem:[#allocation2 + $0xe2] sm:$0xff]
    %v774 = vld [vmem:[#allocation2 + $0xf2] sm:$0xff]
    %v775 = vld [vmem:[#allocation2 + $0xfa] sm:$0xff]
    %v776 = vld [vmem:[#allocation2 + $0x10a] sm:$0xff]
    %v777 = vld [vmem:[#allocation2 + $0x112] sm:$0xff]
    %v778 = vld [vmem:[#allocation2 + $0x122] sm:$0xff]
    %v779 = vld [vmem:[#allocation2 + $0x12a] sm:$0xff]
    %v780 = vld [vmem:[#allocation2 + $0x13a] sm:$0xff]
    %v781 = vld [vmem:[#allocation2 + $0x142] sm:$0xff]
    %v782 = vld [vmem:[#allocation2 + $0x152] sm:$0xff]
    %v783 = vld [vmem:[#allocation2 + $0x15a] sm:$0xff]
    %v784 = vld [vmem:[#allocation2 + $0x16a] sm:$0xff]
    %v785 = vld [vmem:[#allocation2 + $0x172] sm:$0xff]
    %v786 = vld [vmem:[#allocation2 + $0x1b2] sm:$0xff]
    %v787 = vld [vmem:[#allocation2 + $0x1ba] sm:$0xff]
    %v788 = vld [vmem:[#allocation2 + $0x1ca] sm:$0xff]
    %v789 = vld [vmem:[#allocation2 + $0x1d2] sm:$0xff]
    %v790 = vld [vmem:[#allocation2 + $0x1e2] sm:$0xff]
    %v791 = vld [vmem:[#allocation2 + $0x1ea] sm:$0xff]
    %v792 = vld [vmem:[#allocation2 + $0x1fa] sm:$0xff]
    %v793 = vld [vmem:[#allocation2 + $0x202] sm:$0xff]
    %v794 = vld [vmem:[#allocation2 + $0x212] sm:$0xff]
    %v795 = vld [vmem:[#allocation2 + $0x21a] sm:$0xff]
    %v796 = vld [vmem:[#allocation2 + $0x22a] sm:$0xff]
    %v797 = vld [vmem:[#allocation2 + $0x232] sm:$0xff]
    %v798 = vld [vmem:[#allocation2 + $0x242] sm:$0xff]
    %v799 = vld [vmem:[#allocation2 + $0x24a] sm:$0xff]
    %v800 = vld [vmem:[#allocation2 + $0x25a] sm:$0xff]
    %v801 = vld [vmem:[#allocation2 + $0x262] sm:$0xff]
    %v802 = vld [vmem:[#allocation2 + $0x272] sm:$0xff]
    %v803 = vld [vmem:[#allocation2 + $0x27a] sm:$0xff]
    %v804 = vld [vmem:[#allocation2 + $0x28a] sm:$0xff]
    %v805 = vld [vmem:[#allocation2 + $0x292] sm:$0xff]
    %v806 = vld [vmem:[#allocation2 + $0x2a2] sm:$0xff]
    %v807 = vld [vmem:[#allocation2 + $0x2aa] sm:$0xff]
    %v808 = vld [vmem:[#allocation2 + $0x2ba] sm:$0xff]
    %v809 = vld [vmem:[#allocation2 + $0x2c2] sm:$0xff]
    %v810 = vld [vmem:[#allocation2 + $0x2d2] sm:$0xff]
    %v811 = vld [vmem:[#allocation2 + $0x2da] sm:$0xff]
    %v812 = vld [vmem:[#allocation2 + $0x2ea] sm:$0xff]
    %v813 = vld [vmem:[#allocation2 + $0x2f2] sm:$0xff]
    %v814 = vld [vmem:[#allocation2 + $0x302] sm:$0xff]
    %v815 = vld [vmem:[#allocation2 + $0x30a] sm:$0xff]
    %v816 = vld [vmem:[#allocation2 + $0x31a] sm:$0xff]
    %v817 = vld [vmem:[#allocation2 + $0x322] sm:$0xff]
    %882 = vrot.lane.b32.xlu0 %v754, 8
    %v883 = vpop.permute.xlu0 %882
    %884 = vrot.lane.b32.xlu0 %v755, 8
    %v885 = vpop.permute.xlu0 %884
    %886 = vrot.lane.b32.xlu0 %v756, 8
    %v887 = vpop.permute.xlu0 %886
    %888 = vrot.lane.b32.xlu0 %v757, 8
    %v889 = vpop.permute.xlu0 %888
    %890 = vrot.lane.b32.xlu0 %v758, 8
    %v891 = vpop.permute.xlu0 %890
    %892 = vrot.lane.b32.xlu0 %v759, 8
    %v893 = vpop.permute.xlu0 %892
    %894 = vrot.lane.b32.xlu0 %v760, 8
    %v895 = vpop.permute.xlu0 %894
    %896 = vrot.lane.b32.xlu0 %v761, 8
    %v897 = vpop.permute.xlu0 %896
    %898 = vrot.lane.b32.xlu0 %v762, 8
    %v899 = vpop.permute.xlu0 %898
    %900 = vrot.lane.b32.xlu0 %v763, 8
    %v901 = vpop.permute.xlu0 %900
    %902 = vrot.lane.b32.xlu0 %v764, 8
    %v903 = vpop.permute.xlu0 %902
    %904 = vrot.lane.b32.xlu0 %v765, 8
    %v905 = vpop.permute.xlu0 %904
    %906 = vrot.lane.b32.xlu0 %v766, 8
    %v907 = vpop.permute.xlu0 %906
    %908 = vrot.lane.b32.xlu0 %v767, 8
    %v909 = vpop.permute.xlu0 %908
    %910 = vrot.lane.b32.xlu0 %v768, 8
    %v911 = vpop.permute.xlu0 %910
    %912 = vrot.lane.b32.xlu0 %v769, 8
    %v913 = vpop.permute.xlu0 %912
    %914 = vrot.lane.b32.xlu0 %v770, 8
    %v915 = vpop.permute.xlu0 %914
    %916 = vrot.lane.b32.xlu0 %v771, 8
    %v917 = vpop.permute.xlu0 %916
    %918 = vrot.lane.b32.xlu0 %v772, 8
    %v919 = vpop.permute.xlu0 %918
    %920 = vrot.lane.b32.xlu0 %v773, 8
    %v921 = vpop.permute.xlu0 %920
    %922 = vrot.lane.b32.xlu0 %v774, 8
    %v923 = vpop.permute.xlu0 %922
    %924 = vrot.lane.b32.xlu0 %v775, 8
    %v925 = vpop.permute.xlu0 %924
    %926 = vrot.lane.b32.xlu0 %v776, 8
    %v927 = vpop.permute.xlu0 %926
    %928 = vrot.lane.b32.xlu0 %v777, 8
    %v929 = vpop.permute.xlu0 %928
    %930 = vrot.lane.b32.xlu0 %v778, 8
    %v931 = vpop.permute.xlu0 %930
    %932 = vrot.lane.b32.xlu0 %v779, 8
    %v933 = vpop.permute.xlu0 %932
    %934 = vrot.lane.b32.xlu0 %v780, 8
    %v935 = vpop.permute.xlu0 %934
    %936 = vrot.lane.b32.xlu0 %v781, 8
    %v937 = vpop.permute.xlu0 %936
    %938 = vrot.lane.b32.xlu0 %v782, 8
    %v939 = vpop.permute.xlu0 %938
    %940 = vrot.lane.b32.xlu0 %v783, 8
    %v941 = vpop.permute.xlu0 %940
    %942 = vrot.lane.b32.xlu0 %v784, 8
    %v943 = vpop.permute.xlu0 %942
    %944 = vrot.lane.b32.xlu0 %v785, 8
    %v945 = vpop.permute.xlu0 %944
    %946 = vrot.lane.b32.xlu0 %v786, 8
    %v947 = vpop.permute.xlu0 %946
    %948 = vrot.lane.b32.xlu0 %v787, 8
    %v949 = vpop.permute.xlu0 %948
    %950 = vrot.lane.b32.xlu0 %v788, 8
    %v951 = vpop.permute.xlu0 %950
    %952 = vrot.lane.b32.xlu0 %v789, 8
    %v953 = vpop.permute.xlu0 %952
    %954 = vrot.lane.b32.xlu0 %v790, 8
    %v955 = vpop.permute.xlu0 %954
    %956 = vrot.lane.b32.xlu0 %v791, 8
    %v957 = vpop.permute.xlu0 %956
    %958 = vrot.lane.b32.xlu0 %v792, 8
    %v959 = vpop.permute.xlu0 %958
    %960 = vrot.lane.b32.xlu0 %v793, 8
    %v961 = vpop.permute.xlu0 %960
    %962 = vrot.lane.b32.xlu0 %v794, 8
    %v963 = vpop.permute.xlu0 %962
    %964 = vrot.lane.b32.xlu0 %v795, 8
    %v965 = vpop.permute.xlu0 %964
    %966 = vrot.lane.b32.xlu0 %v796, 8
    %v967 = vpop.permute.xlu0 %966
    %968 = vrot.lane.b32.xlu0 %v797, 8
    %v969 = vpop.permute.xlu0 %968
    %970 = vrot.lane.b32.xlu0 %v798, 8
    %v971 = vpop.permute.xlu0 %970
    %972 = vrot.lane.b32.xlu0 %v799, 8
    %v973 = vpop.permute.xlu0 %972
    %974 = vrot.lane.b32.xlu0 %v800, 8
    %v975 = vpop.permute.xlu0 %974
    %976 = vrot.lane.b32.xlu0 %v801, 8
    %v977 = vpop.permute.xlu0 %976
    %978 = vrot.lane.b32.xlu0 %v802, 8
    %v979 = vpop.permute.xlu0 %978
    %980 = vrot.lane.b32.xlu0 %v803, 8
    %v981 = vpop.permute.xlu0 %980
    %982 = vrot.lane.b32.xlu0 %v804, 8
    %v983 = vpop.permute.xlu0 %982
    %984 = vrot.lane.b32.xlu0 %v805, 8
    %v985 = vpop.permute.xlu0 %984
    %986 = vrot.lane.b32.xlu0 %v806, 8
    %v987 = vpop.permute.xlu0 %986
    %988 = vrot.lane.b32.xlu0 %v807, 8
    %v989 = vpop.permute.xlu0 %988
    %990 = vrot.lane.b32.xlu0 %v808, 8
    %v991 = vpop.permute.xlu0 %990
    %992 = vrot.lane.b32.xlu0 %v809, 8
    %v993 = vpop.permute.xlu0 %992
    %994 = vrot.lane.b32.xlu0 %v810, 8
    %v995 = vpop.permute.xlu0 %994
    %996 = vrot.lane.b32.xlu0 %v811, 8
    %v997 = vpop.permute.xlu0 %996
    %998 = vrot.lane.b32.xlu0 %v812, 8
    %v999 = vpop.permute.xlu0 %998
    %1000 = vrot.lane.b32.xlu0 %v813, 8
    %v1001 = vpop.permute.xlu0 %1000
    %1002 = vrot.lane.b32.xlu0 %v814, 8
    %v1003 = vpop.permute.xlu0 %1002
    %1004 = vrot.lane.b32.xlu0 %v815, 8
    %v1005 = vpop.permute.xlu0 %1004
    %1006 = vrot.lane.b32.xlu0 %v816, 8
    %v1007 = vpop.permute.xlu0 %1006
    %1008 = vrot.lane.b32.xlu0 %v817, 8
    %v1009 = vpop.permute.xlu0 %1008
    %vm1074 = vcmask 97344
    %1075 = vst.msk [vmem:[#allocation3] sm:$0xff] %vm1074, %v883
    %1076 = vst.msk [vmem:[#allocation3 + $0x8] sm:$0xff] %vm1074, %v885
    %1077 = vst.msk [vmem:[#allocation3 + $0x10] sm:$0xff] %vm1074, %v887
    %1078 = vst.msk [vmem:[#allocation3 + $0x18] sm:$0xff] %vm1074, %v889
    %1079 = vst.msk [vmem:[#allocation3 + $0x20] sm:$0xff] %vm1074, %v891
    %1080 = vst.msk [vmem:[#allocation3 + $0x28] sm:$0xff] %vm1074, %v893
    %1081 = vst.msk [vmem:[#allocation3 + $0x30] sm:$0xff] %vm1074, %v895
    %1082 = vst.msk [vmem:[#allocation3 + $0x38] sm:$0xff] %vm1074, %v897
    %1083 = vst.msk [vmem:[#allocation3 + $0x40] sm:$0xff] %vm1074, %v899
    %1084 = vst.msk [vmem:[#allocation3 + $0x48] sm:$0xff] %vm1074, %v901
    %1085 = vst.msk [vmem:[#allocation3 + $0x50] sm:$0xff] %vm1074, %v903
    %1086 = vst.msk [vmem:[#allocation3 + $0x58] sm:$0xff] %vm1074, %v905
    %1087 = vst.msk [vmem:[#allocation3 + $0x60] sm:$0xff] %vm1074, %v907
    %1088 = vst.msk [vmem:[#allocation3 + $0x68] sm:$0xff] %vm1074, %v909
    %1089 = vst.msk [vmem:[#allocation3 + $0x70] sm:$0xff] %vm1074, %v911
    %1090 = vst.msk [vmem:[#allocation3 + $0x78] sm:$0xff] %vm1074, %v913
    %1091 = vst.msk [vmem:[#allocation3 + $0x80] sm:$0xff] %vm1074, %v915
    %1092 = vst.msk [vmem:[#allocation3 + $0x88] sm:$0xff] %vm1074, %v917
    %1093 = vst.msk [vmem:[#allocation3 + $0x90] sm:$0xff] %vm1074, %v919
    %1094 = vst.msk [vmem:[#allocation3 + $0x98] sm:$0xff] %vm1074, %v921
    %1095 = vst.msk [vmem:[#allocation3 + $0xa0] sm:$0xff] %vm1074, %v923
    %1096 = vst.msk [vmem:[#allocation3 + $0xa8] sm:$0xff] %vm1074, %v925
    %1097 = vst.msk [vmem:[#allocation3 + $0xb0] sm:$0xff] %vm1074, %v927
    %1098 = vst.msk [vmem:[#allocation3 + $0xb8] sm:$0xff] %vm1074, %v929
    %1099 = vst.msk [vmem:[#allocation3 + $0xc0] sm:$0xff] %vm1074, %v931
    %1100 = vst.msk [vmem:[#allocation3 + $0xc8] sm:$0xff] %vm1074, %v933
    %1101 = vst.msk [vmem:[#allocation3 + $0xd0] sm:$0xff] %vm1074, %v935
    %1102 = vst.msk [vmem:[#allocation3 + $0xd8] sm:$0xff] %vm1074, %v937
    %1103 = vst.msk [vmem:[#allocation3 + $0xe0] sm:$0xff] %vm1074, %v939
    %1104 = vst.msk [vmem:[#allocation3 + $0xe8] sm:$0xff] %vm1074, %v941
    %1105 = vst.msk [vmem:[#allocation3 + $0xf0] sm:$0xff] %vm1074, %v943
    %1106 = vst.msk [vmem:[#allocation3 + $0xf8] sm:$0xff] %vm1074, %v945
    %1107 = vst.msk [vmem:[#allocation3 + $0x100] sm:$0xff] %vm1074, %v947
    %1108 = vst.msk [vmem:[#allocation3 + $0x108] sm:$0xff] %vm1074, %v949
    %1109 = vst.msk [vmem:[#allocation3 + $0x110] sm:$0xff] %vm1074, %v951
    %1110 = vst.msk [vmem:[#allocation3 + $0x118] sm:$0xff] %vm1074, %v953
    %1111 = vst.msk [vmem:[#allocation3 + $0x120] sm:$0xff] %vm1074, %v955
    %1112 = vst.msk [vmem:[#allocation3 + $0x128] sm:$0xff] %vm1074, %v957
    %1113 = vst.msk [vmem:[#allocation3 + $0x130] sm:$0xff] %vm1074, %v959
    %1114 = vst.msk [vmem:[#allocation3 + $0x138] sm:$0xff] %vm1074, %v961
    %1115 = vst.msk [vmem:[#allocation3 + $0x140] sm:$0xff] %vm1074, %v963
    %1116 = vst.msk [vmem:[#allocation3 + $0x148] sm:$0xff] %vm1074, %v965
    %1117 = vst.msk [vmem:[#allocation3 + $0x150] sm:$0xff] %vm1074, %v967
    %1118 = vst.msk [vmem:[#allocation3 + $0x158] sm:$0xff] %vm1074, %v969
    %1119 = vst.msk [vmem:[#allocation3 + $0x160] sm:$0xff] %vm1074, %v971
    %1120 = vst.msk [vmem:[#allocation3 + $0x168] sm:$0xff] %vm1074, %v973
    %1121 = vst.msk [vmem:[#allocation3 + $0x170] sm:$0xff] %vm1074, %v975
    %1122 = vst.msk [vmem:[#allocation3 + $0x178] sm:$0xff] %vm1074, %v977
    %1123 = vst.msk [vmem:[#allocation3 + $0x180] sm:$0xff] %vm1074, %v979
    %1124 = vst.msk [vmem:[#allocation3 + $0x188] sm:$0xff] %vm1074, %v981
    %1125 = vst.msk [vmem:[#allocation3 + $0x190] sm:$0xff] %vm1074, %v983
    %1126 = vst.msk [vmem:[#allocation3 + $0x198] sm:$0xff] %vm1074, %v985
    %1127 = vst.msk [vmem:[#allocation3 + $0x1a0] sm:$0xff] %vm1074, %v987
    %1128 = vst.msk [vmem:[#allocation3 + $0x1a8] sm:$0xff] %vm1074, %v989
    %1129 = vst.msk [vmem:[#allocation3 + $0x1b0] sm:$0xff] %vm1074, %v991
    %1130 = vst.msk [vmem:[#allocation3 + $0x1b8] sm:$0xff] %vm1074, %v993
    %1131 = vst.msk [vmem:[#allocation3 + $0x1c0] sm:$0xff] %vm1074, %v995
    %1132 = vst.msk [vmem:[#allocation3 + $0x1c8] sm:$0xff] %vm1074, %v997
    %1133 = vst.msk [vmem:[#allocation3 + $0x1d0] sm:$0xff] %vm1074, %v999
    %1134 = vst.msk [vmem:[#allocation3 + $0x1d8] sm:$0xff] %vm1074, %v1001
    %1135 = vst.msk [vmem:[#allocation3 + $0x1e0] sm:$0xff] %vm1074, %v1003
    %1136 = vst.msk [vmem:[#allocation3 + $0x1e8] sm:$0xff] %vm1074, %v1005
    %1137 = vst.msk [vmem:[#allocation3 + $0x1f0] sm:$0xff] %vm1074, %v1007
    %1138 = vst.msk [vmem:[#allocation3 + $0x1f8] sm:$0xff] %vm1074, %v1009
    %v1139 = vld [vmem:[%s176] sm:$0xff]
    %v1140 = vld [vmem:[%s176 + $0x8] sm:$0xff]
    %v1141 = vld [vmem:[%s176 + $0x18] sm:$0xff]
    %v1142 = vld [vmem:[%s176 + $0x20] sm:$0xff]
    %v1143 = vld [vmem:[%s176 + $0x30] sm:$0xff]
    %v1144 = vld [vmem:[%s176 + $0x38] sm:$0xff]
    %v1145 = vld [vmem:[%s176 + $0x48] sm:$0xff]
    %v1146 = vld [vmem:[%s176 + $0x50] sm:$0xff]
    %v1147 = vld [vmem:[%s176 + $0x60] sm:$0xff]
    %v1148 = vld [vmem:[%s176 + $0x68] sm:$0xff]
    %v1149 = vld [vmem:[%s176 + $0x78] sm:$0xff]
    %v1150 = vld [vmem:[%s176 + $0x80] sm:$0xff]
    %v1151 = vld [vmem:[%s176 + $0x90] sm:$0xff]
    %v1152 = vld [vmem:[%s176 + $0x98] sm:$0xff]
    %v1153 = vld [vmem:[%s176 + $0xa8] sm:$0xff]
    %v1154 = vld [vmem:[%s176 + $0xb0] sm:$0xff]
    %v1155 = vld [vmem:[%s176 + $0xc0] sm:$0xff]
    %v1156 = vld [vmem:[%s176 + $0xc8] sm:$0xff]
    %v1157 = vld [vmem:[%s176 + $0xd8] sm:$0xff]
    %v1158 = vld [vmem:[%s176 + $0xe0] sm:$0xff]
    %v1159 = vld [vmem:[%s176 + $0xf0] sm:$0xff]
    %v1160 = vld [vmem:[%s176 + $0xf8] sm:$0xff]
    %v1161 = vld [vmem:[%s176 + $0x108] sm:$0xff]
    %v1162 = vld [vmem:[%s176 + $0x110] sm:$0xff]
    %v1163 = vld [vmem:[%s176 + $0x120] sm:$0xff]
    %v1164 = vld [vmem:[%s176 + $0x128] sm:$0xff]
    %v1165 = vld [vmem:[%s176 + $0x138] sm:$0xff]
    %v1166 = vld [vmem:[%s176 + $0x140] sm:$0xff]
    %v1167 = vld [vmem:[%s176 + $0x150] sm:$0xff]
    %v1168 = vld [vmem:[%s176 + $0x158] sm:$0xff]
    %v1169 = vld [vmem:[%s176 + $0x168] sm:$0xff]
    %v1170 = vld [vmem:[%s176 + $0x170] sm:$0xff]
    %v1171 = vld [vmem:[%s176 + $0x1b0] sm:$0xff]
    %v1172 = vld [vmem:[%s176 + $0x1b8] sm:$0xff]
    %v1173 = vld [vmem:[%s176 + $0x1c8] sm:$0xff]
    %v1174 = vld [vmem:[%s176 + $0x1d0] sm:$0xff]
    %v1175 = vld [vmem:[%s176 + $0x1e0] sm:$0xff]
    %v1176 = vld [vmem:[%s176 + $0x1e8] sm:$0xff]
    %v1177 = vld [vmem:[%s176 + $0x1f8] sm:$0xff]
    %v1178 = vld [vmem:[%s176 + $0x200] sm:$0xff]
    %v1179 = vld [vmem:[%s176 + $0x210] sm:$0xff]
    %v1180 = vld [vmem:[%s176 + $0x218] sm:$0xff]
    %v1181 = vld [vmem:[%s176 + $0x228] sm:$0xff]
    %v1182 = vld [vmem:[%s176 + $0x230] sm:$0xff]
    %v1183 = vld [vmem:[%s176 + $0x240] sm:$0xff]
    %v1184 = vld [vmem:[%s176 + $0x248] sm:$0xff]
    %v1185 = vld [vmem:[%s176 + $0x258] sm:$0xff]
    %v1186 = vld [vmem:[%s176 + $0x260] sm:$0xff]
    %v1187 = vld [vmem:[%s176 + $0x270] sm:$0xff]
    %v1188 = vld [vmem:[%s176 + $0x278] sm:$0xff]
    %v1189 = vld [vmem:[%s176 + $0x288] sm:$0xff]
    %v1190 = vld [vmem:[%s176 + $0x290] sm:$0xff]
    %v1191 = vld [vmem:[%s176 + $0x2a0] sm:$0xff]
    %v1192 = vld [vmem:[%s176 + $0x2a8] sm:$0xff]
    %v1193 = vld [vmem:[%s176 + $0x2b8] sm:$0xff]
    %v1194 = vld [vmem:[%s176 + $0x2c0] sm:$0xff]
    %v1195 = vld [vmem:[%s176 + $0x2d0] sm:$0xff]
    %v1196 = vld [vmem:[%s176 + $0x2d8] sm:$0xff]
    %v1197 = vld [vmem:[%s176 + $0x2e8] sm:$0xff]
    %v1198 = vld [vmem:[%s176 + $0x2f0] sm:$0xff]
    %v1199 = vld [vmem:[%s176 + $0x300] sm:$0xff]
    %v1200 = vld [vmem:[%s176 + $0x308] sm:$0xff]
    %v1201 = vld [vmem:[%s176 + $0x318] sm:$0xff]
    %v1202 = vld [vmem:[%s176 + $0x320] sm:$0xff]
    %1267 = vrot.lane.b32.xlu0 %v1139, 12
    %v1268 = vpop.permute.xlu0 %1267
    %1269 = vrot.lane.b32.xlu0 %v1140, 12
    %v1270 = vpop.permute.xlu0 %1269
    %1271 = vrot.lane.b32.xlu0 %v1141, 12
    %v1272 = vpop.permute.xlu0 %1271
    %1273 = vrot.lane.b32.xlu0 %v1142, 12
    %v1274 = vpop.permute.xlu0 %1273
    %1275 = vrot.lane.b32.xlu0 %v1143, 12
    %v1276 = vpop.permute.xlu0 %1275
    %1277 = vrot.lane.b32.xlu0 %v1144, 12
    %v1278 = vpop.permute.xlu0 %1277
    %1279 = vrot.lane.b32.xlu0 %v1145, 12
    %v1280 = vpop.permute.xlu0 %1279
    %1281 = vrot.lane.b32.xlu0 %v1146, 12
    %v1282 = vpop.permute.xlu0 %1281
    %1283 = vrot.lane.b32.xlu0 %v1147, 12
    %v1284 = vpop.permute.xlu0 %1283
    %1285 = vrot.lane.b32.xlu0 %v1148, 12
    %v1286 = vpop.permute.xlu0 %1285
    %1287 = vrot.lane.b32.xlu0 %v1149, 12
    %v1288 = vpop.permute.xlu0 %1287
    %1289 = vrot.lane.b32.xlu0 %v1150, 12
    %v1290 = vpop.permute.xlu0 %1289
    %1291 = vrot.lane.b32.xlu0 %v1151, 12
    %v1292 = vpop.permute.xlu0 %1291
    %1293 = vrot.lane.b32.xlu0 %v1152, 12
    %v1294 = vpop.permute.xlu0 %1293
    %1295 = vrot.lane.b32.xlu0 %v1153, 12
    %v1296 = vpop.permute.xlu0 %1295
    %1297 = vrot.lane.b32.xlu0 %v1154, 12
    %v1298 = vpop.permute.xlu0 %1297
    %1299 = vrot.lane.b32.xlu0 %v1155, 12
    %v1300 = vpop.permute.xlu0 %1299
    %1301 = vrot.lane.b32.xlu0 %v1156, 12
    %v1302 = vpop.permute.xlu0 %1301
    %1303 = vrot.lane.b32.xlu0 %v1157, 12
    %v1304 = vpop.permute.xlu0 %1303
    %1305 = vrot.lane.b32.xlu0 %v1158, 12
    %v1306 = vpop.permute.xlu0 %1305
    %1307 = vrot.lane.b32.xlu0 %v1159, 12
    %v1308 = vpop.permute.xlu0 %1307
    %1309 = vrot.lane.b32.xlu0 %v1160, 12
    %v1310 = vpop.permute.xlu0 %1309
    %1311 = vrot.lane.b32.xlu0 %v1161, 12
    %v1312 = vpop.permute.xlu0 %1311
    %1313 = vrot.lane.b32.xlu0 %v1162, 12
    %v1314 = vpop.permute.xlu0 %1313
    %1315 = vrot.lane.b32.xlu0 %v1163, 12
    %v1316 = vpop.permute.xlu0 %1315
    %1317 = vrot.lane.b32.xlu0 %v1164, 12
    %v1318 = vpop.permute.xlu0 %1317
    %1319 = vrot.lane.b32.xlu0 %v1165, 12
    %v1320 = vpop.permute.xlu0 %1319
    %1321 = vrot.lane.b32.xlu0 %v1166, 12
    %v1322 = vpop.permute.xlu0 %1321
    %1323 = vrot.lane.b32.xlu0 %v1167, 12
    %v1324 = vpop.permute.xlu0 %1323
    %1325 = vrot.lane.b32.xlu0 %v1168, 12
    %v1326 = vpop.permute.xlu0 %1325
    %1327 = vrot.lane.b32.xlu0 %v1169, 12
    %v1328 = vpop.permute.xlu0 %1327
    %1329 = vrot.lane.b32.xlu0 %v1170, 12
    %v1330 = vpop.permute.xlu0 %1329
    %1331 = vrot.lane.b32.xlu0 %v1171, 12
    %v1332 = vpop.permute.xlu0 %1331
    %1333 = vrot.lane.b32.xlu0 %v1172, 12
    %v1334 = vpop.permute.xlu0 %1333
    %1335 = vrot.lane.b32.xlu0 %v1173, 12
    %v1336 = vpop.permute.xlu0 %1335
    %1337 = vrot.lane.b32.xlu0 %v1174, 12
    %v1338 = vpop.permute.xlu0 %1337
    %1339 = vrot.lane.b32.xlu0 %v1175, 12
    %v1340 = vpop.permute.xlu0 %1339
    %1341 = vrot.lane.b32.xlu0 %v1176, 12
    %v1342 = vpop.permute.xlu0 %1341
    %1343 = vrot.lane.b32.xlu0 %v1177, 12
    %v1344 = vpop.permute.xlu0 %1343
    %1345 = vrot.lane.b32.xlu0 %v1178, 12
    %v1346 = vpop.permute.xlu0 %1345
    %1347 = vrot.lane.b32.xlu0 %v1179, 12
    %v1348 = vpop.permute.xlu0 %1347
    %1349 = vrot.lane.b32.xlu0 %v1180, 12
    %v1350 = vpop.permute.xlu0 %1349
    %1351 = vrot.lane.b32.xlu0 %v1181, 12
    %v1352 = vpop.permute.xlu0 %1351
    %1353 = vrot.lane.b32.xlu0 %v1182, 12
    %v1354 = vpop.permute.xlu0 %1353
    %1355 = vrot.lane.b32.xlu0 %v1183, 12
    %v1356 = vpop.permute.xlu0 %1355
    %1357 = vrot.lane.b32.xlu0 %v1184, 12
    %v1358 = vpop.permute.xlu0 %1357
    %1359 = vrot.lane.b32.xlu0 %v1185, 12
    %v1360 = vpop.permute.xlu0 %1359
    %1361 = vrot.lane.b32.xlu0 %v1186, 12
    %v1362 = vpop.permute.xlu0 %1361
    %1363 = vrot.lane.b32.xlu0 %v1187, 12
    %v1364 = vpop.permute.xlu0 %1363
    %1365 = vrot.lane.b32.xlu0 %v1188, 12
    %v1366 = vpop.permute.xlu0 %1365
    %1367 = vrot.lane.b32.xlu0 %v1189, 12
    %v1368 = vpop.permute.xlu0 %1367
    %1369 = vrot.lane.b32.xlu0 %v1190, 12
    %v1370 = vpop.permute.xlu0 %1369
    %1371 = vrot.lane.b32.xlu0 %v1191, 12
    %v1372 = vpop.permute.xlu0 %1371
    %1373 = vrot.lane.b32.xlu0 %v1192, 12
    %v1374 = vpop.permute.xlu0 %1373
    %1375 = vrot.lane.b32.xlu0 %v1193, 12
    %v1376 = vpop.permute.xlu0 %1375
    %1377 = vrot.lane.b32.xlu0 %v1194, 12
    %v1378 = vpop.permute.xlu0 %1377
    %1379 = vrot.lane.b32.xlu0 %v1195, 12
    %v1380 = vpop.permute.xlu0 %1379
    %1381 = vrot.lane.b32.xlu0 %v1196, 12
    %v1382 = vpop.permute.xlu0 %1381
    %1383 = vrot.lane.b32.xlu0 %v1197, 12
    %v1384 = vpop.permute.xlu0 %1383
    %1385 = vrot.lane.b32.xlu0 %v1198, 12
    %v1386 = vpop.permute.xlu0 %1385
    %1387 = vrot.lane.b32.xlu0 %v1199, 12
    %v1388 = vpop.permute.xlu0 %1387
    %1389 = vrot.lane.b32.xlu0 %v1200, 12
    %v1390 = vpop.permute.xlu0 %1389
    %1391 = vrot.lane.b32.xlu0 %v1201, 12
    %v1392 = vpop.permute.xlu0 %1391
    %1393 = vrot.lane.b32.xlu0 %v1202, 12
    %v1394 = vpop.permute.xlu0 %1393
    %vm1459 = vcmask 130144
    %1460 = vst.msk [vmem:[#allocation3] sm:$0xff] %vm1459, %v1268
    %1461 = vst.msk [vmem:[#allocation3 + $0x8] sm:$0xff] %vm1459, %v1270
    %1462 = vst.msk [vmem:[#allocation3 + $0x10] sm:$0xff] %vm1459, %v1272
    %1463 = vst.msk [vmem:[#allocation3 + $0x18] sm:$0xff] %vm1459, %v1274
    %1464 = vst.msk [vmem:[#allocation3 + $0x20] sm:$0xff] %vm1459, %v1276
    %1465 = vst.msk [vmem:[#allocation3 + $0x28] sm:$0xff] %vm1459, %v1278
    %1466 = vst.msk [vmem:[#allocation3 + $0x30] sm:$0xff] %vm1459, %v1280
    %1467 = vst.msk [vmem:[#allocation3 + $0x38] sm:$0xff] %vm1459, %v1282
    %1468 = vst.msk [vmem:[#allocation3 + $0x40] sm:$0xff] %vm1459, %v1284
    %1469 = vst.msk [vmem:[#allocation3 + $0x48] sm:$0xff] %vm1459, %v1286
    %1470 = vst.msk [vmem:[#allocation3 + $0x50] sm:$0xff] %vm1459, %v1288
    %1471 = vst.msk [vmem:[#allocation3 + $0x58] sm:$0xff] %vm1459, %v1290
    %1472 = vst.msk [vmem:[#allocation3 + $0x60] sm:$0xff] %vm1459, %v1292
    %1473 = vst.msk [vmem:[#allocation3 + $0x68] sm:$0xff] %vm1459, %v1294
    %1474 = vst.msk [vmem:[#allocation3 + $0x70] sm:$0xff] %vm1459, %v1296
    %1475 = vst.msk [vmem:[#allocation3 + $0x78] sm:$0xff] %vm1459, %v1298
    %1476 = vst.msk [vmem:[#allocation3 + $0x80] sm:$0xff] %vm1459, %v1300
    %1477 = vst.msk [vmem:[#allocation3 + $0x88] sm:$0xff] %vm1459, %v1302
    %1478 = vst.msk [vmem:[#allocation3 + $0x90] sm:$0xff] %vm1459, %v1304
    %1479 = vst.msk [vmem:[#allocation3 + $0x98] sm:$0xff] %vm1459, %v1306
    %1480 = vst.msk [vmem:[#allocation3 + $0xa0] sm:$0xff] %vm1459, %v1308
    %1481 = vst.msk [vmem:[#allocation3 + $0xa8] sm:$0xff] %vm1459, %v1310
    %1482 = vst.msk [vmem:[#allocation3 + $0xb0] sm:$0xff] %vm1459, %v1312
    %1483 = vst.msk [vmem:[#allocation3 + $0xb8] sm:$0xff] %vm1459, %v1314
    %1484 = vst.msk [vmem:[#allocation3 + $0xc0] sm:$0xff] %vm1459, %v1316
    %1485 = vst.msk [vmem:[#allocation3 + $0xc8] sm:$0xff] %vm1459, %v1318
    %1486 = vst.msk [vmem:[#allocation3 + $0xd0] sm:$0xff] %vm1459, %v1320
    %1487 = vst.msk [vmem:[#allocation3 + $0xd8] sm:$0xff] %vm1459, %v1322
    %1488 = vst.msk [vmem:[#allocation3 + $0xe0] sm:$0xff] %vm1459, %v1324
    %1489 = vst.msk [vmem:[#allocation3 + $0xe8] sm:$0xff] %vm1459, %v1326
    %1490 = vst.msk [vmem:[#allocation3 + $0xf0] sm:$0xff] %vm1459, %v1328
    %1491 = vst.msk [vmem:[#allocation3 + $0xf8] sm:$0xff] %vm1459, %v1330
    %1492 = vst.msk [vmem:[#allocation3 + $0x100] sm:$0xff] %vm1459, %v1332
    %1493 = vst.msk [vmem:[#allocation3 + $0x108] sm:$0xff] %vm1459, %v1334
    %1494 = vst.msk [vmem:[#allocation3 + $0x110] sm:$0xff] %vm1459, %v1336
    %1495 = vst.msk [vmem:[#allocation3 + $0x118] sm:$0xff] %vm1459, %v1338
    %1496 = vst.msk [vmem:[#allocation3 + $0x120] sm:$0xff] %vm1459, %v1340
    %1497 = vst.msk [vmem:[#allocation3 + $0x128] sm:$0xff] %vm1459, %v1342
    %1498 = vst.msk [vmem:[#allocation3 + $0x130] sm:$0xff] %vm1459, %v1344
    %1499 = vst.msk [vmem:[#allocation3 + $0x138] sm:$0xff] %vm1459, %v1346
    %1500 = vst.msk [vmem:[#allocation3 + $0x140] sm:$0xff] %vm1459, %v1348
    %1501 = vst.msk [vmem:[#allocation3 + $0x148] sm:$0xff] %vm1459, %v1350
    %1502 = vst.msk [vmem:[#allocation3 + $0x150] sm:$0xff] %vm1459, %v1352
    %1503 = vst.msk [vmem:[#allocation3 + $0x158] sm:$0xff] %vm1459, %v1354
    %1504 = vst.msk [vmem:[#allocation3 + $0x160] sm:$0xff] %vm1459, %v1356
    %1505 = vst.msk [vmem:[#allocation3 + $0x168] sm:$0xff] %vm1459, %v1358
    %1506 = vst.msk [vmem:[#allocation3 + $0x170] sm:$0xff] %vm1459, %v1360
    %1507 = vst.msk [vmem:[#allocation3 + $0x178] sm:$0xff] %vm1459, %v1362
    %1508 = vst.msk [vmem:[#allocation3 + $0x180] sm:$0xff] %vm1459, %v1364
    %1509 = vst.msk [vmem:[#allocation3 + $0x188] sm:$0xff] %vm1459, %v1366
    %1510 = vst.msk [vmem:[#allocation3 + $0x190] sm:$0xff] %vm1459, %v1368
    %1511 = vst.msk [vmem:[#allocation3 + $0x198] sm:$0xff] %vm1459, %v1370
    %1512 = vst.msk [vmem:[#allocation3 + $0x1a0] sm:$0xff] %vm1459, %v1372
    %1513 = vst.msk [vmem:[#allocation3 + $0x1a8] sm:$0xff] %vm1459, %v1374
    %1514 = vst.msk [vmem:[#allocation3 + $0x1b0] sm:$0xff] %vm1459, %v1376
    %1515 = vst.msk [vmem:[#allocation3 + $0x1b8] sm:$0xff] %vm1459, %v1378
    %1516 = vst.msk [vmem:[#allocation3 + $0x1c0] sm:$0xff] %vm1459, %v1380
    %1517 = vst.msk [vmem:[#allocation3 + $0x1c8] sm:$0xff] %vm1459, %v1382
    %1518 = vst.msk [vmem:[#allocation3 + $0x1d0] sm:$0xff] %vm1459, %v1384
    %1519 = vst.msk [vmem:[#allocation3 + $0x1d8] sm:$0xff] %vm1459, %v1386
    %1520 = vst.msk [vmem:[#allocation3 + $0x1e0] sm:$0xff] %vm1459, %v1388
    %1521 = vst.msk [vmem:[#allocation3 + $0x1e8] sm:$0xff] %vm1459, %v1390
    %1522 = vst.msk [vmem:[#allocation3 + $0x1f0] sm:$0xff] %vm1459, %v1392
    %1523 = vst.msk [vmem:[#allocation3 + $0x1f8] sm:$0xff] %vm1459, %v1394
    %v1524 = vld [vmem:[%s176 + $0x1] sm:$0xff]
    %v1525 = vld [vmem:[%s176 + $0x9] sm:$0xff]
    %v1526 = vld [vmem:[%s176 + $0x19] sm:$0xff]
    %v1527 = vld [vmem:[%s176 + $0x21] sm:$0xff]
    %v1528 = vld [vmem:[%s176 + $0x31] sm:$0xff]
    %v1529 = vld [vmem:[%s176 + $0x39] sm:$0xff]
    %v1530 = vld [vmem:[%s176 + $0x49] sm:$0xff]
    %v1531 = vld [vmem:[%s176 + $0x51] sm:$0xff]
    %v1532 = vld [vmem:[%s176 + $0x61] sm:$0xff]
    %v1533 = vld [vmem:[%s176 + $0x69] sm:$0xff]
    %v1534 = vld [vmem:[%s176 + $0x79] sm:$0xff]
    %v1535 = vld [vmem:[%s176 + $0x81] sm:$0xff]
    %v1536 = vld [vmem:[%s176 + $0x91] sm:$0xff]
    %v1537 = vld [vmem:[%s176 + $0x99] sm:$0xff]
    %v1538 = vld [vmem:[%s176 + $0xa9] sm:$0xff]
    %v1539 = vld [vmem:[%s176 + $0xb1] sm:$0xff]
    %v1540 = vld [vmem:[%s176 + $0xc1] sm:$0xff]
    %v1541 = vld [vmem:[%s176 + $0xc9] sm:$0xff]
    %v1542 = vld [vmem:[%s176 + $0xd9] sm:$0xff]
    %v1543 = vld [vmem:[%s176 + $0xe1] sm:$0xff]
    %v1544 = vld [vmem:[%s176 + $0xf1] sm:$0xff]
    %v1545 = vld [vmem:[%s176 + $0xf9] sm:$0xff]
    %v1546 = vld [vmem:[%s176 + $0x109] sm:$0xff]
    %v1547 = vld [vmem:[%s176 + $0x111] sm:$0xff]
    %v1548 = vld [vmem:[%s176 + $0x121] sm:$0xff]
    %v1549 = vld [vmem:[%s176 + $0x129] sm:$0xff]
    %v1550 = vld [vmem:[%s176 + $0x139] sm:$0xff]
    %v1551 = vld [vmem:[%s176 + $0x141] sm:$0xff]
    %v1552 = vld [vmem:[%s176 + $0x151] sm:$0xff]
    %v1553 = vld [vmem:[%s176 + $0x159] sm:$0xff]
    %v1554 = vld [vmem:[%s176 + $0x169] sm:$0xff]
    %v1555 = vld [vmem:[%s176 + $0x171] sm:$0xff]
    %v1556 = vld [vmem:[%s176 + $0x1b1] sm:$0xff]
    %v1557 = vld [vmem:[%s176 + $0x1b9] sm:$0xff]
    %v1558 = vld [vmem:[%s176 + $0x1c9] sm:$0xff]
    %v1559 = vld [vmem:[%s176 + $0x1d1] sm:$0xff]
    %v1560 = vld [vmem:[%s176 + $0x1e1] sm:$0xff]
    %v1561 = vld [vmem:[%s176 + $0x1e9] sm:$0xff]
    %v1562 = vld [vmem:[%s176 + $0x1f9] sm:$0xff]
    %v1563 = vld [vmem:[%s176 + $0x201] sm:$0xff]
    %v1564 = vld [vmem:[%s176 + $0x211] sm:$0xff]
    %v1565 = vld [vmem:[%s176 + $0x219] sm:$0xff]
    %v1566 = vld [vmem:[%s176 + $0x229] sm:$0xff]
    %v1567 = vld [vmem:[%s176 + $0x231] sm:$0xff]
    %v1568 = vld [vmem:[%s176 + $0x241] sm:$0xff]
    %v1569 = vld [vmem:[%s176 + $0x249] sm:$0xff]
    %v1570 = vld [vmem:[%s176 + $0x259] sm:$0xff]
    %v1571 = vld [vmem:[%s176 + $0x261] sm:$0xff]
    %v1572 = vld [vmem:[%s176 + $0x271] sm:$0xff]
    %v1573 = vld [vmem:[%s176 + $0x279] sm:$0xff]
    %v1574 = vld [vmem:[%s176 + $0x289] sm:$0xff]
    %v1575 = vld [vmem:[%s176 + $0x291] sm:$0xff]
    %v1576 = vld [vmem:[%s176 + $0x2a1] sm:$0xff]
    %v1577 = vld [vmem:[%s176 + $0x2a9] sm:$0xff]
    %v1578 = vld [vmem:[%s176 + $0x2b9] sm:$0xff]
    %v1579 = vld [vmem:[%s176 + $0x2c1] sm:$0xff]
    %v1580 = vld [vmem:[%s176 + $0x2d1] sm:$0xff]
    %v1581 = vld [vmem:[%s176 + $0x2d9] sm:$0xff]
    %v1582 = vld [vmem:[%s176 + $0x2e9] sm:$0xff]
    %v1583 = vld [vmem:[%s176 + $0x2f1] sm:$0xff]
    %v1584 = vld [vmem:[%s176 + $0x301] sm:$0xff]
    %v1585 = vld [vmem:[%s176 + $0x309] sm:$0xff]
    %v1586 = vld [vmem:[%s176 + $0x319] sm:$0xff]
    %v1587 = vld [vmem:[%s176 + $0x321] sm:$0xff]
    %1652 = vrot.lane.b32.xlu0 %v1524, 16
    %v1653 = vpop.permute.xlu0 %1652
    %1654 = vrot.lane.b32.xlu0 %v1525, 16
    %v1655 = vpop.permute.xlu0 %1654
    %1656 = vrot.lane.b32.xlu0 %v1526, 16
    %v1657 = vpop.permute.xlu0 %1656
    %1658 = vrot.lane.b32.xlu0 %v1527, 16
    %v1659 = vpop.permute.xlu0 %1658
    %1660 = vrot.lane.b32.xlu0 %v1528, 16
    %v1661 = vpop.permute.xlu0 %1660
    %1662 = vrot.lane.b32.xlu0 %v1529, 16
    %v1663 = vpop.permute.xlu0 %1662
    %1664 = vrot.lane.b32.xlu0 %v1530, 16
    %v1665 = vpop.permute.xlu0 %1664
    %1666 = vrot.lane.b32.xlu0 %v1531, 16
    %v1667 = vpop.permute.xlu0 %1666
    %1668 = vrot.lane.b32.xlu0 %v1532, 16
    %v1669 = vpop.permute.xlu0 %1668
    %1670 = vrot.lane.b32.xlu0 %v1533, 16
    %v1671 = vpop.permute.xlu0 %1670
    %1672 = vrot.lane.b32.xlu0 %v1534, 16
    %v1673 = vpop.permute.xlu0 %1672
    %1674 = vrot.lane.b32.xlu0 %v1535, 16
    %v1675 = vpop.permute.xlu0 %1674
    %1676 = vrot.lane.b32.xlu0 %v1536, 16
    %v1677 = vpop.permute.xlu0 %1676
    %1678 = vrot.lane.b32.xlu0 %v1537, 16
    %v1679 = vpop.permute.xlu0 %1678
    %1680 = vrot.lane.b32.xlu0 %v1538, 16
    %v1681 = vpop.permute.xlu0 %1680
    %1682 = vrot.lane.b32.xlu0 %v1539, 16
    %v1683 = vpop.permute.xlu0 %1682
    %1684 = vrot.lane.b32.xlu0 %v1540, 16
    %v1685 = vpop.permute.xlu0 %1684
    %1686 = vrot.lane.b32.xlu0 %v1541, 16
    %v1687 = vpop.permute.xlu0 %1686
    %1688 = vrot.lane.b32.xlu0 %v1542, 16
    %v1689 = vpop.permute.xlu0 %1688
    %1690 = vrot.lane.b32.xlu0 %v1543, 16
    %v1691 = vpop.permute.xlu0 %1690
    %1692 = vrot.lane.b32.xlu0 %v1544, 16
    %v1693 = vpop.permute.xlu0 %1692
    %1694 = vrot.lane.b32.xlu0 %v1545, 16
    %v1695 = vpop.permute.xlu0 %1694
    %1696 = vrot.lane.b32.xlu0 %v1546, 16
    %v1697 = vpop.permute.xlu0 %1696
    %1698 = vrot.lane.b32.xlu0 %v1547, 16
    %v1699 = vpop.permute.xlu0 %1698
    %1700 = vrot.lane.b32.xlu0 %v1548, 16
    %v1701 = vpop.permute.xlu0 %1700
    %1702 = vrot.lane.b32.xlu0 %v1549, 16
    %v1703 = vpop.permute.xlu0 %1702
    %1704 = vrot.lane.b32.xlu0 %v1550, 16
    %v1705 = vpop.permute.xlu0 %1704
    %1706 = vrot.lane.b32.xlu0 %v1551, 16
    %v1707 = vpop.permute.xlu0 %1706
    %1708 = vrot.lane.b32.xlu0 %v1552, 16
    %v1709 = vpop.permute.xlu0 %1708
    %1710 = vrot.lane.b32.xlu0 %v1553, 16
    %v1711 = vpop.permute.xlu0 %1710
    %1712 = vrot.lane.b32.xlu0 %v1554, 16
    %v1713 = vpop.permute.xlu0 %1712
    %1714 = vrot.lane.b32.xlu0 %v1555, 16
    %v1715 = vpop.permute.xlu0 %1714
    %1716 = vrot.lane.b32.xlu0 %v1556, 16
    %v1717 = vpop.permute.xlu0 %1716
    %1718 = vrot.lane.b32.xlu0 %v1557, 16
    %v1719 = vpop.permute.xlu0 %1718
    %1720 = vrot.lane.b32.xlu0 %v1558, 16
    %v1721 = vpop.permute.xlu0 %1720
    %1722 = vrot.lane.b32.xlu0 %v1559, 16
    %v1723 = vpop.permute.xlu0 %1722
    %1724 = vrot.lane.b32.xlu0 %v1560, 16
    %v1725 = vpop.permute.xlu0 %1724
    %1726 = vrot.lane.b32.xlu0 %v1561, 16
    %v1727 = vpop.permute.xlu0 %1726
    %1728 = vrot.lane.b32.xlu0 %v1562, 16
    %v1729 = vpop.permute.xlu0 %1728
    %1730 = vrot.lane.b32.xlu0 %v1563, 16
    %v1731 = vpop.permute.xlu0 %1730
    %1732 = vrot.lane.b32.xlu0 %v1564, 16
    %v1733 = vpop.permute.xlu0 %1732
    %1734 = vrot.lane.b32.xlu0 %v1565, 16
    %v1735 = vpop.permute.xlu0 %1734
    %1736 = vrot.lane.b32.xlu0 %v1566, 16
    %v1737 = vpop.permute.xlu0 %1736
    %1738 = vrot.lane.b32.xlu0 %v1567, 16
    %v1739 = vpop.permute.xlu0 %1738
    %1740 = vrot.lane.b32.xlu0 %v1568, 16
    %v1741 = vpop.permute.xlu0 %1740
    %1742 = vrot.lane.b32.xlu0 %v1569, 16
    %v1743 = vpop.permute.xlu0 %1742
    %1744 = vrot.lane.b32.xlu0 %v1570, 16
    %v1745 = vpop.permute.xlu0 %1744
    %1746 = vrot.lane.b32.xlu0 %v1571, 16
    %v1747 = vpop.permute.xlu0 %1746
    %1748 = vrot.lane.b32.xlu0 %v1572, 16
    %v1749 = vpop.permute.xlu0 %1748
    %1750 = vrot.lane.b32.xlu0 %v1573, 16
    %v1751 = vpop.permute.xlu0 %1750
    %1752 = vrot.lane.b32.xlu0 %v1574, 16
    %v1753 = vpop.permute.xlu0 %1752
    %1754 = vrot.lane.b32.xlu0 %v1575, 16
    %v1755 = vpop.permute.xlu0 %1754
    %1756 = vrot.lane.b32.xlu0 %v1576, 16
    %v1757 = vpop.permute.xlu0 %1756
    %1758 = vrot.lane.b32.xlu0 %v1577, 16
    %v1759 = vpop.permute.xlu0 %1758
    %1760 = vrot.lane.b32.xlu0 %v1578, 16
    %v1761 = vpop.permute.xlu0 %1760
    %1762 = vrot.lane.b32.xlu0 %v1579, 16
    %v1763 = vpop.permute.xlu0 %1762
    %1764 = vrot.lane.b32.xlu0 %v1580, 16
    %v1765 = vpop.permute.xlu0 %1764
    %1766 = vrot.lane.b32.xlu0 %v1581, 16
    %v1767 = vpop.permute.xlu0 %1766
    %1768 = vrot.lane.b32.xlu0 %v1582, 16
    %v1769 = vpop.permute.xlu0 %1768
    %1770 = vrot.lane.b32.xlu0 %v1583, 16
    %v1771 = vpop.permute.xlu0 %1770
    %1772 = vrot.lane.b32.xlu0 %v1584, 16
    %v1773 = vpop.permute.xlu0 %1772
    %1774 = vrot.lane.b32.xlu0 %v1585, 16
    %v1775 = vpop.permute.xlu0 %1774
    %1776 = vrot.lane.b32.xlu0 %v1586, 16
    %v1777 = vpop.permute.xlu0 %1776
    %1778 = vrot.lane.b32.xlu0 %v1587, 16
    %v1779 = vpop.permute.xlu0 %1778
    %vm1844 = vcmask 162944
    %1845 = vst.msk [vmem:[#allocation3] sm:$0xff] %vm1844, %v1653
    %1846 = vst.msk [vmem:[#allocation3 + $0x8] sm:$0xff] %vm1844, %v1655
    %1847 = vst.msk [vmem:[#allocation3 + $0x10] sm:$0xff] %vm1844, %v1657
    %1848 = vst.msk [vmem:[#allocation3 + $0x18] sm:$0xff] %vm1844, %v1659
    %1849 = vst.msk [vmem:[#allocation3 + $0x20] sm:$0xff] %vm1844, %v1661
    %1850 = vst.msk [vmem:[#allocation3 + $0x28] sm:$0xff] %vm1844, %v1663
    %1851 = vst.msk [vmem:[#allocation3 + $0x30] sm:$0xff] %vm1844, %v1665
    %1852 = vst.msk [vmem:[#allocation3 + $0x38] sm:$0xff] %vm1844, %v1667
    %1853 = vst.msk [vmem:[#allocation3 + $0x40] sm:$0xff] %vm1844, %v1669
    %1854 = vst.msk [vmem:[#allocation3 + $0x48] sm:$0xff] %vm1844, %v1671
    %1855 = vst.msk [vmem:[#allocation3 + $0x50] sm:$0xff] %vm1844, %v1673
    %1856 = vst.msk [vmem:[#allocation3 + $0x58] sm:$0xff] %vm1844, %v1675
    %1857 = vst.msk [vmem:[#allocation3 + $0x60] sm:$0xff] %vm1844, %v1677
    %1858 = vst.msk [vmem:[#allocation3 + $0x68] sm:$0xff] %vm1844, %v1679
    %1859 = vst.msk [vmem:[#allocation3 + $0x70] sm:$0xff] %vm1844, %v1681
    %1860 = vst.msk [vmem:[#allocation3 + $0x78] sm:$0xff] %vm1844, %v1683
    %1861 = vst.msk [vmem:[#allocation3 + $0x80] sm:$0xff] %vm1844, %v1685
    %1862 = vst.msk [vmem:[#allocation3 + $0x88] sm:$0xff] %vm1844, %v1687
    %1863 = vst.msk [vmem:[#allocation3 + $0x90] sm:$0xff] %vm1844, %v1689
    %1864 = vst.msk [vmem:[#allocation3 + $0x98] sm:$0xff] %vm1844, %v1691
    %1865 = vst.msk [vmem:[#allocation3 + $0xa0] sm:$0xff] %vm1844, %v1693
    %1866 = vst.msk [vmem:[#allocation3 + $0xa8] sm:$0xff] %vm1844, %v1695
    %1867 = vst.msk [vmem:[#allocation3 + $0xb0] sm:$0xff] %vm1844, %v1697
    %1868 = vst.msk [vmem:[#allocation3 + $0xb8] sm:$0xff] %vm1844, %v1699
    %1869 = vst.msk [vmem:[#allocation3 + $0xc0] sm:$0xff] %vm1844, %v1701
    %1870 = vst.msk [vmem:[#allocation3 + $0xc8] sm:$0xff] %vm1844, %v1703
    %1871 = vst.msk [vmem:[#allocation3 + $0xd0] sm:$0xff] %vm1844, %v1705
    %1872 = vst.msk [vmem:[#allocation3 + $0xd8] sm:$0xff] %vm1844, %v1707
    %1873 = vst.msk [vmem:[#allocation3 + $0xe0] sm:$0xff] %vm1844, %v1709
    %1874 = vst.msk [vmem:[#allocation3 + $0xe8] sm:$0xff] %vm1844, %v1711
    %1875 = vst.msk [vmem:[#allocation3 + $0xf0] sm:$0xff] %vm1844, %v1713
    %1876 = vst.msk [vmem:[#allocation3 + $0xf8] sm:$0xff] %vm1844, %v1715
    %1877 = vst.msk [vmem:[#allocation3 + $0x100] sm:$0xff] %vm1844, %v1717
    %1878 = vst.msk [vmem:[#allocation3 + $0x108] sm:$0xff] %vm1844, %v1719
    %1879 = vst.msk [vmem:[#allocation3 + $0x110] sm:$0xff] %vm1844, %v1721
    %1880 = vst.msk [vmem:[#allocation3 + $0x118] sm:$0xff] %vm1844, %v1723
    %1881 = vst.msk [vmem:[#allocation3 + $0x120] sm:$0xff] %vm1844, %v1725
    %1882 = vst.msk [vmem:[#allocation3 + $0x128] sm:$0xff] %vm1844, %v1727
    %1883 = vst.msk [vmem:[#allocation3 + $0x130] sm:$0xff] %vm1844, %v1729
    %1884 = vst.msk [vmem:[#allocation3 + $0x138] sm:$0xff] %vm1844, %v1731
    %1885 = vst.msk [vmem:[#allocation3 + $0x140] sm:$0xff] %vm1844, %v1733
    %1886 = vst.msk [vmem:[#allocation3 + $0x148] sm:$0xff] %vm1844, %v1735
    %1887 = vst.msk [vmem:[#allocation3 + $0x150] sm:$0xff] %vm1844, %v1737
    %1888 = vst.msk [vmem:[#allocation3 + $0x158] sm:$0xff] %vm1844, %v1739
    %1889 = vst.msk [vmem:[#allocation3 + $0x160] sm:$0xff] %vm1844, %v1741
    %1890 = vst.msk [vmem:[#allocation3 + $0x168] sm:$0xff] %vm1844, %v1743
    %1891 = vst.msk [vmem:[#allocation3 + $0x170] sm:$0xff] %vm1844, %v1745
    %1892 = vst.msk [vmem:[#allocation3 + $0x178] sm:$0xff] %vm1844, %v1747
    %1893 = vst.msk [vmem:[#allocation3 + $0x180] sm:$0xff] %vm1844, %v1749
    %1894 = vst.msk [vmem:[#allocation3 + $0x188] sm:$0xff] %vm1844, %v1751
    %1895 = vst.msk [vmem:[#allocation3 + $0x190] sm:$0xff] %vm1844, %v1753
    %1896 = vst.msk [vmem:[#allocation3 + $0x198] sm:$0xff] %vm1844, %v1755
    %1897 = vst.msk [vmem:[#allocation3 + $0x1a0] sm:$0xff] %vm1844, %v1757
    %1898 = vst.msk [vmem:[#allocation3 + $0x1a8] sm:$0xff] %vm1844, %v1759
    %1899 = vst.msk [vmem:[#allocation3 + $0x1b0] sm:$0xff] %vm1844, %v1761
    %1900 = vst.msk [vmem:[#allocation3 + $0x1b8] sm:$0xff] %vm1844, %v1763
    %1901 = vst.msk [vmem:[#allocation3 + $0x1c0] sm:$0xff] %vm1844, %v1765
    %1902 = vst.msk [vmem:[#allocation3 + $0x1c8] sm:$0xff] %vm1844, %v1767
    %1903 = vst.msk [vmem:[#allocation3 + $0x1d0] sm:$0xff] %vm1844, %v1769
    %1904 = vst.msk [vmem:[#allocation3 + $0x1d8] sm:$0xff] %vm1844, %v1771
    %1905 = vst.msk [vmem:[#allocation3 + $0x1e0] sm:$0xff] %vm1844, %v1773
    %1906 = vst.msk [vmem:[#allocation3 + $0x1e8] sm:$0xff] %vm1844, %v1775
    %1907 = vst.msk [vmem:[#allocation3 + $0x1f0] sm:$0xff] %vm1844, %v1777
    %1908 = vst.msk [vmem:[#allocation3 + $0x1f8] sm:$0xff] %vm1844, %v1779
    %v1909 = vld [vmem:[%s176 + $0x2] sm:$0xff]
    %v1910 = vld [vmem:[%s176 + $0xa] sm:$0xff]
    %v1911 = vld [vmem:[%s176 + $0x1a] sm:$0xff]
    %v1912 = vld [vmem:[%s176 + $0x22] sm:$0xff]
    %v1913 = vld [vmem:[%s176 + $0x32] sm:$0xff]
    %v1914 = vld [vmem:[%s176 + $0x3a] sm:$0xff]
    %v1915 = vld [vmem:[%s176 + $0x4a] sm:$0xff]
    %v1916 = vld [vmem:[%s176 + $0x52] sm:$0xff]
    %v1917 = vld [vmem:[%s176 + $0x62] sm:$0xff]
    %v1918 = vld [vmem:[%s176 + $0x6a] sm:$0xff]
    %v1919 = vld [vmem:[%s176 + $0x7a] sm:$0xff]
    %v1920 = vld [vmem:[%s176 + $0x82] sm:$0xff]
    %v1921 = vld [vmem:[%s176 + $0x92] sm:$0xff]
    %v1922 = vld [vmem:[%s176 + $0x9a] sm:$0xff]
    %v1923 = vld [vmem:[%s176 + $0xaa] sm:$0xff]
    %v1924 = vld [vmem:[%s176 + $0xb2] sm:$0xff]
    %v1925 = vld [vmem:[%s176 + $0xc2] sm:$0xff]
    %v1926 = vld [vmem:[%s176 + $0xca] sm:$0xff]
    %v1927 = vld [vmem:[%s176 + $0xda] sm:$0xff]
    %v1928 = vld [vmem:[%s176 + $0xe2] sm:$0xff]
    %v1929 = vld [vmem:[%s176 + $0xf2] sm:$0xff]
    %v1930 = vld [vmem:[%s176 + $0xfa] sm:$0xff]
    %v1931 = vld [vmem:[%s176 + $0x10a] sm:$0xff]
    %v1932 = vld [vmem:[%s176 + $0x112] sm:$0xff]
    %v1933 = vld [vmem:[%s176 + $0x122] sm:$0xff]
    %v1934 = vld [vmem:[%s176 + $0x12a] sm:$0xff]
    %v1935 = vld [vmem:[%s176 + $0x13a] sm:$0xff]
    %v1936 = vld [vmem:[%s176 + $0x142] sm:$0xff]
    %v1937 = vld [vmem:[%s176 + $0x152] sm:$0xff]
    %v1938 = vld [vmem:[%s176 + $0x15a] sm:$0xff]
    %v1939 = vld [vmem:[%s176 + $0x16a] sm:$0xff]
    %v1940 = vld [vmem:[%s176 + $0x172] sm:$0xff]
    %v1941 = vld [vmem:[%s176 + $0x1b2] sm:$0xff]
    %v1942 = vld [vmem:[%s176 + $0x1ba] sm:$0xff]
    %v1943 = vld [vmem:[%s176 + $0x1ca] sm:$0xff]
    %v1944 = vld [vmem:[%s176 + $0x1d2] sm:$0xff]
    %v1945 = vld [vmem:[%s176 + $0x1e2] sm:$0xff]
    %v1946 = vld [vmem:[%s176 + $0x1ea] sm:$0xff]
    %v1947 = vld [vmem:[%s176 + $0x1fa] sm:$0xff]
    %v1948 = vld [vmem:[%s176 + $0x202] sm:$0xff]
    %v1949 = vld [vmem:[%s176 + $0x212] sm:$0xff]
    %v1950 = vld [vmem:[%s176 + $0x21a] sm:$0xff]
    %v1951 = vld [vmem:[%s176 + $0x22a] sm:$0xff]
    %v1952 = vld [vmem:[%s176 + $0x232] sm:$0xff]
    %v1953 = vld [vmem:[%s176 + $0x242] sm:$0xff]
    %v1954 = vld [vmem:[%s176 + $0x24a] sm:$0xff]
    %v1955 = vld [vmem:[%s176 + $0x25a] sm:$0xff]
    %v1956 = vld [vmem:[%s176 + $0x262] sm:$0xff]
    %v1957 = vld [vmem:[%s176 + $0x272] sm:$0xff]
    %v1958 = vld [vmem:[%s176 + $0x27a] sm:$0xff]
    %v1959 = vld [vmem:[%s176 + $0x28a] sm:$0xff]
    %v1960 = vld [vmem:[%s176 + $0x292] sm:$0xff]
    %v1961 = vld [vmem:[%s176 + $0x2a2] sm:$0xff]
    %v1962 = vld [vmem:[%s176 + $0x2aa] sm:$0xff]
    %v1963 = vld [vmem:[%s176 + $0x2ba] sm:$0xff]
    %v1964 = vld [vmem:[%s176 + $0x2c2] sm:$0xff]
    %v1965 = vld [vmem:[%s176 + $0x2d2] sm:$0xff]
    %v1966 = vld [vmem:[%s176 + $0x2da] sm:$0xff]
    %v1967 = vld [vmem:[%s176 + $0x2ea] sm:$0xff]
    %v1968 = vld [vmem:[%s176 + $0x2f2] sm:$0xff]
    %v1969 = vld [vmem:[%s176 + $0x302] sm:$0xff]
    %v1970 = vld [vmem:[%s176 + $0x30a] sm:$0xff]
    %v1971 = vld [vmem:[%s176 + $0x31a] sm:$0xff]
    %v1972 = vld [vmem:[%s176 + $0x322] sm:$0xff]
    %2037 = vrot.lane.b32.xlu0 %v1909, 20
    %v2038 = vpop.permute.xlu0 %2037
    %2039 = vrot.lane.b32.xlu0 %v1910, 20
    %v2040 = vpop.permute.xlu0 %2039
    %2041 = vrot.lane.b32.xlu0 %v1911, 20
    %v2042 = vpop.permute.xlu0 %2041
    %2043 = vrot.lane.b32.xlu0 %v1912, 20
    %v2044 = vpop.permute.xlu0 %2043
    %2045 = vrot.lane.b32.xlu0 %v1913, 20
    %v2046 = vpop.permute.xlu0 %2045
    %2047 = vrot.lane.b32.xlu0 %v1914, 20
    %v2048 = vpop.permute.xlu0 %2047
    %2049 = vrot.lane.b32.xlu0 %v1915, 20
    %v2050 = vpop.permute.xlu0 %2049
    %2051 = vrot.lane.b32.xlu0 %v1916, 20
    %v2052 = vpop.permute.xlu0 %2051
    %2053 = vrot.lane.b32.xlu0 %v1917, 20
    %v2054 = vpop.permute.xlu0 %2053
    %2055 = vrot.lane.b32.xlu0 %v1918, 20
    %v2056 = vpop.permute.xlu0 %2055
    %2057 = vrot.lane.b32.xlu0 %v1919, 20
    %v2058 = vpop.permute.xlu0 %2057
    %2059 = vrot.lane.b32.xlu0 %v1920, 20
    %v2060 = vpop.permute.xlu0 %2059
    %2061 = vrot.lane.b32.xlu0 %v1921, 20
    %v2062 = vpop.permute.xlu0 %2061
    %2063 = vrot.lane.b32.xlu0 %v1922, 20
    %v2064 = vpop.permute.xlu0 %2063
    %2065 = vrot.lane.b32.xlu0 %v1923, 20
    %v2066 = vpop.permute.xlu0 %2065
    %2067 = vrot.lane.b32.xlu0 %v1924, 20
    %v2068 = vpop.permute.xlu0 %2067
    %2069 = vrot.lane.b32.xlu0 %v1925, 20
    %v2070 = vpop.permute.xlu0 %2069
    %2071 = vrot.lane.b32.xlu0 %v1926, 20
    %v2072 = vpop.permute.xlu0 %2071
    %2073 = vrot.lane.b32.xlu0 %v1927, 20
    %v2074 = vpop.permute.xlu0 %2073
    %2075 = vrot.lane.b32.xlu0 %v1928, 20
    %v2076 = vpop.permute.xlu0 %2075
    %2077 = vrot.lane.b32.xlu0 %v1929, 20
    %v2078 = vpop.permute.xlu0 %2077
    %2079 = vrot.lane.b32.xlu0 %v1930, 20
    %v2080 = vpop.permute.xlu0 %2079
    %2081 = vrot.lane.b32.xlu0 %v1931, 20
    %v2082 = vpop.permute.xlu0 %2081
    %2083 = vrot.lane.b32.xlu0 %v1932, 20
    %v2084 = vpop.permute.xlu0 %2083
    %2085 = vrot.lane.b32.xlu0 %v1933, 20
    %v2086 = vpop.permute.xlu0 %2085
    %2087 = vrot.lane.b32.xlu0 %v1934, 20
    %v2088 = vpop.permute.xlu0 %2087
    %2089 = vrot.lane.b32.xlu0 %v1935, 20
    %v2090 = vpop.permute.xlu0 %2089
    %2091 = vrot.lane.b32.xlu0 %v1936, 20
    %v2092 = vpop.permute.xlu0 %2091
    %2093 = vrot.lane.b32.xlu0 %v1937, 20
    %v2094 = vpop.permute.xlu0 %2093
    %2095 = vrot.lane.b32.xlu0 %v1938, 20
    %v2096 = vpop.permute.xlu0 %2095
    %2097 = vrot.lane.b32.xlu0 %v1939, 20
    %v2098 = vpop.permute.xlu0 %2097
    %2099 = vrot.lane.b32.xlu0 %v1940, 20
    %v2100 = vpop.permute.xlu0 %2099
    %2101 = vrot.lane.b32.xlu0 %v1941, 20
    %v2102 = vpop.permute.xlu0 %2101
    %2103 = vrot.lane.b32.xlu0 %v1942, 20
    %v2104 = vpop.permute.xlu0 %2103
    %2105 = vrot.lane.b32.xlu0 %v1943, 20
    %v2106 = vpop.permute.xlu0 %2105
    %2107 = vrot.lane.b32.xlu0 %v1944, 20
    %v2108 = vpop.permute.xlu0 %2107
    %2109 = vrot.lane.b32.xlu0 %v1945, 20
    %v2110 = vpop.permute.xlu0 %2109
    %2111 = vrot.lane.b32.xlu0 %v1946, 20
    %v2112 = vpop.permute.xlu0 %2111
    %2113 = vrot.lane.b32.xlu0 %v1947, 20
    %v2114 = vpop.permute.xlu0 %2113
    %2115 = vrot.lane.b32.xlu0 %v1948, 20
    %v2116 = vpop.permute.xlu0 %2115
    %2117 = vrot.lane.b32.xlu0 %v1949, 20
    %v2118 = vpop.permute.xlu0 %2117
    %2119 = vrot.lane.b32.xlu0 %v1950, 20
    %v2120 = vpop.permute.xlu0 %2119
    %2121 = vrot.lane.b32.xlu0 %v1951, 20
    %v2122 = vpop.permute.xlu0 %2121
    %2123 = vrot.lane.b32.xlu0 %v1952, 20
    %v2124 = vpop.permute.xlu0 %2123
    %2125 = vrot.lane.b32.xlu0 %v1953, 20
    %v2126 = vpop.permute.xlu0 %2125
    %2127 = vrot.lane.b32.xlu0 %v1954, 20
    %v2128 = vpop.permute.xlu0 %2127
    %2129 = vrot.lane.b32.xlu0 %v1955, 20
    %v2130 = vpop.permute.xlu0 %2129
    %2131 = vrot.lane.b32.xlu0 %v1956, 20
    %v2132 = vpop.permute.xlu0 %2131
    %2133 = vrot.lane.b32.xlu0 %v1957, 20
    %v2134 = vpop.permute.xlu0 %2133
    %2135 = vrot.lane.b32.xlu0 %v1958, 20
    %v2136 = vpop.permute.xlu0 %2135
    %2137 = vrot.lane.b32.xlu0 %v1959, 20
    %v2138 = vpop.permute.xlu0 %2137
    %2139 = vrot.lane.b32.xlu0 %v1960, 20
    %v2140 = vpop.permute.xlu0 %2139
    %2141 = vrot.lane.b32.xlu0 %v1961, 20
    %v2142 = vpop.permute.xlu0 %2141
    %2143 = vrot.lane.b32.xlu0 %v1962, 20
    %v2144 = vpop.permute.xlu0 %2143
    %2145 = vrot.lane.b32.xlu0 %v1963, 20
    %v2146 = vpop.permute.xlu0 %2145
    %2147 = vrot.lane.b32.xlu0 %v1964, 20
    %v2148 = vpop.permute.xlu0 %2147
    %2149 = vrot.lane.b32.xlu0 %v1965, 20
    %v2150 = vpop.permute.xlu0 %2149
    %2151 = vrot.lane.b32.xlu0 %v1966, 20
    %v2152 = vpop.permute.xlu0 %2151
    %2153 = vrot.lane.b32.xlu0 %v1967, 20
    %v2154 = vpop.permute.xlu0 %2153
    %2155 = vrot.lane.b32.xlu0 %v1968, 20
    %v2156 = vpop.permute.xlu0 %2155
    %2157 = vrot.lane.b32.xlu0 %v1969, 20
    %v2158 = vpop.permute.xlu0 %2157
    %2159 = vrot.lane.b32.xlu0 %v1970, 20
    %v2160 = vpop.permute.xlu0 %2159
    %2161 = vrot.lane.b32.xlu0 %v1971, 20
    %v2162 = vpop.permute.xlu0 %2161
    %2163 = vrot.lane.b32.xlu0 %v1972, 20
    %v2164 = vpop.permute.xlu0 %2163
    %vm2229 = vcmask 195744
    %2230 = vst.msk [vmem:[#allocation3] sm:$0xff] %vm2229, %v2038
    %2231 = vst.msk [vmem:[#allocation3 + $0x8] sm:$0xff] %vm2229, %v2040
    %2232 = vst.msk [vmem:[#allocation3 + $0x10] sm:$0xff] %vm2229, %v2042
    %2233 = vst.msk [vmem:[#allocation3 + $0x18] sm:$0xff] %vm2229, %v2044
    %2234 = vst.msk [vmem:[#allocation3 + $0x20] sm:$0xff] %vm2229, %v2046
    %2235 = vst.msk [vmem:[#allocation3 + $0x28] sm:$0xff] %vm2229, %v2048
    %2236 = vst.msk [vmem:[#allocation3 + $0x30] sm:$0xff] %vm2229, %v2050
    %2237 = vst.msk [vmem:[#allocation3 + $0x38] sm:$0xff] %vm2229, %v2052
    %2238 = vst.msk [vmem:[#allocation3 + $0x40] sm:$0xff] %vm2229, %v2054
    %2239 = vst.msk [vmem:[#allocation3 + $0x48] sm:$0xff] %vm2229, %v2056
    %2240 = vst.msk [vmem:[#allocation3 + $0x50] sm:$0xff] %vm2229, %v2058
    %2241 = vst.msk [vmem:[#allocation3 + $0x58] sm:$0xff] %vm2229, %v2060
    %2242 = vst.msk [vmem:[#allocation3 + $0x60] sm:$0xff] %vm2229, %v2062
    %2243 = vst.msk [vmem:[#allocation3 + $0x68] sm:$0xff] %vm2229, %v2064
    %2244 = vst.msk [vmem:[#allocation3 + $0x70] sm:$0xff] %vm2229, %v2066
    %2245 = vst.msk [vmem:[#allocation3 + $0x78] sm:$0xff] %vm2229, %v2068
    %2246 = vst.msk [vmem:[#allocation3 + $0x80] sm:$0xff] %vm2229, %v2070
    %2247 = vst.msk [vmem:[#allocation3 + $0x88] sm:$0xff] %vm2229, %v2072
    %2248 = vst.msk [vmem:[#allocation3 + $0x90] sm:$0xff] %vm2229, %v2074
    %2249 = vst.msk [vmem:[#allocation3 + $0x98] sm:$0xff] %vm2229, %v2076
    %2250 = vst.msk [vmem:[#allocation3 + $0xa0] sm:$0xff] %vm2229, %v2078
    %2251 = vst.msk [vmem:[#allocation3 + $0xa8] sm:$0xff] %vm2229, %v2080
    %2252 = vst.msk [vmem:[#allocation3 + $0xb0] sm:$0xff] %vm2229, %v2082
    %2253 = vst.msk [vmem:[#allocation3 + $0xb8] sm:$0xff] %vm2229, %v2084
    %2254 = vst.msk [vmem:[#allocation3 + $0xc0] sm:$0xff] %vm2229, %v2086
    %2255 = vst.msk [vmem:[#allocation3 + $0xc8] sm:$0xff] %vm2229, %v2088
    %2256 = vst.msk [vmem:[#allocation3 + $0xd0] sm:$0xff] %vm2229, %v2090
    %2257 = vst.msk [vmem:[#allocation3 + $0xd8] sm:$0xff] %vm2229, %v2092
    %2258 = vst.msk [vmem:[#allocation3 + $0xe0] sm:$0xff] %vm2229, %v2094
    %2259 = vst.msk [vmem:[#allocation3 + $0xe8] sm:$0xff] %vm2229, %v2096
    %2260 = vst.msk [vmem:[#allocation3 + $0xf0] sm:$0xff] %vm2229, %v2098
    %2261 = vst.msk [vmem:[#allocation3 + $0xf8] sm:$0xff] %vm2229, %v2100
    %2262 = vst.msk [vmem:[#allocation3 + $0x100] sm:$0xff] %vm2229, %v2102
    %2263 = vst.msk [vmem:[#allocation3 + $0x108] sm:$0xff] %vm2229, %v2104
    %2264 = vst.msk [vmem:[#allocation3 + $0x110] sm:$0xff] %vm2229, %v2106
    %2265 = vst.msk [vmem:[#allocation3 + $0x118] sm:$0xff] %vm2229, %v2108
    %2266 = vst.msk [vmem:[#allocation3 + $0x120] sm:$0xff] %vm2229, %v2110
    %2267 = vst.msk [vmem:[#allocation3 + $0x128] sm:$0xff] %vm2229, %v2112
    %2268 = vst.msk [vmem:[#allocation3 + $0x130] sm:$0xff] %vm2229, %v2114
    %2269 = vst.msk [vmem:[#allocation3 + $0x138] sm:$0xff] %vm2229, %v2116
    %2270 = vst.msk [vmem:[#allocation3 + $0x140] sm:$0xff] %vm2229, %v2118
    %2271 = vst.msk [vmem:[#allocation3 + $0x148] sm:$0xff] %vm2229, %v2120
    %2272 = vst.msk [vmem:[#allocation3 + $0x150] sm:$0xff] %vm2229, %v2122
    %2273 = vst.msk [vmem:[#allocation3 + $0x158] sm:$0xff] %vm2229, %v2124
    %2274 = vst.msk [vmem:[#allocation3 + $0x160] sm:$0xff] %vm2229, %v2126
    %2275 = vst.msk [vmem:[#allocation3 + $0x168] sm:$0xff] %vm2229, %v2128
    %2276 = vst.msk [vmem:[#allocation3 + $0x170] sm:$0xff] %vm2229, %v2130
    %2277 = vst.msk [vmem:[#allocation3 + $0x178] sm:$0xff] %vm2229, %v2132
    %2278 = vst.msk [vmem:[#allocation3 + $0x180] sm:$0xff] %vm2229, %v2134
    %2279 = vst.msk [vmem:[#allocation3 + $0x188] sm:$0xff] %vm2229, %v2136
    %2280 = vst.msk [vmem:[#allocation3 + $0x190] sm:$0xff] %vm2229, %v2138
    %2281 = vst.msk [vmem:[#allocation3 + $0x198] sm:$0xff] %vm2229, %v2140
    %2282 = vst.msk [vmem:[#allocation3 + $0x1a0] sm:$0xff] %vm2229, %v2142
    %2283 = vst.msk [vmem:[#allocation3 + $0x1a8] sm:$0xff] %vm2229, %v2144
    %2284 = vst.msk [vmem:[#allocation3 + $0x1b0] sm:$0xff] %vm2229, %v2146
    %2285 = vst.msk [vmem:[#allocation3 + $0x1b8] sm:$0xff] %vm2229, %v2148
    %2286 = vst.msk [vmem:[#allocation3 + $0x1c0] sm:$0xff] %vm2229, %v2150
    %2287 = vst.msk [vmem:[#allocation3 + $0x1c8] sm:$0xff] %vm2229, %v2152
    %2288 = vst.msk [vmem:[#allocation3 + $0x1d0] sm:$0xff] %vm2229, %v2154
    %2289 = vst.msk [vmem:[#allocation3 + $0x1d8] sm:$0xff] %vm2229, %v2156
    %2290 = vst.msk [vmem:[#allocation3 + $0x1e0] sm:$0xff] %vm2229, %v2158
    %2291 = vst.msk [vmem:[#allocation3 + $0x1e8] sm:$0xff] %vm2229, %v2160
    %2292 = vst.msk [vmem:[#allocation3 + $0x1f0] sm:$0xff] %vm2229, %v2162
    %2293 = vst.msk [vmem:[#allocation3 + $0x1f8] sm:$0xff] %vm2229, %v2164
    %s2294 = scalar_lea.vmem [#allocation2], 48
    %v2295 = vld [vmem:[%s2294] sm:$0xff]
    %v2296 = vld [vmem:[%s2294 + $0x8] sm:$0xff]
    %v2297 = vld [vmem:[%s2294 + $0x18] sm:$0xff]
    %v2298 = vld [vmem:[%s2294 + $0x20] sm:$0xff]
    %v2299 = vld [vmem:[%s2294 + $0x30] sm:$0xff]
    %v2300 = vld [vmem:[%s2294 + $0x38] sm:$0xff]
    %v2301 = vld [vmem:[%s2294 + $0x48] sm:$0xff]
    %v2302 = vld [vmem:[%s2294 + $0x50] sm:$0xff]
    %v2303 = vld [vmem:[%s2294 + $0x60] sm:$0xff]
    %v2304 = vld [vmem:[%s2294 + $0x68] sm:$0xff]
    %v2305 = vld [vmem:[%s2294 + $0x78] sm:$0xff]
    %v2306 = vld [vmem:[%s2294 + $0x80] sm:$0xff]
    %v2307 = vld [vmem:[%s2294 + $0x90] sm:$0xff]
    %v2308 = vld [vmem:[%s2294 + $0x98] sm:$0xff]
    %v2309 = vld [vmem:[%s2294 + $0xa8] sm:$0xff]
    %v2310 = vld [vmem:[%s2294 + $0xb0] sm:$0xff]
    %v2311 = vld [vmem:[%s2294 + $0xc0] sm:$0xff]
    %v2312 = vld [vmem:[%s2294 + $0xc8] sm:$0xff]
    %v2313 = vld [vmem:[%s2294 + $0xd8] sm:$0xff]
    %v2314 = vld [vmem:[%s2294 + $0xe0] sm:$0xff]
    %v2315 = vld [vmem:[%s2294 + $0xf0] sm:$0xff]
    %v2316 = vld [vmem:[%s2294 + $0xf8] sm:$0xff]
    %v2317 = vld [vmem:[%s2294 + $0x108] sm:$0xff]
    %v2318 = vld [vmem:[%s2294 + $0x110] sm:$0xff]
    %v2319 = vld [vmem:[%s2294 + $0x120] sm:$0xff]
    %v2320 = vld [vmem:[%s2294 + $0x128] sm:$0xff]
    %v2321 = vld [vmem:[%s2294 + $0x138] sm:$0xff]
    %v2322 = vld [vmem:[%s2294 + $0x140] sm:$0xff]
    %v2323 = vld [vmem:[%s2294 + $0x150] sm:$0xff]
    %v2324 = vld [vmem:[%s2294 + $0x158] sm:$0xff]
    %v2325 = vld [vmem:[%s2294 + $0x168] sm:$0xff]
    %v2326 = vld [vmem:[%s2294 + $0x170] sm:$0xff]
    %v2327 = vld [vmem:[%s2294 + $0x1b0] sm:$0xff]
    %v2328 = vld [vmem:[%s2294 + $0x1b8] sm:$0xff]
    %v2329 = vld [vmem:[%s2294 + $0x1c8] sm:$0xff]
    %v2330 = vld [vmem:[%s2294 + $0x1d0] sm:$0xff]
    %v2331 = vld [vmem:[%s2294 + $0x1e0] sm:$0xff]
    %v2332 = vld [vmem:[%s2294 + $0x1e8] sm:$0xff]
    %v2333 = vld [vmem:[%s2294 + $0x1f8] sm:$0xff]
    %v2334 = vld [vmem:[%s2294 + $0x200] sm:$0xff]
    %v2335 = vld [vmem:[%s2294 + $0x210] sm:$0xff]
    %v2336 = vld [vmem:[%s2294 + $0x218] sm:$0xff]
    %v2337 = vld [vmem:[%s2294 + $0x228] sm:$0xff]
    %v2338 = vld [vmem:[%s2294 + $0x230] sm:$0xff]
    %v2339 = vld [vmem:[%s2294 + $0x240] sm:$0xff]
    %v2340 = vld [vmem:[%s2294 + $0x248] sm:$0xff]
    %v2341 = vld [vmem:[%s2294 + $0x258] sm:$0xff]
    %v2342 = vld [vmem:[%s2294 + $0x260] sm:$0xff]
    %v2343 = vld [vmem:[%s2294 + $0x270] sm:$0xff]
    %v2344 = vld [vmem:[%s2294 + $0x278] sm:$0xff]
    %v2345 = vld [vmem:[%s2294 + $0x288] sm:$0xff]
    %v2346 = vld [vmem:[%s2294 + $0x290] sm:$0xff]
    %v2347 = vld [vmem:[%s2294 + $0x2a0] sm:$0xff]
    %v2348 = vld [vmem:[%s2294 + $0x2a8] sm:$0xff]
    %v2349 = vld [vmem:[%s2294 + $0x2b8] sm:$0xff]
    %v2350 = vld [vmem:[%s2294 + $0x2c0] sm:$0xff]
    %v2351 = vld [vmem:[%s2294 + $0x2d0] sm:$0xff]
    %v2352 = vld [vmem:[%s2294 + $0x2d8] sm:$0xff]
    %v2353 = vld [vmem:[%s2294 + $0x2e8] sm:$0xff]
    %v2354 = vld [vmem:[%s2294 + $0x2f0] sm:$0xff]
    %v2355 = vld [vmem:[%s2294 + $0x300] sm:$0xff]
    %v2356 = vld [vmem:[%s2294 + $0x308] sm:$0xff]
    %v2357 = vld [vmem:[%s2294 + $0x318] sm:$0xff]
    %v2358 = vld [vmem:[%s2294 + $0x320] sm:$0xff]
    %2423 = vrot.lane.b32.xlu0 %v2295, 24
    %v2424 = vpop.permute.xlu0 %2423
    %2425 = vrot.lane.b32.xlu0 %v2296, 24
    %v2426 = vpop.permute.xlu0 %2425
    %2427 = vrot.lane.b32.xlu0 %v2297, 24
    %v2428 = vpop.permute.xlu0 %2427
    %2429 = vrot.lane.b32.xlu0 %v2298, 24
    %v2430 = vpop.permute.xlu0 %2429
    %2431 = vrot.lane.b32.xlu0 %v2299, 24
    %v2432 = vpop.permute.xlu0 %2431
    %2433 = vrot.lane.b32.xlu0 %v2300, 24
    %v2434 = vpop.permute.xlu0 %2433
    %2435 = vrot.lane.b32.xlu0 %v2301, 24
    %v2436 = vpop.permute.xlu0 %2435
    %2437 = vrot.lane.b32.xlu0 %v2302, 24
    %v2438 = vpop.permute.xlu0 %2437
    %2439 = vrot.lane.b32.xlu0 %v2303, 24
    %v2440 = vpop.permute.xlu0 %2439
    %2441 = vrot.lane.b32.xlu0 %v2304, 24
    %v2442 = vpop.permute.xlu0 %2441
    %2443 = vrot.lane.b32.xlu0 %v2305, 24
    %v2444 = vpop.permute.xlu0 %2443
    %2445 = vrot.lane.b32.xlu0 %v2306, 24
    %v2446 = vpop.permute.xlu0 %2445
    %2447 = vrot.lane.b32.xlu0 %v2307, 24
    %v2448 = vpop.permute.xlu0 %2447
    %2449 = vrot.lane.b32.xlu0 %v2308, 24
    %v2450 = vpop.permute.xlu0 %2449
    %2451 = vrot.lane.b32.xlu0 %v2309, 24
    %v2452 = vpop.permute.xlu0 %2451
    %2453 = vrot.lane.b32.xlu0 %v2310, 24
    %v2454 = vpop.permute.xlu0 %2453
    %2455 = vrot.lane.b32.xlu0 %v2311, 24
    %v2456 = vpop.permute.xlu0 %2455
    %2457 = vrot.lane.b32.xlu0 %v2312, 24
    %v2458 = vpop.permute.xlu0 %2457
    %2459 = vrot.lane.b32.xlu0 %v2313, 24
    %v2460 = vpop.permute.xlu0 %2459
    %2461 = vrot.lane.b32.xlu0 %v2314, 24
    %v2462 = vpop.permute.xlu0 %2461
    %2463 = vrot.lane.b32.xlu0 %v2315, 24
    %v2464 = vpop.permute.xlu0 %2463
    %2465 = vrot.lane.b32.xlu0 %v2316, 24
    %v2466 = vpop.permute.xlu0 %2465
    %2467 = vrot.lane.b32.xlu0 %v2317, 24
    %v2468 = vpop.permute.xlu0 %2467
    %2469 = vrot.lane.b32.xlu0 %v2318, 24
    %v2470 = vpop.permute.xlu0 %2469
    %2471 = vrot.lane.b32.xlu0 %v2319, 24
    %v2472 = vpop.permute.xlu0 %2471
    %2473 = vrot.lane.b32.xlu0 %v2320, 24
    %v2474 = vpop.permute.xlu0 %2473
    %2475 = vrot.lane.b32.xlu0 %v2321, 24
    %v2476 = vpop.permute.xlu0 %2475
    %2477 = vrot.lane.b32.xlu0 %v2322, 24
    %v2478 = vpop.permute.xlu0 %2477
    %2479 = vrot.lane.b32.xlu0 %v2323, 24
    %v2480 = vpop.permute.xlu0 %2479
    %2481 = vrot.lane.b32.xlu0 %v2324, 24
    %v2482 = vpop.permute.xlu0 %2481
    %2483 = vrot.lane.b32.xlu0 %v2325, 24
    %v2484 = vpop.permute.xlu0 %2483
    %2485 = vrot.lane.b32.xlu0 %v2326, 24
    %v2486 = vpop.permute.xlu0 %2485
    %2487 = vrot.lane.b32.xlu0 %v2327, 24
    %v2488 = vpop.permute.xlu0 %2487
    %2489 = vrot.lane.b32.xlu0 %v2328, 24
    %v2490 = vpop.permute.xlu0 %2489
    %2491 = vrot.lane.b32.xlu0 %v2329, 24
    %v2492 = vpop.permute.xlu0 %2491
    %2493 = vrot.lane.b32.xlu0 %v2330, 24
    %v2494 = vpop.permute.xlu0 %2493
    %2495 = vrot.lane.b32.xlu0 %v2331, 24
    %v2496 = vpop.permute.xlu0 %2495
    %2497 = vrot.lane.b32.xlu0 %v2332, 24
    %v2498 = vpop.permute.xlu0 %2497
    %2499 = vrot.lane.b32.xlu0 %v2333, 24
    %v2500 = vpop.permute.xlu0 %2499
    %2501 = vrot.lane.b32.xlu0 %v2334, 24
    %v2502 = vpop.permute.xlu0 %2501
    %2503 = vrot.lane.b32.xlu0 %v2335, 24
    %v2504 = vpop.permute.xlu0 %2503
    %2505 = vrot.lane.b32.xlu0 %v2336, 24
    %v2506 = vpop.permute.xlu0 %2505
    %2507 = vrot.lane.b32.xlu0 %v2337, 24
    %v2508 = vpop.permute.xlu0 %2507
    %2509 = vrot.lane.b32.xlu0 %v2338, 24
    %v2510 = vpop.permute.xlu0 %2509
    %2511 = vrot.lane.b32.xlu0 %v2339, 24
    %v2512 = vpop.permute.xlu0 %2511
    %2513 = vrot.lane.b32.xlu0 %v2340, 24
    %v2514 = vpop.permute.xlu0 %2513
    %2515 = vrot.lane.b32.xlu0 %v2341, 24
    %v2516 = vpop.permute.xlu0 %2515
    %2517 = vrot.lane.b32.xlu0 %v2342, 24
    %v2518 = vpop.permute.xlu0 %2517
    %2519 = vrot.lane.b32.xlu0 %v2343, 24
    %v2520 = vpop.permute.xlu0 %2519
    %2521 = vrot.lane.b32.xlu0 %v2344, 24
    %v2522 = vpop.permute.xlu0 %2521
    %2523 = vrot.lane.b32.xlu0 %v2345, 24
    %v2524 = vpop.permute.xlu0 %2523
    %2525 = vrot.lane.b32.xlu0 %v2346, 24
    %v2526 = vpop.permute.xlu0 %2525
    %2527 = vrot.lane.b32.xlu0 %v2347, 24
    %v2528 = vpop.permute.xlu0 %2527
    %2529 = vrot.lane.b32.xlu0 %v2348, 24
    %v2530 = vpop.permute.xlu0 %2529
    %2531 = vrot.lane.b32.xlu0 %v2349, 24
    %v2532 = vpop.permute.xlu0 %2531
    %2533 = vrot.lane.b32.xlu0 %v2350, 24
    %v2534 = vpop.permute.xlu0 %2533
    %2535 = vrot.lane.b32.xlu0 %v2351, 24
    %v2536 = vpop.permute.xlu0 %2535
    %2537 = vrot.lane.b32.xlu0 %v2352, 24
    %v2538 = vpop.permute.xlu0 %2537
    %2539 = vrot.lane.b32.xlu0 %v2353, 24
    %v2540 = vpop.permute.xlu0 %2539
    %2541 = vrot.lane.b32.xlu0 %v2354, 24
    %v2542 = vpop.permute.xlu0 %2541
    %2543 = vrot.lane.b32.xlu0 %v2355, 24
    %v2544 = vpop.permute.xlu0 %2543
    %2545 = vrot.lane.b32.xlu0 %v2356, 24
    %v2546 = vpop.permute.xlu0 %2545
    %2547 = vrot.lane.b32.xlu0 %v2357, 24
    %v2548 = vpop.permute.xlu0 %2547
    %2549 = vrot.lane.b32.xlu0 %v2358, 24
    %v2550 = vpop.permute.xlu0 %2549
    %vm2615 = vcmask 228544
    %2616 = vst.msk [vmem:[#allocation3] sm:$0xff] %vm2615, %v2424
    %2617 = vst.msk [vmem:[#allocation3 + $0x8] sm:$0xff] %vm2615, %v2426
    %2618 = vst.msk [vmem:[#allocation3 + $0x10] sm:$0xff] %vm2615, %v2428
    %2619 = vst.msk [vmem:[#allocation3 + $0x18] sm:$0xff] %vm2615, %v2430
    %2620 = vst.msk [vmem:[#allocation3 + $0x20] sm:$0xff] %vm2615, %v2432
    %2621 = vst.msk [vmem:[#allocation3 + $0x28] sm:$0xff] %vm2615, %v2434
    %2622 = vst.msk [vmem:[#allocation3 + $0x30] sm:$0xff] %vm2615, %v2436
    %2623 = vst.msk [vmem:[#allocation3 + $0x38] sm:$0xff] %vm2615, %v2438
    %2624 = vst.msk [vmem:[#allocation3 + $0x40] sm:$0xff] %vm2615, %v2440
    %2625 = vst.msk [vmem:[#allocation3 + $0x48] sm:$0xff] %vm2615, %v2442
    %2626 = vst.msk [vmem:[#allocation3 + $0x50] sm:$0xff] %vm2615, %v2444
    %2627 = vst.msk [vmem:[#allocation3 + $0x58] sm:$0xff] %vm2615, %v2446
    %2628 = vst.msk [vmem:[#allocation3 + $0x60] sm:$0xff] %vm2615, %v2448
    %2629 = vst.msk [vmem:[#allocation3 + $0x68] sm:$0xff] %vm2615, %v2450
    %2630 = vst.msk [vmem:[#allocation3 + $0x70] sm:$0xff] %vm2615, %v2452
    %2631 = vst.msk [vmem:[#allocation3 + $0x78] sm:$0xff] %vm2615, %v2454
    %2632 = vst.msk [vmem:[#allocation3 + $0x80] sm:$0xff] %vm2615, %v2456
    %2633 = vst.msk [vmem:[#allocation3 + $0x88] sm:$0xff] %vm2615, %v2458
    %2634 = vst.msk [vmem:[#allocation3 + $0x90] sm:$0xff] %vm2615, %v2460
    %2635 = vst.msk [vmem:[#allocation3 + $0x98] sm:$0xff] %vm2615, %v2462
    %2636 = vst.msk [vmem:[#allocation3 + $0xa0] sm:$0xff] %vm2615, %v2464
    %2637 = vst.msk [vmem:[#allocation3 + $0xa8] sm:$0xff] %vm2615, %v2466
    %2638 = vst.msk [vmem:[#allocation3 + $0xb0] sm:$0xff] %vm2615, %v2468
    %2639 = vst.msk [vmem:[#allocation3 + $0xb8] sm:$0xff] %vm2615, %v2470
    %2640 = vst.msk [vmem:[#allocation3 + $0xc0] sm:$0xff] %vm2615, %v2472
    %2641 = vst.msk [vmem:[#allocation3 + $0xc8] sm:$0xff] %vm2615, %v2474
    %2642 = vst.msk [vmem:[#allocation3 + $0xd0] sm:$0xff] %vm2615, %v2476
    %2643 = vst.msk [vmem:[#allocation3 + $0xd8] sm:$0xff] %vm2615, %v2478
    %2644 = vst.msk [vmem:[#allocation3 + $0xe0] sm:$0xff] %vm2615, %v2480
    %2645 = vst.msk [vmem:[#allocation3 + $0xe8] sm:$0xff] %vm2615, %v2482
    %2646 = vst.msk [vmem:[#allocation3 + $0xf0] sm:$0xff] %vm2615, %v2484
    %2647 = vst.msk [vmem:[#allocation3 + $0xf8] sm:$0xff] %vm2615, %v2486
    %2648 = vst.msk [vmem:[#allocation3 + $0x100] sm:$0xff] %vm2615, %v2488
    %2649 = vst.msk [vmem:[#allocation3 + $0x108] sm:$0xff] %vm2615, %v2490
    %2650 = vst.msk [vmem:[#allocation3 + $0x110] sm:$0xff] %vm2615, %v2492
    %2651 = vst.msk [vmem:[#allocation3 + $0x118] sm:$0xff] %vm2615, %v2494
    %2652 = vst.msk [vmem:[#allocation3 + $0x120] sm:$0xff] %vm2615, %v2496
    %2653 = vst.msk [vmem:[#allocation3 + $0x128] sm:$0xff] %vm2615, %v2498
    %2654 = vst.msk [vmem:[#allocation3 + $0x130] sm:$0xff] %vm2615, %v2500
    %2655 = vst.msk [vmem:[#allocation3 + $0x138] sm:$0xff] %vm2615, %v2502
    %2656 = vst.msk [vmem:[#allocation3 + $0x140] sm:$0xff] %vm2615, %v2504
    %2657 = vst.msk [vmem:[#allocation3 + $0x148] sm:$0xff] %vm2615, %v2506
    %2658 = vst.msk [vmem:[#allocation3 + $0x150] sm:$0xff] %vm2615, %v2508
    %2659 = vst.msk [vmem:[#allocation3 + $0x158] sm:$0xff] %vm2615, %v2510
    %2660 = vst.msk [vmem:[#allocation3 + $0x160] sm:$0xff] %vm2615, %v2512
    %2661 = vst.msk [vmem:[#allocation3 + $0x168] sm:$0xff] %vm2615, %v2514
    %2662 = vst.msk [vmem:[#allocation3 + $0x170] sm:$0xff] %vm2615, %v2516
    %2663 = vst.msk [vmem:[#allocation3 + $0x178] sm:$0xff] %vm2615, %v2518
    %2664 = vst.msk [vmem:[#allocation3 + $0x180] sm:$0xff] %vm2615, %v2520
    %2665 = vst.msk [vmem:[#allocation3 + $0x188] sm:$0xff] %vm2615, %v2522
    %2666 = vst.msk [vmem:[#allocation3 + $0x190] sm:$0xff] %vm2615, %v2524
    %2667 = vst.msk [vmem:[#allocation3 + $0x198] sm:$0xff] %vm2615, %v2526
    %2668 = vst.msk [vmem:[#allocation3 + $0x1a0] sm:$0xff] %vm2615, %v2528
    %2669 = vst.msk [vmem:[#allocation3 + $0x1a8] sm:$0xff] %vm2615, %v2530
    %2670 = vst.msk [vmem:[#allocation3 + $0x1b0] sm:$0xff] %vm2615, %v2532
    %2671 = vst.msk [vmem:[#allocation3 + $0x1b8] sm:$0xff] %vm2615, %v2534
    %2672 = vst.msk [vmem:[#allocation3 + $0x1c0] sm:$0xff] %vm2615, %v2536
    %2673 = vst.msk [vmem:[#allocation3 + $0x1c8] sm:$0xff] %vm2615, %v2538
    %2674 = vst.msk [vmem:[#allocation3 + $0x1d0] sm:$0xff] %vm2615, %v2540
    %2675 = vst.msk [vmem:[#allocation3 + $0x1d8] sm:$0xff] %vm2615, %v2542
    %2676 = vst.msk [vmem:[#allocation3 + $0x1e0] sm:$0xff] %vm2615, %v2544
    %2677 = vst.msk [vmem:[#allocation3 + $0x1e8] sm:$0xff] %vm2615, %v2546
    %2678 = vst.msk [vmem:[#allocation3 + $0x1f0] sm:$0xff] %vm2615, %v2548
    %2679 = vst.msk [vmem:[#allocation3 + $0x1f8] sm:$0xff] %vm2615, %v2550
    %v2680 = vld [vmem:[%s2294 + $0x1] sm:$0xff]
    %v2681 = vld [vmem:[%s2294 + $0x9] sm:$0xff]
    %v2682 = vld [vmem:[%s2294 + $0x19] sm:$0xff]
    %v2683 = vld [vmem:[%s2294 + $0x21] sm:$0xff]
    %v2684 = vld [vmem:[%s2294 + $0x31] sm:$0xff]
    %v2685 = vld [vmem:[%s2294 + $0x39] sm:$0xff]
    %v2686 = vld [vmem:[%s2294 + $0x49] sm:$0xff]
    %v2687 = vld [vmem:[%s2294 + $0x51] sm:$0xff]
    %v2688 = vld [vmem:[%s2294 + $0x61] sm:$0xff]
    %v2689 = vld [vmem:[%s2294 + $0x69] sm:$0xff]
    %v2690 = vld [vmem:[%s2294 + $0x79] sm:$0xff]
    %v2691 = vld [vmem:[%s2294 + $0x81] sm:$0xff]
    %v2692 = vld [vmem:[%s2294 + $0x91] sm:$0xff]
    %v2693 = vld [vmem:[%s2294 + $0x99] sm:$0xff]
    %v2694 = vld [vmem:[%s2294 + $0xa9] sm:$0xff]
    %v2695 = vld [vmem:[%s2294 + $0xb1] sm:$0xff]
    %v2696 = vld [vmem:[%s2294 + $0xc1] sm:$0xff]
    %v2697 = vld [vmem:[%s2294 + $0xc9] sm:$0xff]
    %v2698 = vld [vmem:[%s2294 + $0xd9] sm:$0xff]
    %v2699 = vld [vmem:[%s2294 + $0xe1] sm:$0xff]
    %v2700 = vld [vmem:[%s2294 + $0xf1] sm:$0xff]
    %v2701 = vld [vmem:[%s2294 + $0xf9] sm:$0xff]
    %v2702 = vld [vmem:[%s2294 + $0x109] sm:$0xff]
    %v2703 = vld [vmem:[%s2294 + $0x111] sm:$0xff]
    %v2704 = vld [vmem:[%s2294 + $0x121] sm:$0xff]
    %v2705 = vld [vmem:[%s2294 + $0x129] sm:$0xff]
    %v2706 = vld [vmem:[%s2294 + $0x139] sm:$0xff]
    %v2707 = vld [vmem:[%s2294 + $0x141] sm:$0xff]
    %v2708 = vld [vmem:[%s2294 + $0x151] sm:$0xff]
    %v2709 = vld [vmem:[%s2294 + $0x159] sm:$0xff]
    %v2710 = vld [vmem:[%s2294 + $0x169] sm:$0xff]
    %v2711 = vld [vmem:[%s2294 + $0x171] sm:$0xff]
    %v2712 = vld [vmem:[%s2294 + $0x1b1] sm:$0xff]
    %v2713 = vld [vmem:[%s2294 + $0x1b9] sm:$0xff]
    %v2714 = vld [vmem:[%s2294 + $0x1c9] sm:$0xff]
    %v2715 = vld [vmem:[%s2294 + $0x1d1] sm:$0xff]
    %v2716 = vld [vmem:[%s2294 + $0x1e1] sm:$0xff]
    %v2717 = vld [vmem:[%s2294 + $0x1e9] sm:$0xff]
    %v2718 = vld [vmem:[%s2294 + $0x1f9] sm:$0xff]
    %v2719 = vld [vmem:[%s2294 + $0x201] sm:$0xff]
    %v2720 = vld [vmem:[%s2294 + $0x211] sm:$0xff]
    %v2721 = vld [vmem:[%s2294 + $0x219] sm:$0xff]
    %v2722 = vld [vmem:[%s2294 + $0x229] sm:$0xff]
    %v2723 = vld [vmem:[%s2294 + $0x231] sm:$0xff]
    %v2724 = vld [vmem:[%s2294 + $0x241] sm:$0xff]
    %v2725 = vld [vmem:[%s2294 + $0x249] sm:$0xff]
    %v2726 = vld [vmem:[%s2294 + $0x259] sm:$0xff]
    %v2727 = vld [vmem:[%s2294 + $0x261] sm:$0xff]
    %v2728 = vld [vmem:[%s2294 + $0x271] sm:$0xff]
    %v2729 = vld [vmem:[%s2294 + $0x279] sm:$0xff]
    %v2730 = vld [vmem:[%s2294 + $0x289] sm:$0xff]
    %v2731 = vld [vmem:[%s2294 + $0x291] sm:$0xff]
    %v2732 = vld [vmem:[%s2294 + $0x2a1] sm:$0xff]
    %v2733 = vld [vmem:[%s2294 + $0x2a9] sm:$0xff]
    %v2734 = vld [vmem:[%s2294 + $0x2b9] sm:$0xff]
    %v2735 = vld [vmem:[%s2294 + $0x2c1] sm:$0xff]
    %v2736 = vld [vmem:[%s2294 + $0x2d1] sm:$0xff]
    %v2737 = vld [vmem:[%s2294 + $0x2d9] sm:$0xff]
    %v2738 = vld [vmem:[%s2294 + $0x2e9] sm:$0xff]
    %v2739 = vld [vmem:[%s2294 + $0x2f1] sm:$0xff]
    %v2740 = vld [vmem:[%s2294 + $0x301] sm:$0xff]
    %v2741 = vld [vmem:[%s2294 + $0x309] sm:$0xff]
    %v2742 = vld [vmem:[%s2294 + $0x319] sm:$0xff]
    %v2743 = vld [vmem:[%s2294 + $0x321] sm:$0xff]
    %2808 = vrot.lane.b32.xlu0 %v2680, 28
    %v2809 = vpop.permute.xlu0 %2808
    %2810 = vrot.lane.b32.xlu0 %v2681, 28
    %v2811 = vpop.permute.xlu0 %2810
    %2812 = vrot.lane.b32.xlu0 %v2682, 28
    %v2813 = vpop.permute.xlu0 %2812
    %2814 = vrot.lane.b32.xlu0 %v2683, 28
    %v2815 = vpop.permute.xlu0 %2814
    %2816 = vrot.lane.b32.xlu0 %v2684, 28
    %v2817 = vpop.permute.xlu0 %2816
    %2818 = vrot.lane.b32.xlu0 %v2685, 28
    %v2819 = vpop.permute.xlu0 %2818
    %2820 = vrot.lane.b32.xlu0 %v2686, 28
    %v2821 = vpop.permute.xlu0 %2820
    %2822 = vrot.lane.b32.xlu0 %v2687, 28
    %v2823 = vpop.permute.xlu0 %2822
    %2824 = vrot.lane.b32.xlu0 %v2688, 28
    %v2825 = vpop.permute.xlu0 %2824
    %2826 = vrot.lane.b32.xlu0 %v2689, 28
    %v2827 = vpop.permute.xlu0 %2826
    %2828 = vrot.lane.b32.xlu0 %v2690, 28
    %v2829 = vpop.permute.xlu0 %2828
    %2830 = vrot.lane.b32.xlu0 %v2691, 28
    %v2831 = vpop.permute.xlu0 %2830
    %2832 = vrot.lane.b32.xlu0 %v2692, 28
    %v2833 = vpop.permute.xlu0 %2832
    %2834 = vrot.lane.b32.xlu0 %v2693, 28
    %v2835 = vpop.permute.xlu0 %2834
    %2836 = vrot.lane.b32.xlu0 %v2694, 28
    %v2837 = vpop.permute.xlu0 %2836
    %2838 = vrot.lane.b32.xlu0 %v2695, 28
    %v2839 = vpop.permute.xlu0 %2838
    %2840 = vrot.lane.b32.xlu0 %v2696, 28
    %v2841 = vpop.permute.xlu0 %2840
    %2842 = vrot.lane.b32.xlu0 %v2697, 28
    %v2843 = vpop.permute.xlu0 %2842
    %2844 = vrot.lane.b32.xlu0 %v2698, 28
    %v2845 = vpop.permute.xlu0 %2844
    %2846 = vrot.lane.b32.xlu0 %v2699, 28
    %v2847 = vpop.permute.xlu0 %2846
    %2848 = vrot.lane.b32.xlu0 %v2700, 28
    %v2849 = vpop.permute.xlu0 %2848
    %2850 = vrot.lane.b32.xlu0 %v2701, 28
    %v2851 = vpop.permute.xlu0 %2850
    %2852 = vrot.lane.b32.xlu0 %v2702, 28
    %v2853 = vpop.permute.xlu0 %2852
    %2854 = vrot.lane.b32.xlu0 %v2703, 28
    %v2855 = vpop.permute.xlu0 %2854
    %2856 = vrot.lane.b32.xlu0 %v2704, 28
    %v2857 = vpop.permute.xlu0 %2856
    %2858 = vrot.lane.b32.xlu0 %v2705, 28
    %v2859 = vpop.permute.xlu0 %2858
    %2860 = vrot.lane.b32.xlu0 %v2706, 28
    %v2861 = vpop.permute.xlu0 %2860
    %2862 = vrot.lane.b32.xlu0 %v2707, 28
    %v2863 = vpop.permute.xlu0 %2862
    %2864 = vrot.lane.b32.xlu0 %v2708, 28
    %v2865 = vpop.permute.xlu0 %2864
    %2866 = vrot.lane.b32.xlu0 %v2709, 28
    %v2867 = vpop.permute.xlu0 %2866
    %2868 = vrot.lane.b32.xlu0 %v2710, 28
    %v2869 = vpop.permute.xlu0 %2868
    %2870 = vrot.lane.b32.xlu0 %v2711, 28
    %v2871 = vpop.permute.xlu0 %2870
    %2872 = vrot.lane.b32.xlu0 %v2712, 28
    %v2873 = vpop.permute.xlu0 %2872
    %2874 = vrot.lane.b32.xlu0 %v2713, 28
    %v2875 = vpop.permute.xlu0 %2874
    %2876 = vrot.lane.b32.xlu0 %v2714, 28
    %v2877 = vpop.permute.xlu0 %2876
    %2878 = vrot.lane.b32.xlu0 %v2715, 28
    %v2879 = vpop.permute.xlu0 %2878
    %2880 = vrot.lane.b32.xlu0 %v2716, 28
    %v2881 = vpop.permute.xlu0 %2880
    %2882 = vrot.lane.b32.xlu0 %v2717, 28
    %v2883 = vpop.permute.xlu0 %2882
    %2884 = vrot.lane.b32.xlu0 %v2718, 28
    %v2885 = vpop.permute.xlu0 %2884
    %2886 = vrot.lane.b32.xlu0 %v2719, 28
    %v2887 = vpop.permute.xlu0 %2886
    %2888 = vrot.lane.b32.xlu0 %v2720, 28
    %v2889 = vpop.permute.xlu0 %2888
    %2890 = vrot.lane.b32.xlu0 %v2721, 28
    %v2891 = vpop.permute.xlu0 %2890
    %2892 = vrot.lane.b32.xlu0 %v2722, 28
    %v2893 = vpop.permute.xlu0 %2892
    %2894 = vrot.lane.b32.xlu0 %v2723, 28
    %v2895 = vpop.permute.xlu0 %2894
    %2896 = vrot.lane.b32.xlu0 %v2724, 28
    %v2897 = vpop.permute.xlu0 %2896
    %2898 = vrot.lane.b32.xlu0 %v2725, 28
    %v2899 = vpop.permute.xlu0 %2898
    %2900 = vrot.lane.b32.xlu0 %v2726, 28
    %v2901 = vpop.permute.xlu0 %2900
    %2902 = vrot.lane.b32.xlu0 %v2727, 28
    %v2903 = vpop.permute.xlu0 %2902
    %2904 = vrot.lane.b32.xlu0 %v2728, 28
    %v2905 = vpop.permute.xlu0 %2904
    %2906 = vrot.lane.b32.xlu0 %v2729, 28
    %v2907 = vpop.permute.xlu0 %2906
    %2908 = vrot.lane.b32.xlu0 %v2730, 28
    %v2909 = vpop.permute.xlu0 %2908
    %2910 = vrot.lane.b32.xlu0 %v2731, 28
    %v2911 = vpop.permute.xlu0 %2910
    %2912 = vrot.lane.b32.xlu0 %v2732, 28
    %v2913 = vpop.permute.xlu0 %2912
    %2914 = vrot.lane.b32.xlu0 %v2733, 28
    %v2915 = vpop.permute.xlu0 %2914
    %2916 = vrot.lane.b32.xlu0 %v2734, 28
    %v2917 = vpop.permute.xlu0 %2916
    %2918 = vrot.lane.b32.xlu0 %v2735, 28
    %v2919 = vpop.permute.xlu0 %2918
    %2920 = vrot.lane.b32.xlu0 %v2736, 28
    %v2921 = vpop.permute.xlu0 %2920
    %2922 = vrot.lane.b32.xlu0 %v2737, 28
    %v2923 = vpop.permute.xlu0 %2922
    %2924 = vrot.lane.b32.xlu0 %v2738, 28
    %v2925 = vpop.permute.xlu0 %2924
    %2926 = vrot.lane.b32.xlu0 %v2739, 28
    %v2927 = vpop.permute.xlu0 %2926
    %2928 = vrot.lane.b32.xlu0 %v2740, 28
    %v2929 = vpop.permute.xlu0 %2928
    %2930 = vrot.lane.b32.xlu0 %v2741, 28
    %v2931 = vpop.permute.xlu0 %2930
    %2932 = vrot.lane.b32.xlu0 %v2742, 28
    %v2933 = vpop.permute.xlu0 %2932
    %2934 = vrot.lane.b32.xlu0 %v2743, 28
    %v2935 = vpop.permute.xlu0 %2934
    %vm3000 = vcmask 261344
    %3001 = vst.msk [vmem:[#allocation3] sm:$0xff] %vm3000, %v2809
    %3002 = vst.msk [vmem:[#allocation3 + $0x8] sm:$0xff] %vm3000, %v2811
    %3003 = vst.msk [vmem:[#allocation3 + $0x10] sm:$0xff] %vm3000, %v2813
    %3004 = vst.msk [vmem:[#allocation3 + $0x18] sm:$0xff] %vm3000, %v2815
    %3005 = vst.msk [vmem:[#allocation3 + $0x20] sm:$0xff] %vm3000, %v2817
    %3006 = vst.msk [vmem:[#allocation3 + $0x28] sm:$0xff] %vm3000, %v2819
    %3007 = vst.msk [vmem:[#allocation3 + $0x30] sm:$0xff] %vm3000, %v2821
    %3008 = vst.msk [vmem:[#allocation3 + $0x38] sm:$0xff] %vm3000, %v2823
    %3009 = vst.msk [vmem:[#allocation3 + $0x40] sm:$0xff] %vm3000, %v2825
    %3010 = vst.msk [vmem:[#allocation3 + $0x48] sm:$0xff] %vm3000, %v2827
    %3011 = vst.msk [vmem:[#allocation3 + $0x50] sm:$0xff] %vm3000, %v2829
    %3012 = vst.msk [vmem:[#allocation3 + $0x58] sm:$0xff] %vm3000, %v2831
    %3013 = vst.msk [vmem:[#allocation3 + $0x60] sm:$0xff] %vm3000, %v2833
    %3014 = vst.msk [vmem:[#allocation3 + $0x68] sm:$0xff] %vm3000, %v2835
    %3015 = vst.msk [vmem:[#allocation3 + $0x70] sm:$0xff] %vm3000, %v2837
    %3016 = vst.msk [vmem:[#allocation3 + $0x78] sm:$0xff] %vm3000, %v2839
    %3017 = vst.msk [vmem:[#allocation3 + $0x80] sm:$0xff] %vm3000, %v2841
    %3018 = vst.msk [vmem:[#allocation3 + $0x88] sm:$0xff] %vm3000, %v2843
    %3019 = vst.msk [vmem:[#allocation3 + $0x90] sm:$0xff] %vm3000, %v2845
    %3020 = vst.msk [vmem:[#allocation3 + $0x98] sm:$0xff] %vm3000, %v2847
    %3021 = vst.msk [vmem:[#allocation3 + $0xa0] sm:$0xff] %vm3000, %v2849
    %3022 = vst.msk [vmem:[#allocation3 + $0xa8] sm:$0xff] %vm3000, %v2851
    %3023 = vst.msk [vmem:[#allocation3 + $0xb0] sm:$0xff] %vm3000, %v2853
    %3024 = vst.msk [vmem:[#allocation3 + $0xb8] sm:$0xff] %vm3000, %v2855
    %3025 = vst.msk [vmem:[#allocation3 + $0xc0] sm:$0xff] %vm3000, %v2857
    %3026 = vst.msk [vmem:[#allocation3 + $0xc8] sm:$0xff] %vm3000, %v2859
    %3027 = vst.msk [vmem:[#allocation3 + $0xd0] sm:$0xff] %vm3000, %v2861
    %3028 = vst.msk [vmem:[#allocation3 + $0xd8] sm:$0xff] %vm3000, %v2863
    %3029 = vst.msk [vmem:[#allocation3 + $0xe0] sm:$0xff] %vm3000, %v2865
    %3030 = vst.msk [vmem:[#allocation3 + $0xe8] sm:$0xff] %vm3000, %v2867
    %3031 = vst.msk [vmem:[#allocation3 + $0xf0] sm:$0xff] %vm3000, %v2869
    %3032 = vst.msk [vmem:[#allocation3 + $0xf8] sm:$0xff] %vm3000, %v2871
    %3033 = vst.msk [vmem:[#allocation3 + $0x100] sm:$0xff] %vm3000, %v2873
    %3034 = vst.msk [vmem:[#allocation3 + $0x108] sm:$0xff] %vm3000, %v2875
    %3035 = vst.msk [vmem:[#allocation3 + $0x110] sm:$0xff] %vm3000, %v2877
    %3036 = vst.msk [vmem:[#allocation3 + $0x118] sm:$0xff] %vm3000, %v2879
    %3037 = vst.msk [vmem:[#allocation3 + $0x120] sm:$0xff] %vm3000, %v2881
    %3038 = vst.msk [vmem:[#allocation3 + $0x128] sm:$0xff] %vm3000, %v2883
    %3039 = vst.msk [vmem:[#allocation3 + $0x130] sm:$0xff] %vm3000, %v2885
    %3040 = vst.msk [vmem:[#allocation3 + $0x138] sm:$0xff] %vm3000, %v2887
    %3041 = vst.msk [vmem:[#allocation3 + $0x140] sm:$0xff] %vm3000, %v2889
    %3042 = vst.msk [vmem:[#allocation3 + $0x148] sm:$0xff] %vm3000, %v2891
    %3043 = vst.msk [vmem:[#allocation3 + $0x150] sm:$0xff] %vm3000, %v2893
    %3044 = vst.msk [vmem:[#allocation3 + $0x158] sm:$0xff] %vm3000, %v2895
    %3045 = vst.msk [vmem:[#allocation3 + $0x160] sm:$0xff] %vm3000, %v2897
    %3046 = vst.msk [vmem:[#allocation3 + $0x168] sm:$0xff] %vm3000, %v2899
    %3047 = vst.msk [vmem:[#allocation3 + $0x170] sm:$0xff] %vm3000, %v2901
    %3048 = vst.msk [vmem:[#allocation3 + $0x178] sm:$0xff] %vm3000, %v2903
    %3049 = vst.msk [vmem:[#allocation3 + $0x180] sm:$0xff] %vm3000, %v2905
    %3050 = vst.msk [vmem:[#allocation3 + $0x188] sm:$0xff] %vm3000, %v2907
    %3051 = vst.msk [vmem:[#allocation3 + $0x190] sm:$0xff] %vm3000, %v2909
    %3052 = vst.msk [vmem:[#allocation3 + $0x198] sm:$0xff] %vm3000, %v2911
    %3053 = vst.msk [vmem:[#allocation3 + $0x1a0] sm:$0xff] %vm3000, %v2913
    %3054 = vst.msk [vmem:[#allocation3 + $0x1a8] sm:$0xff] %vm3000, %v2915
    %3055 = vst.msk [vmem:[#allocation3 + $0x1b0] sm:$0xff] %vm3000, %v2917
    %3056 = vst.msk [vmem:[#allocation3 + $0x1b8] sm:$0xff] %vm3000, %v2919
    %3057 = vst.msk [vmem:[#allocation3 + $0x1c0] sm:$0xff] %vm3000, %v2921
    %3058 = vst.msk [vmem:[#allocation3 + $0x1c8] sm:$0xff] %vm3000, %v2923
    %3059 = vst.msk [vmem:[#allocation3 + $0x1d0] sm:$0xff] %vm3000, %v2925
    %3060 = vst.msk [vmem:[#allocation3 + $0x1d8] sm:$0xff] %vm3000, %v2927
    %3061 = vst.msk [vmem:[#allocation3 + $0x1e0] sm:$0xff] %vm3000, %v2929
    %3062 = vst.msk [vmem:[#allocation3 + $0x1e8] sm:$0xff] %vm3000, %v2931
    %3063 = vst.msk [vmem:[#allocation3 + $0x1f0] sm:$0xff] %vm3000, %v2933
    %3064 = vst.msk [vmem:[#allocation3 + $0x1f8] sm:$0xff] %vm3000, %v2935
    %v3065 = vld [vmem:[%s2294 + $0x2] sm:$0xff]
    %v3066 = vld [vmem:[%s2294 + $0xa] sm:$0xff]
    %v3067 = vld [vmem:[%s2294 + $0x1a] sm:$0xff]
    %v3068 = vld [vmem:[%s2294 + $0x22] sm:$0xff]
    %v3069 = vld [vmem:[%s2294 + $0x32] sm:$0xff]
    %v3070 = vld [vmem:[%s2294 + $0x3a] sm:$0xff]
    %v3071 = vld [vmem:[%s2294 + $0x4a] sm:$0xff]
    %v3072 = vld [vmem:[%s2294 + $0x52] sm:$0xff]
    %v3073 = vld [vmem:[%s2294 + $0x62] sm:$0xff]
    %v3074 = vld [vmem:[%s2294 + $0x6a] sm:$0xff]
    %v3075 = vld [vmem:[%s2294 + $0x7a] sm:$0xff]
    %v3076 = vld [vmem:[%s2294 + $0x82] sm:$0xff]
    %v3077 = vld [vmem:[%s2294 + $0x92] sm:$0xff]
    %v3078 = vld [vmem:[%s2294 + $0x9a] sm:$0xff]
    %v3079 = vld [vmem:[%s2294 + $0xaa] sm:$0xff]
    %v3080 = vld [vmem:[%s2294 + $0xb2] sm:$0xff]
    %v3081 = vld [vmem:[%s2294 + $0xc2] sm:$0xff]
    %v3082 = vld [vmem:[%s2294 + $0xca] sm:$0xff]
    %v3083 = vld [vmem:[%s2294 + $0xda] sm:$0xff]
    %v3084 = vld [vmem:[%s2294 + $0xe2] sm:$0xff]
    %v3085 = vld [vmem:[%s2294 + $0xf2] sm:$0xff]
    %v3086 = vld [vmem:[%s2294 + $0xfa] sm:$0xff]
    %v3087 = vld [vmem:[%s2294 + $0x10a] sm:$0xff]
    %v3088 = vld [vmem:[%s2294 + $0x112] sm:$0xff]
    %v3089 = vld [vmem:[%s2294 + $0x122] sm:$0xff]
    %v3090 = vld [vmem:[%s2294 + $0x12a] sm:$0xff]
    %v3091 = vld [vmem:[%s2294 + $0x13a] sm:$0xff]
    %v3092 = vld [vmem:[%s2294 + $0x142] sm:$0xff]
    %v3093 = vld [vmem:[%s2294 + $0x152] sm:$0xff]
    %v3094 = vld [vmem:[%s2294 + $0x15a] sm:$0xff]
    %v3095 = vld [vmem:[%s2294 + $0x16a] sm:$0xff]
    %v3096 = vld [vmem:[%s2294 + $0x172] sm:$0xff]
    %v3097 = vld [vmem:[%s2294 + $0x1b2] sm:$0xff]
    %v3098 = vld [vmem:[%s2294 + $0x1ba] sm:$0xff]
    %v3099 = vld [vmem:[%s2294 + $0x1ca] sm:$0xff]
    %v3100 = vld [vmem:[%s2294 + $0x1d2] sm:$0xff]
    %v3101 = vld [vmem:[%s2294 + $0x1e2] sm:$0xff]
    %v3102 = vld [vmem:[%s2294 + $0x1ea] sm:$0xff]
    %v3103 = vld [vmem:[%s2294 + $0x1fa] sm:$0xff]
    %v3104 = vld [vmem:[%s2294 + $0x202] sm:$0xff]
    %v3105 = vld [vmem:[%s2294 + $0x212] sm:$0xff]
    %v3106 = vld [vmem:[%s2294 + $0x21a] sm:$0xff]
    %v3107 = vld [vmem:[%s2294 + $0x22a] sm:$0xff]
    %v3108 = vld [vmem:[%s2294 + $0x232] sm:$0xff]
    %v3109 = vld [vmem:[%s2294 + $0x242] sm:$0xff]
    %v3110 = vld [vmem:[%s2294 + $0x24a] sm:$0xff]
    %v3111 = vld [vmem:[%s2294 + $0x25a] sm:$0xff]
    %v3112 = vld [vmem:[%s2294 + $0x262] sm:$0xff]
    %v3113 = vld [vmem:[%s2294 + $0x272] sm:$0xff]
    %v3114 = vld [vmem:[%s2294 + $0x27a] sm:$0xff]
    %v3115 = vld [vmem:[%s2294 + $0x28a] sm:$0xff]
    %v3116 = vld [vmem:[%s2294 + $0x292] sm:$0xff]
    %v3117 = vld [vmem:[%s2294 + $0x2a2] sm:$0xff]
    %v3118 = vld [vmem:[%s2294 + $0x2aa] sm:$0xff]
    %v3119 = vld [vmem:[%s2294 + $0x2ba] sm:$0xff]
    %v3120 = vld [vmem:[%s2294 + $0x2c2] sm:$0xff]
    %v3121 = vld [vmem:[%s2294 + $0x2d2] sm:$0xff]
    %v3122 = vld [vmem:[%s2294 + $0x2da] sm:$0xff]
    %v3123 = vld [vmem:[%s2294 + $0x2ea] sm:$0xff]
    %v3124 = vld [vmem:[%s2294 + $0x2f2] sm:$0xff]
    %v3125 = vld [vmem:[%s2294 + $0x302] sm:$0xff]
    %v3126 = vld [vmem:[%s2294 + $0x30a] sm:$0xff]
    %v3127 = vld [vmem:[%s2294 + $0x31a] sm:$0xff]
    %v3128 = vld [vmem:[%s2294 + $0x322] sm:$0xff]
    %3193 = vrot.lane.b32.xlu0 %v3065, 32
    %v3194 = vpop.permute.xlu0 %3193
    %3195 = vrot.lane.b32.xlu0 %v3066, 32
    %v3196 = vpop.permute.xlu0 %3195
    %3197 = vrot.lane.b32.xlu0 %v3067, 32
    %v3198 = vpop.permute.xlu0 %3197
    %3199 = vrot.lane.b32.xlu0 %v3068, 32
    %v3200 = vpop.permute.xlu0 %3199
    %3201 = vrot.lane.b32.xlu0 %v3069, 32
    %v3202 = vpop.permute.xlu0 %3201
    %3203 = vrot.lane.b32.xlu0 %v3070, 32
    %v3204 = vpop.permute.xlu0 %3203
    %3205 = vrot.lane.b32.xlu0 %v3071, 32
    %v3206 = vpop.permute.xlu0 %3205
    %3207 = vrot.lane.b32.xlu0 %v3072, 32
    %v3208 = vpop.permute.xlu0 %3207
    %3209 = vrot.lane.b32.xlu0 %v3073, 32
    %v3210 = vpop.permute.xlu0 %3209
    %3211 = vrot.lane.b32.xlu0 %v3074, 32
    %v3212 = vpop.permute.xlu0 %3211
    %3213 = vrot.lane.b32.xlu0 %v3075, 32
    %v3214 = vpop.permute.xlu0 %3213
    %3215 = vrot.lane.b32.xlu0 %v3076, 32
    %v3216 = vpop.permute.xlu0 %3215
    %3217 = vrot.lane.b32.xlu0 %v3077, 32
    %v3218 = vpop.permute.xlu0 %3217
    %3219 = vrot.lane.b32.xlu0 %v3078, 32
    %v3220 = vpop.permute.xlu0 %3219
    %3221 = vrot.lane.b32.xlu0 %v3079, 32
    %v3222 = vpop.permute.xlu0 %3221
    %3223 = vrot.lane.b32.xlu0 %v3080, 32
    %v3224 = vpop.permute.xlu0 %3223
    %3225 = vrot.lane.b32.xlu0 %v3081, 32
    %v3226 = vpop.permute.xlu0 %3225
    %3227 = vrot.lane.b32.xlu0 %v3082, 32
    %v3228 = vpop.permute.xlu0 %3227
    %3229 = vrot.lane.b32.xlu0 %v3083, 32
    %v3230 = vpop.permute.xlu0 %3229
    %3231 = vrot.lane.b32.xlu0 %v3084, 32
    %v3232 = vpop.permute.xlu0 %3231
    %3233 = vrot.lane.b32.xlu0 %v3085, 32
    %v3234 = vpop.permute.xlu0 %3233
    %3235 = vrot.lane.b32.xlu0 %v3086, 32
    %v3236 = vpop.permute.xlu0 %3235
    %3237 = vrot.lane.b32.xlu0 %v3087, 32
    %v3238 = vpop.permute.xlu0 %3237
    %3239 = vrot.lane.b32.xlu0 %v3088, 32
    %v3240 = vpop.permute.xlu0 %3239
    %3241 = vrot.lane.b32.xlu0 %v3089, 32
    %v3242 = vpop.permute.xlu0 %3241
    %3243 = vrot.lane.b32.xlu0 %v3090, 32
    %v3244 = vpop.permute.xlu0 %3243
    %3245 = vrot.lane.b32.xlu0 %v3091, 32
    %v3246 = vpop.permute.xlu0 %3245
    %3247 = vrot.lane.b32.xlu0 %v3092, 32
    %v3248 = vpop.permute.xlu0 %3247
    %3249 = vrot.lane.b32.xlu0 %v3093, 32
    %v3250 = vpop.permute.xlu0 %3249
    %3251 = vrot.lane.b32.xlu0 %v3094, 32
    %v3252 = vpop.permute.xlu0 %3251
    %3253 = vrot.lane.b32.xlu0 %v3095, 32
    %v3254 = vpop.permute.xlu0 %3253
    %3255 = vrot.lane.b32.xlu0 %v3096, 32
    %v3256 = vpop.permute.xlu0 %3255
    %3257 = vrot.lane.b32.xlu0 %v3097, 32
    %v3258 = vpop.permute.xlu0 %3257
    %3259 = vrot.lane.b32.xlu0 %v3098, 32
    %v3260 = vpop.permute.xlu0 %3259
    %3261 = vrot.lane.b32.xlu0 %v3099, 32
    %v3262 = vpop.permute.xlu0 %3261
    %3263 = vrot.lane.b32.xlu0 %v3100, 32
    %v3264 = vpop.permute.xlu0 %3263
    %3265 = vrot.lane.b32.xlu0 %v3101, 32
    %v3266 = vpop.permute.xlu0 %3265
    %3267 = vrot.lane.b32.xlu0 %v3102, 32
    %v3268 = vpop.permute.xlu0 %3267
    %3269 = vrot.lane.b32.xlu0 %v3103, 32
    %v3270 = vpop.permute.xlu0 %3269
    %3271 = vrot.lane.b32.xlu0 %v3104, 32
    %v3272 = vpop.permute.xlu0 %3271
    %3273 = vrot.lane.b32.xlu0 %v3105, 32
    %v3274 = vpop.permute.xlu0 %3273
    %3275 = vrot.lane.b32.xlu0 %v3106, 32
    %v3276 = vpop.permute.xlu0 %3275
    %3277 = vrot.lane.b32.xlu0 %v3107, 32
    %v3278 = vpop.permute.xlu0 %3277
    %3279 = vrot.lane.b32.xlu0 %v3108, 32
    %v3280 = vpop.permute.xlu0 %3279
    %3281 = vrot.lane.b32.xlu0 %v3109, 32
    %v3282 = vpop.permute.xlu0 %3281
    %3283 = vrot.lane.b32.xlu0 %v3110, 32
    %v3284 = vpop.permute.xlu0 %3283
    %3285 = vrot.lane.b32.xlu0 %v3111, 32
    %v3286 = vpop.permute.xlu0 %3285
    %3287 = vrot.lane.b32.xlu0 %v3112, 32
    %v3288 = vpop.permute.xlu0 %3287
    %3289 = vrot.lane.b32.xlu0 %v3113, 32
    %v3290 = vpop.permute.xlu0 %3289
    %3291 = vrot.lane.b32.xlu0 %v3114, 32
    %v3292 = vpop.permute.xlu0 %3291
    %3293 = vrot.lane.b32.xlu0 %v3115, 32
    %v3294 = vpop.permute.xlu0 %3293
    %3295 = vrot.lane.b32.xlu0 %v3116, 32
    %v3296 = vpop.permute.xlu0 %3295
    %3297 = vrot.lane.b32.xlu0 %v3117, 32
    %v3298 = vpop.permute.xlu0 %3297
    %3299 = vrot.lane.b32.xlu0 %v3118, 32
    %v3300 = vpop.permute.xlu0 %3299
    %3301 = vrot.lane.b32.xlu0 %v3119, 32
    %v3302 = vpop.permute.xlu0 %3301
    %3303 = vrot.lane.b32.xlu0 %v3120, 32
    %v3304 = vpop.permute.xlu0 %3303
    %3305 = vrot.lane.b32.xlu0 %v3121, 32
    %v3306 = vpop.permute.xlu0 %3305
    %3307 = vrot.lane.b32.xlu0 %v3122, 32
    %v3308 = vpop.permute.xlu0 %3307
    %3309 = vrot.lane.b32.xlu0 %v3123, 32
    %v3310 = vpop.permute.xlu0 %3309
    %3311 = vrot.lane.b32.xlu0 %v3124, 32
    %v3312 = vpop.permute.xlu0 %3311
    %3313 = vrot.lane.b32.xlu0 %v3125, 32
    %v3314 = vpop.permute.xlu0 %3313
    %3315 = vrot.lane.b32.xlu0 %v3126, 32
    %v3316 = vpop.permute.xlu0 %3315
    %3317 = vrot.lane.b32.xlu0 %v3127, 32
    %v3318 = vpop.permute.xlu0 %3317
    %3319 = vrot.lane.b32.xlu0 %v3128, 32
    %v3320 = vpop.permute.xlu0 %3319
    %vm3385 = vcmask 294144
    %3386 = vst.msk [vmem:[#allocation3] sm:$0xff] %vm3385, %v3194
    %3387 = vst.msk [vmem:[#allocation3 + $0x8] sm:$0xff] %vm3385, %v3196
    %3388 = vst.msk [vmem:[#allocation3 + $0x10] sm:$0xff] %vm3385, %v3198
    %3389 = vst.msk [vmem:[#allocation3 + $0x18] sm:$0xff] %vm3385, %v3200
    %3390 = vst.msk [vmem:[#allocation3 + $0x20] sm:$0xff] %vm3385, %v3202
    %3391 = vst.msk [vmem:[#allocation3 + $0x28] sm:$0xff] %vm3385, %v3204
    %3392 = vst.msk [vmem:[#allocation3 + $0x30] sm:$0xff] %vm3385, %v3206
    %3393 = vst.msk [vmem:[#allocation3 + $0x38] sm:$0xff] %vm3385, %v3208
    %3394 = vst.msk [vmem:[#allocation3 + $0x40] sm:$0xff] %vm3385, %v3210
    %3395 = vst.msk [vmem:[#allocation3 + $0x48] sm:$0xff] %vm3385, %v3212
    %3396 = vst.msk [vmem:[#allocation3 + $0x50] sm:$0xff] %vm3385, %v3214
    %3397 = vst.msk [vmem:[#allocation3 + $0x58] sm:$0xff] %vm3385, %v3216
    %3398 = vst.msk [vmem:[#allocation3 + $0x60] sm:$0xff] %vm3385, %v3218
    %3399 = vst.msk [vmem:[#allocation3 + $0x68] sm:$0xff] %vm3385, %v3220
    %3400 = vst.msk [vmem:[#allocation3 + $0x70] sm:$0xff] %vm3385, %v3222
    %3401 = vst.msk [vmem:[#allocation3 + $0x78] sm:$0xff] %vm3385, %v3224
    %3402 = vst.msk [vmem:[#allocation3 + $0x80] sm:$0xff] %vm3385, %v3226
    %3403 = vst.msk [vmem:[#allocation3 + $0x88] sm:$0xff] %vm3385, %v3228
    %3404 = vst.msk [vmem:[#allocation3 + $0x90] sm:$0xff] %vm3385, %v3230
    %3405 = vst.msk [vmem:[#allocation3 + $0x98] sm:$0xff] %vm3385, %v3232
    %3406 = vst.msk [vmem:[#allocation3 + $0xa0] sm:$0xff] %vm3385, %v3234
    %3407 = vst.msk [vmem:[#allocation3 + $0xa8] sm:$0xff] %vm3385, %v3236
    %3408 = vst.msk [vmem:[#allocation3 + $0xb0] sm:$0xff] %vm3385, %v3238
    %3409 = vst.msk [vmem:[#allocation3 + $0xb8] sm:$0xff] %vm3385, %v3240
    %3410 = vst.msk [vmem:[#allocation3 + $0xc0] sm:$0xff] %vm3385, %v3242
    %3411 = vst.msk [vmem:[#allocation3 + $0xc8] sm:$0xff] %vm3385, %v3244
    %3412 = vst.msk [vmem:[#allocation3 + $0xd0] sm:$0xff] %vm3385, %v3246
    %3413 = vst.msk [vmem:[#allocation3 + $0xd8] sm:$0xff] %vm3385, %v3248
    %3414 = vst.msk [vmem:[#allocation3 + $0xe0] sm:$0xff] %vm3385, %v3250
    %3415 = vst.msk [vmem:[#allocation3 + $0xe8] sm:$0xff] %vm3385, %v3252
    %3416 = vst.msk [vmem:[#allocation3 + $0xf0] sm:$0xff] %vm3385, %v3254
    %3417 = vst.msk [vmem:[#allocation3 + $0xf8] sm:$0xff] %vm3385, %v3256
    %3418 = vst.msk [vmem:[#allocation3 + $0x100] sm:$0xff] %vm3385, %v3258
    %3419 = vst.msk [vmem:[#allocation3 + $0x108] sm:$0xff] %vm3385, %v3260
    %3420 = vst.msk [vmem:[#allocation3 + $0x110] sm:$0xff] %vm3385, %v3262
    %3421 = vst.msk [vmem:[#allocation3 + $0x118] sm:$0xff] %vm3385, %v3264
    %3422 = vst.msk [vmem:[#allocation3 + $0x120] sm:$0xff] %vm3385, %v3266
    %3423 = vst.msk [vmem:[#allocation3 + $0x128] sm:$0xff] %vm3385, %v3268
    %3424 = vst.msk [vmem:[#allocation3 + $0x130] sm:$0xff] %vm3385, %v3270
    %3425 = vst.msk [vmem:[#allocation3 + $0x138] sm:$0xff] %vm3385, %v3272
    %3426 = vst.msk [vmem:[#allocation3 + $0x140] sm:$0xff] %vm3385, %v3274
    %3427 = vst.msk [vmem:[#allocation3 + $0x148] sm:$0xff] %vm3385, %v3276
    %3428 = vst.msk [vmem:[#allocation3 + $0x150] sm:$0xff] %vm3385, %v3278
    %3429 = vst.msk [vmem:[#allocation3 + $0x158] sm:$0xff] %vm3385, %v3280
    %3430 = vst.msk [vmem:[#allocation3 + $0x160] sm:$0xff] %vm3385, %v3282
    %3431 = vst.msk [vmem:[#allocation3 + $0x168] sm:$0xff] %vm3385, %v3284
    %3432 = vst.msk [vmem:[#allocation3 + $0x170] sm:$0xff] %vm3385, %v3286
    %3433 = vst.msk [vmem:[#allocation3 + $0x178] sm:$0xff] %vm3385, %v3288
    %3434 = vst.msk [vmem:[#allocation3 + $0x180] sm:$0xff] %vm3385, %v3290
    %3435 = vst.msk [vmem:[#allocation3 + $0x188] sm:$0xff] %vm3385, %v3292
    %3436 = vst.msk [vmem:[#allocation3 + $0x190] sm:$0xff] %vm3385, %v3294
    %3437 = vst.msk [vmem:[#allocation3 + $0x198] sm:$0xff] %vm3385, %v3296
    %3438 = vst.msk [vmem:[#allocation3 + $0x1a0] sm:$0xff] %vm3385, %v3298
    %3439 = vst.msk [vmem:[#allocation3 + $0x1a8] sm:$0xff] %vm3385, %v3300
    %3440 = vst.msk [vmem:[#allocation3 + $0x1b0] sm:$0xff] %vm3385, %v3302
    %3441 = vst.msk [vmem:[#allocation3 + $0x1b8] sm:$0xff] %vm3385, %v3304
    %3442 = vst.msk [vmem:[#allocation3 + $0x1c0] sm:$0xff] %vm3385, %v3306
    %3443 = vst.msk [vmem:[#allocation3 + $0x1c8] sm:$0xff] %vm3385, %v3308
    %3444 = vst.msk [vmem:[#allocation3 + $0x1d0] sm:$0xff] %vm3385, %v3310
    %3445 = vst.msk [vmem:[#allocation3 + $0x1d8] sm:$0xff] %vm3385, %v3312
    %3446 = vst.msk [vmem:[#allocation3 + $0x1e0] sm:$0xff] %vm3385, %v3314
    %3447 = vst.msk [vmem:[#allocation3 + $0x1e8] sm:$0xff] %vm3385, %v3316
    %3448 = vst.msk [vmem:[#allocation3 + $0x1f0] sm:$0xff] %vm3385, %v3318
    %3449 = vst.msk [vmem:[#allocation3 + $0x1f8] sm:$0xff] %vm3385, %v3320
    %v3450 = vld [vmem:[#allocation3] sm:$0xff]
    %v3451 = vld [vmem:[#allocation3 + $0x8] sm:$0xff]
    %v3452 = vld [vmem:[#allocation3 + $0x10] sm:$0xff]
    %v3453 = vld [vmem:[#allocation3 + $0x18] sm:$0xff]
    %v3454 = vld [vmem:[#allocation3 + $0x20] sm:$0xff]
    %v3455 = vld [vmem:[#allocation3 + $0x28] sm:$0xff]
    %v3456 = vld [vmem:[#allocation3 + $0x30] sm:$0xff]
    %v3457 = vld [vmem:[#allocation3 + $0x38] sm:$0xff]
    %v3458 = vld [vmem:[#allocation3 + $0x40] sm:$0xff]
    %v3459 = vld [vmem:[#allocation3 + $0x48] sm:$0xff]
    %v3460 = vld [vmem:[#allocation3 + $0x50] sm:$0xff]
    %v3461 = vld [vmem:[#allocation3 + $0x58] sm:$0xff]
    %v3462 = vld [vmem:[#allocation3 + $0x60] sm:$0xff]
    %v3463 = vld [vmem:[#allocation3 + $0x68] sm:$0xff]
    %v3464 = vld [vmem:[#allocation3 + $0x70] sm:$0xff]
    %v3465 = vld [vmem:[#allocation3 + $0x78] sm:$0xff]
    %v3466 = vld [vmem:[#allocation3 + $0x80] sm:$0xff]
    %v3467 = vld [vmem:[#allocation3 + $0x88] sm:$0xff]
    %v3468 = vld [vmem:[#allocation3 + $0x90] sm:$0xff]
    %v3469 = vld [vmem:[#allocation3 + $0x98] sm:$0xff]
    %v3470 = vld [vmem:[#allocation3 + $0xa0] sm:$0xff]
    %v3471 = vld [vmem:[#allocation3 + $0xa8] sm:$0xff]
    %v3472 = vld [vmem:[#allocation3 + $0xb0] sm:$0xff]
    %v3473 = vld [vmem:[#allocation3 + $0xb8] sm:$0xff]
    %v3474 = vld [vmem:[#allocation3 + $0xc0] sm:$0xff]
    %v3475 = vld [vmem:[#allocation3 + $0xc8] sm:$0xff]
    %v3476 = vld [vmem:[#allocation3 + $0xd0] sm:$0xff]
    %v3477 = vld [vmem:[#allocation3 + $0xd8] sm:$0xff]
    %v3478 = vld [vmem:[#allocation3 + $0xe0] sm:$0xff]
    %v3479 = vld [vmem:[#allocation3 + $0xe8] sm:$0xff]
    %v3480 = vld [vmem:[#allocation3 + $0xf0] sm:$0xff]
    %v3481 = vld [vmem:[#allocation3 + $0xf8] sm:$0xff]
    %v3482 = vld [vmem:[#allocation3 + $0x100] sm:$0xff]
    %v3483 = vld [vmem:[#allocation3 + $0x108] sm:$0xff]
    %v3484 = vld [vmem:[#allocation3 + $0x110] sm:$0xff]
    %v3485 = vld [vmem:[#allocation3 + $0x118] sm:$0xff]
    %v3486 = vld [vmem:[#allocation3 + $0x120] sm:$0xff]
    %v3487 = vld [vmem:[#allocation3 + $0x128] sm:$0xff]
    %v3488 = vld [vmem:[#allocation3 + $0x130] sm:$0xff]
    %v3489 = vld [vmem:[#allocation3 + $0x138] sm:$0xff]
    %v3490 = vld [vmem:[#allocation3 + $0x140] sm:$0xff]
    %v3491 = vld [vmem:[#allocation3 + $0x148] sm:$0xff]
    %v3492 = vld [vmem:[#allocation3 + $0x150] sm:$0xff]
    %v3493 = vld [vmem:[#allocation3 + $0x158] sm:$0xff]
    %v3494 = vld [vmem:[#allocation3 + $0x160] sm:$0xff]
    %v3495 = vld [vmem:[#allocation3 + $0x168] sm:$0xff]
    %v3496 = vld [vmem:[#allocation3 + $0x170] sm:$0xff]
    %v3497 = vld [vmem:[#allocation3 + $0x178] sm:$0xff]
    %v3498 = vld [vmem:[#allocation3 + $0x180] sm:$0xff]
    %v3499 = vld [vmem:[#allocation3 + $0x188] sm:$0xff]
    %v3500 = vld [vmem:[#allocation3 + $0x190] sm:$0xff]
    %v3501 = vld [vmem:[#allocation3 + $0x198] sm:$0xff]
    %v3502 = vld [vmem:[#allocation3 + $0x1a0] sm:$0xff]
    %v3503 = vld [vmem:[#allocation3 + $0x1a8] sm:$0xff]
    %v3504 = vld [vmem:[#allocation3 + $0x1b0] sm:$0xff]
    %v3505 = vld [vmem:[#allocation3 + $0x1b8] sm:$0xff]
    %v3506 = vld [vmem:[#allocation3 + $0x1c0] sm:$0xff]
    %v3507 = vld [vmem:[#allocation3 + $0x1c8] sm:$0xff]
    %v3508 = vld [vmem:[#allocation3 + $0x1d0] sm:$0xff]
    %v3509 = vld [vmem:[#allocation3 + $0x1d8] sm:$0xff]
    %v3510 = vld [vmem:[#allocation3 + $0x1e0] sm:$0xff]
    %v3511 = vld [vmem:[#allocation3 + $0x1e8] sm:$0xff]
    %v3512 = vld [vmem:[#allocation3 + $0x1f0] sm:$0xff]
    %v3513 = vld [vmem:[#allocation3 + $0x1f8] sm:$0xff]
    %v3514 = vld [vmem:[%s1] sm:$0xff]
    %v3515 = vld [vmem:[%s1 + $0x8] sm:$0xff]
    %v3516 = vld [vmem:[%s1 + $0x10] sm:$0xff]
    %v3517 = vld [vmem:[%s1 + $0x18] sm:$0xff]
    %v3518 = vld [vmem:[%s1 + $0x20] sm:$0xf]
    %vm3519 = vcmask 293888
    %v3521 = vsel %vm3519, %v3450, 0
    %v3524 = vsel %vm3519, %v3451, 0
    %v3527 = vsel %vm3519, %v3452, 0
    %v3530 = vsel %vm3519, %v3453, 0
    %v3533 = vsel %vm3519, %v3454, 0
    %v3536 = vsel %vm3519, %v3455, 0
    %v3539 = vsel %vm3519, %v3456, 0
    %v3542 = vsel %vm3519, %v3457, 0
    %v3545 = vsel %vm3519, %v3458, 0
    %v3548 = vsel %vm3519, %v3459, 0
    %v3551 = vsel %vm3519, %v3460, 0
    %v3554 = vsel %vm3519, %v3461, 0
    %v3557 = vsel %vm3519, %v3462, 0
    %v3560 = vsel %vm3519, %v3463, 0
    %v3563 = vsel %vm3519, %v3464, 0
    %v3566 = vsel %vm3519, %v3465, 0
    %v3569 = vsel %vm3519, %v3466, 0
    %v3572 = vsel %vm3519, %v3467, 0
    %v3575 = vsel %vm3519, %v3468, 0
    %v3578 = vsel %vm3519, %v3469, 0
    %v3581 = vsel %vm3519, %v3470, 0
    %v3584 = vsel %vm3519, %v3471, 0
    %v3587 = vsel %vm3519, %v3472, 0
    %v3590 = vsel %vm3519, %v3473, 0
    %v3593 = vsel %vm3519, %v3474, 0
    %v3596 = vsel %vm3519, %v3475, 0
    %v3599 = vsel %vm3519, %v3476, 0
    %v3602 = vsel %vm3519, %v3477, 0
    %v3605 = vsel %vm3519, %v3478, 0
    %v3608 = vsel %vm3519, %v3479, 0
    %v3611 = vsel %vm3519, %v3480, 0
    %v3614 = vsel %vm3519, %v3481, 0
    %v3617 = vsel %vm3519, %v3482, 0
    %v3620 = vsel %vm3519, %v3483, 0
    %v3623 = vsel %vm3519, %v3484, 0
    %v3626 = vsel %vm3519, %v3485, 0
    %v3629 = vsel %vm3519, %v3486, 0
    %v3632 = vsel %vm3519, %v3487, 0
    %v3635 = vsel %vm3519, %v3488, 0
    %v3638 = vsel %vm3519, %v3489, 0
    %v3641 = vsel %vm3519, %v3490, 0
    %v3644 = vsel %vm3519, %v3491, 0
    %v3647 = vsel %vm3519, %v3492, 0
    %v3650 = vsel %vm3519, %v3493, 0
    %v3653 = vsel %vm3519, %v3494, 0
    %v3656 = vsel %vm3519, %v3495, 0
    %v3659 = vsel %vm3519, %v3496, 0
    %v3662 = vsel %vm3519, %v3497, 0
    %v3665 = vsel %vm3519, %v3498, 0
    %v3668 = vsel %vm3519, %v3499, 0
    %v3671 = vsel %vm3519, %v3500, 0
    %v3674 = vsel %vm3519, %v3501, 0
    %v3677 = vsel %vm3519, %v3502, 0
    %v3680 = vsel %vm3519, %v3503, 0
    %v3683 = vsel %vm3519, %v3504, 0
    %v3686 = vsel %vm3519, %v3505, 0
    %v3689 = vsel %vm3519, %v3506, 0
    %v3692 = vsel %vm3519, %v3507, 0
    %v3695 = vsel %vm3519, %v3508, 0
    %v3698 = vsel %vm3519, %v3509, 0
    %v3701 = vsel %vm3519, %v3510, 0
    %v3704 = vsel %vm3519, %v3511, 0
    %v3707 = vsel %vm3519, %v3512, 0
    %v3710 = vsel %vm3519, %v3513, 0
    %vm3712 = vcmask 1043456
    %v3714 = vsel %vm3712, %v3518, 0
    %3716 = vmatprep.subr.mxu0 0.0
    %3717 = vmatpush1.msra.mxu0 0.0
    %3718 = vmatprep.subr.mxu0 0.0
    %3719 = vmatpush1.msra.mxu0 0.0
    %3720 = vmatprep.subr.mxu0 0.0
    %3721 = vmatpush1.msra.mxu0 0.0
    %3722 = vmatprep.subr.mxu0 0.0
    %3723 = vmatpush1.msra.mxu0 0.0
    %3724 = vmatprep.subr.mxu0 0.0
    %3725 = vmatpush1.msra.mxu0 0.0
    %3726 = vmatprep.subr.mxu0 0.0
    %3727 = vmatpush1.msra.mxu0 0.0
    %3728 = vmatprep.subr.mxu0 0.0
    %3729 = vmatpush1.msra.mxu0 0.0
    %3730 = vmatprep.subr.mxu0 0.0
    %3731 = vmatpush1.msra.mxu0 0.0
    %3732 = vmatprep.subr.mxu0 0.0
    %3733 = vmatpush1.msra.mxu0 0.0
    %3734 = vmatprep.subr.mxu0 0.0
    %3735 = vmatpush1.msra.mxu0 0.0
    %3736 = vmatprep.subr.mxu0 0.0
    %3737 = vmatpush1.msra.mxu0 0.0
    %3738 = vmatprep.subr.mxu0 0.0
    %3739 = vmatpush1.msra.mxu0 %v3714
    %3740 = vmatprep.subr.mxu0 0.0
    %3741 = vmatpush1.msra.mxu0 %v3517
    %3742 = vmatprep.subr.mxu0 0.0
    %3743 = vmatpush1.msra.mxu0 %v3516
    %3744 = vmatprep.subr.mxu0 0.0
    %3745 = vmatpush1.msra.mxu0 %v3515
    %3746 = vmatprep.subr.mxu0 0.0
    %3747 = vmatpush1.msra.mxu0 %v3514
    %3748 = vmatprep.subr.mxu0 0.0
    %3749 = vmatpush2.msra.mxu0 0.0
    %3750 = vmatprep.subr.mxu0 0.0
    %3751 = vmatpush2.msra.mxu0 0.0
    %3752 = vmatprep.subr.mxu0 0.0
    %3753 = vmatpush2.msra.mxu0 0.0
    %3754 = vmatprep.subr.mxu0 0.0
    %3755 = vmatpush2.msra.mxu0 0.0
    %3756 = vmatprep.subr.mxu0 0.0
    %3757 = vmatpush2.msra.mxu0 0.0
    %3758 = vmatprep.subr.mxu0 0.0
    %3759 = vmatpush2.msra.mxu0 0.0
    %3760 = vmatprep.subr.mxu0 0.0
    %3761 = vmatpush2.msra.mxu0 0.0
    %3762 = vmatprep.subr.mxu0 0.0
    %3763 = vmatpush2.msra.mxu0 0.0
    %3764 = vmatprep.subr.mxu0 0.0
    %3765 = vmatpush2.msra.mxu0 0.0
    %3766 = vmatprep.subr.mxu0 0.0
    %3767 = vmatpush2.msra.mxu0 0.0
    %3768 = vmatprep.subr.mxu0 0.0
    %3769 = vmatpush2.msra.mxu0 0.0
    %3770 = vmatprep.subr.mxu0 0.0
    %3771 = vmatpush2.msra.mxu0 0.0
    %3772 = vmatprep.subr.mxu0 0.0
    %3773 = vmatpush2.msra.mxu0 0.0
    %3774 = vmatprep.subr.mxu0 0.0
    %3775 = vmatpush2.msra.mxu0 0.0
    %3776 = vmatprep.subr.mxu0 0.0
    %3777 = vmatpush2.msra.mxu0 0.0
    %3778 = vmatprep.subr.mxu0 0.0
    %3779 = vmatpush2.msra.mxu0 0.0
    %3780 = vmatprep.mubr.f32.mxu0 0.0
    %3781 = vmatmul.mubr.f32.gmra.mxu0 %v3521
    %v3782 = vpop.f32.mrf.mxu0
    %v3783 = vadd.f32 0.0, %v3782
    %v3784 = vpop.f32.mrf.mxu0
    %3785 = vmatprep.mubr.f32.mxu0 0.0
    %3786 = vmatmul.mubr.f32.gmra.mxu0 %v3524
    %v3787 = vpop.f32.mrf.mxu0
    %v3788 = vadd.f32 0.0, %v3787
    %v3789 = vpop.f32.mrf.mxu0
    %3790 = vmatprep.mubr.f32.mxu0 0.0
    %3791 = vmatmul.mubr.f32.gmra.mxu0 %v3527
    %v3792 = vpop.f32.mrf.mxu0
    %v3793 = vadd.f32 0.0, %v3792
    %v3794 = vpop.f32.mrf.mxu0
    %3795 = vmatprep.mubr.f32.mxu0 0.0
    %3796 = vmatmul.mubr.f32.gmra.mxu0 %v3530
    %v3797 = vpop.f32.mrf.mxu0
    %v3798 = vadd.f32 0.0, %v3797
    %v3799 = vpop.f32.mrf.mxu0
    %3800 = vmatprep.mubr.f32.mxu0 0.0
    %3801 = vmatmul.mubr.f32.gmra.mxu0 %v3533
    %v3802 = vpop.f32.mrf.mxu0
    %v3803 = vadd.f32 0.0, %v3802
    %v3804 = vpop.f32.mrf.mxu0
    %3805 = vmatprep.mubr.f32.mxu0 0.0
    %3806 = vmatmul.mubr.f32.gmra.mxu0 %v3536
    %v3807 = vpop.f32.mrf.mxu0
    %v3808 = vadd.f32 0.0, %v3807
    %v3809 = vpop.f32.mrf.mxu0
    %3810 = vmatprep.mubr.f32.mxu0 0.0
    %3811 = vmatmul.mubr.f32.gmra.mxu0 %v3539
    %v3812 = vpop.f32.mrf.mxu0
    %v3813 = vadd.f32 0.0, %v3812
    %v3814 = vpop.f32.mrf.mxu0
    %3815 = vmatprep.mubr.f32.mxu0 0.0
    %3816 = vmatmul.mubr.f32.gmra.mxu0 %v3542
    %v3817 = vpop.f32.mrf.mxu0
    %v3818 = vadd.f32 0.0, %v3817
    %v3819 = vpop.f32.mrf.mxu0
    %3820 = vmatprep.mubr.f32.mxu0 0.0
    %3821 = vmatmul.mubr.f32.gmra.mxu0 %v3545
    %v3822 = vpop.f32.mrf.mxu0
    %v3823 = vadd.f32 0.0, %v3822
    %v3824 = vpop.f32.mrf.mxu0
    %3825 = vmatprep.mubr.f32.mxu0 0.0
    %3826 = vmatmul.mubr.f32.gmra.mxu0 %v3548
    %v3827 = vpop.f32.mrf.mxu0
    %v3828 = vadd.f32 0.0, %v3827
    %v3829 = vpop.f32.mrf.mxu0
    %3830 = vmatprep.mubr.f32.mxu0 0.0
    %3831 = vmatmul.mubr.f32.gmra.mxu0 %v3551
    %v3832 = vpop.f32.mrf.mxu0
    %v3833 = vadd.f32 0.0, %v3832
    %v3834 = vpop.f32.mrf.mxu0
    %3835 = vmatprep.mubr.f32.mxu0 0.0
    %3836 = vmatmul.mubr.f32.gmra.mxu0 %v3554
    %v3837 = vpop.f32.mrf.mxu0
    %v3838 = vadd.f32 0.0, %v3837
    %v3839 = vpop.f32.mrf.mxu0
    %3840 = vmatprep.mubr.f32.mxu0 0.0
    %3841 = vmatmul.mubr.f32.gmra.mxu0 %v3557
    %v3842 = vpop.f32.mrf.mxu0
    %v3843 = vadd.f32 0.0, %v3842
    %v3844 = vpop.f32.mrf.mxu0
    %3845 = vmatprep.mubr.f32.mxu0 0.0
    %3846 = vmatmul.mubr.f32.gmra.mxu0 %v3560
    %v3847 = vpop.f32.mrf.mxu0
    %v3848 = vadd.f32 0.0, %v3847
    %v3849 = vpop.f32.mrf.mxu0
    %3850 = vmatprep.mubr.f32.mxu0 0.0
    %3851 = vmatmul.mubr.f32.gmra.mxu0 %v3563
    %v3852 = vpop.f32.mrf.mxu0
    %v3853 = vadd.f32 0.0, %v3852
    %v3854 = vpop.f32.mrf.mxu0
    %3855 = vmatprep.mubr.f32.mxu0 0.0
    %3856 = vmatmul.mubr.f32.gmra.mxu0 %v3566
    %v3857 = vpop.f32.mrf.mxu0
    %v3858 = vadd.f32 0.0, %v3857
    %v3859 = vpop.f32.mrf.mxu0
    %3860 = vmatprep.mubr.f32.mxu0 0.0
    %3861 = vmatmul.mubr.f32.gmra.mxu0 %v3569
    %v3862 = vpop.f32.mrf.mxu0
    %v3863 = vadd.f32 0.0, %v3862
    %v3864 = vpop.f32.mrf.mxu0
    %3865 = vmatprep.mubr.f32.mxu0 0.0
    %3866 = vmatmul.mubr.f32.gmra.mxu0 %v3572
    %v3867 = vpop.f32.mrf.mxu0
    %v3868 = vadd.f32 0.0, %v3867
    %v3869 = vpop.f32.mrf.mxu0
    %3870 = vmatprep.mubr.f32.mxu0 0.0
    %3871 = vmatmul.mubr.f32.gmra.mxu0 %v3575
    %v3872 = vpop.f32.mrf.mxu0
    %v3873 = vadd.f32 0.0, %v3872
    %v3874 = vpop.f32.mrf.mxu0
    %3875 = vmatprep.mubr.f32.mxu0 0.0
    %3876 = vmatmul.mubr.f32.gmra.mxu0 %v3578
    %v3877 = vpop.f32.mrf.mxu0
    %v3878 = vadd.f32 0.0, %v3877
    %v3879 = vpop.f32.mrf.mxu0
    %3880 = vmatprep.mubr.f32.mxu0 0.0
    %3881 = vmatmul.mubr.f32.gmra.mxu0 %v3581
    %v3882 = vpop.f32.mrf.mxu0
    %v3883 = vadd.f32 0.0, %v3882
    %v3884 = vpop.f32.mrf.mxu0
    %3885 = vmatprep.mubr.f32.mxu0 0.0
    %3886 = vmatmul.mubr.f32.gmra.mxu0 %v3584
    %v3887 = vpop.f32.mrf.mxu0
    %v3888 = vadd.f32 0.0, %v3887
    %v3889 = vpop.f32.mrf.mxu0
    %3890 = vmatprep.mubr.f32.mxu0 0.0
    %3891 = vmatmul.mubr.f32.gmra.mxu0 %v3587
    %v3892 = vpop.f32.mrf.mxu0
    %v3893 = vadd.f32 0.0, %v3892
    %v3894 = vpop.f32.mrf.mxu0
    %3895 = vmatprep.mubr.f32.mxu0 0.0
    %3896 = vmatmul.mubr.f32.gmra.mxu0 %v3590
    %v3897 = vpop.f32.mrf.mxu0
    %v3898 = vadd.f32 0.0, %v3897
    %v3899 = vpop.f32.mrf.mxu0
    %3900 = vmatprep.mubr.f32.mxu0 0.0
    %3901 = vmatmul.mubr.f32.gmra.mxu0 %v3593
    %v3902 = vpop.f32.mrf.mxu0
    %v3903 = vadd.f32 0.0, %v3902
    %v3904 = vpop.f32.mrf.mxu0
    %3905 = vmatprep.mubr.f32.mxu0 0.0
    %3906 = vmatmul.mubr.f32.gmra.mxu0 %v3596
    %v3907 = vpop.f32.mrf.mxu0
    %v3908 = vadd.f32 0.0, %v3907
    %v3909 = vpop.f32.mrf.mxu0
    %3910 = vmatprep.mubr.f32.mxu0 0.0
    %3911 = vmatmul.mubr.f32.gmra.mxu0 %v3599
    %v3912 = vpop.f32.mrf.mxu0
    %v3913 = vadd.f32 0.0, %v3912
    %v3914 = vpop.f32.mrf.mxu0
    %3915 = vmatprep.mubr.f32.mxu0 0.0
    %3916 = vmatmul.mubr.f32.gmra.mxu0 %v3602
    %v3917 = vpop.f32.mrf.mxu0
    %v3918 = vadd.f32 0.0, %v3917
    %v3919 = vpop.f32.mrf.mxu0
    %3920 = vmatprep.mubr.f32.mxu0 0.0
    %3921 = vmatmul.mubr.f32.gmra.mxu0 %v3605
    %v3922 = vpop.f32.mrf.mxu0
    %v3923 = vadd.f32 0.0, %v3922
    %v3924 = vpop.f32.mrf.mxu0
    %3925 = vmatprep.mubr.f32.mxu0 0.0
    %3926 = vmatmul.mubr.f32.gmra.mxu0 %v3608
    %v3927 = vpop.f32.mrf.mxu0
    %v3928 = vadd.f32 0.0, %v3927
    %v3929 = vpop.f32.mrf.mxu0
    %3930 = vmatprep.mubr.f32.mxu0 0.0
    %3931 = vmatmul.mubr.f32.gmra.mxu0 %v3611
    %v3932 = vpop.f32.mrf.mxu0
    %v3933 = vadd.f32 0.0, %v3932
    %v3934 = vpop.f32.mrf.mxu0
    %3935 = vmatprep.mubr.f32.mxu0 0.0
    %3936 = vmatmul.mubr.f32.gmra.mxu0 %v3614
    %v3937 = vpop.f32.mrf.mxu0
    %v3938 = vadd.f32 0.0, %v3937
    %v3939 = vpop.f32.mrf.mxu0
    %3940 = vmatprep.mubr.f32.mxu0 0.0
    %3941 = vmatmul.mubr.f32.gmra.mxu0 %v3617
    %v3942 = vpop.f32.mrf.mxu0
    %v3943 = vadd.f32 0.0, %v3942
    %v3944 = vpop.f32.mrf.mxu0
    %3945 = vmatprep.mubr.f32.mxu0 0.0
    %3946 = vmatmul.mubr.f32.gmra.mxu0 %v3620
    %v3947 = vpop.f32.mrf.mxu0
    %v3948 = vadd.f32 0.0, %v3947
    %v3949 = vpop.f32.mrf.mxu0
    %3950 = vmatprep.mubr.f32.mxu0 0.0
    %3951 = vmatmul.mubr.f32.gmra.mxu0 %v3623
    %v3952 = vpop.f32.mrf.mxu0
    %v3953 = vadd.f32 0.0, %v3952
    %v3954 = vpop.f32.mrf.mxu0
    %3955 = vmatprep.mubr.f32.mxu0 0.0
    %3956 = vmatmul.mubr.f32.gmra.mxu0 %v3626
    %v3957 = vpop.f32.mrf.mxu0
    %v3958 = vadd.f32 0.0, %v3957
    %v3959 = vpop.f32.mrf.mxu0
    %3960 = vmatprep.mubr.f32.mxu0 0.0
    %3961 = vmatmul.mubr.f32.gmra.mxu0 %v3629
    %v3962 = vpop.f32.mrf.mxu0
    %v3963 = vadd.f32 0.0, %v3962
    %v3964 = vpop.f32.mrf.mxu0
    %3965 = vmatprep.mubr.f32.mxu0 0.0
    %3966 = vmatmul.mubr.f32.gmra.mxu0 %v3632
    %v3967 = vpop.f32.mrf.mxu0
    %v3968 = vadd.f32 0.0, %v3967
    %v3969 = vpop.f32.mrf.mxu0
    %3970 = vmatprep.mubr.f32.mxu0 0.0
    %3971 = vmatmul.mubr.f32.gmra.mxu0 %v3635
    %v3972 = vpop.f32.mrf.mxu0
    %v3973 = vadd.f32 0.0, %v3972
    %v3974 = vpop.f32.mrf.mxu0
    %3975 = vmatprep.mubr.f32.mxu0 0.0
    %3976 = vmatmul.mubr.f32.gmra.mxu0 %v3638
    %v3977 = vpop.f32.mrf.mxu0
    %v3978 = vadd.f32 0.0, %v3977
    %v3979 = vpop.f32.mrf.mxu0
    %3980 = vmatprep.mubr.f32.mxu0 0.0
    %3981 = vmatmul.mubr.f32.gmra.mxu0 %v3641
    %v3982 = vpop.f32.mrf.mxu0
    %v3983 = vadd.f32 0.0, %v3982
    %v3984 = vpop.f32.mrf.mxu0
    %3985 = vmatprep.mubr.f32.mxu0 0.0
    %3986 = vmatmul.mubr.f32.gmra.mxu0 %v3644
    %v3987 = vpop.f32.mrf.mxu0
    %v3988 = vadd.f32 0.0, %v3987
    %v3989 = vpop.f32.mrf.mxu0
    %3990 = vmatprep.mubr.f32.mxu0 0.0
    %3991 = vmatmul.mubr.f32.gmra.mxu0 %v3647
    %v3992 = vpop.f32.mrf.mxu0
    %v3993 = vadd.f32 0.0, %v3992
    %v3994 = vpop.f32.mrf.mxu0
    %3995 = vmatprep.mubr.f32.mxu0 0.0
    %3996 = vmatmul.mubr.f32.gmra.mxu0 %v3650
    %v3997 = vpop.f32.mrf.mxu0
    %v3998 = vadd.f32 0.0, %v3997
    %v3999 = vpop.f32.mrf.mxu0
    %4000 = vmatprep.mubr.f32.mxu0 0.0
    %4001 = vmatmul.mubr.f32.gmra.mxu0 %v3653
    %v4002 = vpop.f32.mrf.mxu0
    %v4003 = vadd.f32 0.0, %v4002
    %v4004 = vpop.f32.mrf.mxu0
    %4005 = vmatprep.mubr.f32.mxu0 0.0
    %4006 = vmatmul.mubr.f32.gmra.mxu0 %v3656
    %v4007 = vpop.f32.mrf.mxu0
    %v4008 = vadd.f32 0.0, %v4007
    %v4009 = vpop.f32.mrf.mxu0
    %4010 = vmatprep.mubr.f32.mxu0 0.0
    %4011 = vmatmul.mubr.f32.gmra.mxu0 %v3659
    %v4012 = vpop.f32.mrf.mxu0
    %v4013 = vadd.f32 0.0, %v4012
    %v4014 = vpop.f32.mrf.mxu0
    %4015 = vmatprep.mubr.f32.mxu0 0.0
    %4016 = vmatmul.mubr.f32.gmra.mxu0 %v3662
    %v4017 = vpop.f32.mrf.mxu0
    %v4018 = vadd.f32 0.0, %v4017
    %v4019 = vpop.f32.mrf.mxu0
    %4020 = vmatprep.mubr.f32.mxu0 0.0
    %4021 = vmatmul.mubr.f32.gmra.mxu0 %v3665
    %v4022 = vpop.f32.mrf.mxu0
    %v4023 = vadd.f32 0.0, %v4022
    %v4024 = vpop.f32.mrf.mxu0
    %4025 = vmatprep.mubr.f32.mxu0 0.0
    %4026 = vmatmul.mubr.f32.gmra.mxu0 %v3668
    %v4027 = vpop.f32.mrf.mxu0
    %v4028 = vadd.f32 0.0, %v4027
    %v4029 = vpop.f32.mrf.mxu0
    %4030 = vmatprep.mubr.f32.mxu0 0.0
    %4031 = vmatmul.mubr.f32.gmra.mxu0 %v3671
    %v4032 = vpop.f32.mrf.mxu0
    %v4033 = vadd.f32 0.0, %v4032
    %v4034 = vpop.f32.mrf.mxu0
    %4035 = vmatprep.mubr.f32.mxu0 0.0
    %4036 = vmatmul.mubr.f32.gmra.mxu0 %v3674
    %v4037 = vpop.f32.mrf.mxu0
    %v4038 = vadd.f32 0.0, %v4037
    %v4039 = vpop.f32.mrf.mxu0
    %4040 = vmatprep.mubr.f32.mxu0 0.0
    %4041 = vmatmul.mubr.f32.gmra.mxu0 %v3677
    %v4042 = vpop.f32.mrf.mxu0
    %v4043 = vadd.f32 0.0, %v4042
    %v4044 = vpop.f32.mrf.mxu0
    %4045 = vmatprep.mubr.f32.mxu0 0.0
    %4046 = vmatmul.mubr.f32.gmra.mxu0 %v3680
    %v4047 = vpop.f32.mrf.mxu0
    %v4048 = vadd.f32 0.0, %v4047
    %v4049 = vpop.f32.mrf.mxu0
    %4050 = vmatprep.mubr.f32.mxu0 0.0
    %4051 = vmatmul.mubr.f32.gmra.mxu0 %v3683
    %v4052 = vpop.f32.mrf.mxu0
    %v4053 = vadd.f32 0.0, %v4052
    %v4054 = vpop.f32.mrf.mxu0
    %4055 = vmatprep.mubr.f32.mxu0 0.0
    %4056 = vmatmul.mubr.f32.gmra.mxu0 %v3686
    %v4057 = vpop.f32.mrf.mxu0
    %v4058 = vadd.f32 0.0, %v4057
    %v4059 = vpop.f32.mrf.mxu0
    %4060 = vmatprep.mubr.f32.mxu0 0.0
    %4061 = vmatmul.mubr.f32.gmra.mxu0 %v3689
    %v4062 = vpop.f32.mrf.mxu0
    %v4063 = vadd.f32 0.0, %v4062
    %v4064 = vpop.f32.mrf.mxu0
    %4065 = vmatprep.mubr.f32.mxu0 0.0
    %4066 = vmatmul.mubr.f32.gmra.mxu0 %v3692
    %v4067 = vpop.f32.mrf.mxu0
    %v4068 = vadd.f32 0.0, %v4067
    %v4069 = vpop.f32.mrf.mxu0
    %4070 = vmatprep.mubr.f32.mxu0 0.0
    %4071 = vmatmul.mubr.f32.gmra.mxu0 %v3695
    %v4072 = vpop.f32.mrf.mxu0
    %v4073 = vadd.f32 0.0, %v4072
    %v4074 = vpop.f32.mrf.mxu0
    %4075 = vmatprep.mubr.f32.mxu0 0.0
    %4076 = vmatmul.mubr.f32.gmra.mxu0 %v3698
    %v4077 = vpop.f32.mrf.mxu0
    %v4078 = vadd.f32 0.0, %v4077
    %v4079 = vpop.f32.mrf.mxu0
    %4080 = vmatprep.mubr.f32.mxu0 0.0
    %4081 = vmatmul.mubr.f32.gmra.mxu0 %v3701
    %v4082 = vpop.f32.mrf.mxu0
    %v4083 = vadd.f32 0.0, %v4082
    %v4084 = vpop.f32.mrf.mxu0
    %4085 = vmatprep.mubr.f32.mxu0 0.0
    %4086 = vmatmul.mubr.f32.gmra.mxu0 %v3704
    %v4087 = vpop.f32.mrf.mxu0
    %v4088 = vadd.f32 0.0, %v4087
    %v4089 = vpop.f32.mrf.mxu0
    %4090 = vmatprep.mubr.f32.mxu0 0.0
    %4091 = vmatmul.mubr.f32.gmra.mxu0 %v3707
    %v4092 = vpop.f32.mrf.mxu0
    %v4093 = vadd.f32 0.0, %v4092
    %v4094 = vpop.f32.mrf.mxu0
    %4095 = vmatprep.mubr.f32.mxu0 0.0
    %4096 = vmatmul.mubr.f32.gmra.mxu0 %v3710
    %v4097 = vpop.f32.mrf.mxu0
    %v4098 = vadd.f32 0.0, %v4097
    %v4099 = vpop.f32.mrf.mxu0
    %4100 = vdwg.mxu0
    %v4101 = vmax.f32 %v3783, 0.0
    %v4102 = vmax.f32 %v3788, 0.0
    %v4103 = vmax.f32 %v3793, 0.0
    %v4104 = vmax.f32 %v3798, 0.0
    %v4105 = vmax.f32 %v3803, 0.0
    %v4106 = vmax.f32 %v3808, 0.0
    %v4107 = vmax.f32 %v3813, 0.0
    %v4108 = vmax.f32 %v3818, 0.0
    %v4109 = vmax.f32 %v3823, 0.0
    %v4110 = vmax.f32 %v3828, 0.0
    %v4111 = vmax.f32 %v3833, 0.0
    %v4112 = vmax.f32 %v3838, 0.0
    %v4113 = vmax.f32 %v3843, 0.0
    %v4114 = vmax.f32 %v3848, 0.0
    %v4115 = vmax.f32 %v3853, 0.0
    %v4116 = vmax.f32 %v3858, 0.0
    %v4117 = vmax.f32 %v3863, 0.0
    %v4118 = vmax.f32 %v3868, 0.0
    %v4119 = vmax.f32 %v3873, 0.0
    %v4120 = vmax.f32 %v3878, 0.0
    %v4121 = vmax.f32 %v3883, 0.0
    %v4122 = vmax.f32 %v3888, 0.0
    %v4123 = vmax.f32 %v3893, 0.0
    %v4124 = vmax.f32 %v3898, 0.0
    %v4125 = vmax.f32 %v3903, 0.0
    %v4126 = vmax.f32 %v3908, 0.0
    %v4127 = vmax.f32 %v3913, 0.0
    %v4128 = vmax.f32 %v3918, 0.0
    %v4129 = vmax.f32 %v3923, 0.0
    %v4130 = vmax.f32 %v3928, 0.0
    %v4131 = vmax.f32 %v3933, 0.0
    %v4132 = vmax.f32 %v3938, 0.0
    %v4133 = vmax.f32 %v3943, 0.0
    %v4134 = vmax.f32 %v3948, 0.0
    %v4135 = vmax.f32 %v3953, 0.0
    %v4136 = vmax.f32 %v3958, 0.0
    %v4137 = vmax.f32 %v3963, 0.0
    %v4138 = vmax.f32 %v3968, 0.0
    %v4139 = vmax.f32 %v3973, 0.0
    %v4140 = vmax.f32 %v3978, 0.0
    %v4141 = vmax.f32 %v3983, 0.0
    %v4142 = vmax.f32 %v3988, 0.0
    %v4143 = vmax.f32 %v3993, 0.0
    %v4144 = vmax.f32 %v3998, 0.0
    %v4145 = vmax.f32 %v4003, 0.0
    %v4146 = vmax.f32 %v4008, 0.0
    %v4147 = vmax.f32 %v4013, 0.0
    %v4148 = vmax.f32 %v4018, 0.0
    %v4149 = vmax.f32 %v4023, 0.0
    %v4150 = vmax.f32 %v4028, 0.0
    %v4151 = vmax.f32 %v4033, 0.0
    %v4152 = vmax.f32 %v4038, 0.0
    %v4153 = vmax.f32 %v4043, 0.0
    %v4154 = vmax.f32 %v4048, 0.0
    %v4155 = vmax.f32 %v4053, 0.0
    %v4156 = vmax.f32 %v4058, 0.0
    %v4157 = vmax.f32 %v4063, 0.0
    %v4158 = vmax.f32 %v4068, 0.0
    %v4159 = vmax.f32 %v4073, 0.0
    %v4160 = vmax.f32 %v4078, 0.0
    %v4161 = vmax.f32 %v4083, 0.0
    %v4162 = vmax.f32 %v4088, 0.0
    %v4163 = vmax.f32 %v4093, 0.0
    %v4164 = vmax.f32 %v4098, 0.0
    %vm4165 = vcmask 64512
    %4166 = vst.msk [vmem:[#allocation4] sm:$0xff] %vm4165, 0.0
    %4167 = vst.msk [vmem:[#allocation4 + $0x8] sm:$0xff] %vm4165, 0.0
    %vm4168 = vcmask 58368
    %4169 = vst.msk [vmem:[#allocation4 + $0x10] sm:$0x3] %vm4168, 0.0
    %4170 = vst.msk [vmem:[#allocation4 + $0x1b0] sm:$0xff] %vm4165, 0.0
    %4171 = vst.msk [vmem:[#allocation4 + $0x1b8] sm:$0xff] %vm4165, 0.0
    %4172 = vst.msk [vmem:[#allocation4 + $0x1c0] sm:$0x3] %vm4168, 0.0
    %s4173 = scalar_lea.vmem [#allocation4], 408
    %4174 = vst.msk [vmem:[%s4173] sm:$0xff] %vm4165, 0.0
    %4175 = vst.msk [vmem:[%s4173 + $0x8] sm:$0xff] %vm4165, 0.0
    %4176 = vst.msk [vmem:[%s4173 + $0x10] sm:$0x3] %vm4168, 0.0
    %4177 = vst.msk [vmem:[%s4173 + $0x1b0] sm:$0xff] %vm4165, 0.0
    %4178 = vst.msk [vmem:[%s4173 + $0x1b8] sm:$0xff] %vm4165, 0.0
    %4179 = vst.msk [vmem:[%s4173 + $0x1c0] sm:$0x3] %vm4168, 0.0
    %vm4180 = vcmask 57344
    %4181 = vst.msk [vmem:[#allocation4] sm:$0x1] %vm4180, 0.0
    %4182 = vst.msk [vmem:[#allocation4 + $0x18] sm:$0x1] %vm4180, 0.0
    %4183 = vst.msk [vmem:[#allocation4 + $0x30] sm:$0x1] %vm4180, 0.0
    %4184 = vst.msk [vmem:[#allocation4 + $0x48] sm:$0x1] %vm4180, 0.0
    %4185 = vst.msk [vmem:[#allocation4 + $0x60] sm:$0x1] %vm4180, 0.0
    %4186 = vst.msk [vmem:[#allocation4 + $0x78] sm:$0x1] %vm4180, 0.0
    %4187 = vst.msk [vmem:[#allocation4 + $0x90] sm:$0x1] %vm4180, 0.0
    %4188 = vst.msk [vmem:[#allocation4 + $0xa8] sm:$0x1] %vm4180, 0.0
    %4189 = vst.msk [vmem:[#allocation4 + $0xc0] sm:$0x1] %vm4180, 0.0
    %4190 = vst.msk [vmem:[#allocation4 + $0xd8] sm:$0x1] %vm4180, 0.0
    %4191 = vst.msk [vmem:[#allocation4 + $0xf0] sm:$0x1] %vm4180, 0.0
    %4192 = vst.msk [vmem:[#allocation4 + $0x108] sm:$0x1] %vm4180, 0.0
    %4193 = vst.msk [vmem:[#allocation4 + $0x120] sm:$0x1] %vm4180, 0.0
    %4194 = vst.msk [vmem:[#allocation4 + $0x138] sm:$0x1] %vm4180, 0.0
    %4195 = vst.msk [vmem:[#allocation4 + $0x150] sm:$0x1] %vm4180, 0.0
    %4196 = vst.msk [vmem:[#allocation4 + $0x168] sm:$0x1] %vm4180, 0.0
    %4197 = vst.msk [vmem:[#allocation4 + $0x180] sm:$0x1] %vm4180, 0.0
    %4198 = vst.msk [vmem:[#allocation4 + $0x198] sm:$0x1] %vm4180, 0.0
    %4199 = vst.msk [vmem:[#allocation4 + $0x1b0] sm:$0x1] %vm4180, 0.0
    %4200 = vst.msk [vmem:[#allocation4 + $0x1c8] sm:$0x1] %vm4180, 0.0
    %4201 = vst.msk [vmem:[#allocation4 + $0x1e0] sm:$0x1] %vm4180, 0.0
    %4202 = vst.msk [vmem:[#allocation4 + $0x1f8] sm:$0x1] %vm4180, 0.0
    %4203 = vst.msk [vmem:[#allocation4 + $0x210] sm:$0x1] %vm4180, 0.0
    %4204 = vst.msk [vmem:[#allocation4 + $0x228] sm:$0x1] %vm4180, 0.0
    %4205 = vst.msk [vmem:[#allocation4 + $0x240] sm:$0x1] %vm4180, 0.0
    %4206 = vst.msk [vmem:[#allocation4 + $0x258] sm:$0x1] %vm4180, 0.0
    %4207 = vst.msk [vmem:[#allocation4 + $0x270] sm:$0x1] %vm4180, 0.0
    %4208 = vst.msk [vmem:[#allocation4 + $0x288] sm:$0x1] %vm4180, 0.0
    %4209 = vst.msk [vmem:[#allocation4 + $0x2a0] sm:$0x1] %vm4180, 0.0
    %4210 = vst.msk [vmem:[#allocation4 + $0x2b8] sm:$0x1] %vm4180, 0.0
    %4211 = vst.msk [vmem:[#allocation4 + $0x2d0] sm:$0x1] %vm4180, 0.0
    %4212 = vst.msk [vmem:[#allocation4 + $0x2e8] sm:$0x1] %vm4180, 0.0
    %4213 = vst.msk [vmem:[#allocation4 + $0x300] sm:$0x1] %vm4180, 0.0
    %4214 = vst.msk [vmem:[#allocation4 + $0x318] sm:$0x1] %vm4180, 0.0
    %4215 = vst.msk [vmem:[#allocation4 + $0x330] sm:$0x1] %vm4180, 0.0
    %4216 = vst.msk [vmem:[#allocation4 + $0x348] sm:$0x1] %vm4180, 0.0
    %4217 = vst.msk [vmem:[#allocation4 + $0x11] sm:$0x1] %vm4180, 0.0
    %4218 = vst.msk [vmem:[#allocation4 + $0x29] sm:$0x1] %vm4180, 0.0
    %4219 = vst.msk [vmem:[#allocation4 + $0x41] sm:$0x1] %vm4180, 0.0
    %4220 = vst.msk [vmem:[#allocation4 + $0x59] sm:$0x1] %vm4180, 0.0
    %4221 = vst.msk [vmem:[#allocation4 + $0x71] sm:$0x1] %vm4180, 0.0
    %4222 = vst.msk [vmem:[#allocation4 + $0x89] sm:$0x1] %vm4180, 0.0
    %4223 = vst.msk [vmem:[#allocation4 + $0xa1] sm:$0x1] %vm4180, 0.0
    %4224 = vst.msk [vmem:[#allocation4 + $0xb9] sm:$0x1] %vm4180, 0.0
    %4225 = vst.msk [vmem:[#allocation4 + $0xd1] sm:$0x1] %vm4180, 0.0
    %4226 = vst.msk [vmem:[#allocation4 + $0xe9] sm:$0x1] %vm4180, 0.0
    %4227 = vst.msk [vmem:[#allocation4 + $0x101] sm:$0x1] %vm4180, 0.0
    %4228 = vst.msk [vmem:[#allocation4 + $0x119] sm:$0x1] %vm4180, 0.0
    %4229 = vst.msk [vmem:[#allocation4 + $0x131] sm:$0x1] %vm4180, 0.0
    %4230 = vst.msk [vmem:[#allocation4 + $0x149] sm:$0x1] %vm4180, 0.0
    %4231 = vst.msk [vmem:[#allocation4 + $0x161] sm:$0x1] %vm4180, 0.0
    %4232 = vst.msk [vmem:[#allocation4 + $0x179] sm:$0x1] %vm4180, 0.0
    %4233 = vst.msk [vmem:[#allocation4 + $0x191] sm:$0x1] %vm4180, 0.0
    %4234 = vst.msk [vmem:[#allocation4 + $0x1a9] sm:$0x1] %vm4180, 0.0
    %4235 = vst.msk [vmem:[#allocation4 + $0x1c1] sm:$0x1] %vm4180, 0.0
    %4236 = vst.msk [vmem:[#allocation4 + $0x1d9] sm:$0x1] %vm4180, 0.0
    %4237 = vst.msk [vmem:[#allocation4 + $0x1f1] sm:$0x1] %vm4180, 0.0
    %4238 = vst.msk [vmem:[#allocation4 + $0x209] sm:$0x1] %vm4180, 0.0
    %4239 = vst.msk [vmem:[#allocation4 + $0x221] sm:$0x1] %vm4180, 0.0
    %4240 = vst.msk [vmem:[#allocation4 + $0x239] sm:$0x1] %vm4180, 0.0
    %4241 = vst.msk [vmem:[#allocation4 + $0x251] sm:$0x1] %vm4180, 0.0
    %4242 = vst.msk [vmem:[#allocation4 + $0x269] sm:$0x1] %vm4180, 0.0
    %4243 = vst.msk [vmem:[#allocation4 + $0x281] sm:$0x1] %vm4180, 0.0
    %4244 = vst.msk [vmem:[#allocation4 + $0x299] sm:$0x1] %vm4180, 0.0
    %4245 = vst.msk [vmem:[#allocation4 + $0x2b1] sm:$0x1] %vm4180, 0.0
    %4246 = vst.msk [vmem:[#allocation4 + $0x2c9] sm:$0x1] %vm4180, 0.0
    %4247 = vst.msk [vmem:[#allocation4 + $0x2e1] sm:$0x1] %vm4180, 0.0
    %4248 = vst.msk [vmem:[#allocation4 + $0x2f9] sm:$0x1] %vm4180, 0.0
    %4249 = vst.msk [vmem:[#allocation4 + $0x311] sm:$0x1] %vm4180, 0.0
    %4250 = vst.msk [vmem:[#allocation4 + $0x329] sm:$0x1] %vm4180, 0.0
    %4251 = vst.msk [vmem:[#allocation4 + $0x341] sm:$0x1] %vm4180, 0.0
    %4252 = vst.msk [vmem:[#allocation4 + $0x359] sm:$0x1] %vm4180, 0.0
    %s4253 = scalar_lea.vmem [#allocation4], 24
    %4254 = vst.msk [vmem:[%s4253 + $0x1] sm:$0xff] %vm4165, %v4101
    %4255 = vst.msk [vmem:[%s4253 + $0x9] sm:$0xff] %vm4165, %v4102
    %4256 = vst.msk [vmem:[%s4253 + $0x19] sm:$0xff] %vm4165, %v4103
    %4257 = vst.msk [vmem:[%s4253 + $0x21] sm:$0xff] %vm4165, %v4104
    %4258 = vst.msk [vmem:[%s4253 + $0x31] sm:$0xff] %vm4165, %v4105
    %4259 = vst.msk [vmem:[%s4253 + $0x39] sm:$0xff] %vm4165, %v4106
    %4260 = vst.msk [vmem:[%s4253 + $0x49] sm:$0xff] %vm4165, %v4107
    %4261 = vst.msk [vmem:[%s4253 + $0x51] sm:$0xff] %vm4165, %v4108
    %4262 = vst.msk [vmem:[%s4253 + $0x61] sm:$0xff] %vm4165, %v4109
    %4263 = vst.msk [vmem:[%s4253 + $0x69] sm:$0xff] %vm4165, %v4110
    %4264 = vst.msk [vmem:[%s4253 + $0x79] sm:$0xff] %vm4165, %v4111
    %4265 = vst.msk [vmem:[%s4253 + $0x81] sm:$0xff] %vm4165, %v4112
    %4266 = vst.msk [vmem:[%s4253 + $0x91] sm:$0xff] %vm4165, %v4113
    %4267 = vst.msk [vmem:[%s4253 + $0x99] sm:$0xff] %vm4165, %v4114
    %4268 = vst.msk [vmem:[%s4253 + $0xa9] sm:$0xff] %vm4165, %v4115
    %4269 = vst.msk [vmem:[%s4253 + $0xb1] sm:$0xff] %vm4165, %v4116
    %4270 = vst.msk [vmem:[%s4253 + $0xc1] sm:$0xff] %vm4165, %v4117
    %4271 = vst.msk [vmem:[%s4253 + $0xc9] sm:$0xff] %vm4165, %v4118
    %4272 = vst.msk [vmem:[%s4253 + $0xd9] sm:$0xff] %vm4165, %v4119
    %4273 = vst.msk [vmem:[%s4253 + $0xe1] sm:$0xff] %vm4165, %v4120
    %4274 = vst.msk [vmem:[%s4253 + $0xf1] sm:$0xff] %vm4165, %v4121
    %4275 = vst.msk [vmem:[%s4253 + $0xf9] sm:$0xff] %vm4165, %v4122
    %4276 = vst.msk [vmem:[%s4253 + $0x109] sm:$0xff] %vm4165, %v4123
    %4277 = vst.msk [vmem:[%s4253 + $0x111] sm:$0xff] %vm4165, %v4124
    %4278 = vst.msk [vmem:[%s4253 + $0x121] sm:$0xff] %vm4165, %v4125
    %4279 = vst.msk [vmem:[%s4253 + $0x129] sm:$0xff] %vm4165, %v4126
    %4280 = vst.msk [vmem:[%s4253 + $0x139] sm:$0xff] %vm4165, %v4127
    %4281 = vst.msk [vmem:[%s4253 + $0x141] sm:$0xff] %vm4165, %v4128
    %4282 = vst.msk [vmem:[%s4253 + $0x151] sm:$0xff] %vm4165, %v4129
    %4283 = vst.msk [vmem:[%s4253 + $0x159] sm:$0xff] %vm4165, %v4130
    %4284 = vst.msk [vmem:[%s4253 + $0x169] sm:$0xff] %vm4165, %v4131
    %4285 = vst.msk [vmem:[%s4253 + $0x171] sm:$0xff] %vm4165, %v4132
    %4286 = vst.msk [vmem:[%s4253 + $0x1b1] sm:$0xff] %vm4165, %v4133
    %4287 = vst.msk [vmem:[%s4253 + $0x1b9] sm:$0xff] %vm4165, %v4134
    %4288 = vst.msk [vmem:[%s4253 + $0x1c9] sm:$0xff] %vm4165, %v4135
    %4289 = vst.msk [vmem:[%s4253 + $0x1d1] sm:$0xff] %vm4165, %v4136
    %4290 = vst.msk [vmem:[%s4253 + $0x1e1] sm:$0xff] %vm4165, %v4137
    %4291 = vst.msk [vmem:[%s4253 + $0x1e9] sm:$0xff] %vm4165, %v4138
    %4292 = vst.msk [vmem:[%s4253 + $0x1f9] sm:$0xff] %vm4165, %v4139
    %4293 = vst.msk [vmem:[%s4253 + $0x201] sm:$0xff] %vm4165, %v4140
    %4294 = vst.msk [vmem:[%s4253 + $0x211] sm:$0xff] %vm4165, %v4141
    %4295 = vst.msk [vmem:[%s4253 + $0x219] sm:$0xff] %vm4165, %v4142
    %4296 = vst.msk [vmem:[%s4253 + $0x229] sm:$0xff] %vm4165, %v4143
    %4297 = vst.msk [vmem:[%s4253 + $0x231] sm:$0xff] %vm4165, %v4144
    %4298 = vst.msk [vmem:[%s4253 + $0x241] sm:$0xff] %vm4165, %v4145
    %4299 = vst.msk [vmem:[%s4253 + $0x249] sm:$0xff] %vm4165, %v4146
    %4300 = vst.msk [vmem:[%s4253 + $0x259] sm:$0xff] %vm4165, %v4147
    %4301 = vst.msk [vmem:[%s4253 + $0x261] sm:$0xff] %vm4165, %v4148
    %4302 = vst.msk [vmem:[%s4253 + $0x271] sm:$0xff] %vm4165, %v4149
    %4303 = vst.msk [vmem:[%s4253 + $0x279] sm:$0xff] %vm4165, %v4150
    %4304 = vst.msk [vmem:[%s4253 + $0x289] sm:$0xff] %vm4165, %v4151
    %4305 = vst.msk [vmem:[%s4253 + $0x291] sm:$0xff] %vm4165, %v4152
    %4306 = vst.msk [vmem:[%s4253 + $0x2a1] sm:$0xff] %vm4165, %v4153
    %4307 = vst.msk [vmem:[%s4253 + $0x2a9] sm:$0xff] %vm4165, %v4154
    %4308 = vst.msk [vmem:[%s4253 + $0x2b9] sm:$0xff] %vm4165, %v4155
    %4309 = vst.msk [vmem:[%s4253 + $0x2c1] sm:$0xff] %vm4165, %v4156
    %4310 = vst.msk [vmem:[%s4253 + $0x2d1] sm:$0xff] %vm4165, %v4157
    %4311 = vst.msk [vmem:[%s4253 + $0x2d9] sm:$0xff] %vm4165, %v4158
    %4312 = vst.msk [vmem:[%s4253 + $0x2e9] sm:$0xff] %vm4165, %v4159
    %4313 = vst.msk [vmem:[%s4253 + $0x2f1] sm:$0xff] %vm4165, %v4160
    %4314 = vst.msk [vmem:[%s4253 + $0x301] sm:$0xff] %vm4165, %v4161
    %4315 = vst.msk [vmem:[%s4253 + $0x309] sm:$0xff] %vm4165, %v4162
    %4316 = vst.msk [vmem:[%s4253 + $0x319] sm:$0xff] %vm4165, %v4163
    %4317 = vst.msk [vmem:[%s4253 + $0x321] sm:$0xff] %vm4165, %v4164
    %v4318 = vld [vmem:[#allocation4] sm:$0xff]
    %v4319 = vld [vmem:[#allocation4 + $0x8] sm:$0xff]
    %v4320 = vld [vmem:[#allocation4 + $0x18] sm:$0xff]
    %v4321 = vld [vmem:[#allocation4 + $0x20] sm:$0xff]
    %v4322 = vld [vmem:[#allocation4 + $0x30] sm:$0xff]
    %v4323 = vld [vmem:[#allocation4 + $0x38] sm:$0xff]
    %v4324 = vld [vmem:[#allocation4 + $0x48] sm:$0xff]
    %v4325 = vld [vmem:[#allocation4 + $0x50] sm:$0xff]
    %v4326 = vld [vmem:[#allocation4 + $0x60] sm:$0xff]
    %v4327 = vld [vmem:[#allocation4 + $0x68] sm:$0xff]
    %v4328 = vld [vmem:[#allocation4 + $0x78] sm:$0xff]
    %v4329 = vld [vmem:[#allocation4 + $0x80] sm:$0xff]
    %v4330 = vld [vmem:[#allocation4 + $0x90] sm:$0xff]
    %v4331 = vld [vmem:[#allocation4 + $0x98] sm:$0xff]
    %v4332 = vld [vmem:[#allocation4 + $0xa8] sm:$0xff]
    %v4333 = vld [vmem:[#allocation4 + $0xb0] sm:$0xff]
    %v4334 = vld [vmem:[#allocation4 + $0xc0] sm:$0xff]
    %v4335 = vld [vmem:[#allocation4 + $0xc8] sm:$0xff]
    %v4336 = vld [vmem:[#allocation4 + $0xd8] sm:$0xff]
    %v4337 = vld [vmem:[#allocation4 + $0xe0] sm:$0xff]
    %v4338 = vld [vmem:[#allocation4 + $0xf0] sm:$0xff]
    %v4339 = vld [vmem:[#allocation4 + $0xf8] sm:$0xff]
    %v4340 = vld [vmem:[#allocation4 + $0x108] sm:$0xff]
    %v4341 = vld [vmem:[#allocation4 + $0x110] sm:$0xff]
    %v4342 = vld [vmem:[#allocation4 + $0x120] sm:$0xff]
    %v4343 = vld [vmem:[#allocation4 + $0x128] sm:$0xff]
    %v4344 = vld [vmem:[#allocation4 + $0x138] sm:$0xff]
    %v4345 = vld [vmem:[#allocation4 + $0x140] sm:$0xff]
    %v4346 = vld [vmem:[#allocation4 + $0x150] sm:$0xff]
    %v4347 = vld [vmem:[#allocation4 + $0x158] sm:$0xff]
    %v4348 = vld [vmem:[#allocation4 + $0x168] sm:$0xff]
    %v4349 = vld [vmem:[#allocation4 + $0x170] sm:$0xff]
    %v4350 = vld [vmem:[#allocation4 + $0x1b0] sm:$0xff]
    %v4351 = vld [vmem:[#allocation4 + $0x1b8] sm:$0xff]
    %v4352 = vld [vmem:[#allocation4 + $0x1c8] sm:$0xff]
    %v4353 = vld [vmem:[#allocation4 + $0x1d0] sm:$0xff]
    %v4354 = vld [vmem:[#allocation4 + $0x1e0] sm:$0xff]
    %v4355 = vld [vmem:[#allocation4 + $0x1e8] sm:$0xff]
    %v4356 = vld [vmem:[#allocation4 + $0x1f8] sm:$0xff]
    %v4357 = vld [vmem:[#allocation4 + $0x200] sm:$0xff]
    %v4358 = vld [vmem:[#allocation4 + $0x210] sm:$0xff]
    %v4359 = vld [vmem:[#allocation4 + $0x218] sm:$0xff]
    %v4360 = vld [vmem:[#allocation4 + $0x228] sm:$0xff]
    %v4361 = vld [vmem:[#allocation4 + $0x230] sm:$0xff]
    %v4362 = vld [vmem:[#allocation4 + $0x240] sm:$0xff]
    %v4363 = vld [vmem:[#allocation4 + $0x248] sm:$0xff]
    %v4364 = vld [vmem:[#allocation4 + $0x258] sm:$0xff]
    %v4365 = vld [vmem:[#allocation4 + $0x260] sm:$0xff]
    %v4366 = vld [vmem:[#allocation4 + $0x270] sm:$0xff]
    %v4367 = vld [vmem:[#allocation4 + $0x278] sm:$0xff]
    %v4368 = vld [vmem:[#allocation4 + $0x288] sm:$0xff]
    %v4369 = vld [vmem:[#allocation4 + $0x290] sm:$0xff]
    %v4370 = vld [vmem:[#allocation4 + $0x2a0] sm:$0xff]
    %v4371 = vld [vmem:[#allocation4 + $0x2a8] sm:$0xff]
    %v4372 = vld [vmem:[#allocation4 + $0x2b8] sm:$0xff]
    %v4373 = vld [vmem:[#allocation4 + $0x2c0] sm:$0xff]
    %v4374 = vld [vmem:[#allocation4 + $0x2d0] sm:$0xff]
    %v4375 = vld [vmem:[#allocation4 + $0x2d8] sm:$0xff]
    %v4376 = vld [vmem:[#allocation4 + $0x2e8] sm:$0xff]
    %v4377 = vld [vmem:[#allocation4 + $0x2f0] sm:$0xff]
    %v4378 = vld [vmem:[#allocation4 + $0x300] sm:$0xff]
    %v4379 = vld [vmem:[#allocation4 + $0x308] sm:$0xff]
    %v4380 = vld [vmem:[#allocation4 + $0x318] sm:$0xff]
    %v4381 = vld [vmem:[#allocation4 + $0x320] sm:$0xff]
    %4382 = vst.msk [vmem:[#allocation5] sm:$0xff] %vm4165, %v4318
    %4383 = vst.msk [vmem:[#allocation5 + $0x8] sm:$0xff] %vm4165, %v4319
    %4384 = vst.msk [vmem:[#allocation5 + $0x10] sm:$0xff] %vm4165, %v4320
    %4385 = vst.msk [vmem:[#allocation5 + $0x18] sm:$0xff] %vm4165, %v4321
    %4386 = vst.msk [vmem:[#allocation5 + $0x20] sm:$0xff] %vm4165, %v4322
    %4387 = vst.msk [vmem:[#allocation5 + $0x28] sm:$0xff] %vm4165, %v4323
    %4388 = vst.msk [vmem:[#allocation5 + $0x30] sm:$0xff] %vm4165, %v4324
    %4389 = vst.msk [vmem:[#allocation5 + $0x38] sm:$0xff] %vm4165, %v4325
    %4390 = vst.msk [vmem:[#allocation5 + $0x40] sm:$0xff] %vm4165, %v4326
    %4391 = vst.msk [vmem:[#allocation5 + $0x48] sm:$0xff] %vm4165, %v4327
    %4392 = vst.msk [vmem:[#allocation5 + $0x50] sm:$0xff] %vm4165, %v4328
    %4393 = vst.msk [vmem:[#allocation5 + $0x58] sm:$0xff] %vm4165, %v4329
    %4394 = vst.msk [vmem:[#allocation5 + $0x60] sm:$0xff] %vm4165, %v4330
    %4395 = vst.msk [vmem:[#allocation5 + $0x68] sm:$0xff] %vm4165, %v4331
    %4396 = vst.msk [vmem:[#allocation5 + $0x70] sm:$0xff] %vm4165, %v4332
    %4397 = vst.msk [vmem:[#allocation5 + $0x78] sm:$0xff] %vm4165, %v4333
    %4398 = vst.msk [vmem:[#allocation5 + $0x80] sm:$0xff] %vm4165, %v4334
    %4399 = vst.msk [vmem:[#allocation5 + $0x88] sm:$0xff] %vm4165, %v4335
    %4400 = vst.msk [vmem:[#allocation5 + $0x90] sm:$0xff] %vm4165, %v4336
    %4401 = vst.msk [vmem:[#allocation5 + $0x98] sm:$0xff] %vm4165, %v4337
    %4402 = vst.msk [vmem:[#allocation5 + $0xa0] sm:$0xff] %vm4165, %v4338
    %4403 = vst.msk [vmem:[#allocation5 + $0xa8] sm:$0xff] %vm4165, %v4339
    %4404 = vst.msk [vmem:[#allocation5 + $0xb0] sm:$0xff] %vm4165, %v4340
    %4405 = vst.msk [vmem:[#allocation5 + $0xb8] sm:$0xff] %vm4165, %v4341
    %4406 = vst.msk [vmem:[#allocation5 + $0xc0] sm:$0xff] %vm4165, %v4342
    %4407 = vst.msk [vmem:[#allocation5 + $0xc8] sm:$0xff] %vm4165, %v4343
    %4408 = vst.msk [vmem:[#allocation5 + $0xd0] sm:$0xff] %vm4165, %v4344
    %4409 = vst.msk [vmem:[#allocation5 + $0xd8] sm:$0xff] %vm4165, %v4345
    %4410 = vst.msk [vmem:[#allocation5 + $0xe0] sm:$0xff] %vm4165, %v4346
    %4411 = vst.msk [vmem:[#allocation5 + $0xe8] sm:$0xff] %vm4165, %v4347
    %4412 = vst.msk [vmem:[#allocation5 + $0xf0] sm:$0xff] %vm4165, %v4348
    %4413 = vst.msk [vmem:[#allocation5 + $0xf8] sm:$0xff] %vm4165, %v4349
    %4414 = vst.msk [vmem:[#allocation5 + $0x100] sm:$0xff] %vm4165, %v4350
    %4415 = vst.msk [vmem:[#allocation5 + $0x108] sm:$0xff] %vm4165, %v4351
    %4416 = vst.msk [vmem:[#allocation5 + $0x110] sm:$0xff] %vm4165, %v4352
    %4417 = vst.msk [vmem:[#allocation5 + $0x118] sm:$0xff] %vm4165, %v4353
    %4418 = vst.msk [vmem:[#allocation5 + $0x120] sm:$0xff] %vm4165, %v4354
    %4419 = vst.msk [vmem:[#allocation5 + $0x128] sm:$0xff] %vm4165, %v4355
    %4420 = vst.msk [vmem:[#allocation5 + $0x130] sm:$0xff] %vm4165, %v4356
    %4421 = vst.msk [vmem:[#allocation5 + $0x138] sm:$0xff] %vm4165, %v4357
    %4422 = vst.msk [vmem:[#allocation5 + $0x140] sm:$0xff] %vm4165, %v4358
    %4423 = vst.msk [vmem:[#allocation5 + $0x148] sm:$0xff] %vm4165, %v4359
    %4424 = vst.msk [vmem:[#allocation5 + $0x150] sm:$0xff] %vm4165, %v4360
    %4425 = vst.msk [vmem:[#allocation5 + $0x158] sm:$0xff] %vm4165, %v4361
    %4426 = vst.msk [vmem:[#allocation5 + $0x160] sm:$0xff] %vm4165, %v4362
    %4427 = vst.msk [vmem:[#allocation5 + $0x168] sm:$0xff] %vm4165, %v4363
    %4428 = vst.msk [vmem:[#allocation5 + $0x170] sm:$0xff] %vm4165, %v4364
    %4429 = vst.msk [vmem:[#allocation5 + $0x178] sm:$0xff] %vm4165, %v4365
    %4430 = vst.msk [vmem:[#allocation5 + $0x180] sm:$0xff] %vm4165, %v4366
    %4431 = vst.msk [vmem:[#allocation5 + $0x188] sm:$0xff] %vm4165, %v4367
    %4432 = vst.msk [vmem:[#allocation5 + $0x190] sm:$0xff] %vm4165, %v4368
    %4433 = vst.msk [vmem:[#allocation5 + $0x198] sm:$0xff] %vm4165, %v4369
    %4434 = vst.msk [vmem:[#allocation5 + $0x1a0] sm:$0xff] %vm4165, %v4370
    %4435 = vst.msk [vmem:[#allocation5 + $0x1a8] sm:$0xff] %vm4165, %v4371
    %4436 = vst.msk [vmem:[#allocation5 + $0x1b0] sm:$0xff] %vm4165, %v4372
    %4437 = vst.msk [vmem:[#allocation5 + $0x1b8] sm:$0xff] %vm4165, %v4373
    %4438 = vst.msk [vmem:[#allocation5 + $0x1c0] sm:$0xff] %vm4165, %v4374
    %4439 = vst.msk [vmem:[#allocation5 + $0x1c8] sm:$0xff] %vm4165, %v4375
    %4440 = vst.msk [vmem:[#allocation5 + $0x1d0] sm:$0xff] %vm4165, %v4376
    %4441 = vst.msk [vmem:[#allocation5 + $0x1d8] sm:$0xff] %vm4165, %v4377
    %4442 = vst.msk [vmem:[#allocation5 + $0x1e0] sm:$0xff] %vm4165, %v4378
    %4443 = vst.msk [vmem:[#allocation5 + $0x1e8] sm:$0xff] %vm4165, %v4379
    %4444 = vst.msk [vmem:[#allocation5 + $0x1f0] sm:$0xff] %vm4165, %v4380
    %4445 = vst.msk [vmem:[#allocation5 + $0x1f8] sm:$0xff] %vm4165, %v4381
    %v4446 = vld [vmem:[#allocation4 + $0x1] sm:$0xff]
    %v4447 = vld [vmem:[#allocation4 + $0x9] sm:$0xff]
    %v4448 = vld [vmem:[#allocation4 + $0x19] sm:$0xff]
    %v4449 = vld [vmem:[#allocation4 + $0x21] sm:$0xff]
    %v4450 = vld [vmem:[#allocation4 + $0x31] sm:$0xff]
    %v4451 = vld [vmem:[#allocation4 + $0x39] sm:$0xff]
    %v4452 = vld [vmem:[#allocation4 + $0x49] sm:$0xff]
    %v4453 = vld [vmem:[#allocation4 + $0x51] sm:$0xff]
    %v4454 = vld [vmem:[#allocation4 + $0x61] sm:$0xff]
    %v4455 = vld [vmem:[#allocation4 + $0x69] sm:$0xff]
    %v4456 = vld [vmem:[#allocation4 + $0x79] sm:$0xff]
    %v4457 = vld [vmem:[#allocation4 + $0x81] sm:$0xff]
    %v4458 = vld [vmem:[#allocation4 + $0x91] sm:$0xff]
    %v4459 = vld [vmem:[#allocation4 + $0x99] sm:$0xff]
    %v4460 = vld [vmem:[#allocation4 + $0xa9] sm:$0xff]
    %v4461 = vld [vmem:[#allocation4 + $0xb1] sm:$0xff]
    %v4462 = vld [vmem:[#allocation4 + $0xc1] sm:$0xff]
    %v4463 = vld [vmem:[#allocation4 + $0xc9] sm:$0xff]
    %v4464 = vld [vmem:[#allocation4 + $0xd9] sm:$0xff]
    %v4465 = vld [vmem:[#allocation4 + $0xe1] sm:$0xff]
    %v4466 = vld [vmem:[#allocation4 + $0xf1] sm:$0xff]
    %v4467 = vld [vmem:[#allocation4 + $0xf9] sm:$0xff]
    %v4468 = vld [vmem:[#allocation4 + $0x109] sm:$0xff]
    %v4469 = vld [vmem:[#allocation4 + $0x111] sm:$0xff]
    %v4470 = vld [vmem:[#allocation4 + $0x121] sm:$0xff]
    %v4471 = vld [vmem:[#allocation4 + $0x129] sm:$0xff]
    %v4472 = vld [vmem:[#allocation4 + $0x139] sm:$0xff]
    %v4473 = vld [vmem:[#allocation4 + $0x141] sm:$0xff]
    %v4474 = vld [vmem:[#allocation4 + $0x151] sm:$0xff]
    %v4475 = vld [vmem:[#allocation4 + $0x159] sm:$0xff]
    %v4476 = vld [vmem:[#allocation4 + $0x169] sm:$0xff]
    %v4477 = vld [vmem:[#allocation4 + $0x171] sm:$0xff]
    %v4478 = vld [vmem:[#allocation4 + $0x1b1] sm:$0xff]
    %v4479 = vld [vmem:[#allocation4 + $0x1b9] sm:$0xff]
    %v4480 = vld [vmem:[#allocation4 + $0x1c9] sm:$0xff]
    %v4481 = vld [vmem:[#allocation4 + $0x1d1] sm:$0xff]
    %v4482 = vld [vmem:[#allocation4 + $0x1e1] sm:$0xff]
    %v4483 = vld [vmem:[#allocation4 + $0x1e9] sm:$0xff]
    %v4484 = vld [vmem:[#allocation4 + $0x1f9] sm:$0xff]
    %v4485 = vld [vmem:[#allocation4 + $0x201] sm:$0xff]
    %v4486 = vld [vmem:[#allocation4 + $0x211] sm:$0xff]
    %v4487 = vld [vmem:[#allocation4 + $0x219] sm:$0xff]
    %v4488 = vld [vmem:[#allocation4 + $0x229] sm:$0xff]
    %v4489 = vld [vmem:[#allocation4 + $0x231] sm:$0xff]
    %v4490 = vld [vmem:[#allocation4 + $0x241] sm:$0xff]
    %v4491 = vld [vmem:[#allocation4 + $0x249] sm:$0xff]
    %v4492 = vld [vmem:[#allocation4 + $0x259] sm:$0xff]
    %v4493 = vld [vmem:[#allocation4 + $0x261] sm:$0xff]
    %v4494 = vld [vmem:[#allocation4 + $0x271] sm:$0xff]
    %v4495 = vld [vmem:[#allocation4 + $0x279] sm:$0xff]
    %v4496 = vld [vmem:[#allocation4 + $0x289] sm:$0xff]
    %v4497 = vld [vmem:[#allocation4 + $0x291] sm:$0xff]
    %v4498 = vld [vmem:[#allocation4 + $0x2a1] sm:$0xff]
    %v4499 = vld [vmem:[#allocation4 + $0x2a9] sm:$0xff]
    %v4500 = vld [vmem:[#allocation4 + $0x2b9] sm:$0xff]
    %v4501 = vld [vmem:[#allocation4 + $0x2c1] sm:$0xff]
    %v4502 = vld [vmem:[#allocation4 + $0x2d1] sm:$0xff]
    %v4503 = vld [vmem:[#allocation4 + $0x2d9] sm:$0xff]
    %v4504 = vld [vmem:[#allocation4 + $0x2e9] sm:$0xff]
    %v4505 = vld [vmem:[#allocation4 + $0x2f1] sm:$0xff]
    %v4506 = vld [vmem:[#allocation4 + $0x301] sm:$0xff]
    %v4507 = vld [vmem:[#allocation4 + $0x309] sm:$0xff]
    %v4508 = vld [vmem:[#allocation4 + $0x319] sm:$0xff]
    %v4509 = vld [vmem:[#allocation4 + $0x321] sm:$0xff]
    %4574 = vrot.lane.b32.xlu0 %v4446, 8
    %v4575 = vpop.permute.xlu0 %4574
    %4576 = vrot.lane.b32.xlu0 %v4447, 8
    %v4577 = vpop.permute.xlu0 %4576
    %4578 = vrot.lane.b32.xlu0 %v4448, 8
    %v4579 = vpop.permute.xlu0 %4578
    %4580 = vrot.lane.b32.xlu0 %v4449, 8
    %v4581 = vpop.permute.xlu0 %4580
    %4582 = vrot.lane.b32.xlu0 %v4450, 8
    %v4583 = vpop.permute.xlu0 %4582
    %4584 = vrot.lane.b32.xlu0 %v4451, 8
    %v4585 = vpop.permute.xlu0 %4584
    %4586 = vrot.lane.b32.xlu0 %v4452, 8
    %v4587 = vpop.permute.xlu0 %4586
    %4588 = vrot.lane.b32.xlu0 %v4453, 8
    %v4589 = vpop.permute.xlu0 %4588
    %4590 = vrot.lane.b32.xlu0 %v4454, 8
    %v4591 = vpop.permute.xlu0 %4590
    %4592 = vrot.lane.b32.xlu0 %v4455, 8
    %v4593 = vpop.permute.xlu0 %4592
    %4594 = vrot.lane.b32.xlu0 %v4456, 8
    %v4595 = vpop.permute.xlu0 %4594
    %4596 = vrot.lane.b32.xlu0 %v4457, 8
    %v4597 = vpop.permute.xlu0 %4596
    %4598 = vrot.lane.b32.xlu0 %v4458, 8
    %v4599 = vpop.permute.xlu0 %4598
    %4600 = vrot.lane.b32.xlu0 %v4459, 8
    %v4601 = vpop.permute.xlu0 %4600
    %4602 = vrot.lane.b32.xlu0 %v4460, 8
    %v4603 = vpop.permute.xlu0 %4602
    %4604 = vrot.lane.b32.xlu0 %v4461, 8
    %v4605 = vpop.permute.xlu0 %4604
    %4606 = vrot.lane.b32.xlu0 %v4462, 8
    %v4607 = vpop.permute.xlu0 %4606
    %4608 = vrot.lane.b32.xlu0 %v4463, 8
    %v4609 = vpop.permute.xlu0 %4608
    %4610 = vrot.lane.b32.xlu0 %v4464, 8
    %v4611 = vpop.permute.xlu0 %4610
    %4612 = vrot.lane.b32.xlu0 %v4465, 8
    %v4613 = vpop.permute.xlu0 %4612
    %4614 = vrot.lane.b32.xlu0 %v4466, 8
    %v4615 = vpop.permute.xlu0 %4614
    %4616 = vrot.lane.b32.xlu0 %v4467, 8
    %v4617 = vpop.permute.xlu0 %4616
    %4618 = vrot.lane.b32.xlu0 %v4468, 8
    %v4619 = vpop.permute.xlu0 %4618
    %4620 = vrot.lane.b32.xlu0 %v4469, 8
    %v4621 = vpop.permute.xlu0 %4620
    %4622 = vrot.lane.b32.xlu0 %v4470, 8
    %v4623 = vpop.permute.xlu0 %4622
    %4624 = vrot.lane.b32.xlu0 %v4471, 8
    %v4625 = vpop.permute.xlu0 %4624
    %4626 = vrot.lane.b32.xlu0 %v4472, 8
    %v4627 = vpop.permute.xlu0 %4626
    %4628 = vrot.lane.b32.xlu0 %v4473, 8
    %v4629 = vpop.permute.xlu0 %4628
    %4630 = vrot.lane.b32.xlu0 %v4474, 8
    %v4631 = vpop.permute.xlu0 %4630
    %4632 = vrot.lane.b32.xlu0 %v4475, 8
    %v4633 = vpop.permute.xlu0 %4632
    %4634 = vrot.lane.b32.xlu0 %v4476, 8
    %v4635 = vpop.permute.xlu0 %4634
    %4636 = vrot.lane.b32.xlu0 %v4477, 8
    %v4637 = vpop.permute.xlu0 %4636
    %4638 = vrot.lane.b32.xlu0 %v4478, 8
    %v4639 = vpop.permute.xlu0 %4638
    %4640 = vrot.lane.b32.xlu0 %v4479, 8
    %v4641 = vpop.permute.xlu0 %4640
    %4642 = vrot.lane.b32.xlu0 %v4480, 8
    %v4643 = vpop.permute.xlu0 %4642
    %4644 = vrot.lane.b32.xlu0 %v4481, 8
    %v4645 = vpop.permute.xlu0 %4644
    %4646 = vrot.lane.b32.xlu0 %v4482, 8
    %v4647 = vpop.permute.xlu0 %4646
    %4648 = vrot.lane.b32.xlu0 %v4483, 8
    %v4649 = vpop.permute.xlu0 %4648
    %4650 = vrot.lane.b32.xlu0 %v4484, 8
    %v4651 = vpop.permute.xlu0 %4650
    %4652 = vrot.lane.b32.xlu0 %v4485, 8
    %v4653 = vpop.permute.xlu0 %4652
    %4654 = vrot.lane.b32.xlu0 %v4486, 8
    %v4655 = vpop.permute.xlu0 %4654
    %4656 = vrot.lane.b32.xlu0 %v4487, 8
    %v4657 = vpop.permute.xlu0 %4656
    %4658 = vrot.lane.b32.xlu0 %v4488, 8
    %v4659 = vpop.permute.xlu0 %4658
    %4660 = vrot.lane.b32.xlu0 %v4489, 8
    %v4661 = vpop.permute.xlu0 %4660
    %4662 = vrot.lane.b32.xlu0 %v4490, 8
    %v4663 = vpop.permute.xlu0 %4662
    %4664 = vrot.lane.b32.xlu0 %v4491, 8
    %v4665 = vpop.permute.xlu0 %4664
    %4666 = vrot.lane.b32.xlu0 %v4492, 8
    %v4667 = vpop.permute.xlu0 %4666
    %4668 = vrot.lane.b32.xlu0 %v4493, 8
    %v4669 = vpop.permute.xlu0 %4668
    %4670 = vrot.lane.b32.xlu0 %v4494, 8
    %v4671 = vpop.permute.xlu0 %4670
    %4672 = vrot.lane.b32.xlu0 %v4495, 8
    %v4673 = vpop.permute.xlu0 %4672
    %4674 = vrot.lane.b32.xlu0 %v4496, 8
    %v4675 = vpop.permute.xlu0 %4674
    %4676 = vrot.lane.b32.xlu0 %v4497, 8
    %v4677 = vpop.permute.xlu0 %4676
    %4678 = vrot.lane.b32.xlu0 %v4498, 8
    %v4679 = vpop.permute.xlu0 %4678
    %4680 = vrot.lane.b32.xlu0 %v4499, 8
    %v4681 = vpop.permute.xlu0 %4680
    %4682 = vrot.lane.b32.xlu0 %v4500, 8
    %v4683 = vpop.permute.xlu0 %4682
    %4684 = vrot.lane.b32.xlu0 %v4501, 8
    %v4685 = vpop.permute.xlu0 %4684
    %4686 = vrot.lane.b32.xlu0 %v4502, 8
    %v4687 = vpop.permute.xlu0 %4686
    %4688 = vrot.lane.b32.xlu0 %v4503, 8
    %v4689 = vpop.permute.xlu0 %4688
    %4690 = vrot.lane.b32.xlu0 %v4504, 8
    %v4691 = vpop.permute.xlu0 %4690
    %4692 = vrot.lane.b32.xlu0 %v4505, 8
    %v4693 = vpop.permute.xlu0 %4692
    %4694 = vrot.lane.b32.xlu0 %v4506, 8
    %v4695 = vpop.permute.xlu0 %4694
    %4696 = vrot.lane.b32.xlu0 %v4507, 8
    %v4697 = vpop.permute.xlu0 %4696
    %4698 = vrot.lane.b32.xlu0 %v4508, 8
    %v4699 = vpop.permute.xlu0 %4698
    %4700 = vrot.lane.b32.xlu0 %v4509, 8
    %v4701 = vpop.permute.xlu0 %4700
    %vm4766 = vcmask 130112
    %4767 = vst.msk [vmem:[#allocation5] sm:$0xff] %vm4766, %v4575
    %4768 = vst.msk [vmem:[#allocation5 + $0x8] sm:$0xff] %vm4766, %v4577
    %4769 = vst.msk [vmem:[#allocation5 + $0x10] sm:$0xff] %vm4766, %v4579
    %4770 = vst.msk [vmem:[#allocation5 + $0x18] sm:$0xff] %vm4766, %v4581
    %4771 = vst.msk [vmem:[#allocation5 + $0x20] sm:$0xff] %vm4766, %v4583
    %4772 = vst.msk [vmem:[#allocation5 + $0x28] sm:$0xff] %vm4766, %v4585
    %4773 = vst.msk [vmem:[#allocation5 + $0x30] sm:$0xff] %vm4766, %v4587
    %4774 = vst.msk [vmem:[#allocation5 + $0x38] sm:$0xff] %vm4766, %v4589
    %4775 = vst.msk [vmem:[#allocation5 + $0x40] sm:$0xff] %vm4766, %v4591
    %4776 = vst.msk [vmem:[#allocation5 + $0x48] sm:$0xff] %vm4766, %v4593
    %4777 = vst.msk [vmem:[#allocation5 + $0x50] sm:$0xff] %vm4766, %v4595
    %4778 = vst.msk [vmem:[#allocation5 + $0x58] sm:$0xff] %vm4766, %v4597
    %4779 = vst.msk [vmem:[#allocation5 + $0x60] sm:$0xff] %vm4766, %v4599
    %4780 = vst.msk [vmem:[#allocation5 + $0x68] sm:$0xff] %vm4766, %v4601
    %4781 = vst.msk [vmem:[#allocation5 + $0x70] sm:$0xff] %vm4766, %v4603
    %4782 = vst.msk [vmem:[#allocation5 + $0x78] sm:$0xff] %vm4766, %v4605
    %4783 = vst.msk [vmem:[#allocation5 + $0x80] sm:$0xff] %vm4766, %v4607
    %4784 = vst.msk [vmem:[#allocation5 + $0x88] sm:$0xff] %vm4766, %v4609
    %4785 = vst.msk [vmem:[#allocation5 + $0x90] sm:$0xff] %vm4766, %v4611
    %4786 = vst.msk [vmem:[#allocation5 + $0x98] sm:$0xff] %vm4766, %v4613
    %4787 = vst.msk [vmem:[#allocation5 + $0xa0] sm:$0xff] %vm4766, %v4615
    %4788 = vst.msk [vmem:[#allocation5 + $0xa8] sm:$0xff] %vm4766, %v4617
    %4789 = vst.msk [vmem:[#allocation5 + $0xb0] sm:$0xff] %vm4766, %v4619
    %4790 = vst.msk [vmem:[#allocation5 + $0xb8] sm:$0xff] %vm4766, %v4621
    %4791 = vst.msk [vmem:[#allocation5 + $0xc0] sm:$0xff] %vm4766, %v4623
    %4792 = vst.msk [vmem:[#allocation5 + $0xc8] sm:$0xff] %vm4766, %v4625
    %4793 = vst.msk [vmem:[#allocation5 + $0xd0] sm:$0xff] %vm4766, %v4627
    %4794 = vst.msk [vmem:[#allocation5 + $0xd8] sm:$0xff] %vm4766, %v4629
    %4795 = vst.msk [vmem:[#allocation5 + $0xe0] sm:$0xff] %vm4766, %v4631
    %4796 = vst.msk [vmem:[#allocation5 + $0xe8] sm:$0xff] %vm4766, %v4633
    %4797 = vst.msk [vmem:[#allocation5 + $0xf0] sm:$0xff] %vm4766, %v4635
    %4798 = vst.msk [vmem:[#allocation5 + $0xf8] sm:$0xff] %vm4766, %v4637
    %4799 = vst.msk [vmem:[#allocation5 + $0x100] sm:$0xff] %vm4766, %v4639
    %4800 = vst.msk [vmem:[#allocation5 + $0x108] sm:$0xff] %vm4766, %v4641
    %4801 = vst.msk [vmem:[#allocation5 + $0x110] sm:$0xff] %vm4766, %v4643
    %4802 = vst.msk [vmem:[#allocation5 + $0x118] sm:$0xff] %vm4766, %v4645
    %4803 = vst.msk [vmem:[#allocation5 + $0x120] sm:$0xff] %vm4766, %v4647
    %4804 = vst.msk [vmem:[#allocation5 + $0x128] sm:$0xff] %vm4766, %v4649
    %4805 = vst.msk [vmem:[#allocation5 + $0x130] sm:$0xff] %vm4766, %v4651
    %4806 = vst.msk [vmem:[#allocation5 + $0x138] sm:$0xff] %vm4766, %v4653
    %4807 = vst.msk [vmem:[#allocation5 + $0x140] sm:$0xff] %vm4766, %v4655
    %4808 = vst.msk [vmem:[#allocation5 + $0x148] sm:$0xff] %vm4766, %v4657
    %4809 = vst.msk [vmem:[#allocation5 + $0x150] sm:$0xff] %vm4766, %v4659
    %4810 = vst.msk [vmem:[#allocation5 + $0x158] sm:$0xff] %vm4766, %v4661
    %4811 = vst.msk [vmem:[#allocation5 + $0x160] sm:$0xff] %vm4766, %v4663
    %4812 = vst.msk [vmem:[#allocation5 + $0x168] sm:$0xff] %vm4766, %v4665
    %4813 = vst.msk [vmem:[#allocation5 + $0x170] sm:$0xff] %vm4766, %v4667
    %4814 = vst.msk [vmem:[#allocation5 + $0x178] sm:$0xff] %vm4766, %v4669
    %4815 = vst.msk [vmem:[#allocation5 + $0x180] sm:$0xff] %vm4766, %v4671
    %4816 = vst.msk [vmem:[#allocation5 + $0x188] sm:$0xff] %vm4766, %v4673
    %4817 = vst.msk [vmem:[#allocation5 + $0x190] sm:$0xff] %vm4766, %v4675
    %4818 = vst.msk [vmem:[#allocation5 + $0x198] sm:$0xff] %vm4766, %v4677
    %4819 = vst.msk [vmem:[#allocation5 + $0x1a0] sm:$0xff] %vm4766, %v4679
    %4820 = vst.msk [vmem:[#allocation5 + $0x1a8] sm:$0xff] %vm4766, %v4681
    %4821 = vst.msk [vmem:[#allocation5 + $0x1b0] sm:$0xff] %vm4766, %v4683
    %4822 = vst.msk [vmem:[#allocation5 + $0x1b8] sm:$0xff] %vm4766, %v4685
    %4823 = vst.msk [vmem:[#allocation5 + $0x1c0] sm:$0xff] %vm4766, %v4687
    %4824 = vst.msk [vmem:[#allocation5 + $0x1c8] sm:$0xff] %vm4766, %v4689
    %4825 = vst.msk [vmem:[#allocation5 + $0x1d0] sm:$0xff] %vm4766, %v4691
    %4826 = vst.msk [vmem:[#allocation5 + $0x1d8] sm:$0xff] %vm4766, %v4693
    %4827 = vst.msk [vmem:[#allocation5 + $0x1e0] sm:$0xff] %vm4766, %v4695
    %4828 = vst.msk [vmem:[#allocation5 + $0x1e8] sm:$0xff] %vm4766, %v4697
    %4829 = vst.msk [vmem:[#allocation5 + $0x1f0] sm:$0xff] %vm4766, %v4699
    %4830 = vst.msk [vmem:[#allocation5 + $0x1f8] sm:$0xff] %vm4766, %v4701
    %v4831 = vld [vmem:[#allocation4 + $0x2] sm:$0xff]
    %v4832 = vld [vmem:[#allocation4 + $0xa] sm:$0xff]
    %v4833 = vld [vmem:[#allocation4 + $0x1a] sm:$0xff]
    %v4834 = vld [vmem:[#allocation4 + $0x22] sm:$0xff]
    %v4835 = vld [vmem:[#allocation4 + $0x32] sm:$0xff]
    %v4836 = vld [vmem:[#allocation4 + $0x3a] sm:$0xff]
    %v4837 = vld [vmem:[#allocation4 + $0x4a] sm:$0xff]
    %v4838 = vld [vmem:[#allocation4 + $0x52] sm:$0xff]
    %v4839 = vld [vmem:[#allocation4 + $0x62] sm:$0xff]
    %v4840 = vld [vmem:[#allocation4 + $0x6a] sm:$0xff]
    %v4841 = vld [vmem:[#allocation4 + $0x7a] sm:$0xff]
    %v4842 = vld [vmem:[#allocation4 + $0x82] sm:$0xff]
    %v4843 = vld [vmem:[#allocation4 + $0x92] sm:$0xff]
    %v4844 = vld [vmem:[#allocation4 + $0x9a] sm:$0xff]
    %v4845 = vld [vmem:[#allocation4 + $0xaa] sm:$0xff]
    %v4846 = vld [vmem:[#allocation4 + $0xb2] sm:$0xff]
    %v4847 = vld [vmem:[#allocation4 + $0xc2] sm:$0xff]
    %v4848 = vld [vmem:[#allocation4 + $0xca] sm:$0xff]
    %v4849 = vld [vmem:[#allocation4 + $0xda] sm:$0xff]
    %v4850 = vld [vmem:[#allocation4 + $0xe2] sm:$0xff]
    %v4851 = vld [vmem:[#allocation4 + $0xf2] sm:$0xff]
    %v4852 = vld [vmem:[#allocation4 + $0xfa] sm:$0xff]
    %v4853 = vld [vmem:[#allocation4 + $0x10a] sm:$0xff]
    %v4854 = vld [vmem:[#allocation4 + $0x112] sm:$0xff]
    %v4855 = vld [vmem:[#allocation4 + $0x122] sm:$0xff]
    %v4856 = vld [vmem:[#allocation4 + $0x12a] sm:$0xff]
    %v4857 = vld [vmem:[#allocation4 + $0x13a] sm:$0xff]
    %v4858 = vld [vmem:[#allocation4 + $0x142] sm:$0xff]
    %v4859 = vld [vmem:[#allocation4 + $0x152] sm:$0xff]
    %v4860 = vld [vmem:[#allocation4 + $0x15a] sm:$0xff]
    %v4861 = vld [vmem:[#allocation4 + $0x16a] sm:$0xff]
    %v4862 = vld [vmem:[#allocation4 + $0x172] sm:$0xff]
    %v4863 = vld [vmem:[#allocation4 + $0x1b2] sm:$0xff]
    %v4864 = vld [vmem:[#allocation4 + $0x1ba] sm:$0xff]
    %v4865 = vld [vmem:[#allocation4 + $0x1ca] sm:$0xff]
    %v4866 = vld [vmem:[#allocation4 + $0x1d2] sm:$0xff]
    %v4867 = vld [vmem:[#allocation4 + $0x1e2] sm:$0xff]
    %v4868 = vld [vmem:[#allocation4 + $0x1ea] sm:$0xff]
    %v4869 = vld [vmem:[#allocation4 + $0x1fa] sm:$0xff]
    %v4870 = vld [vmem:[#allocation4 + $0x202] sm:$0xff]
    %v4871 = vld [vmem:[#allocation4 + $0x212] sm:$0xff]
    %v4872 = vld [vmem:[#allocation4 + $0x21a] sm:$0xff]
    %v4873 = vld [vmem:[#allocation4 + $0x22a] sm:$0xff]
    %v4874 = vld [vmem:[#allocation4 + $0x232] sm:$0xff]
    %v4875 = vld [vmem:[#allocation4 + $0x242] sm:$0xff]
    %v4876 = vld [vmem:[#allocation4 + $0x24a] sm:$0xff]
    %v4877 = vld [vmem:[#allocation4 + $0x25a] sm:$0xff]
    %v4878 = vld [vmem:[#allocation4 + $0x262] sm:$0xff]
    %v4879 = vld [vmem:[#allocation4 + $0x272] sm:$0xff]
    %v4880 = vld [vmem:[#allocation4 + $0x27a] sm:$0xff]
    %v4881 = vld [vmem:[#allocation4 + $0x28a] sm:$0xff]
    %v4882 = vld [vmem:[#allocation4 + $0x292] sm:$0xff]
    %v4883 = vld [vmem:[#allocation4 + $0x2a2] sm:$0xff]
    %v4884 = vld [vmem:[#allocation4 + $0x2aa] sm:$0xff]
    %v4885 = vld [vmem:[#allocation4 + $0x2ba] sm:$0xff]
    %v4886 = vld [vmem:[#allocation4 + $0x2c2] sm:$0xff]
    %v4887 = vld [vmem:[#allocation4 + $0x2d2] sm:$0xff]
    %v4888 = vld [vmem:[#allocation4 + $0x2da] sm:$0xff]
    %v4889 = vld [vmem:[#allocation4 + $0x2ea] sm:$0xff]
    %v4890 = vld [vmem:[#allocation4 + $0x2f2] sm:$0xff]
    %v4891 = vld [vmem:[#allocation4 + $0x302] sm:$0xff]
    %v4892 = vld [vmem:[#allocation4 + $0x30a] sm:$0xff]
    %v4893 = vld [vmem:[#allocation4 + $0x31a] sm:$0xff]
    %v4894 = vld [vmem:[#allocation4 + $0x322] sm:$0xff]
    %4959 = vrot.lane.b32.xlu0 %v4831, 16
    %v4960 = vpop.permute.xlu0 %4959
    %4961 = vrot.lane.b32.xlu0 %v4832, 16
    %v4962 = vpop.permute.xlu0 %4961
    %4963 = vrot.lane.b32.xlu0 %v4833, 16
    %v4964 = vpop.permute.xlu0 %4963
    %4965 = vrot.lane.b32.xlu0 %v4834, 16
    %v4966 = vpop.permute.xlu0 %4965
    %4967 = vrot.lane.b32.xlu0 %v4835, 16
    %v4968 = vpop.permute.xlu0 %4967
    %4969 = vrot.lane.b32.xlu0 %v4836, 16
    %v4970 = vpop.permute.xlu0 %4969
    %4971 = vrot.lane.b32.xlu0 %v4837, 16
    %v4972 = vpop.permute.xlu0 %4971
    %4973 = vrot.lane.b32.xlu0 %v4838, 16
    %v4974 = vpop.permute.xlu0 %4973
    %4975 = vrot.lane.b32.xlu0 %v4839, 16
    %v4976 = vpop.permute.xlu0 %4975
    %4977 = vrot.lane.b32.xlu0 %v4840, 16
    %v4978 = vpop.permute.xlu0 %4977
    %4979 = vrot.lane.b32.xlu0 %v4841, 16
    %v4980 = vpop.permute.xlu0 %4979
    %4981 = vrot.lane.b32.xlu0 %v4842, 16
    %v4982 = vpop.permute.xlu0 %4981
    %4983 = vrot.lane.b32.xlu0 %v4843, 16
    %v4984 = vpop.permute.xlu0 %4983
    %4985 = vrot.lane.b32.xlu0 %v4844, 16
    %v4986 = vpop.permute.xlu0 %4985
    %4987 = vrot.lane.b32.xlu0 %v4845, 16
    %v4988 = vpop.permute.xlu0 %4987
    %4989 = vrot.lane.b32.xlu0 %v4846, 16
    %v4990 = vpop.permute.xlu0 %4989
    %4991 = vrot.lane.b32.xlu0 %v4847, 16
    %v4992 = vpop.permute.xlu0 %4991
    %4993 = vrot.lane.b32.xlu0 %v4848, 16
    %v4994 = vpop.permute.xlu0 %4993
    %4995 = vrot.lane.b32.xlu0 %v4849, 16
    %v4996 = vpop.permute.xlu0 %4995
    %4997 = vrot.lane.b32.xlu0 %v4850, 16
    %v4998 = vpop.permute.xlu0 %4997
    %4999 = vrot.lane.b32.xlu0 %v4851, 16
    %v5000 = vpop.permute.xlu0 %4999
    %5001 = vrot.lane.b32.xlu0 %v4852, 16
    %v5002 = vpop.permute.xlu0 %5001
    %5003 = vrot.lane.b32.xlu0 %v4853, 16
    %v5004 = vpop.permute.xlu0 %5003
    %5005 = vrot.lane.b32.xlu0 %v4854, 16
    %v5006 = vpop.permute.xlu0 %5005
    %5007 = vrot.lane.b32.xlu0 %v4855, 16
    %v5008 = vpop.permute.xlu0 %5007
    %5009 = vrot.lane.b32.xlu0 %v4856, 16
    %v5010 = vpop.permute.xlu0 %5009
    %5011 = vrot.lane.b32.xlu0 %v4857, 16
    %v5012 = vpop.permute.xlu0 %5011
    %5013 = vrot.lane.b32.xlu0 %v4858, 16
    %v5014 = vpop.permute.xlu0 %5013
    %5015 = vrot.lane.b32.xlu0 %v4859, 16
    %v5016 = vpop.permute.xlu0 %5015
    %5017 = vrot.lane.b32.xlu0 %v4860, 16
    %v5018 = vpop.permute.xlu0 %5017
    %5019 = vrot.lane.b32.xlu0 %v4861, 16
    %v5020 = vpop.permute.xlu0 %5019
    %5021 = vrot.lane.b32.xlu0 %v4862, 16
    %v5022 = vpop.permute.xlu0 %5021
    %5023 = vrot.lane.b32.xlu0 %v4863, 16
    %v5024 = vpop.permute.xlu0 %5023
    %5025 = vrot.lane.b32.xlu0 %v4864, 16
    %v5026 = vpop.permute.xlu0 %5025
    %5027 = vrot.lane.b32.xlu0 %v4865, 16
    %v5028 = vpop.permute.xlu0 %5027
    %5029 = vrot.lane.b32.xlu0 %v4866, 16
    %v5030 = vpop.permute.xlu0 %5029
    %5031 = vrot.lane.b32.xlu0 %v4867, 16
    %v5032 = vpop.permute.xlu0 %5031
    %5033 = vrot.lane.b32.xlu0 %v4868, 16
    %v5034 = vpop.permute.xlu0 %5033
    %5035 = vrot.lane.b32.xlu0 %v4869, 16
    %v5036 = vpop.permute.xlu0 %5035
    %5037 = vrot.lane.b32.xlu0 %v4870, 16
    %v5038 = vpop.permute.xlu0 %5037
    %5039 = vrot.lane.b32.xlu0 %v4871, 16
    %v5040 = vpop.permute.xlu0 %5039
    %5041 = vrot.lane.b32.xlu0 %v4872, 16
    %v5042 = vpop.permute.xlu0 %5041
    %5043 = vrot.lane.b32.xlu0 %v4873, 16
    %v5044 = vpop.permute.xlu0 %5043
    %5045 = vrot.lane.b32.xlu0 %v4874, 16
    %v5046 = vpop.permute.xlu0 %5045
    %5047 = vrot.lane.b32.xlu0 %v4875, 16
    %v5048 = vpop.permute.xlu0 %5047
    %5049 = vrot.lane.b32.xlu0 %v4876, 16
    %v5050 = vpop.permute.xlu0 %5049
    %5051 = vrot.lane.b32.xlu0 %v4877, 16
    %v5052 = vpop.permute.xlu0 %5051
    %5053 = vrot.lane.b32.xlu0 %v4878, 16
    %v5054 = vpop.permute.xlu0 %5053
    %5055 = vrot.lane.b32.xlu0 %v4879, 16
    %v5056 = vpop.permute.xlu0 %5055
    %5057 = vrot.lane.b32.xlu0 %v4880, 16
    %v5058 = vpop.permute.xlu0 %5057
    %5059 = vrot.lane.b32.xlu0 %v4881, 16
    %v5060 = vpop.permute.xlu0 %5059
    %5061 = vrot.lane.b32.xlu0 %v4882, 16
    %v5062 = vpop.permute.xlu0 %5061
    %5063 = vrot.lane.b32.xlu0 %v4883, 16
    %v5064 = vpop.permute.xlu0 %5063
    %5065 = vrot.lane.b32.xlu0 %v4884, 16
    %v5066 = vpop.permute.xlu0 %5065
    %5067 = vrot.lane.b32.xlu0 %v4885, 16
    %v5068 = vpop.permute.xlu0 %5067
    %5069 = vrot.lane.b32.xlu0 %v4886, 16
    %v5070 = vpop.permute.xlu0 %5069
    %5071 = vrot.lane.b32.xlu0 %v4887, 16
    %v5072 = vpop.permute.xlu0 %5071
    %5073 = vrot.lane.b32.xlu0 %v4888, 16
    %v5074 = vpop.permute.xlu0 %5073
    %5075 = vrot.lane.b32.xlu0 %v4889, 16
    %v5076 = vpop.permute.xlu0 %5075
    %5077 = vrot.lane.b32.xlu0 %v4890, 16
    %v5078 = vpop.permute.xlu0 %5077
    %5079 = vrot.lane.b32.xlu0 %v4891, 16
    %v5080 = vpop.permute.xlu0 %5079
    %5081 = vrot.lane.b32.xlu0 %v4892, 16
    %v5082 = vpop.permute.xlu0 %5081
    %5083 = vrot.lane.b32.xlu0 %v4893, 16
    %v5084 = vpop.permute.xlu0 %5083
    %5085 = vrot.lane.b32.xlu0 %v4894, 16
    %v5086 = vpop.permute.xlu0 %5085
    %vm5151 = vcmask 195712
    %5152 = vst.msk [vmem:[#allocation5] sm:$0xff] %vm5151, %v4960
    %5153 = vst.msk [vmem:[#allocation5 + $0x8] sm:$0xff] %vm5151, %v4962
    %5154 = vst.msk [vmem:[#allocation5 + $0x10] sm:$0xff] %vm5151, %v4964
    %5155 = vst.msk [vmem:[#allocation5 + $0x18] sm:$0xff] %vm5151, %v4966
    %5156 = vst.msk [vmem:[#allocation5 + $0x20] sm:$0xff] %vm5151, %v4968
    %5157 = vst.msk [vmem:[#allocation5 + $0x28] sm:$0xff] %vm5151, %v4970
    %5158 = vst.msk [vmem:[#allocation5 + $0x30] sm:$0xff] %vm5151, %v4972
    %5159 = vst.msk [vmem:[#allocation5 + $0x38] sm:$0xff] %vm5151, %v4974
    %5160 = vst.msk [vmem:[#allocation5 + $0x40] sm:$0xff] %vm5151, %v4976
    %5161 = vst.msk [vmem:[#allocation5 + $0x48] sm:$0xff] %vm5151, %v4978
    %5162 = vst.msk [vmem:[#allocation5 + $0x50] sm:$0xff] %vm5151, %v4980
    %5163 = vst.msk [vmem:[#allocation5 + $0x58] sm:$0xff] %vm5151, %v4982
    %5164 = vst.msk [vmem:[#allocation5 + $0x60] sm:$0xff] %vm5151, %v4984
    %5165 = vst.msk [vmem:[#allocation5 + $0x68] sm:$0xff] %vm5151, %v4986
    %5166 = vst.msk [vmem:[#allocation5 + $0x70] sm:$0xff] %vm5151, %v4988
    %5167 = vst.msk [vmem:[#allocation5 + $0x78] sm:$0xff] %vm5151, %v4990
    %5168 = vst.msk [vmem:[#allocation5 + $0x80] sm:$0xff] %vm5151, %v4992
    %5169 = vst.msk [vmem:[#allocation5 + $0x88] sm:$0xff] %vm5151, %v4994
    %5170 = vst.msk [vmem:[#allocation5 + $0x90] sm:$0xff] %vm5151, %v4996
    %5171 = vst.msk [vmem:[#allocation5 + $0x98] sm:$0xff] %vm5151, %v4998
    %5172 = vst.msk [vmem:[#allocation5 + $0xa0] sm:$0xff] %vm5151, %v5000
    %5173 = vst.msk [vmem:[#allocation5 + $0xa8] sm:$0xff] %vm5151, %v5002
    %5174 = vst.msk [vmem:[#allocation5 + $0xb0] sm:$0xff] %vm5151, %v5004
    %5175 = vst.msk [vmem:[#allocation5 + $0xb8] sm:$0xff] %vm5151, %v5006
    %5176 = vst.msk [vmem:[#allocation5 + $0xc0] sm:$0xff] %vm5151, %v5008
    %5177 = vst.msk [vmem:[#allocation5 + $0xc8] sm:$0xff] %vm5151, %v5010
    %5178 = vst.msk [vmem:[#allocation5 + $0xd0] sm:$0xff] %vm5151, %v5012
    %5179 = vst.msk [vmem:[#allocation5 + $0xd8] sm:$0xff] %vm5151, %v5014
    %5180 = vst.msk [vmem:[#allocation5 + $0xe0] sm:$0xff] %vm5151, %v5016
    %5181 = vst.msk [vmem:[#allocation5 + $0xe8] sm:$0xff] %vm5151, %v5018
    %5182 = vst.msk [vmem:[#allocation5 + $0xf0] sm:$0xff] %vm5151, %v5020
    %5183 = vst.msk [vmem:[#allocation5 + $0xf8] sm:$0xff] %vm5151, %v5022
    %5184 = vst.msk [vmem:[#allocation5 + $0x100] sm:$0xff] %vm5151, %v5024
    %5185 = vst.msk [vmem:[#allocation5 + $0x108] sm:$0xff] %vm5151, %v5026
    %5186 = vst.msk [vmem:[#allocation5 + $0x110] sm:$0xff] %vm5151, %v5028
    %5187 = vst.msk [vmem:[#allocation5 + $0x118] sm:$0xff] %vm5151, %v5030
    %5188 = vst.msk [vmem:[#allocation5 + $0x120] sm:$0xff] %vm5151, %v5032
    %5189 = vst.msk [vmem:[#allocation5 + $0x128] sm:$0xff] %vm5151, %v5034
    %5190 = vst.msk [vmem:[#allocation5 + $0x130] sm:$0xff] %vm5151, %v5036
    %5191 = vst.msk [vmem:[#allocation5 + $0x138] sm:$0xff] %vm5151, %v5038
    %5192 = vst.msk [vmem:[#allocation5 + $0x140] sm:$0xff] %vm5151, %v5040
    %5193 = vst.msk [vmem:[#allocation5 + $0x148] sm:$0xff] %vm5151, %v5042
    %5194 = vst.msk [vmem:[#allocation5 + $0x150] sm:$0xff] %vm5151, %v5044
    %5195 = vst.msk [vmem:[#allocation5 + $0x158] sm:$0xff] %vm5151, %v5046
    %5196 = vst.msk [vmem:[#allocation5 + $0x160] sm:$0xff] %vm5151, %v5048
    %5197 = vst.msk [vmem:[#allocation5 + $0x168] sm:$0xff] %vm5151, %v5050
    %5198 = vst.msk [vmem:[#allocation5 + $0x170] sm:$0xff] %vm5151, %v5052
    %5199 = vst.msk [vmem:[#allocation5 + $0x178] sm:$0xff] %vm5151, %v5054
    %5200 = vst.msk [vmem:[#allocation5 + $0x180] sm:$0xff] %vm5151, %v5056
    %5201 = vst.msk [vmem:[#allocation5 + $0x188] sm:$0xff] %vm5151, %v5058
    %5202 = vst.msk [vmem:[#allocation5 + $0x190] sm:$0xff] %vm5151, %v5060
    %5203 = vst.msk [vmem:[#allocation5 + $0x198] sm:$0xff] %vm5151, %v5062
    %5204 = vst.msk [vmem:[#allocation5 + $0x1a0] sm:$0xff] %vm5151, %v5064
    %5205 = vst.msk [vmem:[#allocation5 + $0x1a8] sm:$0xff] %vm5151, %v5066
    %5206 = vst.msk [vmem:[#allocation5 + $0x1b0] sm:$0xff] %vm5151, %v5068
    %5207 = vst.msk [vmem:[#allocation5 + $0x1b8] sm:$0xff] %vm5151, %v5070
    %5208 = vst.msk [vmem:[#allocation5 + $0x1c0] sm:$0xff] %vm5151, %v5072
    %5209 = vst.msk [vmem:[#allocation5 + $0x1c8] sm:$0xff] %vm5151, %v5074
    %5210 = vst.msk [vmem:[#allocation5 + $0x1d0] sm:$0xff] %vm5151, %v5076
    %5211 = vst.msk [vmem:[#allocation5 + $0x1d8] sm:$0xff] %vm5151, %v5078
    %5212 = vst.msk [vmem:[#allocation5 + $0x1e0] sm:$0xff] %vm5151, %v5080
    %5213 = vst.msk [vmem:[#allocation5 + $0x1e8] sm:$0xff] %vm5151, %v5082
    %5214 = vst.msk [vmem:[#allocation5 + $0x1f0] sm:$0xff] %vm5151, %v5084
    %5215 = vst.msk [vmem:[#allocation5 + $0x1f8] sm:$0xff] %vm5151, %v5086
    %v5216 = vld [vmem:[%s4253] sm:$0xff]
    %v5217 = vld [vmem:[%s4253 + $0x8] sm:$0xff]
    %v5218 = vld [vmem:[%s4253 + $0x18] sm:$0xff]
    %v5219 = vld [vmem:[%s4253 + $0x20] sm:$0xff]
    %v5220 = vld [vmem:[%s4253 + $0x30] sm:$0xff]
    %v5221 = vld [vmem:[%s4253 + $0x38] sm:$0xff]
    %v5222 = vld [vmem:[%s4253 + $0x48] sm:$0xff]
    %v5223 = vld [vmem:[%s4253 + $0x50] sm:$0xff]
    %v5224 = vld [vmem:[%s4253 + $0x60] sm:$0xff]
    %v5225 = vld [vmem:[%s4253 + $0x68] sm:$0xff]
    %v5226 = vld [vmem:[%s4253 + $0x78] sm:$0xff]
    %v5227 = vld [vmem:[%s4253 + $0x80] sm:$0xff]
    %v5228 = vld [vmem:[%s4253 + $0x90] sm:$0xff]
    %v5229 = vld [vmem:[%s4253 + $0x98] sm:$0xff]
    %v5230 = vld [vmem:[%s4253 + $0xa8] sm:$0xff]
    %v5231 = vld [vmem:[%s4253 + $0xb0] sm:$0xff]
    %v5232 = vld [vmem:[%s4253 + $0xc0] sm:$0xff]
    %v5233 = vld [vmem:[%s4253 + $0xc8] sm:$0xff]
    %v5234 = vld [vmem:[%s4253 + $0xd8] sm:$0xff]
    %v5235 = vld [vmem:[%s4253 + $0xe0] sm:$0xff]
    %v5236 = vld [vmem:[%s4253 + $0xf0] sm:$0xff]
    %v5237 = vld [vmem:[%s4253 + $0xf8] sm:$0xff]
    %v5238 = vld [vmem:[%s4253 + $0x108] sm:$0xff]
    %v5239 = vld [vmem:[%s4253 + $0x110] sm:$0xff]
    %v5240 = vld [vmem:[%s4253 + $0x120] sm:$0xff]
    %v5241 = vld [vmem:[%s4253 + $0x128] sm:$0xff]
    %v5242 = vld [vmem:[%s4253 + $0x138] sm:$0xff]
    %v5243 = vld [vmem:[%s4253 + $0x140] sm:$0xff]
    %v5244 = vld [vmem:[%s4253 + $0x150] sm:$0xff]
    %v5245 = vld [vmem:[%s4253 + $0x158] sm:$0xff]
    %v5246 = vld [vmem:[%s4253 + $0x168] sm:$0xff]
    %v5247 = vld [vmem:[%s4253 + $0x170] sm:$0xff]
    %v5248 = vld [vmem:[%s4253 + $0x1b0] sm:$0xff]
    %v5249 = vld [vmem:[%s4253 + $0x1b8] sm:$0xff]
    %v5250 = vld [vmem:[%s4253 + $0x1c8] sm:$0xff]
    %v5251 = vld [vmem:[%s4253 + $0x1d0] sm:$0xff]
    %v5252 = vld [vmem:[%s4253 + $0x1e0] sm:$0xff]
    %v5253 = vld [vmem:[%s4253 + $0x1e8] sm:$0xff]
    %v5254 = vld [vmem:[%s4253 + $0x1f8] sm:$0xff]
    %v5255 = vld [vmem:[%s4253 + $0x200] sm:$0xff]
    %v5256 = vld [vmem:[%s4253 + $0x210] sm:$0xff]
    %v5257 = vld [vmem:[%s4253 + $0x218] sm:$0xff]
    %v5258 = vld [vmem:[%s4253 + $0x228] sm:$0xff]
    %v5259 = vld [vmem:[%s4253 + $0x230] sm:$0xff]
    %v5260 = vld [vmem:[%s4253 + $0x240] sm:$0xff]
    %v5261 = vld [vmem:[%s4253 + $0x248] sm:$0xff]
    %v5262 = vld [vmem:[%s4253 + $0x258] sm:$0xff]
    %v5263 = vld [vmem:[%s4253 + $0x260] sm:$0xff]
    %v5264 = vld [vmem:[%s4253 + $0x270] sm:$0xff]
    %v5265 = vld [vmem:[%s4253 + $0x278] sm:$0xff]
    %v5266 = vld [vmem:[%s4253 + $0x288] sm:$0xff]
    %v5267 = vld [vmem:[%s4253 + $0x290] sm:$0xff]
    %v5268 = vld [vmem:[%s4253 + $0x2a0] sm:$0xff]
    %v5269 = vld [vmem:[%s4253 + $0x2a8] sm:$0xff]
    %v5270 = vld [vmem:[%s4253 + $0x2b8] sm:$0xff]
    %v5271 = vld [vmem:[%s4253 + $0x2c0] sm:$0xff]
    %v5272 = vld [vmem:[%s4253 + $0x2d0] sm:$0xff]
    %v5273 = vld [vmem:[%s4253 + $0x2d8] sm:$0xff]
    %v5274 = vld [vmem:[%s4253 + $0x2e8] sm:$0xff]
    %v5275 = vld [vmem:[%s4253 + $0x2f0] sm:$0xff]
    %v5276 = vld [vmem:[%s4253 + $0x300] sm:$0xff]
    %v5277 = vld [vmem:[%s4253 + $0x308] sm:$0xff]
    %v5278 = vld [vmem:[%s4253 + $0x318] sm:$0xff]
    %v5279 = vld [vmem:[%s4253 + $0x320] sm:$0xff]
    %5344 = vrot.lane.b32.xlu0 %v5216, 24
    %v5345 = vpop.permute.xlu0 %5344
    %5346 = vrot.lane.b32.xlu0 %v5217, 24
    %v5347 = vpop.permute.xlu0 %5346
    %5348 = vrot.lane.b32.xlu0 %v5218, 24
    %v5349 = vpop.permute.xlu0 %5348
    %5350 = vrot.lane.b32.xlu0 %v5219, 24
    %v5351 = vpop.permute.xlu0 %5350
    %5352 = vrot.lane.b32.xlu0 %v5220, 24
    %v5353 = vpop.permute.xlu0 %5352
    %5354 = vrot.lane.b32.xlu0 %v5221, 24
    %v5355 = vpop.permute.xlu0 %5354
    %5356 = vrot.lane.b32.xlu0 %v5222, 24
    %v5357 = vpop.permute.xlu0 %5356
    %5358 = vrot.lane.b32.xlu0 %v5223, 24
    %v5359 = vpop.permute.xlu0 %5358
    %5360 = vrot.lane.b32.xlu0 %v5224, 24
    %v5361 = vpop.permute.xlu0 %5360
    %5362 = vrot.lane.b32.xlu0 %v5225, 24
    %v5363 = vpop.permute.xlu0 %5362
    %5364 = vrot.lane.b32.xlu0 %v5226, 24
    %v5365 = vpop.permute.xlu0 %5364
    %5366 = vrot.lane.b32.xlu0 %v5227, 24
    %v5367 = vpop.permute.xlu0 %5366
    %5368 = vrot.lane.b32.xlu0 %v5228, 24
    %v5369 = vpop.permute.xlu0 %5368
    %5370 = vrot.lane.b32.xlu0 %v5229, 24
    %v5371 = vpop.permute.xlu0 %5370
    %5372 = vrot.lane.b32.xlu0 %v5230, 24
    %v5373 = vpop.permute.xlu0 %5372
    %5374 = vrot.lane.b32.xlu0 %v5231, 24
    %v5375 = vpop.permute.xlu0 %5374
    %5376 = vrot.lane.b32.xlu0 %v5232, 24
    %v5377 = vpop.permute.xlu0 %5376
    %5378 = vrot.lane.b32.xlu0 %v5233, 24
    %v5379 = vpop.permute.xlu0 %5378
    %5380 = vrot.lane.b32.xlu0 %v5234, 24
    %v5381 = vpop.permute.xlu0 %5380
    %5382 = vrot.lane.b32.xlu0 %v5235, 24
    %v5383 = vpop.permute.xlu0 %5382
    %5384 = vrot.lane.b32.xlu0 %v5236, 24
    %v5385 = vpop.permute.xlu0 %5384
    %5386 = vrot.lane.b32.xlu0 %v5237, 24
    %v5387 = vpop.permute.xlu0 %5386
    %5388 = vrot.lane.b32.xlu0 %v5238, 24
    %v5389 = vpop.permute.xlu0 %5388
    %5390 = vrot.lane.b32.xlu0 %v5239, 24
    %v5391 = vpop.permute.xlu0 %5390
    %5392 = vrot.lane.b32.xlu0 %v5240, 24
    %v5393 = vpop.permute.xlu0 %5392
    %5394 = vrot.lane.b32.xlu0 %v5241, 24
    %v5395 = vpop.permute.xlu0 %5394
    %5396 = vrot.lane.b32.xlu0 %v5242, 24
    %v5397 = vpop.permute.xlu0 %5396
    %5398 = vrot.lane.b32.xlu0 %v5243, 24
    %v5399 = vpop.permute.xlu0 %5398
    %5400 = vrot.lane.b32.xlu0 %v5244, 24
    %v5401 = vpop.permute.xlu0 %5400
    %5402 = vrot.lane.b32.xlu0 %v5245, 24
    %v5403 = vpop.permute.xlu0 %5402
    %5404 = vrot.lane.b32.xlu0 %v5246, 24
    %v5405 = vpop.permute.xlu0 %5404
    %5406 = vrot.lane.b32.xlu0 %v5247, 24
    %v5407 = vpop.permute.xlu0 %5406
    %5408 = vrot.lane.b32.xlu0 %v5248, 24
    %v5409 = vpop.permute.xlu0 %5408
    %5410 = vrot.lane.b32.xlu0 %v5249, 24
    %v5411 = vpop.permute.xlu0 %5410
    %5412 = vrot.lane.b32.xlu0 %v5250, 24
    %v5413 = vpop.permute.xlu0 %5412
    %5414 = vrot.lane.b32.xlu0 %v5251, 24
    %v5415 = vpop.permute.xlu0 %5414
    %5416 = vrot.lane.b32.xlu0 %v5252, 24
    %v5417 = vpop.permute.xlu0 %5416
    %5418 = vrot.lane.b32.xlu0 %v5253, 24
    %v5419 = vpop.permute.xlu0 %5418
    %5420 = vrot.lane.b32.xlu0 %v5254, 24
    %v5421 = vpop.permute.xlu0 %5420
    %5422 = vrot.lane.b32.xlu0 %v5255, 24
    %v5423 = vpop.permute.xlu0 %5422
    %5424 = vrot.lane.b32.xlu0 %v5256, 24
    %v5425 = vpop.permute.xlu0 %5424
    %5426 = vrot.lane.b32.xlu0 %v5257, 24
    %v5427 = vpop.permute.xlu0 %5426
    %5428 = vrot.lane.b32.xlu0 %v5258, 24
    %v5429 = vpop.permute.xlu0 %5428
    %5430 = vrot.lane.b32.xlu0 %v5259, 24
    %v5431 = vpop.permute.xlu0 %5430
    %5432 = vrot.lane.b32.xlu0 %v5260, 24
    %v5433 = vpop.permute.xlu0 %5432
    %5434 = vrot.lane.b32.xlu0 %v5261, 24
    %v5435 = vpop.permute.xlu0 %5434
    %5436 = vrot.lane.b32.xlu0 %v5262, 24
    %v5437 = vpop.permute.xlu0 %5436
    %5438 = vrot.lane.b32.xlu0 %v5263, 24
    %v5439 = vpop.permute.xlu0 %5438
    %5440 = vrot.lane.b32.xlu0 %v5264, 24
    %v5441 = vpop.permute.xlu0 %5440
    %5442 = vrot.lane.b32.xlu0 %v5265, 24
    %v5443 = vpop.permute.xlu0 %5442
    %5444 = vrot.lane.b32.xlu0 %v5266, 24
    %v5445 = vpop.permute.xlu0 %5444
    %5446 = vrot.lane.b32.xlu0 %v5267, 24
    %v5447 = vpop.permute.xlu0 %5446
    %5448 = vrot.lane.b32.xlu0 %v5268, 24
    %v5449 = vpop.permute.xlu0 %5448
    %5450 = vrot.lane.b32.xlu0 %v5269, 24
    %v5451 = vpop.permute.xlu0 %5450
    %5452 = vrot.lane.b32.xlu0 %v5270, 24
    %v5453 = vpop.permute.xlu0 %5452
    %5454 = vrot.lane.b32.xlu0 %v5271, 24
    %v5455 = vpop.permute.xlu0 %5454
    %5456 = vrot.lane.b32.xlu0 %v5272, 24
    %v5457 = vpop.permute.xlu0 %5456
    %5458 = vrot.lane.b32.xlu0 %v5273, 24
    %v5459 = vpop.permute.xlu0 %5458
    %5460 = vrot.lane.b32.xlu0 %v5274, 24
    %v5461 = vpop.permute.xlu0 %5460
    %5462 = vrot.lane.b32.xlu0 %v5275, 24
    %v5463 = vpop.permute.xlu0 %5462
    %5464 = vrot.lane.b32.xlu0 %v5276, 24
    %v5465 = vpop.permute.xlu0 %5464
    %5466 = vrot.lane.b32.xlu0 %v5277, 24
    %v5467 = vpop.permute.xlu0 %5466
    %5468 = vrot.lane.b32.xlu0 %v5278, 24
    %v5469 = vpop.permute.xlu0 %5468
    %5470 = vrot.lane.b32.xlu0 %v5279, 24
    %v5471 = vpop.permute.xlu0 %5470
    %vm5536 = vcmask 261312
    %5537 = vst.msk [vmem:[#allocation5] sm:$0xff] %vm5536, %v5345
    %5538 = vst.msk [vmem:[#allocation5 + $0x8] sm:$0xff] %vm5536, %v5347
    %5539 = vst.msk [vmem:[#allocation5 + $0x10] sm:$0xff] %vm5536, %v5349
    %5540 = vst.msk [vmem:[#allocation5 + $0x18] sm:$0xff] %vm5536, %v5351
    %5541 = vst.msk [vmem:[#allocation5 + $0x20] sm:$0xff] %vm5536, %v5353
    %5542 = vst.msk [vmem:[#allocation5 + $0x28] sm:$0xff] %vm5536, %v5355
    %5543 = vst.msk [vmem:[#allocation5 + $0x30] sm:$0xff] %vm5536, %v5357
    %5544 = vst.msk [vmem:[#allocation5 + $0x38] sm:$0xff] %vm5536, %v5359
    %5545 = vst.msk [vmem:[#allocation5 + $0x40] sm:$0xff] %vm5536, %v5361
    %5546 = vst.msk [vmem:[#allocation5 + $0x48] sm:$0xff] %vm5536, %v5363
    %5547 = vst.msk [vmem:[#allocation5 + $0x50] sm:$0xff] %vm5536, %v5365
    %5548 = vst.msk [vmem:[#allocation5 + $0x58] sm:$0xff] %vm5536, %v5367
    %5549 = vst.msk [vmem:[#allocation5 + $0x60] sm:$0xff] %vm5536, %v5369
    %5550 = vst.msk [vmem:[#allocation5 + $0x68] sm:$0xff] %vm5536, %v5371
    %5551 = vst.msk [vmem:[#allocation5 + $0x70] sm:$0xff] %vm5536, %v5373
    %5552 = vst.msk [vmem:[#allocation5 + $0x78] sm:$0xff] %vm5536, %v5375
    %5553 = vst.msk [vmem:[#allocation5 + $0x80] sm:$0xff] %vm5536, %v5377
    %5554 = vst.msk [vmem:[#allocation5 + $0x88] sm:$0xff] %vm5536, %v5379
    %5555 = vst.msk [vmem:[#allocation5 + $0x90] sm:$0xff] %vm5536, %v5381
    %5556 = vst.msk [vmem:[#allocation5 + $0x98] sm:$0xff] %vm5536, %v5383
    %5557 = vst.msk [vmem:[#allocation5 + $0xa0] sm:$0xff] %vm5536, %v5385
    %5558 = vst.msk [vmem:[#allocation5 + $0xa8] sm:$0xff] %vm5536, %v5387
    %5559 = vst.msk [vmem:[#allocation5 + $0xb0] sm:$0xff] %vm5536, %v5389
    %5560 = vst.msk [vmem:[#allocation5 + $0xb8] sm:$0xff] %vm5536, %v5391
    %5561 = vst.msk [vmem:[#allocation5 + $0xc0] sm:$0xff] %vm5536, %v5393
    %5562 = vst.msk [vmem:[#allocation5 + $0xc8] sm:$0xff] %vm5536, %v5395
    %5563 = vst.msk [vmem:[#allocation5 + $0xd0] sm:$0xff] %vm5536, %v5397
    %5564 = vst.msk [vmem:[#allocation5 + $0xd8] sm:$0xff] %vm5536, %v5399
    %5565 = vst.msk [vmem:[#allocation5 + $0xe0] sm:$0xff] %vm5536, %v5401
    %5566 = vst.msk [vmem:[#allocation5 + $0xe8] sm:$0xff] %vm5536, %v5403
    %5567 = vst.msk [vmem:[#allocation5 + $0xf0] sm:$0xff] %vm5536, %v5405
    %5568 = vst.msk [vmem:[#allocation5 + $0xf8] sm:$0xff] %vm5536, %v5407
    %5569 = vst.msk [vmem:[#allocation5 + $0x100] sm:$0xff] %vm5536, %v5409
    %5570 = vst.msk [vmem:[#allocation5 + $0x108] sm:$0xff] %vm5536, %v5411
    %5571 = vst.msk [vmem:[#allocation5 + $0x110] sm:$0xff] %vm5536, %v5413
    %5572 = vst.msk [vmem:[#allocation5 + $0x118] sm:$0xff] %vm5536, %v5415
    %5573 = vst.msk [vmem:[#allocation5 + $0x120] sm:$0xff] %vm5536, %v5417
    %5574 = vst.msk [vmem:[#allocation5 + $0x128] sm:$0xff] %vm5536, %v5419
    %5575 = vst.msk [vmem:[#allocation5 + $0x130] sm:$0xff] %vm5536, %v5421
    %5576 = vst.msk [vmem:[#allocation5 + $0x138] sm:$0xff] %vm5536, %v5423
    %5577 = vst.msk [vmem:[#allocation5 + $0x140] sm:$0xff] %vm5536, %v5425
    %5578 = vst.msk [vmem:[#allocation5 + $0x148] sm:$0xff] %vm5536, %v5427
    %5579 = vst.msk [vmem:[#allocation5 + $0x150] sm:$0xff] %vm5536, %v5429
    %5580 = vst.msk [vmem:[#allocation5 + $0x158] sm:$0xff] %vm5536, %v5431
    %5581 = vst.msk [vmem:[#allocation5 + $0x160] sm:$0xff] %vm5536, %v5433
    %5582 = vst.msk [vmem:[#allocation5 + $0x168] sm:$0xff] %vm5536, %v5435
    %5583 = vst.msk [vmem:[#allocation5 + $0x170] sm:$0xff] %vm5536, %v5437
    %5584 = vst.msk [vmem:[#allocation5 + $0x178] sm:$0xff] %vm5536, %v5439
    %5585 = vst.msk [vmem:[#allocation5 + $0x180] sm:$0xff] %vm5536, %v5441
    %5586 = vst.msk [vmem:[#allocation5 + $0x188] sm:$0xff] %vm5536, %v5443
    %5587 = vst.msk [vmem:[#allocation5 + $0x190] sm:$0xff] %vm5536, %v5445
    %5588 = vst.msk [vmem:[#allocation5 + $0x198] sm:$0xff] %vm5536, %v5447
    %5589 = vst.msk [vmem:[#allocation5 + $0x1a0] sm:$0xff] %vm5536, %v5449
    %5590 = vst.msk [vmem:[#allocation5 + $0x1a8] sm:$0xff] %vm5536, %v5451
    %5591 = vst.msk [vmem:[#allocation5 + $0x1b0] sm:$0xff] %vm5536, %v5453
    %5592 = vst.msk [vmem:[#allocation5 + $0x1b8] sm:$0xff] %vm5536, %v5455
    %5593 = vst.msk [vmem:[#allocation5 + $0x1c0] sm:$0xff] %vm5536, %v5457
    %5594 = vst.msk [vmem:[#allocation5 + $0x1c8] sm:$0xff] %vm5536, %v5459
    %5595 = vst.msk [vmem:[#allocation5 + $0x1d0] sm:$0xff] %vm5536, %v5461
    %5596 = vst.msk [vmem:[#allocation5 + $0x1d8] sm:$0xff] %vm5536, %v5463
    %5597 = vst.msk [vmem:[#allocation5 + $0x1e0] sm:$0xff] %vm5536, %v5465
    %5598 = vst.msk [vmem:[#allocation5 + $0x1e8] sm:$0xff] %vm5536, %v5467
    %5599 = vst.msk [vmem:[#allocation5 + $0x1f0] sm:$0xff] %vm5536, %v5469
    %5600 = vst.msk [vmem:[#allocation5 + $0x1f8] sm:$0xff] %vm5536, %v5471
    %v5601 = vld [vmem:[%s4253 + $0x1] sm:$0xff]
    %v5602 = vld [vmem:[%s4253 + $0x9] sm:$0xff]
    %v5603 = vld [vmem:[%s4253 + $0x19] sm:$0xff]
    %v5604 = vld [vmem:[%s4253 + $0x21] sm:$0xff]
    %v5605 = vld [vmem:[%s4253 + $0x31] sm:$0xff]
    %v5606 = vld [vmem:[%s4253 + $0x39] sm:$0xff]
    %v5607 = vld [vmem:[%s4253 + $0x49] sm:$0xff]
    %v5608 = vld [vmem:[%s4253 + $0x51] sm:$0xff]
    %v5609 = vld [vmem:[%s4253 + $0x61] sm:$0xff]
    %v5610 = vld [vmem:[%s4253 + $0x69] sm:$0xff]
    %v5611 = vld [vmem:[%s4253 + $0x79] sm:$0xff]
    %v5612 = vld [vmem:[%s4253 + $0x81] sm:$0xff]
    %v5613 = vld [vmem:[%s4253 + $0x91] sm:$0xff]
    %v5614 = vld [vmem:[%s4253 + $0x99] sm:$0xff]
    %v5615 = vld [vmem:[%s4253 + $0xa9] sm:$0xff]
    %v5616 = vld [vmem:[%s4253 + $0xb1] sm:$0xff]
    %v5617 = vld [vmem:[%s4253 + $0xc1] sm:$0xff]
    %v5618 = vld [vmem:[%s4253 + $0xc9] sm:$0xff]
    %v5619 = vld [vmem:[%s4253 + $0xd9] sm:$0xff]
    %v5620 = vld [vmem:[%s4253 + $0xe1] sm:$0xff]
    %v5621 = vld [vmem:[%s4253 + $0xf1] sm:$0xff]
    %v5622 = vld [vmem:[%s4253 + $0xf9] sm:$0xff]
    %v5623 = vld [vmem:[%s4253 + $0x109] sm:$0xff]
    %v5624 = vld [vmem:[%s4253 + $0x111] sm:$0xff]
    %v5625 = vld [vmem:[%s4253 + $0x121] sm:$0xff]
    %v5626 = vld [vmem:[%s4253 + $0x129] sm:$0xff]
    %v5627 = vld [vmem:[%s4253 + $0x139] sm:$0xff]
    %v5628 = vld [vmem:[%s4253 + $0x141] sm:$0xff]
    %v5629 = vld [vmem:[%s4253 + $0x151] sm:$0xff]
    %v5630 = vld [vmem:[%s4253 + $0x159] sm:$0xff]
    %v5631 = vld [vmem:[%s4253 + $0x169] sm:$0xff]
    %v5632 = vld [vmem:[%s4253 + $0x171] sm:$0xff]
    %v5633 = vld [vmem:[%s4253 + $0x1b1] sm:$0xff]
    %v5634 = vld [vmem:[%s4253 + $0x1b9] sm:$0xff]
    %v5635 = vld [vmem:[%s4253 + $0x1c9] sm:$0xff]
    %v5636 = vld [vmem:[%s4253 + $0x1d1] sm:$0xff]
    %v5637 = vld [vmem:[%s4253 + $0x1e1] sm:$0xff]
    %v5638 = vld [vmem:[%s4253 + $0x1e9] sm:$0xff]
    %v5639 = vld [vmem:[%s4253 + $0x1f9] sm:$0xff]
    %v5640 = vld [vmem:[%s4253 + $0x201] sm:$0xff]
    %v5641 = vld [vmem:[%s4253 + $0x211] sm:$0xff]
    %v5642 = vld [vmem:[%s4253 + $0x219] sm:$0xff]
    %v5643 = vld [vmem:[%s4253 + $0x229] sm:$0xff]
    %v5644 = vld [vmem:[%s4253 + $0x231] sm:$0xff]
    %v5645 = vld [vmem:[%s4253 + $0x241] sm:$0xff]
    %v5646 = vld [vmem:[%s4253 + $0x249] sm:$0xff]
    %v5647 = vld [vmem:[%s4253 + $0x259] sm:$0xff]
    %v5648 = vld [vmem:[%s4253 + $0x261] sm:$0xff]
    %v5649 = vld [vmem:[%s4253 + $0x271] sm:$0xff]
    %v5650 = vld [vmem:[%s4253 + $0x279] sm:$0xff]
    %v5651 = vld [vmem:[%s4253 + $0x289] sm:$0xff]
    %v5652 = vld [vmem:[%s4253 + $0x291] sm:$0xff]
    %v5653 = vld [vmem:[%s4253 + $0x2a1] sm:$0xff]
    %v5654 = vld [vmem:[%s4253 + $0x2a9] sm:$0xff]
    %v5655 = vld [vmem:[%s4253 + $0x2b9] sm:$0xff]
    %v5656 = vld [vmem:[%s4253 + $0x2c1] sm:$0xff]
    %v5657 = vld [vmem:[%s4253 + $0x2d1] sm:$0xff]
    %v5658 = vld [vmem:[%s4253 + $0x2d9] sm:$0xff]
    %v5659 = vld [vmem:[%s4253 + $0x2e9] sm:$0xff]
    %v5660 = vld [vmem:[%s4253 + $0x2f1] sm:$0xff]
    %v5661 = vld [vmem:[%s4253 + $0x301] sm:$0xff]
    %v5662 = vld [vmem:[%s4253 + $0x309] sm:$0xff]
    %v5663 = vld [vmem:[%s4253 + $0x319] sm:$0xff]
    %v5664 = vld [vmem:[%s4253 + $0x321] sm:$0xff]
    %5729 = vrot.lane.b32.xlu0 %v5601, 32
    %v5730 = vpop.permute.xlu0 %5729
    %5731 = vrot.lane.b32.xlu0 %v5602, 32
    %v5732 = vpop.permute.xlu0 %5731
    %5733 = vrot.lane.b32.xlu0 %v5603, 32
    %v5734 = vpop.permute.xlu0 %5733
    %5735 = vrot.lane.b32.xlu0 %v5604, 32
    %v5736 = vpop.permute.xlu0 %5735
    %5737 = vrot.lane.b32.xlu0 %v5605, 32
    %v5738 = vpop.permute.xlu0 %5737
    %5739 = vrot.lane.b32.xlu0 %v5606, 32
    %v5740 = vpop.permute.xlu0 %5739
    %5741 = vrot.lane.b32.xlu0 %v5607, 32
    %v5742 = vpop.permute.xlu0 %5741
    %5743 = vrot.lane.b32.xlu0 %v5608, 32
    %v5744 = vpop.permute.xlu0 %5743
    %5745 = vrot.lane.b32.xlu0 %v5609, 32
    %v5746 = vpop.permute.xlu0 %5745
    %5747 = vrot.lane.b32.xlu0 %v5610, 32
    %v5748 = vpop.permute.xlu0 %5747
    %5749 = vrot.lane.b32.xlu0 %v5611, 32
    %v5750 = vpop.permute.xlu0 %5749
    %5751 = vrot.lane.b32.xlu0 %v5612, 32
    %v5752 = vpop.permute.xlu0 %5751
    %5753 = vrot.lane.b32.xlu0 %v5613, 32
    %v5754 = vpop.permute.xlu0 %5753
    %5755 = vrot.lane.b32.xlu0 %v5614, 32
    %v5756 = vpop.permute.xlu0 %5755
    %5757 = vrot.lane.b32.xlu0 %v5615, 32
    %v5758 = vpop.permute.xlu0 %5757
    %5759 = vrot.lane.b32.xlu0 %v5616, 32
    %v5760 = vpop.permute.xlu0 %5759
    %5761 = vrot.lane.b32.xlu0 %v5617, 32
    %v5762 = vpop.permute.xlu0 %5761
    %5763 = vrot.lane.b32.xlu0 %v5618, 32
    %v5764 = vpop.permute.xlu0 %5763
    %5765 = vrot.lane.b32.xlu0 %v5619, 32
    %v5766 = vpop.permute.xlu0 %5765
    %5767 = vrot.lane.b32.xlu0 %v5620, 32
    %v5768 = vpop.permute.xlu0 %5767
    %5769 = vrot.lane.b32.xlu0 %v5621, 32
    %v5770 = vpop.permute.xlu0 %5769
    %5771 = vrot.lane.b32.xlu0 %v5622, 32
    %v5772 = vpop.permute.xlu0 %5771
    %5773 = vrot.lane.b32.xlu0 %v5623, 32
    %v5774 = vpop.permute.xlu0 %5773
    %5775 = vrot.lane.b32.xlu0 %v5624, 32
    %v5776 = vpop.permute.xlu0 %5775
    %5777 = vrot.lane.b32.xlu0 %v5625, 32
    %v5778 = vpop.permute.xlu0 %5777
    %5779 = vrot.lane.b32.xlu0 %v5626, 32
    %v5780 = vpop.permute.xlu0 %5779
    %5781 = vrot.lane.b32.xlu0 %v5627, 32
    %v5782 = vpop.permute.xlu0 %5781
    %5783 = vrot.lane.b32.xlu0 %v5628, 32
    %v5784 = vpop.permute.xlu0 %5783
    %5785 = vrot.lane.b32.xlu0 %v5629, 32
    %v5786 = vpop.permute.xlu0 %5785
    %5787 = vrot.lane.b32.xlu0 %v5630, 32
    %v5788 = vpop.permute.xlu0 %5787
    %5789 = vrot.lane.b32.xlu0 %v5631, 32
    %v5790 = vpop.permute.xlu0 %5789
    %5791 = vrot.lane.b32.xlu0 %v5632, 32
    %v5792 = vpop.permute.xlu0 %5791
    %5793 = vrot.lane.b32.xlu0 %v5633, 32
    %v5794 = vpop.permute.xlu0 %5793
    %5795 = vrot.lane.b32.xlu0 %v5634, 32
    %v5796 = vpop.permute.xlu0 %5795
    %5797 = vrot.lane.b32.xlu0 %v5635, 32
    %v5798 = vpop.permute.xlu0 %5797
    %5799 = vrot.lane.b32.xlu0 %v5636, 32
    %v5800 = vpop.permute.xlu0 %5799
    %5801 = vrot.lane.b32.xlu0 %v5637, 32
    %v5802 = vpop.permute.xlu0 %5801
    %5803 = vrot.lane.b32.xlu0 %v5638, 32
    %v5804 = vpop.permute.xlu0 %5803
    %5805 = vrot.lane.b32.xlu0 %v5639, 32
    %v5806 = vpop.permute.xlu0 %5805
    %5807 = vrot.lane.b32.xlu0 %v5640, 32
    %v5808 = vpop.permute.xlu0 %5807
    %5809 = vrot.lane.b32.xlu0 %v5641, 32
    %v5810 = vpop.permute.xlu0 %5809
    %5811 = vrot.lane.b32.xlu0 %v5642, 32
    %v5812 = vpop.permute.xlu0 %5811
    %5813 = vrot.lane.b32.xlu0 %v5643, 32
    %v5814 = vpop.permute.xlu0 %5813
    %5815 = vrot.lane.b32.xlu0 %v5644, 32
    %v5816 = vpop.permute.xlu0 %5815
    %5817 = vrot.lane.b32.xlu0 %v5645, 32
    %v5818 = vpop.permute.xlu0 %5817
    %5819 = vrot.lane.b32.xlu0 %v5646, 32
    %v5820 = vpop.permute.xlu0 %5819
    %5821 = vrot.lane.b32.xlu0 %v5647, 32
    %v5822 = vpop.permute.xlu0 %5821
    %5823 = vrot.lane.b32.xlu0 %v5648, 32
    %v5824 = vpop.permute.xlu0 %5823
    %5825 = vrot.lane.b32.xlu0 %v5649, 32
    %v5826 = vpop.permute.xlu0 %5825
    %5827 = vrot.lane.b32.xlu0 %v5650, 32
    %v5828 = vpop.permute.xlu0 %5827
    %5829 = vrot.lane.b32.xlu0 %v5651, 32
    %v5830 = vpop.permute.xlu0 %5829
    %5831 = vrot.lane.b32.xlu0 %v5652, 32
    %v5832 = vpop.permute.xlu0 %5831
    %5833 = vrot.lane.b32.xlu0 %v5653, 32
    %v5834 = vpop.permute.xlu0 %5833
    %5835 = vrot.lane.b32.xlu0 %v5654, 32
    %v5836 = vpop.permute.xlu0 %5835
    %5837 = vrot.lane.b32.xlu0 %v5655, 32
    %v5838 = vpop.permute.xlu0 %5837
    %5839 = vrot.lane.b32.xlu0 %v5656, 32
    %v5840 = vpop.permute.xlu0 %5839
    %5841 = vrot.lane.b32.xlu0 %v5657, 32
    %v5842 = vpop.permute.xlu0 %5841
    %5843 = vrot.lane.b32.xlu0 %v5658, 32
    %v5844 = vpop.permute.xlu0 %5843
    %5845 = vrot.lane.b32.xlu0 %v5659, 32
    %v5846 = vpop.permute.xlu0 %5845
    %5847 = vrot.lane.b32.xlu0 %v5660, 32
    %v5848 = vpop.permute.xlu0 %5847
    %5849 = vrot.lane.b32.xlu0 %v5661, 32
    %v5850 = vpop.permute.xlu0 %5849
    %5851 = vrot.lane.b32.xlu0 %v5662, 32
    %v5852 = vpop.permute.xlu0 %5851
    %5853 = vrot.lane.b32.xlu0 %v5663, 32
    %v5854 = vpop.permute.xlu0 %5853
    %5855 = vrot.lane.b32.xlu0 %v5664, 32
    %v5856 = vpop.permute.xlu0 %5855
    %vm5921 = vcmask 326912
    %5922 = vst.msk [vmem:[#allocation5] sm:$0xff] %vm5921, %v5730
    %5923 = vst.msk [vmem:[#allocation5 + $0x8] sm:$0xff] %vm5921, %v5732
    %5924 = vst.msk [vmem:[#allocation5 + $0x10] sm:$0xff] %vm5921, %v5734
    %5925 = vst.msk [vmem:[#allocation5 + $0x18] sm:$0xff] %vm5921, %v5736
    %5926 = vst.msk [vmem:[#allocation5 + $0x20] sm:$0xff] %vm5921, %v5738
    %5927 = vst.msk [vmem:[#allocation5 + $0x28] sm:$0xff] %vm5921, %v5740
    %5928 = vst.msk [vmem:[#allocation5 + $0x30] sm:$0xff] %vm5921, %v5742
    %5929 = vst.msk [vmem:[#allocation5 + $0x38] sm:$0xff] %vm5921, %v5744
    %5930 = vst.msk [vmem:[#allocation5 + $0x40] sm:$0xff] %vm5921, %v5746
    %5931 = vst.msk [vmem:[#allocation5 + $0x48] sm:$0xff] %vm5921, %v5748
    %5932 = vst.msk [vmem:[#allocation5 + $0x50] sm:$0xff] %vm5921, %v5750
    %5933 = vst.msk [vmem:[#allocation5 + $0x58] sm:$0xff] %vm5921, %v5752
    %5934 = vst.msk [vmem:[#allocation5 + $0x60] sm:$0xff] %vm5921, %v5754
    %5935 = vst.msk [vmem:[#allocation5 + $0x68] sm:$0xff] %vm5921, %v5756
    %5936 = vst.msk [vmem:[#allocation5 + $0x70] sm:$0xff] %vm5921, %v5758
    %5937 = vst.msk [vmem:[#allocation5 + $0x78] sm:$0xff] %vm5921, %v5760
    %5938 = vst.msk [vmem:[#allocation5 + $0x80] sm:$0xff] %vm5921, %v5762
    %5939 = vst.msk [vmem:[#allocation5 + $0x88] sm:$0xff] %vm5921, %v5764
    %5940 = vst.msk [vmem:[#allocation5 + $0x90] sm:$0xff] %vm5921, %v5766
    %5941 = vst.msk [vmem:[#allocation5 + $0x98] sm:$0xff] %vm5921, %v5768
    %5942 = vst.msk [vmem:[#allocation5 + $0xa0] sm:$0xff] %vm5921, %v5770
    %5943 = vst.msk [vmem:[#allocation5 + $0xa8] sm:$0xff] %vm5921, %v5772
    %5944 = vst.msk [vmem:[#allocation5 + $0xb0] sm:$0xff] %vm5921, %v5774
    %5945 = vst.msk [vmem:[#allocation5 + $0xb8] sm:$0xff] %vm5921, %v5776
    %5946 = vst.msk [vmem:[#allocation5 + $0xc0] sm:$0xff] %vm5921, %v5778
    %5947 = vst.msk [vmem:[#allocation5 + $0xc8] sm:$0xff] %vm5921, %v5780
    %5948 = vst.msk [vmem:[#allocation5 + $0xd0] sm:$0xff] %vm5921, %v5782
    %5949 = vst.msk [vmem:[#allocation5 + $0xd8] sm:$0xff] %vm5921, %v5784
    %5950 = vst.msk [vmem:[#allocation5 + $0xe0] sm:$0xff] %vm5921, %v5786
    %5951 = vst.msk [vmem:[#allocation5 + $0xe8] sm:$0xff] %vm5921, %v5788
    %5952 = vst.msk [vmem:[#allocation5 + $0xf0] sm:$0xff] %vm5921, %v5790
    %5953 = vst.msk [vmem:[#allocation5 + $0xf8] sm:$0xff] %vm5921, %v5792
    %5954 = vst.msk [vmem:[#allocation5 + $0x100] sm:$0xff] %vm5921, %v5794
    %5955 = vst.msk [vmem:[#allocation5 + $0x108] sm:$0xff] %vm5921, %v5796
    %5956 = vst.msk [vmem:[#allocation5 + $0x110] sm:$0xff] %vm5921, %v5798
    %5957 = vst.msk [vmem:[#allocation5 + $0x118] sm:$0xff] %vm5921, %v5800
    %5958 = vst.msk [vmem:[#allocation5 + $0x120] sm:$0xff] %vm5921, %v5802
    %5959 = vst.msk [vmem:[#allocation5 + $0x128] sm:$0xff] %vm5921, %v5804
    %5960 = vst.msk [vmem:[#allocation5 + $0x130] sm:$0xff] %vm5921, %v5806
    %5961 = vst.msk [vmem:[#allocation5 + $0x138] sm:$0xff] %vm5921, %v5808
    %5962 = vst.msk [vmem:[#allocation5 + $0x140] sm:$0xff] %vm5921, %v5810
    %5963 = vst.msk [vmem:[#allocation5 + $0x148] sm:$0xff] %vm5921, %v5812
    %5964 = vst.msk [vmem:[#allocation5 + $0x150] sm:$0xff] %vm5921, %v5814
    %5965 = vst.msk [vmem:[#allocation5 + $0x158] sm:$0xff] %vm5921, %v5816
    %5966 = vst.msk [vmem:[#allocation5 + $0x160] sm:$0xff] %vm5921, %v5818
    %5967 = vst.msk [vmem:[#allocation5 + $0x168] sm:$0xff] %vm5921, %v5820
    %5968 = vst.msk [vmem:[#allocation5 + $0x170] sm:$0xff] %vm5921, %v5822
    %5969 = vst.msk [vmem:[#allocation5 + $0x178] sm:$0xff] %vm5921, %v5824
    %5970 = vst.msk [vmem:[#allocation5 + $0x180] sm:$0xff] %vm5921, %v5826
    %5971 = vst.msk [vmem:[#allocation5 + $0x188] sm:$0xff] %vm5921, %v5828
    %5972 = vst.msk [vmem:[#allocation5 + $0x190] sm:$0xff] %vm5921, %v5830
    %5973 = vst.msk [vmem:[#allocation5 + $0x198] sm:$0xff] %vm5921, %v5832
    %5974 = vst.msk [vmem:[#allocation5 + $0x1a0] sm:$0xff] %vm5921, %v5834
    %5975 = vst.msk [vmem:[#allocation5 + $0x1a8] sm:$0xff] %vm5921, %v5836
    %5976 = vst.msk [vmem:[#allocation5 + $0x1b0] sm:$0xff] %vm5921, %v5838
    %5977 = vst.msk [vmem:[#allocation5 + $0x1b8] sm:$0xff] %vm5921, %v5840
    %5978 = vst.msk [vmem:[#allocation5 + $0x1c0] sm:$0xff] %vm5921, %v5842
    %5979 = vst.msk [vmem:[#allocation5 + $0x1c8] sm:$0xff] %vm5921, %v5844
    %5980 = vst.msk [vmem:[#allocation5 + $0x1d0] sm:$0xff] %vm5921, %v5846
    %5981 = vst.msk [vmem:[#allocation5 + $0x1d8] sm:$0xff] %vm5921, %v5848
    %5982 = vst.msk [vmem:[#allocation5 + $0x1e0] sm:$0xff] %vm5921, %v5850
    %5983 = vst.msk [vmem:[#allocation5 + $0x1e8] sm:$0xff] %vm5921, %v5852
    %5984 = vst.msk [vmem:[#allocation5 + $0x1f0] sm:$0xff] %vm5921, %v5854
    %5985 = vst.msk [vmem:[#allocation5 + $0x1f8] sm:$0xff] %vm5921, %v5856
    %v5986 = vld [vmem:[%s4253 + $0x2] sm:$0xff]
    %v5987 = vld [vmem:[%s4253 + $0xa] sm:$0xff]
    %v5988 = vld [vmem:[%s4253 + $0x1a] sm:$0xff]
    %v5989 = vld [vmem:[%s4253 + $0x22] sm:$0xff]
    %v5990 = vld [vmem:[%s4253 + $0x32] sm:$0xff]
    %v5991 = vld [vmem:[%s4253 + $0x3a] sm:$0xff]
    %v5992 = vld [vmem:[%s4253 + $0x4a] sm:$0xff]
    %v5993 = vld [vmem:[%s4253 + $0x52] sm:$0xff]
    %v5994 = vld [vmem:[%s4253 + $0x62] sm:$0xff]
    %v5995 = vld [vmem:[%s4253 + $0x6a] sm:$0xff]
    %v5996 = vld [vmem:[%s4253 + $0x7a] sm:$0xff]
    %v5997 = vld [vmem:[%s4253 + $0x82] sm:$0xff]
    %v5998 = vld [vmem:[%s4253 + $0x92] sm:$0xff]
    %v5999 = vld [vmem:[%s4253 + $0x9a] sm:$0xff]
    %v6000 = vld [vmem:[%s4253 + $0xaa] sm:$0xff]
    %v6001 = vld [vmem:[%s4253 + $0xb2] sm:$0xff]
    %v6002 = vld [vmem:[%s4253 + $0xc2] sm:$0xff]
    %v6003 = vld [vmem:[%s4253 + $0xca] sm:$0xff]
    %v6004 = vld [vmem:[%s4253 + $0xda] sm:$0xff]
    %v6005 = vld [vmem:[%s4253 + $0xe2] sm:$0xff]
    %v6006 = vld [vmem:[%s4253 + $0xf2] sm:$0xff]
    %v6007 = vld [vmem:[%s4253 + $0xfa] sm:$0xff]
    %v6008 = vld [vmem:[%s4253 + $0x10a] sm:$0xff]
    %v6009 = vld [vmem:[%s4253 + $0x112] sm:$0xff]
    %v6010 = vld [vmem:[%s4253 + $0x122] sm:$0xff]
    %v6011 = vld [vmem:[%s4253 + $0x12a] sm:$0xff]
    %v6012 = vld [vmem:[%s4253 + $0x13a] sm:$0xff]
    %v6013 = vld [vmem:[%s4253 + $0x142] sm:$0xff]
    %v6014 = vld [vmem:[%s4253 + $0x152] sm:$0xff]
    %v6015 = vld [vmem:[%s4253 + $0x15a] sm:$0xff]
    %v6016 = vld [vmem:[%s4253 + $0x16a] sm:$0xff]
    %v6017 = vld [vmem:[%s4253 + $0x172] sm:$0xff]
    %v6018 = vld [vmem:[%s4253 + $0x1b2] sm:$0xff]
    %v6019 = vld [vmem:[%s4253 + $0x1ba] sm:$0xff]
    %v6020 = vld [vmem:[%s4253 + $0x1ca] sm:$0xff]
    %v6021 = vld [vmem:[%s4253 + $0x1d2] sm:$0xff]
    %v6022 = vld [vmem:[%s4253 + $0x1e2] sm:$0xff]
    %v6023 = vld [vmem:[%s4253 + $0x1ea] sm:$0xff]
    %v6024 = vld [vmem:[%s4253 + $0x1fa] sm:$0xff]
    %v6025 = vld [vmem:[%s4253 + $0x202] sm:$0xff]
    %v6026 = vld [vmem:[%s4253 + $0x212] sm:$0xff]
    %v6027 = vld [vmem:[%s4253 + $0x21a] sm:$0xff]
    %v6028 = vld [vmem:[%s4253 + $0x22a] sm:$0xff]
    %v6029 = vld [vmem:[%s4253 + $0x232] sm:$0xff]
    %v6030 = vld [vmem:[%s4253 + $0x242] sm:$0xff]
    %v6031 = vld [vmem:[%s4253 + $0x24a] sm:$0xff]
    %v6032 = vld [vmem:[%s4253 + $0x25a] sm:$0xff]
    %v6033 = vld [vmem:[%s4253 + $0x262] sm:$0xff]
    %v6034 = vld [vmem:[%s4253 + $0x272] sm:$0xff]
    %v6035 = vld [vmem:[%s4253 + $0x27a] sm:$0xff]
    %v6036 = vld [vmem:[%s4253 + $0x28a] sm:$0xff]
    %v6037 = vld [vmem:[%s4253 + $0x292] sm:$0xff]
    %v6038 = vld [vmem:[%s4253 + $0x2a2] sm:$0xff]
    %v6039 = vld [vmem:[%s4253 + $0x2aa] sm:$0xff]
    %v6040 = vld [vmem:[%s4253 + $0x2ba] sm:$0xff]
    %v6041 = vld [vmem:[%s4253 + $0x2c2] sm:$0xff]
    %v6042 = vld [vmem:[%s4253 + $0x2d2] sm:$0xff]
    %v6043 = vld [vmem:[%s4253 + $0x2da] sm:$0xff]
    %v6044 = vld [vmem:[%s4253 + $0x2ea] sm:$0xff]
    %v6045 = vld [vmem:[%s4253 + $0x2f2] sm:$0xff]
    %v6046 = vld [vmem:[%s4253 + $0x302] sm:$0xff]
    %v6047 = vld [vmem:[%s4253 + $0x30a] sm:$0xff]
    %v6048 = vld [vmem:[%s4253 + $0x31a] sm:$0xff]
    %v6049 = vld [vmem:[%s4253 + $0x322] sm:$0xff]
    %6114 = vrot.lane.b32.xlu0 %v5986, 40
    %v6115 = vpop.permute.xlu0 %6114
    %6116 = vrot.lane.b32.xlu0 %v5987, 40
    %v6117 = vpop.permute.xlu0 %6116
    %6118 = vrot.lane.b32.xlu0 %v5988, 40
    %v6119 = vpop.permute.xlu0 %6118
    %6120 = vrot.lane.b32.xlu0 %v5989, 40
    %v6121 = vpop.permute.xlu0 %6120
    %6122 = vrot.lane.b32.xlu0 %v5990, 40
    %v6123 = vpop.permute.xlu0 %6122
    %6124 = vrot.lane.b32.xlu0 %v5991, 40
    %v6125 = vpop.permute.xlu0 %6124
    %6126 = vrot.lane.b32.xlu0 %v5992, 40
    %v6127 = vpop.permute.xlu0 %6126
    %6128 = vrot.lane.b32.xlu0 %v5993, 40
    %v6129 = vpop.permute.xlu0 %6128
    %6130 = vrot.lane.b32.xlu0 %v5994, 40
    %v6131 = vpop.permute.xlu0 %6130
    %6132 = vrot.lane.b32.xlu0 %v5995, 40
    %v6133 = vpop.permute.xlu0 %6132
    %6134 = vrot.lane.b32.xlu0 %v5996, 40
    %v6135 = vpop.permute.xlu0 %6134
    %6136 = vrot.lane.b32.xlu0 %v5997, 40
    %v6137 = vpop.permute.xlu0 %6136
    %6138 = vrot.lane.b32.xlu0 %v5998, 40
    %v6139 = vpop.permute.xlu0 %6138
    %6140 = vrot.lane.b32.xlu0 %v5999, 40
    %v6141 = vpop.permute.xlu0 %6140
    %6142 = vrot.lane.b32.xlu0 %v6000, 40
    %v6143 = vpop.permute.xlu0 %6142
    %6144 = vrot.lane.b32.xlu0 %v6001, 40
    %v6145 = vpop.permute.xlu0 %6144
    %6146 = vrot.lane.b32.xlu0 %v6002, 40
    %v6147 = vpop.permute.xlu0 %6146
    %6148 = vrot.lane.b32.xlu0 %v6003, 40
    %v6149 = vpop.permute.xlu0 %6148
    %6150 = vrot.lane.b32.xlu0 %v6004, 40
    %v6151 = vpop.permute.xlu0 %6150
    %6152 = vrot.lane.b32.xlu0 %v6005, 40
    %v6153 = vpop.permute.xlu0 %6152
    %6154 = vrot.lane.b32.xlu0 %v6006, 40
    %v6155 = vpop.permute.xlu0 %6154
    %6156 = vrot.lane.b32.xlu0 %v6007, 40
    %v6157 = vpop.permute.xlu0 %6156
    %6158 = vrot.lane.b32.xlu0 %v6008, 40
    %v6159 = vpop.permute.xlu0 %6158
    %6160 = vrot.lane.b32.xlu0 %v6009, 40
    %v6161 = vpop.permute.xlu0 %6160
    %6162 = vrot.lane.b32.xlu0 %v6010, 40
    %v6163 = vpop.permute.xlu0 %6162
    %6164 = vrot.lane.b32.xlu0 %v6011, 40
    %v6165 = vpop.permute.xlu0 %6164
    %6166 = vrot.lane.b32.xlu0 %v6012, 40
    %v6167 = vpop.permute.xlu0 %6166
    %6168 = vrot.lane.b32.xlu0 %v6013, 40
    %v6169 = vpop.permute.xlu0 %6168
    %6170 = vrot.lane.b32.xlu0 %v6014, 40
    %v6171 = vpop.permute.xlu0 %6170
    %6172 = vrot.lane.b32.xlu0 %v6015, 40
    %v6173 = vpop.permute.xlu0 %6172
    %6174 = vrot.lane.b32.xlu0 %v6016, 40
    %v6175 = vpop.permute.xlu0 %6174
    %6176 = vrot.lane.b32.xlu0 %v6017, 40
    %v6177 = vpop.permute.xlu0 %6176
    %6178 = vrot.lane.b32.xlu0 %v6018, 40
    %v6179 = vpop.permute.xlu0 %6178
    %6180 = vrot.lane.b32.xlu0 %v6019, 40
    %v6181 = vpop.permute.xlu0 %6180
    %6182 = vrot.lane.b32.xlu0 %v6020, 40
    %v6183 = vpop.permute.xlu0 %6182
    %6184 = vrot.lane.b32.xlu0 %v6021, 40
    %v6185 = vpop.permute.xlu0 %6184
    %6186 = vrot.lane.b32.xlu0 %v6022, 40
    %v6187 = vpop.permute.xlu0 %6186
    %6188 = vrot.lane.b32.xlu0 %v6023, 40
    %v6189 = vpop.permute.xlu0 %6188
    %6190 = vrot.lane.b32.xlu0 %v6024, 40
    %v6191 = vpop.permute.xlu0 %6190
    %6192 = vrot.lane.b32.xlu0 %v6025, 40
    %v6193 = vpop.permute.xlu0 %6192
    %6194 = vrot.lane.b32.xlu0 %v6026, 40
    %v6195 = vpop.permute.xlu0 %6194
    %6196 = vrot.lane.b32.xlu0 %v6027, 40
    %v6197 = vpop.permute.xlu0 %6196
    %6198 = vrot.lane.b32.xlu0 %v6028, 40
    %v6199 = vpop.permute.xlu0 %6198
    %6200 = vrot.lane.b32.xlu0 %v6029, 40
    %v6201 = vpop.permute.xlu0 %6200
    %6202 = vrot.lane.b32.xlu0 %v6030, 40
    %v6203 = vpop.permute.xlu0 %6202
    %6204 = vrot.lane.b32.xlu0 %v6031, 40
    %v6205 = vpop.permute.xlu0 %6204
    %6206 = vrot.lane.b32.xlu0 %v6032, 40
    %v6207 = vpop.permute.xlu0 %6206
    %6208 = vrot.lane.b32.xlu0 %v6033, 40
    %v6209 = vpop.permute.xlu0 %6208
    %6210 = vrot.lane.b32.xlu0 %v6034, 40
    %v6211 = vpop.permute.xlu0 %6210
    %6212 = vrot.lane.b32.xlu0 %v6035, 40
    %v6213 = vpop.permute.xlu0 %6212
    %6214 = vrot.lane.b32.xlu0 %v6036, 40
    %v6215 = vpop.permute.xlu0 %6214
    %6216 = vrot.lane.b32.xlu0 %v6037, 40
    %v6217 = vpop.permute.xlu0 %6216
    %6218 = vrot.lane.b32.xlu0 %v6038, 40
    %v6219 = vpop.permute.xlu0 %6218
    %6220 = vrot.lane.b32.xlu0 %v6039, 40
    %v6221 = vpop.permute.xlu0 %6220
    %6222 = vrot.lane.b32.xlu0 %v6040, 40
    %v6223 = vpop.permute.xlu0 %6222
    %6224 = vrot.lane.b32.xlu0 %v6041, 40
    %v6225 = vpop.permute.xlu0 %6224
    %6226 = vrot.lane.b32.xlu0 %v6042, 40
    %v6227 = vpop.permute.xlu0 %6226
    %6228 = vrot.lane.b32.xlu0 %v6043, 40
    %v6229 = vpop.permute.xlu0 %6228
    %6230 = vrot.lane.b32.xlu0 %v6044, 40
    %v6231 = vpop.permute.xlu0 %6230
    %6232 = vrot.lane.b32.xlu0 %v6045, 40
    %v6233 = vpop.permute.xlu0 %6232
    %6234 = vrot.lane.b32.xlu0 %v6046, 40
    %v6235 = vpop.permute.xlu0 %6234
    %6236 = vrot.lane.b32.xlu0 %v6047, 40
    %v6237 = vpop.permute.xlu0 %6236
    %6238 = vrot.lane.b32.xlu0 %v6048, 40
    %v6239 = vpop.permute.xlu0 %6238
    %6240 = vrot.lane.b32.xlu0 %v6049, 40
    %v6241 = vpop.permute.xlu0 %6240
    %vm6306 = vcmask 392512
    %6307 = vst.msk [vmem:[#allocation5] sm:$0xff] %vm6306, %v6115
    %6308 = vst.msk [vmem:[#allocation5 + $0x8] sm:$0xff] %vm6306, %v6117
    %6309 = vst.msk [vmem:[#allocation5 + $0x10] sm:$0xff] %vm6306, %v6119
    %6310 = vst.msk [vmem:[#allocation5 + $0x18] sm:$0xff] %vm6306, %v6121
    %6311 = vst.msk [vmem:[#allocation5 + $0x20] sm:$0xff] %vm6306, %v6123
    %6312 = vst.msk [vmem:[#allocation5 + $0x28] sm:$0xff] %vm6306, %v6125
    %6313 = vst.msk [vmem:[#allocation5 + $0x30] sm:$0xff] %vm6306, %v6127
    %6314 = vst.msk [vmem:[#allocation5 + $0x38] sm:$0xff] %vm6306, %v6129
    %6315 = vst.msk [vmem:[#allocation5 + $0x40] sm:$0xff] %vm6306, %v6131
    %6316 = vst.msk [vmem:[#allocation5 + $0x48] sm:$0xff] %vm6306, %v6133
    %6317 = vst.msk [vmem:[#allocation5 + $0x50] sm:$0xff] %vm6306, %v6135
    %6318 = vst.msk [vmem:[#allocation5 + $0x58] sm:$0xff] %vm6306, %v6137
    %6319 = vst.msk [vmem:[#allocation5 + $0x60] sm:$0xff] %vm6306, %v6139
    %6320 = vst.msk [vmem:[#allocation5 + $0x68] sm:$0xff] %vm6306, %v6141
    %6321 = vst.msk [vmem:[#allocation5 + $0x70] sm:$0xff] %vm6306, %v6143
    %6322 = vst.msk [vmem:[#allocation5 + $0x78] sm:$0xff] %vm6306, %v6145
    %6323 = vst.msk [vmem:[#allocation5 + $0x80] sm:$0xff] %vm6306, %v6147
    %6324 = vst.msk [vmem:[#allocation5 + $0x88] sm:$0xff] %vm6306, %v6149
    %6325 = vst.msk [vmem:[#allocation5 + $0x90] sm:$0xff] %vm6306, %v6151
    %6326 = vst.msk [vmem:[#allocation5 + $0x98] sm:$0xff] %vm6306, %v6153
    %6327 = vst.msk [vmem:[#allocation5 + $0xa0] sm:$0xff] %vm6306, %v6155
    %6328 = vst.msk [vmem:[#allocation5 + $0xa8] sm:$0xff] %vm6306, %v6157
    %6329 = vst.msk [vmem:[#allocation5 + $0xb0] sm:$0xff] %vm6306, %v6159
    %6330 = vst.msk [vmem:[#allocation5 + $0xb8] sm:$0xff] %vm6306, %v6161
    %6331 = vst.msk [vmem:[#allocation5 + $0xc0] sm:$0xff] %vm6306, %v6163
    %6332 = vst.msk [vmem:[#allocation5 + $0xc8] sm:$0xff] %vm6306, %v6165
    %6333 = vst.msk [vmem:[#allocation5 + $0xd0] sm:$0xff] %vm6306, %v6167
    %6334 = vst.msk [vmem:[#allocation5 + $0xd8] sm:$0xff] %vm6306, %v6169
    %6335 = vst.msk [vmem:[#allocation5 + $0xe0] sm:$0xff] %vm6306, %v6171
    %6336 = vst.msk [vmem:[#allocation5 + $0xe8] sm:$0xff] %vm6306, %v6173
    %6337 = vst.msk [vmem:[#allocation5 + $0xf0] sm:$0xff] %vm6306, %v6175
    %6338 = vst.msk [vmem:[#allocation5 + $0xf8] sm:$0xff] %vm6306, %v6177
    %6339 = vst.msk [vmem:[#allocation5 + $0x100] sm:$0xff] %vm6306, %v6179
    %6340 = vst.msk [vmem:[#allocation5 + $0x108] sm:$0xff] %vm6306, %v6181
    %6341 = vst.msk [vmem:[#allocation5 + $0x110] sm:$0xff] %vm6306, %v6183
    %6342 = vst.msk [vmem:[#allocation5 + $0x118] sm:$0xff] %vm6306, %v6185
    %6343 = vst.msk [vmem:[#allocation5 + $0x120] sm:$0xff] %vm6306, %v6187
    %6344 = vst.msk [vmem:[#allocation5 + $0x128] sm:$0xff] %vm6306, %v6189
    %6345 = vst.msk [vmem:[#allocation5 + $0x130] sm:$0xff] %vm6306, %v6191
    %6346 = vst.msk [vmem:[#allocation5 + $0x138] sm:$0xff] %vm6306, %v6193
    %6347 = vst.msk [vmem:[#allocation5 + $0x140] sm:$0xff] %vm6306, %v6195
    %6348 = vst.msk [vmem:[#allocation5 + $0x148] sm:$0xff] %vm6306, %v6197
    %6349 = vst.msk [vmem:[#allocation5 + $0x150] sm:$0xff] %vm6306, %v6199
    %6350 = vst.msk [vmem:[#allocation5 + $0x158] sm:$0xff] %vm6306, %v6201
    %6351 = vst.msk [vmem:[#allocation5 + $0x160] sm:$0xff] %vm6306, %v6203
    %6352 = vst.msk [vmem:[#allocation5 + $0x168] sm:$0xff] %vm6306, %v6205
    %6353 = vst.msk [vmem:[#allocation5 + $0x170] sm:$0xff] %vm6306, %v6207
    %6354 = vst.msk [vmem:[#allocation5 + $0x178] sm:$0xff] %vm6306, %v6209
    %6355 = vst.msk [vmem:[#allocation5 + $0x180] sm:$0xff] %vm6306, %v6211
    %6356 = vst.msk [vmem:[#allocation5 + $0x188] sm:$0xff] %vm6306, %v6213
    %6357 = vst.msk [vmem:[#allocation5 + $0x190] sm:$0xff] %vm6306, %v6215
    %6358 = vst.msk [vmem:[#allocation5 + $0x198] sm:$0xff] %vm6306, %v6217
    %6359 = vst.msk [vmem:[#allocation5 + $0x1a0] sm:$0xff] %vm6306, %v6219
    %6360 = vst.msk [vmem:[#allocation5 + $0x1a8] sm:$0xff] %vm6306, %v6221
    %6361 = vst.msk [vmem:[#allocation5 + $0x1b0] sm:$0xff] %vm6306, %v6223
    %6362 = vst.msk [vmem:[#allocation5 + $0x1b8] sm:$0xff] %vm6306, %v6225
    %6363 = vst.msk [vmem:[#allocation5 + $0x1c0] sm:$0xff] %vm6306, %v6227
    %6364 = vst.msk [vmem:[#allocation5 + $0x1c8] sm:$0xff] %vm6306, %v6229
    %6365 = vst.msk [vmem:[#allocation5 + $0x1d0] sm:$0xff] %vm6306, %v6231
    %6366 = vst.msk [vmem:[#allocation5 + $0x1d8] sm:$0xff] %vm6306, %v6233
    %6367 = vst.msk [vmem:[#allocation5 + $0x1e0] sm:$0xff] %vm6306, %v6235
    %6368 = vst.msk [vmem:[#allocation5 + $0x1e8] sm:$0xff] %vm6306, %v6237
    %6369 = vst.msk [vmem:[#allocation5 + $0x1f0] sm:$0xff] %vm6306, %v6239
    %6370 = vst.msk [vmem:[#allocation5 + $0x1f8] sm:$0xff] %vm6306, %v6241
    %s6371 = scalar_lea.vmem [#allocation4], 48
    %v6372 = vld [vmem:[%s6371] sm:$0xff]
    %v6373 = vld [vmem:[%s6371 + $0x8] sm:$0xff]
    %v6374 = vld [vmem:[%s6371 + $0x18] sm:$0xff]
    %v6375 = vld [vmem:[%s6371 + $0x20] sm:$0xff]
    %v6376 = vld [vmem:[%s6371 + $0x30] sm:$0xff]
    %v6377 = vld [vmem:[%s6371 + $0x38] sm:$0xff]
    %v6378 = vld [vmem:[%s6371 + $0x48] sm:$0xff]
    %v6379 = vld [vmem:[%s6371 + $0x50] sm:$0xff]
    %v6380 = vld [vmem:[%s6371 + $0x60] sm:$0xff]
    %v6381 = vld [vmem:[%s6371 + $0x68] sm:$0xff]
    %v6382 = vld [vmem:[%s6371 + $0x78] sm:$0xff]
    %v6383 = vld [vmem:[%s6371 + $0x80] sm:$0xff]
    %v6384 = vld [vmem:[%s6371 + $0x90] sm:$0xff]
    %v6385 = vld [vmem:[%s6371 + $0x98] sm:$0xff]
    %v6386 = vld [vmem:[%s6371 + $0xa8] sm:$0xff]
    %v6387 = vld [vmem:[%s6371 + $0xb0] sm:$0xff]
    %v6388 = vld [vmem:[%s6371 + $0xc0] sm:$0xff]
    %v6389 = vld [vmem:[%s6371 + $0xc8] sm:$0xff]
    %v6390 = vld [vmem:[%s6371 + $0xd8] sm:$0xff]
    %v6391 = vld [vmem:[%s6371 + $0xe0] sm:$0xff]
    %v6392 = vld [vmem:[%s6371 + $0xf0] sm:$0xff]
    %v6393 = vld [vmem:[%s6371 + $0xf8] sm:$0xff]
    %v6394 = vld [vmem:[%s6371 + $0x108] sm:$0xff]
    %v6395 = vld [vmem:[%s6371 + $0x110] sm:$0xff]
    %v6396 = vld [vmem:[%s6371 + $0x120] sm:$0xff]
    %v6397 = vld [vmem:[%s6371 + $0x128] sm:$0xff]
    %v6398 = vld [vmem:[%s6371 + $0x138] sm:$0xff]
    %v6399 = vld [vmem:[%s6371 + $0x140] sm:$0xff]
    %v6400 = vld [vmem:[%s6371 + $0x150] sm:$0xff]
    %v6401 = vld [vmem:[%s6371 + $0x158] sm:$0xff]
    %v6402 = vld [vmem:[%s6371 + $0x168] sm:$0xff]
    %v6403 = vld [vmem:[%s6371 + $0x170] sm:$0xff]
    %v6404 = vld [vmem:[%s6371 + $0x1b0] sm:$0xff]
    %v6405 = vld [vmem:[%s6371 + $0x1b8] sm:$0xff]
    %v6406 = vld [vmem:[%s6371 + $0x1c8] sm:$0xff]
    %v6407 = vld [vmem:[%s6371 + $0x1d0] sm:$0xff]
    %v6408 = vld [vmem:[%s6371 + $0x1e0] sm:$0xff]
    %v6409 = vld [vmem:[%s6371 + $0x1e8] sm:$0xff]
    %v6410 = vld [vmem:[%s6371 + $0x1f8] sm:$0xff]
    %v6411 = vld [vmem:[%s6371 + $0x200] sm:$0xff]
    %v6412 = vld [vmem:[%s6371 + $0x210] sm:$0xff]
    %v6413 = vld [vmem:[%s6371 + $0x218] sm:$0xff]
    %v6414 = vld [vmem:[%s6371 + $0x228] sm:$0xff]
    %v6415 = vld [vmem:[%s6371 + $0x230] sm:$0xff]
    %v6416 = vld [vmem:[%s6371 + $0x240] sm:$0xff]
    %v6417 = vld [vmem:[%s6371 + $0x248] sm:$0xff]
    %v6418 = vld [vmem:[%s6371 + $0x258] sm:$0xff]
    %v6419 = vld [vmem:[%s6371 + $0x260] sm:$0xff]
    %v6420 = vld [vmem:[%s6371 + $0x270] sm:$0xff]
    %v6421 = vld [vmem:[%s6371 + $0x278] sm:$0xff]
    %v6422 = vld [vmem:[%s6371 + $0x288] sm:$0xff]
    %v6423 = vld [vmem:[%s6371 + $0x290] sm:$0xff]
    %v6424 = vld [vmem:[%s6371 + $0x2a0] sm:$0xff]
    %v6425 = vld [vmem:[%s6371 + $0x2a8] sm:$0xff]
    %v6426 = vld [vmem:[%s6371 + $0x2b8] sm:$0xff]
    %v6427 = vld [vmem:[%s6371 + $0x2c0] sm:$0xff]
    %v6428 = vld [vmem:[%s6371 + $0x2d0] sm:$0xff]
    %v6429 = vld [vmem:[%s6371 + $0x2d8] sm:$0xff]
    %v6430 = vld [vmem:[%s6371 + $0x2e8] sm:$0xff]
    %v6431 = vld [vmem:[%s6371 + $0x2f0] sm:$0xff]
    %v6432 = vld [vmem:[%s6371 + $0x300] sm:$0xff]
    %v6433 = vld [vmem:[%s6371 + $0x308] sm:$0xff]
    %v6434 = vld [vmem:[%s6371 + $0x318] sm:$0xff]
    %v6435 = vld [vmem:[%s6371 + $0x320] sm:$0xff]
    %6500 = vrot.lane.b32.xlu0 %v6372, 48
    %v6501 = vpop.permute.xlu0 %6500
    %6502 = vrot.lane.b32.xlu0 %v6373, 48
    %v6503 = vpop.permute.xlu0 %6502
    %6504 = vrot.lane.b32.xlu0 %v6374, 48
    %v6505 = vpop.permute.xlu0 %6504
    %6506 = vrot.lane.b32.xlu0 %v6375, 48
    %v6507 = vpop.permute.xlu0 %6506
    %6508 = vrot.lane.b32.xlu0 %v6376, 48
    %v6509 = vpop.permute.xlu0 %6508
    %6510 = vrot.lane.b32.xlu0 %v6377, 48
    %v6511 = vpop.permute.xlu0 %6510
    %6512 = vrot.lane.b32.xlu0 %v6378, 48
    %v6513 = vpop.permute.xlu0 %6512
    %6514 = vrot.lane.b32.xlu0 %v6379, 48
    %v6515 = vpop.permute.xlu0 %6514
    %6516 = vrot.lane.b32.xlu0 %v6380, 48
    %v6517 = vpop.permute.xlu0 %6516
    %6518 = vrot.lane.b32.xlu0 %v6381, 48
    %v6519 = vpop.permute.xlu0 %6518
    %6520 = vrot.lane.b32.xlu0 %v6382, 48
    %v6521 = vpop.permute.xlu0 %6520
    %6522 = vrot.lane.b32.xlu0 %v6383, 48
    %v6523 = vpop.permute.xlu0 %6522
    %6524 = vrot.lane.b32.xlu0 %v6384, 48
    %v6525 = vpop.permute.xlu0 %6524
    %6526 = vrot.lane.b32.xlu0 %v6385, 48
    %v6527 = vpop.permute.xlu0 %6526
    %6528 = vrot.lane.b32.xlu0 %v6386, 48
    %v6529 = vpop.permute.xlu0 %6528
    %6530 = vrot.lane.b32.xlu0 %v6387, 48
    %v6531 = vpop.permute.xlu0 %6530
    %6532 = vrot.lane.b32.xlu0 %v6388, 48
    %v6533 = vpop.permute.xlu0 %6532
    %6534 = vrot.lane.b32.xlu0 %v6389, 48
    %v6535 = vpop.permute.xlu0 %6534
    %6536 = vrot.lane.b32.xlu0 %v6390, 48
    %v6537 = vpop.permute.xlu0 %6536
    %6538 = vrot.lane.b32.xlu0 %v6391, 48
    %v6539 = vpop.permute.xlu0 %6538
    %6540 = vrot.lane.b32.xlu0 %v6392, 48
    %v6541 = vpop.permute.xlu0 %6540
    %6542 = vrot.lane.b32.xlu0 %v6393, 48
    %v6543 = vpop.permute.xlu0 %6542
    %6544 = vrot.lane.b32.xlu0 %v6394, 48
    %v6545 = vpop.permute.xlu0 %6544
    %6546 = vrot.lane.b32.xlu0 %v6395, 48
    %v6547 = vpop.permute.xlu0 %6546
    %6548 = vrot.lane.b32.xlu0 %v6396, 48
    %v6549 = vpop.permute.xlu0 %6548
    %6550 = vrot.lane.b32.xlu0 %v6397, 48
    %v6551 = vpop.permute.xlu0 %6550
    %6552 = vrot.lane.b32.xlu0 %v6398, 48
    %v6553 = vpop.permute.xlu0 %6552
    %6554 = vrot.lane.b32.xlu0 %v6399, 48
    %v6555 = vpop.permute.xlu0 %6554
    %6556 = vrot.lane.b32.xlu0 %v6400, 48
    %v6557 = vpop.permute.xlu0 %6556
    %6558 = vrot.lane.b32.xlu0 %v6401, 48
    %v6559 = vpop.permute.xlu0 %6558
    %6560 = vrot.lane.b32.xlu0 %v6402, 48
    %v6561 = vpop.permute.xlu0 %6560
    %6562 = vrot.lane.b32.xlu0 %v6403, 48
    %v6563 = vpop.permute.xlu0 %6562
    %6564 = vrot.lane.b32.xlu0 %v6404, 48
    %v6565 = vpop.permute.xlu0 %6564
    %6566 = vrot.lane.b32.xlu0 %v6405, 48
    %v6567 = vpop.permute.xlu0 %6566
    %6568 = vrot.lane.b32.xlu0 %v6406, 48
    %v6569 = vpop.permute.xlu0 %6568
    %6570 = vrot.lane.b32.xlu0 %v6407, 48
    %v6571 = vpop.permute.xlu0 %6570
    %6572 = vrot.lane.b32.xlu0 %v6408, 48
    %v6573 = vpop.permute.xlu0 %6572
    %6574 = vrot.lane.b32.xlu0 %v6409, 48
    %v6575 = vpop.permute.xlu0 %6574
    %6576 = vrot.lane.b32.xlu0 %v6410, 48
    %v6577 = vpop.permute.xlu0 %6576
    %6578 = vrot.lane.b32.xlu0 %v6411, 48
    %v6579 = vpop.permute.xlu0 %6578
    %6580 = vrot.lane.b32.xlu0 %v6412, 48
    %v6581 = vpop.permute.xlu0 %6580
    %6582 = vrot.lane.b32.xlu0 %v6413, 48
    %v6583 = vpop.permute.xlu0 %6582
    %6584 = vrot.lane.b32.xlu0 %v6414, 48
    %v6585 = vpop.permute.xlu0 %6584
    %6586 = vrot.lane.b32.xlu0 %v6415, 48
    %v6587 = vpop.permute.xlu0 %6586
    %6588 = vrot.lane.b32.xlu0 %v6416, 48
    %v6589 = vpop.permute.xlu0 %6588
    %6590 = vrot.lane.b32.xlu0 %v6417, 48
    %v6591 = vpop.permute.xlu0 %6590
    %6592 = vrot.lane.b32.xlu0 %v6418, 48
    %v6593 = vpop.permute.xlu0 %6592
    %6594 = vrot.lane.b32.xlu0 %v6419, 48
    %v6595 = vpop.permute.xlu0 %6594
    %6596 = vrot.lane.b32.xlu0 %v6420, 48
    %v6597 = vpop.permute.xlu0 %6596
    %6598 = vrot.lane.b32.xlu0 %v6421, 48
    %v6599 = vpop.permute.xlu0 %6598
    %6600 = vrot.lane.b32.xlu0 %v6422, 48
    %v6601 = vpop.permute.xlu0 %6600
    %6602 = vrot.lane.b32.xlu0 %v6423, 48
    %v6603 = vpop.permute.xlu0 %6602
    %6604 = vrot.lane.b32.xlu0 %v6424, 48
    %v6605 = vpop.permute.xlu0 %6604
    %6606 = vrot.lane.b32.xlu0 %v6425, 48
    %v6607 = vpop.permute.xlu0 %6606
    %6608 = vrot.lane.b32.xlu0 %v6426, 48
    %v6609 = vpop.permute.xlu0 %6608
    %6610 = vrot.lane.b32.xlu0 %v6427, 48
    %v6611 = vpop.permute.xlu0 %6610
    %6612 = vrot.lane.b32.xlu0 %v6428, 48
    %v6613 = vpop.permute.xlu0 %6612
    %6614 = vrot.lane.b32.xlu0 %v6429, 48
    %v6615 = vpop.permute.xlu0 %6614
    %6616 = vrot.lane.b32.xlu0 %v6430, 48
    %v6617 = vpop.permute.xlu0 %6616
    %6618 = vrot.lane.b32.xlu0 %v6431, 48
    %v6619 = vpop.permute.xlu0 %6618
    %6620 = vrot.lane.b32.xlu0 %v6432, 48
    %v6621 = vpop.permute.xlu0 %6620
    %6622 = vrot.lane.b32.xlu0 %v6433, 48
    %v6623 = vpop.permute.xlu0 %6622
    %6624 = vrot.lane.b32.xlu0 %v6434, 48
    %v6625 = vpop.permute.xlu0 %6624
    %6626 = vrot.lane.b32.xlu0 %v6435, 48
    %v6627 = vpop.permute.xlu0 %6626
    %vm6692 = vcmask 458112
    %6693 = vst.msk [vmem:[#allocation5] sm:$0xff] %vm6692, %v6501
    %6694 = vst.msk [vmem:[#allocation5 + $0x8] sm:$0xff] %vm6692, %v6503
    %6695 = vst.msk [vmem:[#allocation5 + $0x10] sm:$0xff] %vm6692, %v6505
    %6696 = vst.msk [vmem:[#allocation5 + $0x18] sm:$0xff] %vm6692, %v6507
    %6697 = vst.msk [vmem:[#allocation5 + $0x20] sm:$0xff] %vm6692, %v6509
    %6698 = vst.msk [vmem:[#allocation5 + $0x28] sm:$0xff] %vm6692, %v6511
    %6699 = vst.msk [vmem:[#allocation5 + $0x30] sm:$0xff] %vm6692, %v6513
    %6700 = vst.msk [vmem:[#allocation5 + $0x38] sm:$0xff] %vm6692, %v6515
    %6701 = vst.msk [vmem:[#allocation5 + $0x40] sm:$0xff] %vm6692, %v6517
    %6702 = vst.msk [vmem:[#allocation5 + $0x48] sm:$0xff] %vm6692, %v6519
    %6703 = vst.msk [vmem:[#allocation5 + $0x50] sm:$0xff] %vm6692, %v6521
    %6704 = vst.msk [vmem:[#allocation5 + $0x58] sm:$0xff] %vm6692, %v6523
    %6705 = vst.msk [vmem:[#allocation5 + $0x60] sm:$0xff] %vm6692, %v6525
    %6706 = vst.msk [vmem:[#allocation5 + $0x68] sm:$0xff] %vm6692, %v6527
    %6707 = vst.msk [vmem:[#allocation5 + $0x70] sm:$0xff] %vm6692, %v6529
    %6708 = vst.msk [vmem:[#allocation5 + $0x78] sm:$0xff] %vm6692, %v6531
    %6709 = vst.msk [vmem:[#allocation5 + $0x80] sm:$0xff] %vm6692, %v6533
    %6710 = vst.msk [vmem:[#allocation5 + $0x88] sm:$0xff] %vm6692, %v6535
    %6711 = vst.msk [vmem:[#allocation5 + $0x90] sm:$0xff] %vm6692, %v6537
    %6712 = vst.msk [vmem:[#allocation5 + $0x98] sm:$0xff] %vm6692, %v6539
    %6713 = vst.msk [vmem:[#allocation5 + $0xa0] sm:$0xff] %vm6692, %v6541
    %6714 = vst.msk [vmem:[#allocation5 + $0xa8] sm:$0xff] %vm6692, %v6543
    %6715 = vst.msk [vmem:[#allocation5 + $0xb0] sm:$0xff] %vm6692, %v6545
    %6716 = vst.msk [vmem:[#allocation5 + $0xb8] sm:$0xff] %vm6692, %v6547
    %6717 = vst.msk [vmem:[#allocation5 + $0xc0] sm:$0xff] %vm6692, %v6549
    %6718 = vst.msk [vmem:[#allocation5 + $0xc8] sm:$0xff] %vm6692, %v6551
    %6719 = vst.msk [vmem:[#allocation5 + $0xd0] sm:$0xff] %vm6692, %v6553
    %6720 = vst.msk [vmem:[#allocation5 + $0xd8] sm:$0xff] %vm6692, %v6555
    %6721 = vst.msk [vmem:[#allocation5 + $0xe0] sm:$0xff] %vm6692, %v6557
    %6722 = vst.msk [vmem:[#allocation5 + $0xe8] sm:$0xff] %vm6692, %v6559
    %6723 = vst.msk [vmem:[#allocation5 + $0xf0] sm:$0xff] %vm6692, %v6561
    %6724 = vst.msk [vmem:[#allocation5 + $0xf8] sm:$0xff] %vm6692, %v6563
    %6725 = vst.msk [vmem:[#allocation5 + $0x100] sm:$0xff] %vm6692, %v6565
    %6726 = vst.msk [vmem:[#allocation5 + $0x108] sm:$0xff] %vm6692, %v6567
    %6727 = vst.msk [vmem:[#allocation5 + $0x110] sm:$0xff] %vm6692, %v6569
    %6728 = vst.msk [vmem:[#allocation5 + $0x118] sm:$0xff] %vm6692, %v6571
    %6729 = vst.msk [vmem:[#allocation5 + $0x120] sm:$0xff] %vm6692, %v6573
    %6730 = vst.msk [vmem:[#allocation5 + $0x128] sm:$0xff] %vm6692, %v6575
    %6731 = vst.msk [vmem:[#allocation5 + $0x130] sm:$0xff] %vm6692, %v6577
    %6732 = vst.msk [vmem:[#allocation5 + $0x138] sm:$0xff] %vm6692, %v6579
    %6733 = vst.msk [vmem:[#allocation5 + $0x140] sm:$0xff] %vm6692, %v6581
    %6734 = vst.msk [vmem:[#allocation5 + $0x148] sm:$0xff] %vm6692, %v6583
    %6735 = vst.msk [vmem:[#allocation5 + $0x150] sm:$0xff] %vm6692, %v6585
    %6736 = vst.msk [vmem:[#allocation5 + $0x158] sm:$0xff] %vm6692, %v6587
    %6737 = vst.msk [vmem:[#allocation5 + $0x160] sm:$0xff] %vm6692, %v6589
    %6738 = vst.msk [vmem:[#allocation5 + $0x168] sm:$0xff] %vm6692, %v6591
    %6739 = vst.msk [vmem:[#allocation5 + $0x170] sm:$0xff] %vm6692, %v6593
    %6740 = vst.msk [vmem:[#allocation5 + $0x178] sm:$0xff] %vm6692, %v6595
    %6741 = vst.msk [vmem:[#allocation5 + $0x180] sm:$0xff] %vm6692, %v6597
    %6742 = vst.msk [vmem:[#allocation5 + $0x188] sm:$0xff] %vm6692, %v6599
    %6743 = vst.msk [vmem:[#allocation5 + $0x190] sm:$0xff] %vm6692, %v6601
    %6744 = vst.msk [vmem:[#allocation5 + $0x198] sm:$0xff] %vm6692, %v6603
    %6745 = vst.msk [vmem:[#allocation5 + $0x1a0] sm:$0xff] %vm6692, %v6605
    %6746 = vst.msk [vmem:[#allocation5 + $0x1a8] sm:$0xff] %vm6692, %v6607
    %6747 = vst.msk [vmem:[#allocation5 + $0x1b0] sm:$0xff] %vm6692, %v6609
    %6748 = vst.msk [vmem:[#allocation5 + $0x1b8] sm:$0xff] %vm6692, %v6611
    %6749 = vst.msk [vmem:[#allocation5 + $0x1c0] sm:$0xff] %vm6692, %v6613
    %6750 = vst.msk [vmem:[#allocation5 + $0x1c8] sm:$0xff] %vm6692, %v6615
    %6751 = vst.msk [vmem:[#allocation5 + $0x1d0] sm:$0xff] %vm6692, %v6617
    %6752 = vst.msk [vmem:[#allocation5 + $0x1d8] sm:$0xff] %vm6692, %v6619
    %6753 = vst.msk [vmem:[#allocation5 + $0x1e0] sm:$0xff] %vm6692, %v6621
    %6754 = vst.msk [vmem:[#allocation5 + $0x1e8] sm:$0xff] %vm6692, %v6623
    %6755 = vst.msk [vmem:[#allocation5 + $0x1f0] sm:$0xff] %vm6692, %v6625
    %6756 = vst.msk [vmem:[#allocation5 + $0x1f8] sm:$0xff] %vm6692, %v6627
    %v6757 = vld [vmem:[%s6371 + $0x1] sm:$0xff]
    %v6758 = vld [vmem:[%s6371 + $0x9] sm:$0xff]
    %v6759 = vld [vmem:[%s6371 + $0x19] sm:$0xff]
    %v6760 = vld [vmem:[%s6371 + $0x21] sm:$0xff]
    %v6761 = vld [vmem:[%s6371 + $0x31] sm:$0xff]
    %v6762 = vld [vmem:[%s6371 + $0x39] sm:$0xff]
    %v6763 = vld [vmem:[%s6371 + $0x49] sm:$0xff]
    %v6764 = vld [vmem:[%s6371 + $0x51] sm:$0xff]
    %v6765 = vld [vmem:[%s6371 + $0x61] sm:$0xff]
    %v6766 = vld [vmem:[%s6371 + $0x69] sm:$0xff]
    %v6767 = vld [vmem:[%s6371 + $0x79] sm:$0xff]
    %v6768 = vld [vmem:[%s6371 + $0x81] sm:$0xff]
    %v6769 = vld [vmem:[%s6371 + $0x91] sm:$0xff]
    %v6770 = vld [vmem:[%s6371 + $0x99] sm:$0xff]
    %v6771 = vld [vmem:[%s6371 + $0xa9] sm:$0xff]
    %v6772 = vld [vmem:[%s6371 + $0xb1] sm:$0xff]
    %v6773 = vld [vmem:[%s6371 + $0xc1] sm:$0xff]
    %v6774 = vld [vmem:[%s6371 + $0xc9] sm:$0xff]
    %v6775 = vld [vmem:[%s6371 + $0xd9] sm:$0xff]
    %v6776 = vld [vmem:[%s6371 + $0xe1] sm:$0xff]
    %v6777 = vld [vmem:[%s6371 + $0xf1] sm:$0xff]
    %v6778 = vld [vmem:[%s6371 + $0xf9] sm:$0xff]
    %v6779 = vld [vmem:[%s6371 + $0x109] sm:$0xff]
    %v6780 = vld [vmem:[%s6371 + $0x111] sm:$0xff]
    %v6781 = vld [vmem:[%s6371 + $0x121] sm:$0xff]
    %v6782 = vld [vmem:[%s6371 + $0x129] sm:$0xff]
    %v6783 = vld [vmem:[%s6371 + $0x139] sm:$0xff]
    %v6784 = vld [vmem:[%s6371 + $0x141] sm:$0xff]
    %v6785 = vld [vmem:[%s6371 + $0x151] sm:$0xff]
    %v6786 = vld [vmem:[%s6371 + $0x159] sm:$0xff]
    %v6787 = vld [vmem:[%s6371 + $0x169] sm:$0xff]
    %v6788 = vld [vmem:[%s6371 + $0x171] sm:$0xff]
    %v6789 = vld [vmem:[%s6371 + $0x1b1] sm:$0xff]
    %v6790 = vld [vmem:[%s6371 + $0x1b9] sm:$0xff]
    %v6791 = vld [vmem:[%s6371 + $0x1c9] sm:$0xff]
    %v6792 = vld [vmem:[%s6371 + $0x1d1] sm:$0xff]
    %v6793 = vld [vmem:[%s6371 + $0x1e1] sm:$0xff]
    %v6794 = vld [vmem:[%s6371 + $0x1e9] sm:$0xff]
    %v6795 = vld [vmem:[%s6371 + $0x1f9] sm:$0xff]
    %v6796 = vld [vmem:[%s6371 + $0x201] sm:$0xff]
    %v6797 = vld [vmem:[%s6371 + $0x211] sm:$0xff]
    %v6798 = vld [vmem:[%s6371 + $0x219] sm:$0xff]
    %v6799 = vld [vmem:[%s6371 + $0x229] sm:$0xff]
    %v6800 = vld [vmem:[%s6371 + $0x231] sm:$0xff]
    %v6801 = vld [vmem:[%s6371 + $0x241] sm:$0xff]
    %v6802 = vld [vmem:[%s6371 + $0x249] sm:$0xff]
    %v6803 = vld [vmem:[%s6371 + $0x259] sm:$0xff]
    %v6804 = vld [vmem:[%s6371 + $0x261] sm:$0xff]
    %v6805 = vld [vmem:[%s6371 + $0x271] sm:$0xff]
    %v6806 = vld [vmem:[%s6371 + $0x279] sm:$0xff]
    %v6807 = vld [vmem:[%s6371 + $0x289] sm:$0xff]
    %v6808 = vld [vmem:[%s6371 + $0x291] sm:$0xff]
    %v6809 = vld [vmem:[%s6371 + $0x2a1] sm:$0xff]
    %v6810 = vld [vmem:[%s6371 + $0x2a9] sm:$0xff]
    %v6811 = vld [vmem:[%s6371 + $0x2b9] sm:$0xff]
    %v6812 = vld [vmem:[%s6371 + $0x2c1] sm:$0xff]
    %v6813 = vld [vmem:[%s6371 + $0x2d1] sm:$0xff]
    %v6814 = vld [vmem:[%s6371 + $0x2d9] sm:$0xff]
    %v6815 = vld [vmem:[%s6371 + $0x2e9] sm:$0xff]
    %v6816 = vld [vmem:[%s6371 + $0x2f1] sm:$0xff]
    %v6817 = vld [vmem:[%s6371 + $0x301] sm:$0xff]
    %v6818 = vld [vmem:[%s6371 + $0x309] sm:$0xff]
    %v6819 = vld [vmem:[%s6371 + $0x319] sm:$0xff]
    %v6820 = vld [vmem:[%s6371 + $0x321] sm:$0xff]
    %6885 = vrot.lane.b32.xlu0 %v6757, 56
    %v6886 = vpop.permute.xlu0 %6885
    %6887 = vrot.lane.b32.xlu0 %v6758, 56
    %v6888 = vpop.permute.xlu0 %6887
    %6889 = vrot.lane.b32.xlu0 %v6759, 56
    %v6890 = vpop.permute.xlu0 %6889
    %6891 = vrot.lane.b32.xlu0 %v6760, 56
    %v6892 = vpop.permute.xlu0 %6891
    %6893 = vrot.lane.b32.xlu0 %v6761, 56
    %v6894 = vpop.permute.xlu0 %6893
    %6895 = vrot.lane.b32.xlu0 %v6762, 56
    %v6896 = vpop.permute.xlu0 %6895
    %6897 = vrot.lane.b32.xlu0 %v6763, 56
    %v6898 = vpop.permute.xlu0 %6897
    %6899 = vrot.lane.b32.xlu0 %v6764, 56
    %v6900 = vpop.permute.xlu0 %6899
    %6901 = vrot.lane.b32.xlu0 %v6765, 56
    %v6902 = vpop.permute.xlu0 %6901
    %6903 = vrot.lane.b32.xlu0 %v6766, 56
    %v6904 = vpop.permute.xlu0 %6903
    %6905 = vrot.lane.b32.xlu0 %v6767, 56
    %v6906 = vpop.permute.xlu0 %6905
    %6907 = vrot.lane.b32.xlu0 %v6768, 56
    %v6908 = vpop.permute.xlu0 %6907
    %6909 = vrot.lane.b32.xlu0 %v6769, 56
    %v6910 = vpop.permute.xlu0 %6909
    %6911 = vrot.lane.b32.xlu0 %v6770, 56
    %v6912 = vpop.permute.xlu0 %6911
    %6913 = vrot.lane.b32.xlu0 %v6771, 56
    %v6914 = vpop.permute.xlu0 %6913
    %6915 = vrot.lane.b32.xlu0 %v6772, 56
    %v6916 = vpop.permute.xlu0 %6915
    %6917 = vrot.lane.b32.xlu0 %v6773, 56
    %v6918 = vpop.permute.xlu0 %6917
    %6919 = vrot.lane.b32.xlu0 %v6774, 56
    %v6920 = vpop.permute.xlu0 %6919
    %6921 = vrot.lane.b32.xlu0 %v6775, 56
    %v6922 = vpop.permute.xlu0 %6921
    %6923 = vrot.lane.b32.xlu0 %v6776, 56
    %v6924 = vpop.permute.xlu0 %6923
    %6925 = vrot.lane.b32.xlu0 %v6777, 56
    %v6926 = vpop.permute.xlu0 %6925
    %6927 = vrot.lane.b32.xlu0 %v6778, 56
    %v6928 = vpop.permute.xlu0 %6927
    %6929 = vrot.lane.b32.xlu0 %v6779, 56
    %v6930 = vpop.permute.xlu0 %6929
    %6931 = vrot.lane.b32.xlu0 %v6780, 56
    %v6932 = vpop.permute.xlu0 %6931
    %6933 = vrot.lane.b32.xlu0 %v6781, 56
    %v6934 = vpop.permute.xlu0 %6933
    %6935 = vrot.lane.b32.xlu0 %v6782, 56
    %v6936 = vpop.permute.xlu0 %6935
    %6937 = vrot.lane.b32.xlu0 %v6783, 56
    %v6938 = vpop.permute.xlu0 %6937
    %6939 = vrot.lane.b32.xlu0 %v6784, 56
    %v6940 = vpop.permute.xlu0 %6939
    %6941 = vrot.lane.b32.xlu0 %v6785, 56
    %v6942 = vpop.permute.xlu0 %6941
    %6943 = vrot.lane.b32.xlu0 %v6786, 56
    %v6944 = vpop.permute.xlu0 %6943
    %6945 = vrot.lane.b32.xlu0 %v6787, 56
    %v6946 = vpop.permute.xlu0 %6945
    %6947 = vrot.lane.b32.xlu0 %v6788, 56
    %v6948 = vpop.permute.xlu0 %6947
    %6949 = vrot.lane.b32.xlu0 %v6789, 56
    %v6950 = vpop.permute.xlu0 %6949
    %6951 = vrot.lane.b32.xlu0 %v6790, 56
    %v6952 = vpop.permute.xlu0 %6951
    %6953 = vrot.lane.b32.xlu0 %v6791, 56
    %v6954 = vpop.permute.xlu0 %6953
    %6955 = vrot.lane.b32.xlu0 %v6792, 56
    %v6956 = vpop.permute.xlu0 %6955
    %6957 = vrot.lane.b32.xlu0 %v6793, 56
    %v6958 = vpop.permute.xlu0 %6957
    %6959 = vrot.lane.b32.xlu0 %v6794, 56
    %v6960 = vpop.permute.xlu0 %6959
    %6961 = vrot.lane.b32.xlu0 %v6795, 56
    %v6962 = vpop.permute.xlu0 %6961
    %6963 = vrot.lane.b32.xlu0 %v6796, 56
    %v6964 = vpop.permute.xlu0 %6963
    %6965 = vrot.lane.b32.xlu0 %v6797, 56
    %v6966 = vpop.permute.xlu0 %6965
    %6967 = vrot.lane.b32.xlu0 %v6798, 56
    %v6968 = vpop.permute.xlu0 %6967
    %6969 = vrot.lane.b32.xlu0 %v6799, 56
    %v6970 = vpop.permute.xlu0 %6969
    %6971 = vrot.lane.b32.xlu0 %v6800, 56
    %v6972 = vpop.permute.xlu0 %6971
    %6973 = vrot.lane.b32.xlu0 %v6801, 56
    %v6974 = vpop.permute.xlu0 %6973
    %6975 = vrot.lane.b32.xlu0 %v6802, 56
    %v6976 = vpop.permute.xlu0 %6975
    %6977 = vrot.lane.b32.xlu0 %v6803, 56
    %v6978 = vpop.permute.xlu0 %6977
    %6979 = vrot.lane.b32.xlu0 %v6804, 56
    %v6980 = vpop.permute.xlu0 %6979
    %6981 = vrot.lane.b32.xlu0 %v6805, 56
    %v6982 = vpop.permute.xlu0 %6981
    %6983 = vrot.lane.b32.xlu0 %v6806, 56
    %v6984 = vpop.permute.xlu0 %6983
    %6985 = vrot.lane.b32.xlu0 %v6807, 56
    %v6986 = vpop.permute.xlu0 %6985
    %6987 = vrot.lane.b32.xlu0 %v6808, 56
    %v6988 = vpop.permute.xlu0 %6987
    %6989 = vrot.lane.b32.xlu0 %v6809, 56
    %v6990 = vpop.permute.xlu0 %6989
    %6991 = vrot.lane.b32.xlu0 %v6810, 56
    %v6992 = vpop.permute.xlu0 %6991
    %6993 = vrot.lane.b32.xlu0 %v6811, 56
    %v6994 = vpop.permute.xlu0 %6993
    %6995 = vrot.lane.b32.xlu0 %v6812, 56
    %v6996 = vpop.permute.xlu0 %6995
    %6997 = vrot.lane.b32.xlu0 %v6813, 56
    %v6998 = vpop.permute.xlu0 %6997
    %6999 = vrot.lane.b32.xlu0 %v6814, 56
    %v7000 = vpop.permute.xlu0 %6999
    %7001 = vrot.lane.b32.xlu0 %v6815, 56
    %v7002 = vpop.permute.xlu0 %7001
    %7003 = vrot.lane.b32.xlu0 %v6816, 56
    %v7004 = vpop.permute.xlu0 %7003
    %7005 = vrot.lane.b32.xlu0 %v6817, 56
    %v7006 = vpop.permute.xlu0 %7005
    %7007 = vrot.lane.b32.xlu0 %v6818, 56
    %v7008 = vpop.permute.xlu0 %7007
    %7009 = vrot.lane.b32.xlu0 %v6819, 56
    %v7010 = vpop.permute.xlu0 %7009
    %7011 = vrot.lane.b32.xlu0 %v6820, 56
    %v7012 = vpop.permute.xlu0 %7011
    %vm7077 = vcmask 523712
    %7078 = vst.msk [vmem:[#allocation5] sm:$0xff] %vm7077, %v6886
    %7079 = vst.msk [vmem:[#allocation5 + $0x8] sm:$0xff] %vm7077, %v6888
    %7080 = vst.msk [vmem:[#allocation5 + $0x10] sm:$0xff] %vm7077, %v6890
    %7081 = vst.msk [vmem:[#allocation5 + $0x18] sm:$0xff] %vm7077, %v6892
    %7082 = vst.msk [vmem:[#allocation5 + $0x20] sm:$0xff] %vm7077, %v6894
    %7083 = vst.msk [vmem:[#allocation5 + $0x28] sm:$0xff] %vm7077, %v6896
    %7084 = vst.msk [vmem:[#allocation5 + $0x30] sm:$0xff] %vm7077, %v6898
    %7085 = vst.msk [vmem:[#allocation5 + $0x38] sm:$0xff] %vm7077, %v6900
    %7086 = vst.msk [vmem:[#allocation5 + $0x40] sm:$0xff] %vm7077, %v6902
    %7087 = vst.msk [vmem:[#allocation5 + $0x48] sm:$0xff] %vm7077, %v6904
    %7088 = vst.msk [vmem:[#allocation5 + $0x50] sm:$0xff] %vm7077, %v6906
    %7089 = vst.msk [vmem:[#allocation5 + $0x58] sm:$0xff] %vm7077, %v6908
    %7090 = vst.msk [vmem:[#allocation5 + $0x60] sm:$0xff] %vm7077, %v6910
    %7091 = vst.msk [vmem:[#allocation5 + $0x68] sm:$0xff] %vm7077, %v6912
    %7092 = vst.msk [vmem:[#allocation5 + $0x70] sm:$0xff] %vm7077, %v6914
    %7093 = vst.msk [vmem:[#allocation5 + $0x78] sm:$0xff] %vm7077, %v6916
    %7094 = vst.msk [vmem:[#allocation5 + $0x80] sm:$0xff] %vm7077, %v6918
    %7095 = vst.msk [vmem:[#allocation5 + $0x88] sm:$0xff] %vm7077, %v6920
    %7096 = vst.msk [vmem:[#allocation5 + $0x90] sm:$0xff] %vm7077, %v6922
    %7097 = vst.msk [vmem:[#allocation5 + $0x98] sm:$0xff] %vm7077, %v6924
    %7098 = vst.msk [vmem:[#allocation5 + $0xa0] sm:$0xff] %vm7077, %v6926
    %7099 = vst.msk [vmem:[#allocation5 + $0xa8] sm:$0xff] %vm7077, %v6928
    %7100 = vst.msk [vmem:[#allocation5 + $0xb0] sm:$0xff] %vm7077, %v6930
    %7101 = vst.msk [vmem:[#allocation5 + $0xb8] sm:$0xff] %vm7077, %v6932
    %7102 = vst.msk [vmem:[#allocation5 + $0xc0] sm:$0xff] %vm7077, %v6934
    %7103 = vst.msk [vmem:[#allocation5 + $0xc8] sm:$0xff] %vm7077, %v6936
    %7104 = vst.msk [vmem:[#allocation5 + $0xd0] sm:$0xff] %vm7077, %v6938
    %7105 = vst.msk [vmem:[#allocation5 + $0xd8] sm:$0xff] %vm7077, %v6940
    %7106 = vst.msk [vmem:[#allocation5 + $0xe0] sm:$0xff] %vm7077, %v6942
    %7107 = vst.msk [vmem:[#allocation5 + $0xe8] sm:$0xff] %vm7077, %v6944
    %7108 = vst.msk [vmem:[#allocation5 + $0xf0] sm:$0xff] %vm7077, %v6946
    %7109 = vst.msk [vmem:[#allocation5 + $0xf8] sm:$0xff] %vm7077, %v6948
    %7110 = vst.msk [vmem:[#allocation5 + $0x100] sm:$0xff] %vm7077, %v6950
    %7111 = vst.msk [vmem:[#allocation5 + $0x108] sm:$0xff] %vm7077, %v6952
    %7112 = vst.msk [vmem:[#allocation5 + $0x110] sm:$0xff] %vm7077, %v6954
    %7113 = vst.msk [vmem:[#allocation5 + $0x118] sm:$0xff] %vm7077, %v6956
    %7114 = vst.msk [vmem:[#allocation5 + $0x120] sm:$0xff] %vm7077, %v6958
    %7115 = vst.msk [vmem:[#allocation5 + $0x128] sm:$0xff] %vm7077, %v6960
    %7116 = vst.msk [vmem:[#allocation5 + $0x130] sm:$0xff] %vm7077, %v6962
    %7117 = vst.msk [vmem:[#allocation5 + $0x138] sm:$0xff] %vm7077, %v6964
    %7118 = vst.msk [vmem:[#allocation5 + $0x140] sm:$0xff] %vm7077, %v6966
    %7119 = vst.msk [vmem:[#allocation5 + $0x148] sm:$0xff] %vm7077, %v6968
    %7120 = vst.msk [vmem:[#allocation5 + $0x150] sm:$0xff] %vm7077, %v6970
    %7121 = vst.msk [vmem:[#allocation5 + $0x158] sm:$0xff] %vm7077, %v6972
    %7122 = vst.msk [vmem:[#allocation5 + $0x160] sm:$0xff] %vm7077, %v6974
    %7123 = vst.msk [vmem:[#allocation5 + $0x168] sm:$0xff] %vm7077, %v6976
    %7124 = vst.msk [vmem:[#allocation5 + $0x170] sm:$0xff] %vm7077, %v6978
    %7125 = vst.msk [vmem:[#allocation5 + $0x178] sm:$0xff] %vm7077, %v6980
    %7126 = vst.msk [vmem:[#allocation5 + $0x180] sm:$0xff] %vm7077, %v6982
    %7127 = vst.msk [vmem:[#allocation5 + $0x188] sm:$0xff] %vm7077, %v6984
    %7128 = vst.msk [vmem:[#allocation5 + $0x190] sm:$0xff] %vm7077, %v6986
    %7129 = vst.msk [vmem:[#allocation5 + $0x198] sm:$0xff] %vm7077, %v6988
    %7130 = vst.msk [vmem:[#allocation5 + $0x1a0] sm:$0xff] %vm7077, %v6990
    %7131 = vst.msk [vmem:[#allocation5 + $0x1a8] sm:$0xff] %vm7077, %v6992
    %7132 = vst.msk [vmem:[#allocation5 + $0x1b0] sm:$0xff] %vm7077, %v6994
    %7133 = vst.msk [vmem:[#allocation5 + $0x1b8] sm:$0xff] %vm7077, %v6996
    %7134 = vst.msk [vmem:[#allocation5 + $0x1c0] sm:$0xff] %vm7077, %v6998
    %7135 = vst.msk [vmem:[#allocation5 + $0x1c8] sm:$0xff] %vm7077, %v7000
    %7136 = vst.msk [vmem:[#allocation5 + $0x1d0] sm:$0xff] %vm7077, %v7002
    %7137 = vst.msk [vmem:[#allocation5 + $0x1d8] sm:$0xff] %vm7077, %v7004
    %7138 = vst.msk [vmem:[#allocation5 + $0x1e0] sm:$0xff] %vm7077, %v7006
    %7139 = vst.msk [vmem:[#allocation5 + $0x1e8] sm:$0xff] %vm7077, %v7008
    %7140 = vst.msk [vmem:[#allocation5 + $0x1f0] sm:$0xff] %vm7077, %v7010
    %7141 = vst.msk [vmem:[#allocation5 + $0x1f8] sm:$0xff] %vm7077, %v7012
    %v7142 = vld [vmem:[%s6371 + $0x2] sm:$0xff]
    %v7143 = vld [vmem:[%s6371 + $0xa] sm:$0xff]
    %v7144 = vld [vmem:[%s6371 + $0x1a] sm:$0xff]
    %v7145 = vld [vmem:[%s6371 + $0x22] sm:$0xff]
    %v7146 = vld [vmem:[%s6371 + $0x32] sm:$0xff]
    %v7147 = vld [vmem:[%s6371 + $0x3a] sm:$0xff]
    %v7148 = vld [vmem:[%s6371 + $0x4a] sm:$0xff]
    %v7149 = vld [vmem:[%s6371 + $0x52] sm:$0xff]
    %v7150 = vld [vmem:[%s6371 + $0x62] sm:$0xff]
    %v7151 = vld [vmem:[%s6371 + $0x6a] sm:$0xff]
    %v7152 = vld [vmem:[%s6371 + $0x7a] sm:$0xff]
    %v7153 = vld [vmem:[%s6371 + $0x82] sm:$0xff]
    %v7154 = vld [vmem:[%s6371 + $0x92] sm:$0xff]
    %v7155 = vld [vmem:[%s6371 + $0x9a] sm:$0xff]
    %v7156 = vld [vmem:[%s6371 + $0xaa] sm:$0xff]
    %v7157 = vld [vmem:[%s6371 + $0xb2] sm:$0xff]
    %v7158 = vld [vmem:[%s6371 + $0xc2] sm:$0xff]
    %v7159 = vld [vmem:[%s6371 + $0xca] sm:$0xff]
    %v7160 = vld [vmem:[%s6371 + $0xda] sm:$0xff]
    %v7161 = vld [vmem:[%s6371 + $0xe2] sm:$0xff]
    %v7162 = vld [vmem:[%s6371 + $0xf2] sm:$0xff]
    %v7163 = vld [vmem:[%s6371 + $0xfa] sm:$0xff]
    %v7164 = vld [vmem:[%s6371 + $0x10a] sm:$0xff]
    %v7165 = vld [vmem:[%s6371 + $0x112] sm:$0xff]
    %v7166 = vld [vmem:[%s6371 + $0x122] sm:$0xff]
    %v7167 = vld [vmem:[%s6371 + $0x12a] sm:$0xff]
    %v7168 = vld [vmem:[%s6371 + $0x13a] sm:$0xff]
    %v7169 = vld [vmem:[%s6371 + $0x142] sm:$0xff]
    %v7170 = vld [vmem:[%s6371 + $0x152] sm:$0xff]
    %v7171 = vld [vmem:[%s6371 + $0x15a] sm:$0xff]
    %v7172 = vld [vmem:[%s6371 + $0x16a] sm:$0xff]
    %v7173 = vld [vmem:[%s6371 + $0x172] sm:$0xff]
    %v7174 = vld [vmem:[%s6371 + $0x1b2] sm:$0xff]
    %v7175 = vld [vmem:[%s6371 + $0x1ba] sm:$0xff]
    %v7176 = vld [vmem:[%s6371 + $0x1ca] sm:$0xff]
    %v7177 = vld [vmem:[%s6371 + $0x1d2] sm:$0xff]
    %v7178 = vld [vmem:[%s6371 + $0x1e2] sm:$0xff]
    %v7179 = vld [vmem:[%s6371 + $0x1ea] sm:$0xff]
    %v7180 = vld [vmem:[%s6371 + $0x1fa] sm:$0xff]
    %v7181 = vld [vmem:[%s6371 + $0x202] sm:$0xff]
    %v7182 = vld [vmem:[%s6371 + $0x212] sm:$0xff]
    %v7183 = vld [vmem:[%s6371 + $0x21a] sm:$0xff]
    %v7184 = vld [vmem:[%s6371 + $0x22a] sm:$0xff]
    %v7185 = vld [vmem:[%s6371 + $0x232] sm:$0xff]
    %v7186 = vld [vmem:[%s6371 + $0x242] sm:$0xff]
    %v7187 = vld [vmem:[%s6371 + $0x24a] sm:$0xff]
    %v7188 = vld [vmem:[%s6371 + $0x25a] sm:$0xff]
    %v7189 = vld [vmem:[%s6371 + $0x262] sm:$0xff]
    %v7190 = vld [vmem:[%s6371 + $0x272] sm:$0xff]
    %v7191 = vld [vmem:[%s6371 + $0x27a] sm:$0xff]
    %v7192 = vld [vmem:[%s6371 + $0x28a] sm:$0xff]
    %v7193 = vld [vmem:[%s6371 + $0x292] sm:$0xff]
    %v7194 = vld [vmem:[%s6371 + $0x2a2] sm:$0xff]
    %v7195 = vld [vmem:[%s6371 + $0x2aa] sm:$0xff]
    %v7196 = vld [vmem:[%s6371 + $0x2ba] sm:$0xff]
    %v7197 = vld [vmem:[%s6371 + $0x2c2] sm:$0xff]
    %v7198 = vld [vmem:[%s6371 + $0x2d2] sm:$0xff]
    %v7199 = vld [vmem:[%s6371 + $0x2da] sm:$0xff]
    %v7200 = vld [vmem:[%s6371 + $0x2ea] sm:$0xff]
    %v7201 = vld [vmem:[%s6371 + $0x2f2] sm:$0xff]
    %v7202 = vld [vmem:[%s6371 + $0x302] sm:$0xff]
    %v7203 = vld [vmem:[%s6371 + $0x30a] sm:$0xff]
    %v7204 = vld [vmem:[%s6371 + $0x31a] sm:$0xff]
    %v7205 = vld [vmem:[%s6371 + $0x322] sm:$0xff]
    %7270 = vrot.lane.b32.xlu0 %v7142, 64
    %v7271 = vpop.permute.xlu0 %7270
    %7272 = vrot.lane.b32.xlu0 %v7143, 64
    %v7273 = vpop.permute.xlu0 %7272
    %7274 = vrot.lane.b32.xlu0 %v7144, 64
    %v7275 = vpop.permute.xlu0 %7274
    %7276 = vrot.lane.b32.xlu0 %v7145, 64
    %v7277 = vpop.permute.xlu0 %7276
    %7278 = vrot.lane.b32.xlu0 %v7146, 64
    %v7279 = vpop.permute.xlu0 %7278
    %7280 = vrot.lane.b32.xlu0 %v7147, 64
    %v7281 = vpop.permute.xlu0 %7280
    %7282 = vrot.lane.b32.xlu0 %v7148, 64
    %v7283 = vpop.permute.xlu0 %7282
    %7284 = vrot.lane.b32.xlu0 %v7149, 64
    %v7285 = vpop.permute.xlu0 %7284
    %7286 = vrot.lane.b32.xlu0 %v7150, 64
    %v7287 = vpop.permute.xlu0 %7286
    %7288 = vrot.lane.b32.xlu0 %v7151, 64
    %v7289 = vpop.permute.xlu0 %7288
    %7290 = vrot.lane.b32.xlu0 %v7152, 64
    %v7291 = vpop.permute.xlu0 %7290
    %7292 = vrot.lane.b32.xlu0 %v7153, 64
    %v7293 = vpop.permute.xlu0 %7292
    %7294 = vrot.lane.b32.xlu0 %v7154, 64
    %v7295 = vpop.permute.xlu0 %7294
    %7296 = vrot.lane.b32.xlu0 %v7155, 64
    %v7297 = vpop.permute.xlu0 %7296
    %7298 = vrot.lane.b32.xlu0 %v7156, 64
    %v7299 = vpop.permute.xlu0 %7298
    %7300 = vrot.lane.b32.xlu0 %v7157, 64
    %v7301 = vpop.permute.xlu0 %7300
    %7302 = vrot.lane.b32.xlu0 %v7158, 64
    %v7303 = vpop.permute.xlu0 %7302
    %7304 = vrot.lane.b32.xlu0 %v7159, 64
    %v7305 = vpop.permute.xlu0 %7304
    %7306 = vrot.lane.b32.xlu0 %v7160, 64
    %v7307 = vpop.permute.xlu0 %7306
    %7308 = vrot.lane.b32.xlu0 %v7161, 64
    %v7309 = vpop.permute.xlu0 %7308
    %7310 = vrot.lane.b32.xlu0 %v7162, 64
    %v7311 = vpop.permute.xlu0 %7310
    %7312 = vrot.lane.b32.xlu0 %v7163, 64
    %v7313 = vpop.permute.xlu0 %7312
    %7314 = vrot.lane.b32.xlu0 %v7164, 64
    %v7315 = vpop.permute.xlu0 %7314
    %7316 = vrot.lane.b32.xlu0 %v7165, 64
    %v7317 = vpop.permute.xlu0 %7316
    %7318 = vrot.lane.b32.xlu0 %v7166, 64
    %v7319 = vpop.permute.xlu0 %7318
    %7320 = vrot.lane.b32.xlu0 %v7167, 64
    %v7321 = vpop.permute.xlu0 %7320
    %7322 = vrot.lane.b32.xlu0 %v7168, 64
    %v7323 = vpop.permute.xlu0 %7322
    %7324 = vrot.lane.b32.xlu0 %v7169, 64
    %v7325 = vpop.permute.xlu0 %7324
    %7326 = vrot.lane.b32.xlu0 %v7170, 64
    %v7327 = vpop.permute.xlu0 %7326
    %7328 = vrot.lane.b32.xlu0 %v7171, 64
    %v7329 = vpop.permute.xlu0 %7328
    %7330 = vrot.lane.b32.xlu0 %v7172, 64
    %v7331 = vpop.permute.xlu0 %7330
    %7332 = vrot.lane.b32.xlu0 %v7173, 64
    %v7333 = vpop.permute.xlu0 %7332
    %7334 = vrot.lane.b32.xlu0 %v7174, 64
    %v7335 = vpop.permute.xlu0 %7334
    %7336 = vrot.lane.b32.xlu0 %v7175, 64
    %v7337 = vpop.permute.xlu0 %7336
    %7338 = vrot.lane.b32.xlu0 %v7176, 64
    %v7339 = vpop.permute.xlu0 %7338
    %7340 = vrot.lane.b32.xlu0 %v7177, 64
    %v7341 = vpop.permute.xlu0 %7340
    %7342 = vrot.lane.b32.xlu0 %v7178, 64
    %v7343 = vpop.permute.xlu0 %7342
    %7344 = vrot.lane.b32.xlu0 %v7179, 64
    %v7345 = vpop.permute.xlu0 %7344
    %7346 = vrot.lane.b32.xlu0 %v7180, 64
    %v7347 = vpop.permute.xlu0 %7346
    %7348 = vrot.lane.b32.xlu0 %v7181, 64
    %v7349 = vpop.permute.xlu0 %7348
    %7350 = vrot.lane.b32.xlu0 %v7182, 64
    %v7351 = vpop.permute.xlu0 %7350
    %7352 = vrot.lane.b32.xlu0 %v7183, 64
    %v7353 = vpop.permute.xlu0 %7352
    %7354 = vrot.lane.b32.xlu0 %v7184, 64
    %v7355 = vpop.permute.xlu0 %7354
    %7356 = vrot.lane.b32.xlu0 %v7185, 64
    %v7357 = vpop.permute.xlu0 %7356
    %7358 = vrot.lane.b32.xlu0 %v7186, 64
    %v7359 = vpop.permute.xlu0 %7358
    %7360 = vrot.lane.b32.xlu0 %v7187, 64
    %v7361 = vpop.permute.xlu0 %7360
    %7362 = vrot.lane.b32.xlu0 %v7188, 64
    %v7363 = vpop.permute.xlu0 %7362
    %7364 = vrot.lane.b32.xlu0 %v7189, 64
    %v7365 = vpop.permute.xlu0 %7364
    %7366 = vrot.lane.b32.xlu0 %v7190, 64
    %v7367 = vpop.permute.xlu0 %7366
    %7368 = vrot.lane.b32.xlu0 %v7191, 64
    %v7369 = vpop.permute.xlu0 %7368
    %7370 = vrot.lane.b32.xlu0 %v7192, 64
    %v7371 = vpop.permute.xlu0 %7370
    %7372 = vrot.lane.b32.xlu0 %v7193, 64
    %v7373 = vpop.permute.xlu0 %7372
    %7374 = vrot.lane.b32.xlu0 %v7194, 64
    %v7375 = vpop.permute.xlu0 %7374
    %7376 = vrot.lane.b32.xlu0 %v7195, 64
    %v7377 = vpop.permute.xlu0 %7376
    %7378 = vrot.lane.b32.xlu0 %v7196, 64
    %v7379 = vpop.permute.xlu0 %7378
    %7380 = vrot.lane.b32.xlu0 %v7197, 64
    %v7381 = vpop.permute.xlu0 %7380
    %7382 = vrot.lane.b32.xlu0 %v7198, 64
    %v7383 = vpop.permute.xlu0 %7382
    %7384 = vrot.lane.b32.xlu0 %v7199, 64
    %v7385 = vpop.permute.xlu0 %7384
    %7386 = vrot.lane.b32.xlu0 %v7200, 64
    %v7387 = vpop.permute.xlu0 %7386
    %7388 = vrot.lane.b32.xlu0 %v7201, 64
    %v7389 = vpop.permute.xlu0 %7388
    %7390 = vrot.lane.b32.xlu0 %v7202, 64
    %v7391 = vpop.permute.xlu0 %7390
    %7392 = vrot.lane.b32.xlu0 %v7203, 64
    %v7393 = vpop.permute.xlu0 %7392
    %7394 = vrot.lane.b32.xlu0 %v7204, 64
    %v7395 = vpop.permute.xlu0 %7394
    %7396 = vrot.lane.b32.xlu0 %v7205, 64
    %v7397 = vpop.permute.xlu0 %7396
    %vm7462 = vcmask 589312
    %7463 = vst.msk [vmem:[#allocation5] sm:$0xff] %vm7462, %v7271
    %7464 = vst.msk [vmem:[#allocation5 + $0x8] sm:$0xff] %vm7462, %v7273
    %7465 = vst.msk [vmem:[#allocation5 + $0x10] sm:$0xff] %vm7462, %v7275
    %7466 = vst.msk [vmem:[#allocation5 + $0x18] sm:$0xff] %vm7462, %v7277
    %7467 = vst.msk [vmem:[#allocation5 + $0x20] sm:$0xff] %vm7462, %v7279
    %7468 = vst.msk [vmem:[#allocation5 + $0x28] sm:$0xff] %vm7462, %v7281
    %7469 = vst.msk [vmem:[#allocation5 + $0x30] sm:$0xff] %vm7462, %v7283
    %7470 = vst.msk [vmem:[#allocation5 + $0x38] sm:$0xff] %vm7462, %v7285
    %7471 = vst.msk [vmem:[#allocation5 + $0x40] sm:$0xff] %vm7462, %v7287
    %7472 = vst.msk [vmem:[#allocation5 + $0x48] sm:$0xff] %vm7462, %v7289
    %7473 = vst.msk [vmem:[#allocation5 + $0x50] sm:$0xff] %vm7462, %v7291
    %7474 = vst.msk [vmem:[#allocation5 + $0x58] sm:$0xff] %vm7462, %v7293
    %7475 = vst.msk [vmem:[#allocation5 + $0x60] sm:$0xff] %vm7462, %v7295
    %7476 = vst.msk [vmem:[#allocation5 + $0x68] sm:$0xff] %vm7462, %v7297
    %7477 = vst.msk [vmem:[#allocation5 + $0x70] sm:$0xff] %vm7462, %v7299
    %7478 = vst.msk [vmem:[#allocation5 + $0x78] sm:$0xff] %vm7462, %v7301
    %7479 = vst.msk [vmem:[#allocation5 + $0x80] sm:$0xff] %vm7462, %v7303
    %7480 = vst.msk [vmem:[#allocation5 + $0x88] sm:$0xff] %vm7462, %v7305
    %7481 = vst.msk [vmem:[#allocation5 + $0x90] sm:$0xff] %vm7462, %v7307
    %7482 = vst.msk [vmem:[#allocation5 + $0x98] sm:$0xff] %vm7462, %v7309
    %7483 = vst.msk [vmem:[#allocation5 + $0xa0] sm:$0xff] %vm7462, %v7311
    %7484 = vst.msk [vmem:[#allocation5 + $0xa8] sm:$0xff] %vm7462, %v7313
    %7485 = vst.msk [vmem:[#allocation5 + $0xb0] sm:$0xff] %vm7462, %v7315
    %7486 = vst.msk [vmem:[#allocation5 + $0xb8] sm:$0xff] %vm7462, %v7317
    %7487 = vst.msk [vmem:[#allocation5 + $0xc0] sm:$0xff] %vm7462, %v7319
    %7488 = vst.msk [vmem:[#allocation5 + $0xc8] sm:$0xff] %vm7462, %v7321
    %7489 = vst.msk [vmem:[#allocation5 + $0xd0] sm:$0xff] %vm7462, %v7323
    %7490 = vst.msk [vmem:[#allocation5 + $0xd8] sm:$0xff] %vm7462, %v7325
    %7491 = vst.msk [vmem:[#allocation5 + $0xe0] sm:$0xff] %vm7462, %v7327
    %7492 = vst.msk [vmem:[#allocation5 + $0xe8] sm:$0xff] %vm7462, %v7329
    %7493 = vst.msk [vmem:[#allocation5 + $0xf0] sm:$0xff] %vm7462, %v7331
    %7494 = vst.msk [vmem:[#allocation5 + $0xf8] sm:$0xff] %vm7462, %v7333
    %7495 = vst.msk [vmem:[#allocation5 + $0x100] sm:$0xff] %vm7462, %v7335
    %7496 = vst.msk [vmem:[#allocation5 + $0x108] sm:$0xff] %vm7462, %v7337
    %7497 = vst.msk [vmem:[#allocation5 + $0x110] sm:$0xff] %vm7462, %v7339
    %7498 = vst.msk [vmem:[#allocation5 + $0x118] sm:$0xff] %vm7462, %v7341
    %7499 = vst.msk [vmem:[#allocation5 + $0x120] sm:$0xff] %vm7462, %v7343
    %7500 = vst.msk [vmem:[#allocation5 + $0x128] sm:$0xff] %vm7462, %v7345
    %7501 = vst.msk [vmem:[#allocation5 + $0x130] sm:$0xff] %vm7462, %v7347
    %7502 = vst.msk [vmem:[#allocation5 + $0x138] sm:$0xff] %vm7462, %v7349
    %7503 = vst.msk [vmem:[#allocation5 + $0x140] sm:$0xff] %vm7462, %v7351
    %7504 = vst.msk [vmem:[#allocation5 + $0x148] sm:$0xff] %vm7462, %v7353
    %7505 = vst.msk [vmem:[#allocation5 + $0x150] sm:$0xff] %vm7462, %v7355
    %7506 = vst.msk [vmem:[#allocation5 + $0x158] sm:$0xff] %vm7462, %v7357
    %7507 = vst.msk [vmem:[#allocation5 + $0x160] sm:$0xff] %vm7462, %v7359
    %7508 = vst.msk [vmem:[#allocation5 + $0x168] sm:$0xff] %vm7462, %v7361
    %7509 = vst.msk [vmem:[#allocation5 + $0x170] sm:$0xff] %vm7462, %v7363
    %7510 = vst.msk [vmem:[#allocation5 + $0x178] sm:$0xff] %vm7462, %v7365
    %7511 = vst.msk [vmem:[#allocation5 + $0x180] sm:$0xff] %vm7462, %v7367
    %7512 = vst.msk [vmem:[#allocation5 + $0x188] sm:$0xff] %vm7462, %v7369
    %7513 = vst.msk [vmem:[#allocation5 + $0x190] sm:$0xff] %vm7462, %v7371
    %7514 = vst.msk [vmem:[#allocation5 + $0x198] sm:$0xff] %vm7462, %v7373
    %7515 = vst.msk [vmem:[#allocation5 + $0x1a0] sm:$0xff] %vm7462, %v7375
    %7516 = vst.msk [vmem:[#allocation5 + $0x1a8] sm:$0xff] %vm7462, %v7377
    %7517 = vst.msk [vmem:[#allocation5 + $0x1b0] sm:$0xff] %vm7462, %v7379
    %7518 = vst.msk [vmem:[#allocation5 + $0x1b8] sm:$0xff] %vm7462, %v7381
    %7519 = vst.msk [vmem:[#allocation5 + $0x1c0] sm:$0xff] %vm7462, %v7383
    %7520 = vst.msk [vmem:[#allocation5 + $0x1c8] sm:$0xff] %vm7462, %v7385
    %7521 = vst.msk [vmem:[#allocation5 + $0x1d0] sm:$0xff] %vm7462, %v7387
    %7522 = vst.msk [vmem:[#allocation5 + $0x1d8] sm:$0xff] %vm7462, %v7389
    %7523 = vst.msk [vmem:[#allocation5 + $0x1e0] sm:$0xff] %vm7462, %v7391
    %7524 = vst.msk [vmem:[#allocation5 + $0x1e8] sm:$0xff] %vm7462, %v7393
    %7525 = vst.msk [vmem:[#allocation5 + $0x1f0] sm:$0xff] %vm7462, %v7395
    %7526 = vst.msk [vmem:[#allocation5 + $0x1f8] sm:$0xff] %vm7462, %v7397
    %v7527 = vld [vmem:[#allocation5] sm:$0xff]
    %v7528 = vld [vmem:[#allocation5 + $0x8] sm:$0xff]
    %v7529 = vld [vmem:[#allocation5 + $0x10] sm:$0xff]
    %v7530 = vld [vmem:[#allocation5 + $0x18] sm:$0xff]
    %v7531 = vld [vmem:[#allocation5 + $0x20] sm:$0xff]
    %v7532 = vld [vmem:[#allocation5 + $0x28] sm:$0xff]
    %v7533 = vld [vmem:[#allocation5 + $0x30] sm:$0xff]
    %v7534 = vld [vmem:[#allocation5 + $0x38] sm:$0xff]
    %v7535 = vld [vmem:[#allocation5 + $0x40] sm:$0xff]
    %v7536 = vld [vmem:[#allocation5 + $0x48] sm:$0xff]
    %v7537 = vld [vmem:[#allocation5 + $0x50] sm:$0xff]
    %v7538 = vld [vmem:[#allocation5 + $0x58] sm:$0xff]
    %v7539 = vld [vmem:[#allocation5 + $0x60] sm:$0xff]
    %v7540 = vld [vmem:[#allocation5 + $0x68] sm:$0xff]
    %v7541 = vld [vmem:[#allocation5 + $0x70] sm:$0xff]
    %v7542 = vld [vmem:[#allocation5 + $0x78] sm:$0xff]
    %v7543 = vld [vmem:[#allocation5 + $0x80] sm:$0xff]
    %v7544 = vld [vmem:[#allocation5 + $0x88] sm:$0xff]
    %v7545 = vld [vmem:[#allocation5 + $0x90] sm:$0xff]
    %v7546 = vld [vmem:[#allocation5 + $0x98] sm:$0xff]
    %v7547 = vld [vmem:[#allocation5 + $0xa0] sm:$0xff]
    %v7548 = vld [vmem:[#allocation5 + $0xa8] sm:$0xff]
    %v7549 = vld [vmem:[#allocation5 + $0xb0] sm:$0xff]
    %v7550 = vld [vmem:[#allocation5 + $0xb8] sm:$0xff]
    %v7551 = vld [vmem:[#allocation5 + $0xc0] sm:$0xff]
    %v7552 = vld [vmem:[#allocation5 + $0xc8] sm:$0xff]
    %v7553 = vld [vmem:[#allocation5 + $0xd0] sm:$0xff]
    %v7554 = vld [vmem:[#allocation5 + $0xd8] sm:$0xff]
    %v7555 = vld [vmem:[#allocation5 + $0xe0] sm:$0xff]
    %v7556 = vld [vmem:[#allocation5 + $0xe8] sm:$0xff]
    %v7557 = vld [vmem:[#allocation5 + $0xf0] sm:$0xff]
    %v7558 = vld [vmem:[#allocation5 + $0xf8] sm:$0xff]
    %v7559 = vld [vmem:[#allocation5 + $0x100] sm:$0xff]
    %v7560 = vld [vmem:[#allocation5 + $0x108] sm:$0xff]
    %v7561 = vld [vmem:[#allocation5 + $0x110] sm:$0xff]
    %v7562 = vld [vmem:[#allocation5 + $0x118] sm:$0xff]
    %v7563 = vld [vmem:[#allocation5 + $0x120] sm:$0xff]
    %v7564 = vld [vmem:[#allocation5 + $0x128] sm:$0xff]
    %v7565 = vld [vmem:[#allocation5 + $0x130] sm:$0xff]
    %v7566 = vld [vmem:[#allocation5 + $0x138] sm:$0xff]
    %v7567 = vld [vmem:[#allocation5 + $0x140] sm:$0xff]
    %v7568 = vld [vmem:[#allocation5 + $0x148] sm:$0xff]
    %v7569 = vld [vmem:[#allocation5 + $0x150] sm:$0xff]
    %v7570 = vld [vmem:[#allocation5 + $0x158] sm:$0xff]
    %v7571 = vld [vmem:[#allocation5 + $0x160] sm:$0xff]
    %v7572 = vld [vmem:[#allocation5 + $0x168] sm:$0xff]
    %v7573 = vld [vmem:[#allocation5 + $0x170] sm:$0xff]
    %v7574 = vld [vmem:[#allocation5 + $0x178] sm:$0xff]
    %v7575 = vld [vmem:[#allocation5 + $0x180] sm:$0xff]
    %v7576 = vld [vmem:[#allocation5 + $0x188] sm:$0xff]
    %v7577 = vld [vmem:[#allocation5 + $0x190] sm:$0xff]
    %v7578 = vld [vmem:[#allocation5 + $0x198] sm:$0xff]
    %v7579 = vld [vmem:[#allocation5 + $0x1a0] sm:$0xff]
    %v7580 = vld [vmem:[#allocation5 + $0x1a8] sm:$0xff]
    %v7581 = vld [vmem:[#allocation5 + $0x1b0] sm:$0xff]
    %v7582 = vld [vmem:[#allocation5 + $0x1b8] sm:$0xff]
    %v7583 = vld [vmem:[#allocation5 + $0x1c0] sm:$0xff]
    %v7584 = vld [vmem:[#allocation5 + $0x1c8] sm:$0xff]
    %v7585 = vld [vmem:[#allocation5 + $0x1d0] sm:$0xff]
    %v7586 = vld [vmem:[#allocation5 + $0x1d8] sm:$0xff]
    %v7587 = vld [vmem:[#allocation5 + $0x1e0] sm:$0xff]
    %v7588 = vld [vmem:[#allocation5 + $0x1e8] sm:$0xff]
    %v7589 = vld [vmem:[#allocation5 + $0x1f0] sm:$0xff]
    %v7590 = vld [vmem:[#allocation5 + $0x1f8] sm:$0xff]
    %v7591 = vld [vmem:[%s2] sm:$0xff]
    %v7592 = vld [vmem:[%s2 + $0x8] sm:$0xff]
    %v7593 = vld [vmem:[%s2 + $0x10] sm:$0xff]
    %v7594 = vld [vmem:[%s2 + $0x18] sm:$0xff]
    %v7595 = vld [vmem:[%s2 + $0x20] sm:$0xff]
    %v7596 = vld [vmem:[%s2 + $0x28] sm:$0xff]
    %v7597 = vld [vmem:[%s2 + $0x30] sm:$0xff]
    %v7598 = vld [vmem:[%s2 + $0x38] sm:$0xff]
    %v7599 = vld [vmem:[%s2 + $0x40] sm:$0xff]
    %vm7600 = vcmask 588800
    %v7602 = vsel %vm7600, %v7527, 0
    %v7605 = vsel %vm7600, %v7528, 0
    %v7608 = vsel %vm7600, %v7529, 0
    %v7611 = vsel %vm7600, %v7530, 0
    %v7614 = vsel %vm7600, %v7531, 0
    %v7617 = vsel %vm7600, %v7532, 0
    %v7620 = vsel %vm7600, %v7533, 0
    %v7623 = vsel %vm7600, %v7534, 0
    %v7626 = vsel %vm7600, %v7535, 0
    %v7629 = vsel %vm7600, %v7536, 0
    %v7632 = vsel %vm7600, %v7537, 0
    %v7635 = vsel %vm7600, %v7538, 0
    %v7638 = vsel %vm7600, %v7539, 0
    %v7641 = vsel %vm7600, %v7540, 0
    %v7644 = vsel %vm7600, %v7541, 0
    %v7647 = vsel %vm7600, %v7542, 0
    %v7650 = vsel %vm7600, %v7543, 0
    %v7653 = vsel %vm7600, %v7544, 0
    %v7656 = vsel %vm7600, %v7545, 0
    %v7659 = vsel %vm7600, %v7546, 0
    %v7662 = vsel %vm7600, %v7547, 0
    %v7665 = vsel %vm7600, %v7548, 0
    %v7668 = vsel %vm7600, %v7549, 0
    %v7671 = vsel %vm7600, %v7550, 0
    %v7674 = vsel %vm7600, %v7551, 0
    %v7677 = vsel %vm7600, %v7552, 0
    %v7680 = vsel %vm7600, %v7553, 0
    %v7683 = vsel %vm7600, %v7554, 0
    %v7686 = vsel %vm7600, %v7555, 0
    %v7689 = vsel %vm7600, %v7556, 0
    %v7692 = vsel %vm7600, %v7557, 0
    %v7695 = vsel %vm7600, %v7558, 0
    %v7698 = vsel %vm7600, %v7559, 0
    %v7701 = vsel %vm7600, %v7560, 0
    %v7704 = vsel %vm7600, %v7561, 0
    %v7707 = vsel %vm7600, %v7562, 0
    %v7710 = vsel %vm7600, %v7563, 0
    %v7713 = vsel %vm7600, %v7564, 0
    %v7716 = vsel %vm7600, %v7565, 0
    %v7719 = vsel %vm7600, %v7566, 0
    %v7722 = vsel %vm7600, %v7567, 0
    %v7725 = vsel %vm7600, %v7568, 0
    %v7728 = vsel %vm7600, %v7569, 0
    %v7731 = vsel %vm7600, %v7570, 0
    %v7734 = vsel %vm7600, %v7571, 0
    %v7737 = vsel %vm7600, %v7572, 0
    %v7740 = vsel %vm7600, %v7573, 0
    %v7743 = vsel %vm7600, %v7574, 0
    %v7746 = vsel %vm7600, %v7575, 0
    %v7749 = vsel %vm7600, %v7576, 0
    %v7752 = vsel %vm7600, %v7577, 0
    %v7755 = vsel %vm7600, %v7578, 0
    %v7758 = vsel %vm7600, %v7579, 0
    %v7761 = vsel %vm7600, %v7580, 0
    %v7764 = vsel %vm7600, %v7581, 0
    %v7767 = vsel %vm7600, %v7582, 0
    %v7770 = vsel %vm7600, %v7583, 0
    %v7773 = vsel %vm7600, %v7584, 0
    %v7776 = vsel %vm7600, %v7585, 0
    %v7779 = vsel %vm7600, %v7586, 0
    %v7782 = vsel %vm7600, %v7587, 0
    %v7785 = vsel %vm7600, %v7588, 0
    %v7788 = vsel %vm7600, %v7589, 0
    %v7791 = vsel %vm7600, %v7590, 0
    %7793 = vmatprep.subr.mxu0 0.0
    %7794 = vmatpush1.msra.mxu0 0.0
    %7795 = vmatprep.subr.mxu0 0.0
    %7796 = vmatpush1.msra.mxu0 0.0
    %7797 = vmatprep.subr.mxu0 0.0
    %7798 = vmatpush1.msra.mxu0 0.0
    %7799 = vmatprep.subr.mxu0 0.0
    %7800 = vmatpush1.msra.mxu0 0.0
    %7801 = vmatprep.subr.mxu0 0.0
    %7802 = vmatpush1.msra.mxu0 0.0
    %7803 = vmatprep.subr.mxu0 0.0
    %7804 = vmatpush1.msra.mxu0 0.0
    %7805 = vmatprep.subr.mxu0 0.0
    %7806 = vmatpush1.msra.mxu0 0.0
    %7807 = vmatprep.subr.mxu0 0.0
    %7808 = vmatpush1.msra.mxu0 %v7599
    %7809 = vmatprep.subr.mxu0 0.0
    %7810 = vmatpush1.msra.mxu0 %v7598
    %7811 = vmatprep.subr.mxu0 0.0
    %7812 = vmatpush1.msra.mxu0 %v7597
    %7813 = vmatprep.subr.mxu0 0.0
    %7814 = vmatpush1.msra.mxu0 %v7596
    %7815 = vmatprep.subr.mxu0 0.0
    %7816 = vmatpush1.msra.mxu0 %v7595
    %7817 = vmatprep.subr.mxu0 0.0
    %7818 = vmatpush1.msra.mxu0 %v7594
    %7819 = vmatprep.subr.mxu0 0.0
    %7820 = vmatpush1.msra.mxu0 %v7593
    %7821 = vmatprep.subr.mxu0 0.0
    %7822 = vmatpush1.msra.mxu0 %v7592
    %7823 = vmatprep.subr.mxu0 0.0
    %7824 = vmatpush1.msra.mxu0 %v7591
    %7825 = vmatprep.subr.mxu0 0.0
    %7826 = vmatpush2.msra.mxu0 0.0
    %7827 = vmatprep.subr.mxu0 0.0
    %7828 = vmatpush2.msra.mxu0 0.0
    %7829 = vmatprep.subr.mxu0 0.0
    %7830 = vmatpush2.msra.mxu0 0.0
    %7831 = vmatprep.subr.mxu0 0.0
    %7832 = vmatpush2.msra.mxu0 0.0
    %7833 = vmatprep.subr.mxu0 0.0
    %7834 = vmatpush2.msra.mxu0 0.0
    %7835 = vmatprep.subr.mxu0 0.0
    %7836 = vmatpush2.msra.mxu0 0.0
    %7837 = vmatprep.subr.mxu0 0.0
    %7838 = vmatpush2.msra.mxu0 0.0
    %7839 = vmatprep.subr.mxu0 0.0
    %7840 = vmatpush2.msra.mxu0 0.0
    %7841 = vmatprep.subr.mxu0 0.0
    %7842 = vmatpush2.msra.mxu0 0.0
    %7843 = vmatprep.subr.mxu0 0.0
    %7844 = vmatpush2.msra.mxu0 0.0
    %7845 = vmatprep.subr.mxu0 0.0
    %7846 = vmatpush2.msra.mxu0 0.0
    %7847 = vmatprep.subr.mxu0 0.0
    %7848 = vmatpush2.msra.mxu0 0.0
    %7849 = vmatprep.subr.mxu0 0.0
    %7850 = vmatpush2.msra.mxu0 0.0
    %7851 = vmatprep.subr.mxu0 0.0
    %7852 = vmatpush2.msra.mxu0 0.0
    %7853 = vmatprep.subr.mxu0 0.0
    %7854 = vmatpush2.msra.mxu0 0.0
    %7855 = vmatprep.subr.mxu0 0.0
    %7856 = vmatpush2.msra.mxu0 0.0
    %7857 = vmatprep.mubr.f32.mxu0 0.0
    %7858 = vmatmul.mubr.f32.gmra.mxu0 %v7602
    %v7859 = vpop.f32.mrf.mxu0
    %v7860 = vadd.f32 0.0, %v7859
    %v7861 = vpop.f32.mrf.mxu0
    %7862 = vmatprep.mubr.f32.mxu0 0.0
    %7863 = vmatmul.mubr.f32.gmra.mxu0 %v7605
    %v7864 = vpop.f32.mrf.mxu0
    %v7865 = vadd.f32 0.0, %v7864
    %v7866 = vpop.f32.mrf.mxu0
    %7867 = vmatprep.mubr.f32.mxu0 0.0
    %7868 = vmatmul.mubr.f32.gmra.mxu0 %v7608
    %v7869 = vpop.f32.mrf.mxu0
    %v7870 = vadd.f32 0.0, %v7869
    %v7871 = vpop.f32.mrf.mxu0
    %7872 = vmatprep.mubr.f32.mxu0 0.0
    %7873 = vmatmul.mubr.f32.gmra.mxu0 %v7611
    %v7874 = vpop.f32.mrf.mxu0
    %v7875 = vadd.f32 0.0, %v7874
    %v7876 = vpop.f32.mrf.mxu0
    %7877 = vmatprep.mubr.f32.mxu0 0.0
    %7878 = vmatmul.mubr.f32.gmra.mxu0 %v7614
    %v7879 = vpop.f32.mrf.mxu0
    %v7880 = vadd.f32 0.0, %v7879
    %v7881 = vpop.f32.mrf.mxu0
    %7882 = vmatprep.mubr.f32.mxu0 0.0
    %7883 = vmatmul.mubr.f32.gmra.mxu0 %v7617
    %v7884 = vpop.f32.mrf.mxu0
    %v7885 = vadd.f32 0.0, %v7884
    %v7886 = vpop.f32.mrf.mxu0
    %7887 = vmatprep.mubr.f32.mxu0 0.0
    %7888 = vmatmul.mubr.f32.gmra.mxu0 %v7620
    %v7889 = vpop.f32.mrf.mxu0
    %v7890 = vadd.f32 0.0, %v7889
    %v7891 = vpop.f32.mrf.mxu0
    %7892 = vmatprep.mubr.f32.mxu0 0.0
    %7893 = vmatmul.mubr.f32.gmra.mxu0 %v7623
    %v7894 = vpop.f32.mrf.mxu0
    %v7895 = vadd.f32 0.0, %v7894
    %v7896 = vpop.f32.mrf.mxu0
    %7897 = vmatprep.mubr.f32.mxu0 0.0
    %7898 = vmatmul.mubr.f32.gmra.mxu0 %v7626
    %v7899 = vpop.f32.mrf.mxu0
    %v7900 = vadd.f32 0.0, %v7899
    %v7901 = vpop.f32.mrf.mxu0
    %7902 = vmatprep.mubr.f32.mxu0 0.0
    %7903 = vmatmul.mubr.f32.gmra.mxu0 %v7629
    %v7904 = vpop.f32.mrf.mxu0
    %v7905 = vadd.f32 0.0, %v7904
    %v7906 = vpop.f32.mrf.mxu0
    %7907 = vmatprep.mubr.f32.mxu0 0.0
    %7908 = vmatmul.mubr.f32.gmra.mxu0 %v7632
    %v7909 = vpop.f32.mrf.mxu0
    %v7910 = vadd.f32 0.0, %v7909
    %v7911 = vpop.f32.mrf.mxu0
    %7912 = vmatprep.mubr.f32.mxu0 0.0
    %7913 = vmatmul.mubr.f32.gmra.mxu0 %v7635
    %v7914 = vpop.f32.mrf.mxu0
    %v7915 = vadd.f32 0.0, %v7914
    %v7916 = vpop.f32.mrf.mxu0
    %7917 = vmatprep.mubr.f32.mxu0 0.0
    %7918 = vmatmul.mubr.f32.gmra.mxu0 %v7638
    %v7919 = vpop.f32.mrf.mxu0
    %v7920 = vadd.f32 0.0, %v7919
    %v7921 = vpop.f32.mrf.mxu0
    %7922 = vmatprep.mubr.f32.mxu0 0.0
    %7923 = vmatmul.mubr.f32.gmra.mxu0 %v7641
    %v7924 = vpop.f32.mrf.mxu0
    %v7925 = vadd.f32 0.0, %v7924
    %v7926 = vpop.f32.mrf.mxu0
    %7927 = vmatprep.mubr.f32.mxu0 0.0
    %7928 = vmatmul.mubr.f32.gmra.mxu0 %v7644
    %v7929 = vpop.f32.mrf.mxu0
    %v7930 = vadd.f32 0.0, %v7929
    %v7931 = vpop.f32.mrf.mxu0
    %7932 = vmatprep.mubr.f32.mxu0 0.0
    %7933 = vmatmul.mubr.f32.gmra.mxu0 %v7647
    %v7934 = vpop.f32.mrf.mxu0
    %v7935 = vadd.f32 0.0, %v7934
    %v7936 = vpop.f32.mrf.mxu0
    %7937 = vmatprep.mubr.f32.mxu0 0.0
    %7938 = vmatmul.mubr.f32.gmra.mxu0 %v7650
    %v7939 = vpop.f32.mrf.mxu0
    %v7940 = vadd.f32 0.0, %v7939
    %v7941 = vpop.f32.mrf.mxu0
    %7942 = vmatprep.mubr.f32.mxu0 0.0
    %7943 = vmatmul.mubr.f32.gmra.mxu0 %v7653
    %v7944 = vpop.f32.mrf.mxu0
    %v7945 = vadd.f32 0.0, %v7944
    %v7946 = vpop.f32.mrf.mxu0
    %7947 = vmatprep.mubr.f32.mxu0 0.0
    %7948 = vmatmul.mubr.f32.gmra.mxu0 %v7656
    %v7949 = vpop.f32.mrf.mxu0
    %v7950 = vadd.f32 0.0, %v7949
    %v7951 = vpop.f32.mrf.mxu0
    %7952 = vmatprep.mubr.f32.mxu0 0.0
    %7953 = vmatmul.mubr.f32.gmra.mxu0 %v7659
    %v7954 = vpop.f32.mrf.mxu0
    %v7955 = vadd.f32 0.0, %v7954
    %v7956 = vpop.f32.mrf.mxu0
    %7957 = vmatprep.mubr.f32.mxu0 0.0
    %7958 = vmatmul.mubr.f32.gmra.mxu0 %v7662
    %v7959 = vpop.f32.mrf.mxu0
    %v7960 = vadd.f32 0.0, %v7959
    %v7961 = vpop.f32.mrf.mxu0
    %7962 = vmatprep.mubr.f32.mxu0 0.0
    %7963 = vmatmul.mubr.f32.gmra.mxu0 %v7665
    %v7964 = vpop.f32.mrf.mxu0
    %v7965 = vadd.f32 0.0, %v7964
    %v7966 = vpop.f32.mrf.mxu0
    %7967 = vmatprep.mubr.f32.mxu0 0.0
    %7968 = vmatmul.mubr.f32.gmra.mxu0 %v7668
    %v7969 = vpop.f32.mrf.mxu0
    %v7970 = vadd.f32 0.0, %v7969
    %v7971 = vpop.f32.mrf.mxu0
    %7972 = vmatprep.mubr.f32.mxu0 0.0
    %7973 = vmatmul.mubr.f32.gmra.mxu0 %v7671
    %v7974 = vpop.f32.mrf.mxu0
    %v7975 = vadd.f32 0.0, %v7974
    %v7976 = vpop.f32.mrf.mxu0
    %7977 = vmatprep.mubr.f32.mxu0 0.0
    %7978 = vmatmul.mubr.f32.gmra.mxu0 %v7674
    %v7979 = vpop.f32.mrf.mxu0
    %v7980 = vadd.f32 0.0, %v7979
    %v7981 = vpop.f32.mrf.mxu0
    %7982 = vmatprep.mubr.f32.mxu0 0.0
    %7983 = vmatmul.mubr.f32.gmra.mxu0 %v7677
    %v7984 = vpop.f32.mrf.mxu0
    %v7985 = vadd.f32 0.0, %v7984
    %v7986 = vpop.f32.mrf.mxu0
    %7987 = vmatprep.mubr.f32.mxu0 0.0
    %7988 = vmatmul.mubr.f32.gmra.mxu0 %v7680
    %v7989 = vpop.f32.mrf.mxu0
    %v7990 = vadd.f32 0.0, %v7989
    %v7991 = vpop.f32.mrf.mxu0
    %7992 = vmatprep.mubr.f32.mxu0 0.0
    %7993 = vmatmul.mubr.f32.gmra.mxu0 %v7683
    %v7994 = vpop.f32.mrf.mxu0
    %v7995 = vadd.f32 0.0, %v7994
    %v7996 = vpop.f32.mrf.mxu0
    %7997 = vmatprep.mubr.f32.mxu0 0.0
    %7998 = vmatmul.mubr.f32.gmra.mxu0 %v7686
    %v7999 = vpop.f32.mrf.mxu0
    %v8000 = vadd.f32 0.0, %v7999
    %v8001 = vpop.f32.mrf.mxu0
    %8002 = vmatprep.mubr.f32.mxu0 0.0
    %8003 = vmatmul.mubr.f32.gmra.mxu0 %v7689
    %v8004 = vpop.f32.mrf.mxu0
    %v8005 = vadd.f32 0.0, %v8004
    %v8006 = vpop.f32.mrf.mxu0
    %8007 = vmatprep.mubr.f32.mxu0 0.0
    %8008 = vmatmul.mubr.f32.gmra.mxu0 %v7692
    %v8009 = vpop.f32.mrf.mxu0
    %v8010 = vadd.f32 0.0, %v8009
    %v8011 = vpop.f32.mrf.mxu0
    %8012 = vmatprep.mubr.f32.mxu0 0.0
    %8013 = vmatmul.mubr.f32.gmra.mxu0 %v7695
    %v8014 = vpop.f32.mrf.mxu0
    %v8015 = vadd.f32 0.0, %v8014
    %v8016 = vpop.f32.mrf.mxu0
    %8017 = vmatprep.mubr.f32.mxu0 0.0
    %8018 = vmatmul.mubr.f32.gmra.mxu0 %v7698
    %v8019 = vpop.f32.mrf.mxu0
    %v8020 = vadd.f32 0.0, %v8019
    %v8021 = vpop.f32.mrf.mxu0
    %8022 = vmatprep.mubr.f32.mxu0 0.0
    %8023 = vmatmul.mubr.f32.gmra.mxu0 %v7701
    %v8024 = vpop.f32.mrf.mxu0
    %v8025 = vadd.f32 0.0, %v8024
    %v8026 = vpop.f32.mrf.mxu0
    %8027 = vmatprep.mubr.f32.mxu0 0.0
    %8028 = vmatmul.mubr.f32.gmra.mxu0 %v7704
    %v8029 = vpop.f32.mrf.mxu0
    %v8030 = vadd.f32 0.0, %v8029
    %v8031 = vpop.f32.mrf.mxu0
    %8032 = vmatprep.mubr.f32.mxu0 0.0
    %8033 = vmatmul.mubr.f32.gmra.mxu0 %v7707
    %v8034 = vpop.f32.mrf.mxu0
    %v8035 = vadd.f32 0.0, %v8034
    %v8036 = vpop.f32.mrf.mxu0
    %8037 = vmatprep.mubr.f32.mxu0 0.0
    %8038 = vmatmul.mubr.f32.gmra.mxu0 %v7710
    %v8039 = vpop.f32.mrf.mxu0
    %v8040 = vadd.f32 0.0, %v8039
    %v8041 = vpop.f32.mrf.mxu0
    %8042 = vmatprep.mubr.f32.mxu0 0.0
    %8043 = vmatmul.mubr.f32.gmra.mxu0 %v7713
    %v8044 = vpop.f32.mrf.mxu0
    %v8045 = vadd.f32 0.0, %v8044
    %v8046 = vpop.f32.mrf.mxu0
    %8047 = vmatprep.mubr.f32.mxu0 0.0
    %8048 = vmatmul.mubr.f32.gmra.mxu0 %v7716
    %v8049 = vpop.f32.mrf.mxu0
    %v8050 = vadd.f32 0.0, %v8049
    %v8051 = vpop.f32.mrf.mxu0
    %8052 = vmatprep.mubr.f32.mxu0 0.0
    %8053 = vmatmul.mubr.f32.gmra.mxu0 %v7719
    %v8054 = vpop.f32.mrf.mxu0
    %v8055 = vadd.f32 0.0, %v8054
    %v8056 = vpop.f32.mrf.mxu0
    %8057 = vmatprep.mubr.f32.mxu0 0.0
    %8058 = vmatmul.mubr.f32.gmra.mxu0 %v7722
    %v8059 = vpop.f32.mrf.mxu0
    %v8060 = vadd.f32 0.0, %v8059
    %v8061 = vpop.f32.mrf.mxu0
    %8062 = vmatprep.mubr.f32.mxu0 0.0
    %8063 = vmatmul.mubr.f32.gmra.mxu0 %v7725
    %v8064 = vpop.f32.mrf.mxu0
    %v8065 = vadd.f32 0.0, %v8064
    %v8066 = vpop.f32.mrf.mxu0
    %8067 = vmatprep.mubr.f32.mxu0 0.0
    %8068 = vmatmul.mubr.f32.gmra.mxu0 %v7728
    %v8069 = vpop.f32.mrf.mxu0
    %v8070 = vadd.f32 0.0, %v8069
    %v8071 = vpop.f32.mrf.mxu0
    %8072 = vmatprep.mubr.f32.mxu0 0.0
    %8073 = vmatmul.mubr.f32.gmra.mxu0 %v7731
    %v8074 = vpop.f32.mrf.mxu0
    %v8075 = vadd.f32 0.0, %v8074
    %v8076 = vpop.f32.mrf.mxu0
    %8077 = vmatprep.mubr.f32.mxu0 0.0
    %8078 = vmatmul.mubr.f32.gmra.mxu0 %v7734
    %v8079 = vpop.f32.mrf.mxu0
    %v8080 = vadd.f32 0.0, %v8079
    %v8081 = vpop.f32.mrf.mxu0
    %8082 = vmatprep.mubr.f32.mxu0 0.0
    %8083 = vmatmul.mubr.f32.gmra.mxu0 %v7737
    %v8084 = vpop.f32.mrf.mxu0
    %v8085 = vadd.f32 0.0, %v8084
    %v8086 = vpop.f32.mrf.mxu0
    %8087 = vmatprep.mubr.f32.mxu0 0.0
    %8088 = vmatmul.mubr.f32.gmra.mxu0 %v7740
    %v8089 = vpop.f32.mrf.mxu0
    %v8090 = vadd.f32 0.0, %v8089
    %v8091 = vpop.f32.mrf.mxu0
    %8092 = vmatprep.mubr.f32.mxu0 0.0
    %8093 = vmatmul.mubr.f32.gmra.mxu0 %v7743
    %v8094 = vpop.f32.mrf.mxu0
    %v8095 = vadd.f32 0.0, %v8094
    %v8096 = vpop.f32.mrf.mxu0
    %8097 = vmatprep.mubr.f32.mxu0 0.0
    %8098 = vmatmul.mubr.f32.gmra.mxu0 %v7746
    %v8099 = vpop.f32.mrf.mxu0
    %v8100 = vadd.f32 0.0, %v8099
    %v8101 = vpop.f32.mrf.mxu0
    %8102 = vmatprep.mubr.f32.mxu0 0.0
    %8103 = vmatmul.mubr.f32.gmra.mxu0 %v7749
    %v8104 = vpop.f32.mrf.mxu0
    %v8105 = vadd.f32 0.0, %v8104
    %v8106 = vpop.f32.mrf.mxu0
    %8107 = vmatprep.mubr.f32.mxu0 0.0
    %8108 = vmatmul.mubr.f32.gmra.mxu0 %v7752
    %v8109 = vpop.f32.mrf.mxu0
    %v8110 = vadd.f32 0.0, %v8109
    %v8111 = vpop.f32.mrf.mxu0
    %8112 = vmatprep.mubr.f32.mxu0 0.0
    %8113 = vmatmul.mubr.f32.gmra.mxu0 %v7755
    %v8114 = vpop.f32.mrf.mxu0
    %v8115 = vadd.f32 0.0, %v8114
    %v8116 = vpop.f32.mrf.mxu0
    %8117 = vmatprep.mubr.f32.mxu0 0.0
    %8118 = vmatmul.mubr.f32.gmra.mxu0 %v7758
    %v8119 = vpop.f32.mrf.mxu0
    %v8120 = vadd.f32 0.0, %v8119
    %v8121 = vpop.f32.mrf.mxu0
    %8122 = vmatprep.mubr.f32.mxu0 0.0
    %8123 = vmatmul.mubr.f32.gmra.mxu0 %v7761
    %v8124 = vpop.f32.mrf.mxu0
    %v8125 = vadd.f32 0.0, %v8124
    %v8126 = vpop.f32.mrf.mxu0
    %8127 = vmatprep.mubr.f32.mxu0 0.0
    %8128 = vmatmul.mubr.f32.gmra.mxu0 %v7764
    %v8129 = vpop.f32.mrf.mxu0
    %v8130 = vadd.f32 0.0, %v8129
    %v8131 = vpop.f32.mrf.mxu0
    %8132 = vmatprep.mubr.f32.mxu0 0.0
    %8133 = vmatmul.mubr.f32.gmra.mxu0 %v7767
    %v8134 = vpop.f32.mrf.mxu0
    %v8135 = vadd.f32 0.0, %v8134
    %v8136 = vpop.f32.mrf.mxu0
    %8137 = vmatprep.mubr.f32.mxu0 0.0
    %8138 = vmatmul.mubr.f32.gmra.mxu0 %v7770
    %v8139 = vpop.f32.mrf.mxu0
    %v8140 = vadd.f32 0.0, %v8139
    %v8141 = vpop.f32.mrf.mxu0
    %8142 = vmatprep.mubr.f32.mxu0 0.0
    %8143 = vmatmul.mubr.f32.gmra.mxu0 %v7773
    %v8144 = vpop.f32.mrf.mxu0
    %v8145 = vadd.f32 0.0, %v8144
    %v8146 = vpop.f32.mrf.mxu0
    %8147 = vmatprep.mubr.f32.mxu0 0.0
    %8148 = vmatmul.mubr.f32.gmra.mxu0 %v7776
    %v8149 = vpop.f32.mrf.mxu0
    %v8150 = vadd.f32 0.0, %v8149
    %v8151 = vpop.f32.mrf.mxu0
    %8152 = vmatprep.mubr.f32.mxu0 0.0
    %8153 = vmatmul.mubr.f32.gmra.mxu0 %v7779
    %v8154 = vpop.f32.mrf.mxu0
    %v8155 = vadd.f32 0.0, %v8154
    %v8156 = vpop.f32.mrf.mxu0
    %8157 = vmatprep.mubr.f32.mxu0 0.0
    %8158 = vmatmul.mubr.f32.gmra.mxu0 %v7782
    %v8159 = vpop.f32.mrf.mxu0
    %v8160 = vadd.f32 0.0, %v8159
    %v8161 = vpop.f32.mrf.mxu0
    %8162 = vmatprep.mubr.f32.mxu0 0.0
    %8163 = vmatmul.mubr.f32.gmra.mxu0 %v7785
    %v8164 = vpop.f32.mrf.mxu0
    %v8165 = vadd.f32 0.0, %v8164
    %v8166 = vpop.f32.mrf.mxu0
    %8167 = vmatprep.mubr.f32.mxu0 0.0
    %8168 = vmatmul.mubr.f32.gmra.mxu0 %v7788
    %v8169 = vpop.f32.mrf.mxu0
    %v8170 = vadd.f32 0.0, %v8169
    %v8171 = vpop.f32.mrf.mxu0
    %8172 = vmatprep.mubr.f32.mxu0 0.0
    %8173 = vmatmul.mubr.f32.gmra.mxu0 %v7791
    %v8174 = vpop.f32.mrf.mxu0
    %v8175 = vadd.f32 0.0, %v8174
    %v8176 = vpop.f32.mrf.mxu0
    %8177 = vdwg.mxu0
    %v8178 = vmax.f32 %v7860, 0.0
    %v8179 = vmax.f32 %v7865, 0.0
    %v8180 = vmax.f32 %v7870, 0.0
    %v8181 = vmax.f32 %v7875, 0.0
    %v8182 = vmax.f32 %v7880, 0.0
    %v8183 = vmax.f32 %v7885, 0.0
    %v8184 = vmax.f32 %v7890, 0.0
    %v8185 = vmax.f32 %v7895, 0.0
    %v8186 = vmax.f32 %v7900, 0.0
    %v8187 = vmax.f32 %v7905, 0.0
    %v8188 = vmax.f32 %v7910, 0.0
    %v8189 = vmax.f32 %v7915, 0.0
    %v8190 = vmax.f32 %v7920, 0.0
    %v8191 = vmax.f32 %v7925, 0.0
    %v8192 = vmax.f32 %v7930, 0.0
    %v8193 = vmax.f32 %v7935, 0.0
    %v8194 = vmax.f32 %v7940, 0.0
    %v8195 = vmax.f32 %v7945, 0.0
    %v8196 = vmax.f32 %v7950, 0.0
    %v8197 = vmax.f32 %v7955, 0.0
    %v8198 = vmax.f32 %v7960, 0.0
    %v8199 = vmax.f32 %v7965, 0.0
    %v8200 = vmax.f32 %v7970, 0.0
    %v8201 = vmax.f32 %v7975, 0.0
    %v8202 = vmax.f32 %v7980, 0.0
    %v8203 = vmax.f32 %v7985, 0.0
    %v8204 = vmax.f32 %v7990, 0.0
    %v8205 = vmax.f32 %v7995, 0.0
    %v8206 = vmax.f32 %v8000, 0.0
    %v8207 = vmax.f32 %v8005, 0.0
    %v8208 = vmax.f32 %v8010, 0.0
    %v8209 = vmax.f32 %v8015, 0.0
    %v8210 = vmax.f32 %v8020, 0.0
    %v8211 = vmax.f32 %v8025, 0.0
    %v8212 = vmax.f32 %v8030, 0.0
    %v8213 = vmax.f32 %v8035, 0.0
    %v8214 = vmax.f32 %v8040, 0.0
    %v8215 = vmax.f32 %v8045, 0.0
    %v8216 = vmax.f32 %v8050, 0.0
    %v8217 = vmax.f32 %v8055, 0.0
    %v8218 = vmax.f32 %v8060, 0.0
    %v8219 = vmax.f32 %v8065, 0.0
    %v8220 = vmax.f32 %v8070, 0.0
    %v8221 = vmax.f32 %v8075, 0.0
    %v8222 = vmax.f32 %v8080, 0.0
    %v8223 = vmax.f32 %v8085, 0.0
    %v8224 = vmax.f32 %v8090, 0.0
    %v8225 = vmax.f32 %v8095, 0.0
    %v8226 = vmax.f32 %v8100, 0.0
    %v8227 = vmax.f32 %v8105, 0.0
    %v8228 = vmax.f32 %v8110, 0.0
    %v8229 = vmax.f32 %v8115, 0.0
    %v8230 = vmax.f32 %v8120, 0.0
    %v8231 = vmax.f32 %v8125, 0.0
    %v8232 = vmax.f32 %v8130, 0.0
    %v8233 = vmax.f32 %v8135, 0.0
    %v8234 = vmax.f32 %v8140, 0.0
    %v8235 = vmax.f32 %v8145, 0.0
    %v8236 = vmax.f32 %v8150, 0.0
    %v8237 = vmax.f32 %v8155, 0.0
    %v8238 = vmax.f32 %v8160, 0.0
    %v8239 = vmax.f32 %v8165, 0.0
    %v8240 = vmax.f32 %v8170, 0.0
    %v8241 = vmax.f32 %v8175, 0.0
    %v8242 = vmax.f32 %v8178, %v8180
    %v8243 = vmax.f32 %v8179, %v8181
    %v8244 = vmax.f32 %v8182, %v8184
    %v8245 = vmax.f32 %v8183, %v8185
    %v8246 = vmax.f32 %v8186, %v8188
    %v8247 = vmax.f32 %v8187, %v8189
    %v8248 = vmax.f32 %v8190, %v8192
    %v8249 = vmax.f32 %v8191, %v8193
    %v8250 = vmax.f32 %v8194, %v8196
    %v8251 = vmax.f32 %v8195, %v8197
    %v8252 = vmax.f32 %v8198, %v8200
    %v8253 = vmax.f32 %v8199, %v8201
    %v8254 = vmax.f32 %v8202, %v8204
    %v8255 = vmax.f32 %v8203, %v8205
    %v8256 = vmax.f32 %v8206, %v8208
    %v8257 = vmax.f32 %v8207, %v8209
    %v8258 = vmax.f32 %v8210, %v8212
    %v8259 = vmax.f32 %v8211, %v8213
    %v8260 = vmax.f32 %v8214, %v8216
    %v8261 = vmax.f32 %v8215, %v8217
    %v8262 = vmax.f32 %v8218, %v8220
    %v8263 = vmax.f32 %v8219, %v8221
    %v8264 = vmax.f32 %v8222, %v8224
    %v8265 = vmax.f32 %v8223, %v8225
    %v8266 = vmax.f32 %v8226, %v8228
    %v8267 = vmax.f32 %v8227, %v8229
    %v8268 = vmax.f32 %v8230, %v8232
    %v8269 = vmax.f32 %v8231, %v8233
    %v8270 = vmax.f32 %v8234, %v8236
    %v8271 = vmax.f32 %v8235, %v8237
    %v8272 = vmax.f32 %v8238, %v8240
    %v8273 = vmax.f32 %v8239, %v8241
    %vm8274 = vcmask 130048
    %8275 = vst.msk [vmem:[#allocation8] sm:$0xff] %vm8274, %v8242
    %8276 = vst.msk [vmem:[#allocation8 + $0x8] sm:$0xff] %vm8274, %v8243
    %8277 = vst.msk [vmem:[#allocation8 + $0x10] sm:$0xff] %vm8274, %v8244
    %8278 = vst.msk [vmem:[#allocation8 + $0x18] sm:$0xff] %vm8274, %v8245
    %8279 = vst.msk [vmem:[#allocation8 + $0x20] sm:$0xff] %vm8274, %v8246
    %8280 = vst.msk [vmem:[#allocation8 + $0x28] sm:$0xff] %vm8274, %v8247
    %8281 = vst.msk [vmem:[#allocation8 + $0x30] sm:$0xff] %vm8274, %v8248
    %8282 = vst.msk [vmem:[#allocation8 + $0x38] sm:$0xff] %vm8274, %v8249
    %8283 = vst.msk [vmem:[#allocation8 + $0x40] sm:$0xff] %vm8274, %v8250
    %8284 = vst.msk [vmem:[#allocation8 + $0x48] sm:$0xff] %vm8274, %v8251
    %8285 = vst.msk [vmem:[#allocation8 + $0x50] sm:$0xff] %vm8274, %v8252
    %8286 = vst.msk [vmem:[#allocation8 + $0x58] sm:$0xff] %vm8274, %v8253
    %8287 = vst.msk [vmem:[#allocation8 + $0x60] sm:$0xff] %vm8274, %v8254
    %8288 = vst.msk [vmem:[#allocation8 + $0x68] sm:$0xff] %vm8274, %v8255
    %8289 = vst.msk [vmem:[#allocation8 + $0x70] sm:$0xff] %vm8274, %v8256
    %8290 = vst.msk [vmem:[#allocation8 + $0x78] sm:$0xff] %vm8274, %v8257
    %8291 = vst.msk [vmem:[#allocation8 + $0x80] sm:$0xff] %vm8274, %v8258
    %8292 = vst.msk [vmem:[#allocation8 + $0x88] sm:$0xff] %vm8274, %v8259
    %8293 = vst.msk [vmem:[#allocation8 + $0x90] sm:$0xff] %vm8274, %v8260
    %8294 = vst.msk [vmem:[#allocation8 + $0x98] sm:$0xff] %vm8274, %v8261
    %8295 = vst.msk [vmem:[#allocation8 + $0xa0] sm:$0xff] %vm8274, %v8262
    %8296 = vst.msk [vmem:[#allocation8 + $0xa8] sm:$0xff] %vm8274, %v8263
    %8297 = vst.msk [vmem:[#allocation8 + $0xb0] sm:$0xff] %vm8274, %v8264
    %8298 = vst.msk [vmem:[#allocation8 + $0xb8] sm:$0xff] %vm8274, %v8265
    %8299 = vst.msk [vmem:[#allocation8 + $0xc0] sm:$0xff] %vm8274, %v8266
    %8300 = vst.msk [vmem:[#allocation8 + $0xc8] sm:$0xff] %vm8274, %v8267
    %8301 = vst.msk [vmem:[#allocation8 + $0xd0] sm:$0xff] %vm8274, %v8268
    %8302 = vst.msk [vmem:[#allocation8 + $0xd8] sm:$0xff] %vm8274, %v8269
    %8303 = vst.msk [vmem:[#allocation8 + $0xe0] sm:$0xff] %vm8274, %v8270
    %8304 = vst.msk [vmem:[#allocation8 + $0xe8] sm:$0xff] %vm8274, %v8271
    %8305 = vst.msk [vmem:[#allocation8 + $0xf0] sm:$0xff] %vm8274, %v8272
    %8306 = vst.msk [vmem:[#allocation8 + $0xf8] sm:$0xff] %vm8274, %v8273
    %v8307 = vld [vmem:[#allocation8] ss:$2 sm:$0xff]
    %s8308 = scalar_lea.vmem [#allocation8], 16
    %v8309 = vld [vmem:[%s8308] ss:$2 sm:$0xff]
    %s8310 = scalar_lea.vmem [#allocation8], 32
    %v8311 = vld [vmem:[%s8310] ss:$2 sm:$0xff]
    %s8312 = scalar_lea.vmem [#allocation8], 48
    %v8313 = vld [vmem:[%s8312] ss:$2 sm:$0xff]
    %s8314 = scalar_lea.vmem [#allocation8], 64
    %v8315 = vld [vmem:[%s8314] ss:$2 sm:$0xff]
    %s8316 = scalar_lea.vmem [#allocation8], 80
    %v8317 = vld [vmem:[%s8316] ss:$2 sm:$0xff]
    %s8318 = scalar_lea.vmem [#allocation8], 96
    %v8319 = vld [vmem:[%s8318] ss:$2 sm:$0xff]
    %s8320 = scalar_lea.vmem [#allocation8], 112
    %v8321 = vld [vmem:[%s8320] ss:$2 sm:$0xff]
    %s8322 = scalar_lea.vmem [#allocation8], 128
    %v8323 = vld [vmem:[%s8322] ss:$2 sm:$0xff]
    %s8324 = scalar_lea.vmem [#allocation8], 144
    %v8325 = vld [vmem:[%s8324] ss:$2 sm:$0xff]
    %s8326 = scalar_lea.vmem [#allocation8], 160
    %v8327 = vld [vmem:[%s8326] ss:$2 sm:$0xff]
    %s8328 = scalar_lea.vmem [#allocation8], 176
    %v8329 = vld [vmem:[%s8328] ss:$2 sm:$0xff]
    %s8330 = scalar_lea.vmem [#allocation8], 192
    %v8331 = vld [vmem:[%s8330] ss:$2 sm:$0xff]
    %s8332 = scalar_lea.vmem [#allocation8], 208
    %v8333 = vld [vmem:[%s8332] ss:$2 sm:$0xff]
    %s8334 = scalar_lea.vmem [#allocation8], 224
    %v8335 = vld [vmem:[%s8334] ss:$2 sm:$0xff]
    %s8336 = scalar_lea.vmem [#allocation8], 240
    %v8337 = vld [vmem:[%s8336] ss:$2 sm:$0xff]
    %s8338 = scalar_lea.vmem [#allocation8], 1
    %v8339 = vld [vmem:[%s8338] ss:$2 sm:$0xff]
    %s8340 = scalar_lea.vmem [#allocation8], 17
    %v8341 = vld [vmem:[%s8340] ss:$2 sm:$0xff]
    %s8342 = scalar_lea.vmem [#allocation8], 33
    %v8343 = vld [vmem:[%s8342] ss:$2 sm:$0xff]
    %s8344 = scalar_lea.vmem [#allocation8], 49
    %v8345 = vld [vmem:[%s8344] ss:$2 sm:$0xff]
    %s8346 = scalar_lea.vmem [#allocation8], 65
    %v8347 = vld [vmem:[%s8346] ss:$2 sm:$0xff]
    %s8348 = scalar_lea.vmem [#allocation8], 81
    %v8349 = vld [vmem:[%s8348] ss:$2 sm:$0xff]
    %s8350 = scalar_lea.vmem [#allocation8], 97
    %v8351 = vld [vmem:[%s8350] ss:$2 sm:$0xff]
    %s8352 = scalar_lea.vmem [#allocation8], 113
    %v8353 = vld [vmem:[%s8352] ss:$2 sm:$0xff]
    %s8354 = scalar_lea.vmem [#allocation8], 129
    %v8355 = vld [vmem:[%s8354] ss:$2 sm:$0xff]
    %s8356 = scalar_lea.vmem [#allocation8], 145
    %v8357 = vld [vmem:[%s8356] ss:$2 sm:$0xff]
    %s8358 = scalar_lea.vmem [#allocation8], 161
    %v8359 = vld [vmem:[%s8358] ss:$2 sm:$0xff]
    %s8360 = scalar_lea.vmem [#allocation8], 177
    %v8361 = vld [vmem:[%s8360] ss:$2 sm:$0xff]
    %s8362 = scalar_lea.vmem [#allocation8], 193
    %v8363 = vld [vmem:[%s8362] ss:$2 sm:$0xff]
    %s8364 = scalar_lea.vmem [#allocation8], 209
    %v8365 = vld [vmem:[%s8364] ss:$2 sm:$0xff]
    %s8366 = scalar_lea.vmem [#allocation8], 225
    %v8367 = vld [vmem:[%s8366] ss:$2 sm:$0xff]
    %s8368 = scalar_lea.vmem [#allocation8], 241
    %v8369 = vld [vmem:[%s8368] ss:$2 sm:$0xff]
    %v8370 = vmax.f32 %v8307, %v8339
    %v8371 = vmax.f32 %v8309, %v8341
    %v8372 = vmax.f32 %v8311, %v8343
    %v8373 = vmax.f32 %v8313, %v8345
    %v8374 = vmax.f32 %v8315, %v8347
    %v8375 = vmax.f32 %v8317, %v8349
    %v8376 = vmax.f32 %v8319, %v8351
    %v8377 = vmax.f32 %v8321, %v8353
    %v8378 = vmax.f32 %v8323, %v8355
    %v8379 = vmax.f32 %v8325, %v8357
    %v8380 = vmax.f32 %v8327, %v8359
    %v8381 = vmax.f32 %v8329, %v8361
    %v8382 = vmax.f32 %v8331, %v8363
    %v8383 = vmax.f32 %v8333, %v8365
    %v8384 = vmax.f32 %v8335, %v8367
    %v8385 = vmax.f32 %v8337, %v8369
    %8386 = vst.msk [vmem:[#allocation6] sm:$0xff] %vm8274, 0.0
    %vm8387 = vcmask 123904
    %8388 = vst.msk [vmem:[#allocation6 + $0x8] sm:$0x3] %vm8387, 0.0
    %8389 = vst.msk [vmem:[#allocation6 + $0xa0] sm:$0xff] %vm8274, 0.0
    %8390 = vst.msk [vmem:[#allocation6 + $0xa8] sm:$0x3] %vm8387, 0.0
    %s8391 = scalar_lea.vmem [#allocation6], 144
    %8392 = vst.msk [vmem:[%s8391] sm:$0xff] %vm8274, 0.0
    %8393 = vst.msk [vmem:[%s8391 + $0x8] sm:$0x3] %vm8387, 0.0
    %8394 = vst.msk [vmem:[%s8391 + $0xa0] sm:$0xff] %vm8274, 0.0
    %8395 = vst.msk [vmem:[%s8391 + $0xa8] sm:$0x3] %vm8387, 0.0
    %vm8396 = vcmask 122880
    %8397 = vst.msk [vmem:[#allocation6] sm:$0x1] %vm8396, 0.0
    %8398 = vst.msk [vmem:[#allocation6 + $0x10] sm:$0x1] %vm8396, 0.0
    %8399 = vst.msk [vmem:[#allocation6 + $0x20] sm:$0x1] %vm8396, 0.0
    %8400 = vst.msk [vmem:[#allocation6 + $0x30] sm:$0x1] %vm8396, 0.0
    %8401 = vst.msk [vmem:[#allocation6 + $0x40] sm:$0x1] %vm8396, 0.0
    %8402 = vst.msk [vmem:[#allocation6 + $0x50] sm:$0x1] %vm8396, 0.0
    %8403 = vst.msk [vmem:[#allocation6 + $0x60] sm:$0x1] %vm8396, 0.0
    %8404 = vst.msk [vmem:[#allocation6 + $0x70] sm:$0x1] %vm8396, 0.0
    %8405 = vst.msk [vmem:[#allocation6 + $0x80] sm:$0x1] %vm8396, 0.0
    %8406 = vst.msk [vmem:[#allocation6 + $0x90] sm:$0x1] %vm8396, 0.0
    %8407 = vst.msk [vmem:[#allocation6 + $0xa0] sm:$0x1] %vm8396, 0.0
    %8408 = vst.msk [vmem:[#allocation6 + $0xb0] sm:$0x1] %vm8396, 0.0
    %8409 = vst.msk [vmem:[#allocation6 + $0xc0] sm:$0x1] %vm8396, 0.0
    %8410 = vst.msk [vmem:[#allocation6 + $0xd0] sm:$0x1] %vm8396, 0.0
    %8411 = vst.msk [vmem:[#allocation6 + $0xe0] sm:$0x1] %vm8396, 0.0
    %8412 = vst.msk [vmem:[#allocation6 + $0xf0] sm:$0x1] %vm8396, 0.0
    %8413 = vst.msk [vmem:[#allocation6 + $0x100] sm:$0x1] %vm8396, 0.0
    %8414 = vst.msk [vmem:[#allocation6 + $0x110] sm:$0x1] %vm8396, 0.0
    %8415 = vst.msk [vmem:[#allocation6 + $0x120] sm:$0x1] %vm8396, 0.0
    %8416 = vst.msk [vmem:[#allocation6 + $0x130] sm:$0x1] %vm8396, 0.0
    %8417 = vst.msk [vmem:[#allocation6 + $0x9] sm:$0x1] %vm8396, 0.0
    %8418 = vst.msk [vmem:[#allocation6 + $0x19] sm:$0x1] %vm8396, 0.0
    %8419 = vst.msk [vmem:[#allocation6 + $0x29] sm:$0x1] %vm8396, 0.0
    %8420 = vst.msk [vmem:[#allocation6 + $0x39] sm:$0x1] %vm8396, 0.0
    %8421 = vst.msk [vmem:[#allocation6 + $0x49] sm:$0x1] %vm8396, 0.0
    %8422 = vst.msk [vmem:[#allocation6 + $0x59] sm:$0x1] %vm8396, 0.0
    %8423 = vst.msk [vmem:[#allocation6 + $0x69] sm:$0x1] %vm8396, 0.0
    %8424 = vst.msk [vmem:[#allocation6 + $0x79] sm:$0x1] %vm8396, 0.0
    %8425 = vst.msk [vmem:[#allocation6 + $0x89] sm:$0x1] %vm8396, 0.0
    %8426 = vst.msk [vmem:[#allocation6 + $0x99] sm:$0x1] %vm8396, 0.0
    %8427 = vst.msk [vmem:[#allocation6 + $0xa9] sm:$0x1] %vm8396, 0.0
    %8428 = vst.msk [vmem:[#allocation6 + $0xb9] sm:$0x1] %vm8396, 0.0
    %8429 = vst.msk [vmem:[#allocation6 + $0xc9] sm:$0x1] %vm8396, 0.0
    %8430 = vst.msk [vmem:[#allocation6 + $0xd9] sm:$0x1] %vm8396, 0.0
    %8431 = vst.msk [vmem:[#allocation6 + $0xe9] sm:$0x1] %vm8396, 0.0
    %8432 = vst.msk [vmem:[#allocation6 + $0xf9] sm:$0x1] %vm8396, 0.0
    %8433 = vst.msk [vmem:[#allocation6 + $0x109] sm:$0x1] %vm8396, 0.0
    %8434 = vst.msk [vmem:[#allocation6 + $0x119] sm:$0x1] %vm8396, 0.0
    %8435 = vst.msk [vmem:[#allocation6 + $0x129] sm:$0x1] %vm8396, 0.0
    %8436 = vst.msk [vmem:[#allocation6 + $0x139] sm:$0x1] %vm8396, 0.0
    %s8437 = scalar_lea.vmem [#allocation6], 16
    %8438 = vst.msk [vmem:[%s8437 + $0x1] sm:$0xff] %vm8274, %v8370
    %8439 = vst.msk [vmem:[%s8437 + $0x11] sm:$0xff] %vm8274, %v8371
    %8440 = vst.msk [vmem:[%s8437 + $0x21] sm:$0xff] %vm8274, %v8372
    %8441 = vst.msk [vmem:[%s8437 + $0x31] sm:$0xff] %vm8274, %v8373
    %8442 = vst.msk [vmem:[%s8437 + $0x41] sm:$0xff] %vm8274, %v8374
    %8443 = vst.msk [vmem:[%s8437 + $0x51] sm:$0xff] %vm8274, %v8375
    %8444 = vst.msk [vmem:[%s8437 + $0x61] sm:$0xff] %vm8274, %v8376
    %8445 = vst.msk [vmem:[%s8437 + $0x71] sm:$0xff] %vm8274, %v8377
    %8446 = vst.msk [vmem:[%s8437 + $0xa1] sm:$0xff] %vm8274, %v8378
    %8447 = vst.msk [vmem:[%s8437 + $0xb1] sm:$0xff] %vm8274, %v8379
    %8448 = vst.msk [vmem:[%s8437 + $0xc1] sm:$0xff] %vm8274, %v8380
    %8449 = vst.msk [vmem:[%s8437 + $0xd1] sm:$0xff] %vm8274, %v8381
    %8450 = vst.msk [vmem:[%s8437 + $0xe1] sm:$0xff] %vm8274, %v8382
    %8451 = vst.msk [vmem:[%s8437 + $0xf1] sm:$0xff] %vm8274, %v8383
    %8452 = vst.msk [vmem:[%s8437 + $0x101] sm:$0xff] %vm8274, %v8384
    %8453 = vst.msk [vmem:[%s8437 + $0x111] sm:$0xff] %vm8274, %v8385
    %v8454 = vld [vmem:[#allocation6] sm:$0xff]
    %v8455 = vld [vmem:[#allocation6 + $0x10] sm:$0xff]
    %v8456 = vld [vmem:[#allocation6 + $0x20] sm:$0xff]
    %v8457 = vld [vmem:[#allocation6 + $0x30] sm:$0xff]
    %v8458 = vld [vmem:[#allocation6 + $0x40] sm:$0xff]
    %v8459 = vld [vmem:[#allocation6 + $0x50] sm:$0xff]
    %v8460 = vld [vmem:[#allocation6 + $0x60] sm:$0xff]
    %v8461 = vld [vmem:[#allocation6 + $0x70] sm:$0xff]
    %v8462 = vld [vmem:[#allocation6 + $0xa0] sm:$0xff]
    %v8463 = vld [vmem:[#allocation6 + $0xb0] sm:$0xff]
    %v8464 = vld [vmem:[#allocation6 + $0xc0] sm:$0xff]
    %v8465 = vld [vmem:[#allocation6 + $0xd0] sm:$0xff]
    %v8466 = vld [vmem:[#allocation6 + $0xe0] sm:$0xff]
    %v8467 = vld [vmem:[#allocation6 + $0xf0] sm:$0xff]
    %v8468 = vld [vmem:[#allocation6 + $0x100] sm:$0xff]
    %v8469 = vld [vmem:[#allocation6 + $0x110] sm:$0xff]
    %8470 = vst.msk [vmem:[#allocation7] sm:$0xff] %vm8274, %v8454
    %8471 = vst.msk [vmem:[#allocation7 + $0x10] sm:$0xff] %vm8274, %v8455
    %8472 = vst.msk [vmem:[#allocation7 + $0x20] sm:$0xff] %vm8274, %v8456
    %8473 = vst.msk [vmem:[#allocation7 + $0x30] sm:$0xff] %vm8274, %v8457
    %8474 = vst.msk [vmem:[#allocation7 + $0x40] sm:$0xff] %vm8274, %v8458
    %8475 = vst.msk [vmem:[#allocation7 + $0x50] sm:$0xff] %vm8274, %v8459
    %8476 = vst.msk [vmem:[#allocation7 + $0x60] sm:$0xff] %vm8274, %v8460
    %8477 = vst.msk [vmem:[#allocation7 + $0x70] sm:$0xff] %vm8274, %v8461
    %8478 = vst.msk [vmem:[#allocation7 + $0x80] sm:$0xff] %vm8274, %v8462
    %8479 = vst.msk [vmem:[#allocation7 + $0x90] sm:$0xff] %vm8274, %v8463
    %8480 = vst.msk [vmem:[#allocation7 + $0xa0] sm:$0xff] %vm8274, %v8464
    %8481 = vst.msk [vmem:[#allocation7 + $0xb0] sm:$0xff] %vm8274, %v8465
    %8482 = vst.msk [vmem:[#allocation7 + $0xc0] sm:$0xff] %vm8274, %v8466
    %8483 = vst.msk [vmem:[#allocation7 + $0xd0] sm:$0xff] %vm8274, %v8467
    %8484 = vst.msk [vmem:[#allocation7 + $0xe0] sm:$0xff] %vm8274, %v8468
    %8485 = vst.msk [vmem:[#allocation7 + $0xf0] sm:$0xff] %vm8274, %v8469
    %v8486 = vld [vmem:[#allocation6 + $0x1] sm:$0xff]
    %v8487 = vld [vmem:[#allocation6 + $0x11] sm:$0xff]
    %v8488 = vld [vmem:[#allocation6 + $0x21] sm:$0xff]
    %v8489 = vld [vmem:[#allocation6 + $0x31] sm:$0xff]
    %v8490 = vld [vmem:[#allocation6 + $0x41] sm:$0xff]
    %v8491 = vld [vmem:[#allocation6 + $0x51] sm:$0xff]
    %v8492 = vld [vmem:[#allocation6 + $0x61] sm:$0xff]
    %v8493 = vld [vmem:[#allocation6 + $0x71] sm:$0xff]
    %v8494 = vld [vmem:[#allocation6 + $0xa1] sm:$0xff]
    %v8495 = vld [vmem:[#allocation6 + $0xb1] sm:$0xff]
    %v8496 = vld [vmem:[#allocation6 + $0xc1] sm:$0xff]
    %v8497 = vld [vmem:[#allocation6 + $0xd1] sm:$0xff]
    %v8498 = vld [vmem:[#allocation6 + $0xe1] sm:$0xff]
    %v8499 = vld [vmem:[#allocation6 + $0xf1] sm:$0xff]
    %v8500 = vld [vmem:[#allocation6 + $0x101] sm:$0xff]
    %v8501 = vld [vmem:[#allocation6 + $0x111] sm:$0xff]
    %8518 = vrot.lane.b32.xlu0 %v8486, 16
    %v8519 = vpop.permute.xlu0 %8518
    %8520 = vrot.lane.b32.xlu0 %v8487, 16
    %v8521 = vpop.permute.xlu0 %8520
    %8522 = vrot.lane.b32.xlu0 %v8488, 16
    %v8523 = vpop.permute.xlu0 %8522
    %8524 = vrot.lane.b32.xlu0 %v8489, 16
    %v8525 = vpop.permute.xlu0 %8524
    %8526 = vrot.lane.b32.xlu0 %v8490, 16
    %v8527 = vpop.permute.xlu0 %8526
    %8528 = vrot.lane.b32.xlu0 %v8491, 16
    %v8529 = vpop.permute.xlu0 %8528
    %8530 = vrot.lane.b32.xlu0 %v8492, 16
    %v8531 = vpop.permute.xlu0 %8530
    %8532 = vrot.lane.b32.xlu0 %v8493, 16
    %v8533 = vpop.permute.xlu0 %8532
    %8534 = vrot.lane.b32.xlu0 %v8494, 16
    %v8535 = vpop.permute.xlu0 %8534
    %8536 = vrot.lane.b32.xlu0 %v8495, 16
    %v8537 = vpop.permute.xlu0 %8536
    %8538 = vrot.lane.b32.xlu0 %v8496, 16
    %v8539 = vpop.permute.xlu0 %8538
    %8540 = vrot.lane.b32.xlu0 %v8497, 16
    %v8541 = vpop.permute.xlu0 %8540
    %8542 = vrot.lane.b32.xlu0 %v8498, 16
    %v8543 = vpop.permute.xlu0 %8542
    %8544 = vrot.lane.b32.xlu0 %v8499, 16
    %v8545 = vpop.permute.xlu0 %8544
    %8546 = vrot.lane.b32.xlu0 %v8500, 16
    %v8547 = vpop.permute.xlu0 %8546
    %8548 = vrot.lane.b32.xlu0 %v8501, 16
    %v8549 = vpop.permute.xlu0 %8548
    %vm8566 = vcmask 261248
    %8567 = vst.msk [vmem:[#allocation7] sm:$0xff] %vm8566, %v8519
    %8568 = vst.msk [vmem:[#allocation7 + $0x10] sm:$0xff] %vm8566, %v8521
    %8569 = vst.msk [vmem:[#allocation7 + $0x20] sm:$0xff] %vm8566, %v8523
    %8570 = vst.msk [vmem:[#allocation7 + $0x30] sm:$0xff] %vm8566, %v8525
    %8571 = vst.msk [vmem:[#allocation7 + $0x40] sm:$0xff] %vm8566, %v8527
    %8572 = vst.msk [vmem:[#allocation7 + $0x50] sm:$0xff] %vm8566, %v8529
    %8573 = vst.msk [vmem:[#allocation7 + $0x60] sm:$0xff] %vm8566, %v8531
    %8574 = vst.msk [vmem:[#allocation7 + $0x70] sm:$0xff] %vm8566, %v8533
    %8575 = vst.msk [vmem:[#allocation7 + $0x80] sm:$0xff] %vm8566, %v8535
    %8576 = vst.msk [vmem:[#allocation7 + $0x90] sm:$0xff] %vm8566, %v8537
    %8577 = vst.msk [vmem:[#allocation7 + $0xa0] sm:$0xff] %vm8566, %v8539
    %8578 = vst.msk [vmem:[#allocation7 + $0xb0] sm:$0xff] %vm8566, %v8541
    %8579 = vst.msk [vmem:[#allocation7 + $0xc0] sm:$0xff] %vm8566, %v8543
    %8580 = vst.msk [vmem:[#allocation7 + $0xd0] sm:$0xff] %vm8566, %v8545
    %8581 = vst.msk [vmem:[#allocation7 + $0xe0] sm:$0xff] %vm8566, %v8547
    %8582 = vst.msk [vmem:[#allocation7 + $0xf0] sm:$0xff] %vm8566, %v8549
    %v8583 = vld [vmem:[#allocation6 + $0x2] sm:$0xff]
    %v8584 = vld [vmem:[#allocation6 + $0x12] sm:$0xff]
    %v8585 = vld [vmem:[#allocation6 + $0x22] sm:$0xff]
    %v8586 = vld [vmem:[#allocation6 + $0x32] sm:$0xff]
    %v8587 = vld [vmem:[#allocation6 + $0x42] sm:$0xff]
    %v8588 = vld [vmem:[#allocation6 + $0x52] sm:$0xff]
    %v8589 = vld [vmem:[#allocation6 + $0x62] sm:$0xff]
    %v8590 = vld [vmem:[#allocation6 + $0x72] sm:$0xff]
    %v8591 = vld [vmem:[#allocation6 + $0xa2] sm:$0xff]
    %v8592 = vld [vmem:[#allocation6 + $0xb2] sm:$0xff]
    %v8593 = vld [vmem:[#allocation6 + $0xc2] sm:$0xff]
    %v8594 = vld [vmem:[#allocation6 + $0xd2] sm:$0xff]
    %v8595 = vld [vmem:[#allocation6 + $0xe2] sm:$0xff]
    %v8596 = vld [vmem:[#allocation6 + $0xf2] sm:$0xff]
    %v8597 = vld [vmem:[#allocation6 + $0x102] sm:$0xff]
    %v8598 = vld [vmem:[#allocation6 + $0x112] sm:$0xff]
    %8615 = vrot.lane.b32.xlu0 %v8583, 32
    %v8616 = vpop.permute.xlu0 %8615
    %8617 = vrot.lane.b32.xlu0 %v8584, 32
    %v8618 = vpop.permute.xlu0 %8617
    %8619 = vrot.lane.b32.xlu0 %v8585, 32
    %v8620 = vpop.permute.xlu0 %8619
    %8621 = vrot.lane.b32.xlu0 %v8586, 32
    %v8622 = vpop.permute.xlu0 %8621
    %8623 = vrot.lane.b32.xlu0 %v8587, 32
    %v8624 = vpop.permute.xlu0 %8623
    %8625 = vrot.lane.b32.xlu0 %v8588, 32
    %v8626 = vpop.permute.xlu0 %8625
    %8627 = vrot.lane.b32.xlu0 %v8589, 32
    %v8628 = vpop.permute.xlu0 %8627
    %8629 = vrot.lane.b32.xlu0 %v8590, 32
    %v8630 = vpop.permute.xlu0 %8629
    %8631 = vrot.lane.b32.xlu0 %v8591, 32
    %v8632 = vpop.permute.xlu0 %8631
    %8633 = vrot.lane.b32.xlu0 %v8592, 32
    %v8634 = vpop.permute.xlu0 %8633
    %8635 = vrot.lane.b32.xlu0 %v8593, 32
    %v8636 = vpop.permute.xlu0 %8635
    %8637 = vrot.lane.b32.xlu0 %v8594, 32
    %v8638 = vpop.permute.xlu0 %8637
    %8639 = vrot.lane.b32.xlu0 %v8595, 32
    %v8640 = vpop.permute.xlu0 %8639
    %8641 = vrot.lane.b32.xlu0 %v8596, 32
    %v8642 = vpop.permute.xlu0 %8641
    %8643 = vrot.lane.b32.xlu0 %v8597, 32
    %v8644 = vpop.permute.xlu0 %8643
    %8645 = vrot.lane.b32.xlu0 %v8598, 32
    %v8646 = vpop.permute.xlu0 %8645
    %vm8663 = vcmask 392448
    %8664 = vst.msk [vmem:[#allocation7] sm:$0xff] %vm8663, %v8616
    %8665 = vst.msk [vmem:[#allocation7 + $0x10] sm:$0xff] %vm8663, %v8618
    %8666 = vst.msk [vmem:[#allocation7 + $0x20] sm:$0xff] %vm8663, %v8620
    %8667 = vst.msk [vmem:[#allocation7 + $0x30] sm:$0xff] %vm8663, %v8622
    %8668 = vst.msk [vmem:[#allocation7 + $0x40] sm:$0xff] %vm8663, %v8624
    %8669 = vst.msk [vmem:[#allocation7 + $0x50] sm:$0xff] %vm8663, %v8626
    %8670 = vst.msk [vmem:[#allocation7 + $0x60] sm:$0xff] %vm8663, %v8628
    %8671 = vst.msk [vmem:[#allocation7 + $0x70] sm:$0xff] %vm8663, %v8630
    %8672 = vst.msk [vmem:[#allocation7 + $0x80] sm:$0xff] %vm8663, %v8632
    %8673 = vst.msk [vmem:[#allocation7 + $0x90] sm:$0xff] %vm8663, %v8634
    %8674 = vst.msk [vmem:[#allocation7 + $0xa0] sm:$0xff] %vm8663, %v8636
    %8675 = vst.msk [vmem:[#allocation7 + $0xb0] sm:$0xff] %vm8663, %v8638
    %8676 = vst.msk [vmem:[#allocation7 + $0xc0] sm:$0xff] %vm8663, %v8640
    %8677 = vst.msk [vmem:[#allocation7 + $0xd0] sm:$0xff] %vm8663, %v8642
    %8678 = vst.msk [vmem:[#allocation7 + $0xe0] sm:$0xff] %vm8663, %v8644
    %8679 = vst.msk [vmem:[#allocation7 + $0xf0] sm:$0xff] %vm8663, %v8646
    %v8680 = vld [vmem:[%s8437] sm:$0xff]
    %v8681 = vld [vmem:[%s8437 + $0x10] sm:$0xff]
    %v8682 = vld [vmem:[%s8437 + $0x20] sm:$0xff]
    %v8683 = vld [vmem:[%s8437 + $0x30] sm:$0xff]
    %v8684 = vld [vmem:[%s8437 + $0x40] sm:$0xff]
    %v8685 = vld [vmem:[%s8437 + $0x50] sm:$0xff]
    %v8686 = vld [vmem:[%s8437 + $0x60] sm:$0xff]
    %v8687 = vld [vmem:[%s8437 + $0x70] sm:$0xff]
    %v8688 = vld [vmem:[%s8437 + $0xa0] sm:$0xff]
    %v8689 = vld [vmem:[%s8437 + $0xb0] sm:$0xff]
    %v8690 = vld [vmem:[%s8437 + $0xc0] sm:$0xff]
    %v8691 = vld [vmem:[%s8437 + $0xd0] sm:$0xff]
    %v8692 = vld [vmem:[%s8437 + $0xe0] sm:$0xff]
    %v8693 = vld [vmem:[%s8437 + $0xf0] sm:$0xff]
    %v8694 = vld [vmem:[%s8437 + $0x100] sm:$0xff]
    %v8695 = vld [vmem:[%s8437 + $0x110] sm:$0xff]
    %8712 = vrot.lane.b32.xlu0 %v8680, 48
    %v8713 = vpop.permute.xlu0 %8712
    %8714 = vrot.lane.b32.xlu0 %v8681, 48
    %v8715 = vpop.permute.xlu0 %8714
    %8716 = vrot.lane.b32.xlu0 %v8682, 48
    %v8717 = vpop.permute.xlu0 %8716
    %8718 = vrot.lane.b32.xlu0 %v8683, 48
    %v8719 = vpop.permute.xlu0 %8718
    %8720 = vrot.lane.b32.xlu0 %v8684, 48
    %v8721 = vpop.permute.xlu0 %8720
    %8722 = vrot.lane.b32.xlu0 %v8685, 48
    %v8723 = vpop.permute.xlu0 %8722
    %8724 = vrot.lane.b32.xlu0 %v8686, 48
    %v8725 = vpop.permute.xlu0 %8724
    %8726 = vrot.lane.b32.xlu0 %v8687, 48
    %v8727 = vpop.permute.xlu0 %8726
    %8728 = vrot.lane.b32.xlu0 %v8688, 48
    %v8729 = vpop.permute.xlu0 %8728
    %8730 = vrot.lane.b32.xlu0 %v8689, 48
    %v8731 = vpop.permute.xlu0 %8730
    %8732 = vrot.lane.b32.xlu0 %v8690, 48
    %v8733 = vpop.permute.xlu0 %8732
    %8734 = vrot.lane.b32.xlu0 %v8691, 48
    %v8735 = vpop.permute.xlu0 %8734
    %8736 = vrot.lane.b32.xlu0 %v8692, 48
    %v8737 = vpop.permute.xlu0 %8736
    %8738 = vrot.lane.b32.xlu0 %v8693, 48
    %v8739 = vpop.permute.xlu0 %8738
    %8740 = vrot.lane.b32.xlu0 %v8694, 48
    %v8741 = vpop.permute.xlu0 %8740
    %8742 = vrot.lane.b32.xlu0 %v8695, 48
    %v8743 = vpop.permute.xlu0 %8742
    %vm8760 = vcmask 523648
    %8761 = vst.msk [vmem:[#allocation7] sm:$0xff] %vm8760, %v8713
    %8762 = vst.msk [vmem:[#allocation7 + $0x10] sm:$0xff] %vm8760, %v8715
    %8763 = vst.msk [vmem:[#allocation7 + $0x20] sm:$0xff] %vm8760, %v8717
    %8764 = vst.msk [vmem:[#allocation7 + $0x30] sm:$0xff] %vm8760, %v8719
    %8765 = vst.msk [vmem:[#allocation7 + $0x40] sm:$0xff] %vm8760, %v8721
    %8766 = vst.msk [vmem:[#allocation7 + $0x50] sm:$0xff] %vm8760, %v8723
    %8767 = vst.msk [vmem:[#allocation7 + $0x60] sm:$0xff] %vm8760, %v8725
    %8768 = vst.msk [vmem:[#allocation7 + $0x70] sm:$0xff] %vm8760, %v8727
    %8769 = vst.msk [vmem:[#allocation7 + $0x80] sm:$0xff] %vm8760, %v8729
    %8770 = vst.msk [vmem:[#allocation7 + $0x90] sm:$0xff] %vm8760, %v8731
    %8771 = vst.msk [vmem:[#allocation7 + $0xa0] sm:$0xff] %vm8760, %v8733
    %8772 = vst.msk [vmem:[#allocation7 + $0xb0] sm:$0xff] %vm8760, %v8735
    %8773 = vst.msk [vmem:[#allocation7 + $0xc0] sm:$0xff] %vm8760, %v8737
    %8774 = vst.msk [vmem:[#allocation7 + $0xd0] sm:$0xff] %vm8760, %v8739
    %8775 = vst.msk [vmem:[#allocation7 + $0xe0] sm:$0xff] %vm8760, %v8741
    %8776 = vst.msk [vmem:[#allocation7 + $0xf0] sm:$0xff] %vm8760, %v8743
    %v8777 = vld [vmem:[%s8437 + $0x1] sm:$0xff]
    %v8778 = vld [vmem:[%s8437 + $0x11] sm:$0xff]
    %v8779 = vld [vmem:[%s8437 + $0x21] sm:$0xff]
    %v8780 = vld [vmem:[%s8437 + $0x31] sm:$0xff]
    %v8781 = vld [vmem:[%s8437 + $0x41] sm:$0xff]
    %v8782 = vld [vmem:[%s8437 + $0x51] sm:$0xff]
    %v8783 = vld [vmem:[%s8437 + $0x61] sm:$0xff]
    %v8784 = vld [vmem:[%s8437 + $0x71] sm:$0xff]
    %v8785 = vld [vmem:[%s8437 + $0xa1] sm:$0xff]
    %v8786 = vld [vmem:[%s8437 + $0xb1] sm:$0xff]
    %v8787 = vld [vmem:[%s8437 + $0xc1] sm:$0xff]
    %v8788 = vld [vmem:[%s8437 + $0xd1] sm:$0xff]
    %v8789 = vld [vmem:[%s8437 + $0xe1] sm:$0xff]
    %v8790 = vld [vmem:[%s8437 + $0xf1] sm:$0xff]
    %v8791 = vld [vmem:[%s8437 + $0x101] sm:$0xff]
    %v8792 = vld [vmem:[%s8437 + $0x111] sm:$0xff]
    %8809 = vrot.lane.b32.xlu0 %v8777, 64
    %v8810 = vpop.permute.xlu0 %8809
    %8811 = vrot.lane.b32.xlu0 %v8778, 64
    %v8812 = vpop.permute.xlu0 %8811
    %8813 = vrot.lane.b32.xlu0 %v8779, 64
    %v8814 = vpop.permute.xlu0 %8813
    %8815 = vrot.lane.b32.xlu0 %v8780, 64
    %v8816 = vpop.permute.xlu0 %8815
    %8817 = vrot.lane.b32.xlu0 %v8781, 64
    %v8818 = vpop.permute.xlu0 %8817
    %8819 = vrot.lane.b32.xlu0 %v8782, 64
    %v8820 = vpop.permute.xlu0 %8819
    %8821 = vrot.lane.b32.xlu0 %v8783, 64
    %v8822 = vpop.permute.xlu0 %8821
    %8823 = vrot.lane.b32.xlu0 %v8784, 64
    %v8824 = vpop.permute.xlu0 %8823
    %8825 = vrot.lane.b32.xlu0 %v8785, 64
    %v8826 = vpop.permute.xlu0 %8825
    %8827 = vrot.lane.b32.xlu0 %v8786, 64
    %v8828 = vpop.permute.xlu0 %8827
    %8829 = vrot.lane.b32.xlu0 %v8787, 64
    %v8830 = vpop.permute.xlu0 %8829
    %8831 = vrot.lane.b32.xlu0 %v8788, 64
    %v8832 = vpop.permute.xlu0 %8831
    %8833 = vrot.lane.b32.xlu0 %v8789, 64
    %v8834 = vpop.permute.xlu0 %8833
    %8835 = vrot.lane.b32.xlu0 %v8790, 64
    %v8836 = vpop.permute.xlu0 %8835
    %8837 = vrot.lane.b32.xlu0 %v8791, 64
    %v8838 = vpop.permute.xlu0 %8837
    %8839 = vrot.lane.b32.xlu0 %v8792, 64
    %v8840 = vpop.permute.xlu0 %8839
    %vm8857 = vcmask 654848
    %8858 = vst.msk [vmem:[#allocation7] sm:$0xff] %vm8857, %v8810
    %8859 = vst.msk [vmem:[#allocation7 + $0x10] sm:$0xff] %vm8857, %v8812
    %8860 = vst.msk [vmem:[#allocation7 + $0x20] sm:$0xff] %vm8857, %v8814
    %8861 = vst.msk [vmem:[#allocation7 + $0x30] sm:$0xff] %vm8857, %v8816
    %8862 = vst.msk [vmem:[#allocation7 + $0x40] sm:$0xff] %vm8857, %v8818
    %8863 = vst.msk [vmem:[#allocation7 + $0x50] sm:$0xff] %vm8857, %v8820
    %8864 = vst.msk [vmem:[#allocation7 + $0x60] sm:$0xff] %vm8857, %v8822
    %8865 = vst.msk [vmem:[#allocation7 + $0x70] sm:$0xff] %vm8857, %v8824
    %8866 = vst.msk [vmem:[#allocation7 + $0x80] sm:$0xff] %vm8857, %v8826
    %8867 = vst.msk [vmem:[#allocation7 + $0x90] sm:$0xff] %vm8857, %v8828
    %8868 = vst.msk [vmem:[#allocation7 + $0xa0] sm:$0xff] %vm8857, %v8830
    %8869 = vst.msk [vmem:[#allocation7 + $0xb0] sm:$0xff] %vm8857, %v8832
    %8870 = vst.msk [vmem:[#allocation7 + $0xc0] sm:$0xff] %vm8857, %v8834
    %8871 = vst.msk [vmem:[#allocation7 + $0xd0] sm:$0xff] %vm8857, %v8836
    %8872 = vst.msk [vmem:[#allocation7 + $0xe0] sm:$0xff] %vm8857, %v8838
    %8873 = vst.msk [vmem:[#allocation7 + $0xf0] sm:$0xff] %vm8857, %v8840
    %v8874 = vld [vmem:[%s8437 + $0x2] sm:$0xff]
    %v8875 = vld [vmem:[%s8437 + $0x12] sm:$0xff]
    %v8876 = vld [vmem:[%s8437 + $0x22] sm:$0xff]
    %v8877 = vld [vmem:[%s8437 + $0x32] sm:$0xff]
    %v8878 = vld [vmem:[%s8437 + $0x42] sm:$0xff]
    %v8879 = vld [vmem:[%s8437 + $0x52] sm:$0xff]
    %v8880 = vld [vmem:[%s8437 + $0x62] sm:$0xff]
    %v8881 = vld [vmem:[%s8437 + $0x72] sm:$0xff]
    %v8882 = vld [vmem:[%s8437 + $0xa2] sm:$0xff]
    %v8883 = vld [vmem:[%s8437 + $0xb2] sm:$0xff]
    %v8884 = vld [vmem:[%s8437 + $0xc2] sm:$0xff]
    %v8885 = vld [vmem:[%s8437 + $0xd2] sm:$0xff]
    %v8886 = vld [vmem:[%s8437 + $0xe2] sm:$0xff]
    %v8887 = vld [vmem:[%s8437 + $0xf2] sm:$0xff]
    %v8888 = vld [vmem:[%s8437 + $0x102] sm:$0xff]
    %v8889 = vld [vmem:[%s8437 + $0x112] sm:$0xff]
    %8906 = vrot.lane.b32.xlu0 %v8874, 80
    %v8907 = vpop.permute.xlu0 %8906
    %8908 = vrot.lane.b32.xlu0 %v8875, 80
    %v8909 = vpop.permute.xlu0 %8908
    %8910 = vrot.lane.b32.xlu0 %v8876, 80
    %v8911 = vpop.permute.xlu0 %8910
    %8912 = vrot.lane.b32.xlu0 %v8877, 80
    %v8913 = vpop.permute.xlu0 %8912
    %8914 = vrot.lane.b32.xlu0 %v8878, 80
    %v8915 = vpop.permute.xlu0 %8914
    %8916 = vrot.lane.b32.xlu0 %v8879, 80
    %v8917 = vpop.permute.xlu0 %8916
    %8918 = vrot.lane.b32.xlu0 %v8880, 80
    %v8919 = vpop.permute.xlu0 %8918
    %8920 = vrot.lane.b32.xlu0 %v8881, 80
    %v8921 = vpop.permute.xlu0 %8920
    %8922 = vrot.lane.b32.xlu0 %v8882, 80
    %v8923 = vpop.permute.xlu0 %8922
    %8924 = vrot.lane.b32.xlu0 %v8883, 80
    %v8925 = vpop.permute.xlu0 %8924
    %8926 = vrot.lane.b32.xlu0 %v8884, 80
    %v8927 = vpop.permute.xlu0 %8926
    %8928 = vrot.lane.b32.xlu0 %v8885, 80
    %v8929 = vpop.permute.xlu0 %8928
    %8930 = vrot.lane.b32.xlu0 %v8886, 80
    %v8931 = vpop.permute.xlu0 %8930
    %8932 = vrot.lane.b32.xlu0 %v8887, 80
    %v8933 = vpop.permute.xlu0 %8932
    %8934 = vrot.lane.b32.xlu0 %v8888, 80
    %v8935 = vpop.permute.xlu0 %8934
    %8936 = vrot.lane.b32.xlu0 %v8889, 80
    %v8937 = vpop.permute.xlu0 %8936
    %vm8954 = vcmask 786048
    %8955 = vst.msk [vmem:[#allocation7] sm:$0xff] %vm8954, %v8907
    %8956 = vst.msk [vmem:[#allocation7 + $0x10] sm:$0xff] %vm8954, %v8909
    %8957 = vst.msk [vmem:[#allocation7 + $0x20] sm:$0xff] %vm8954, %v8911
    %8958 = vst.msk [vmem:[#allocation7 + $0x30] sm:$0xff] %vm8954, %v8913
    %8959 = vst.msk [vmem:[#allocation7 + $0x40] sm:$0xff] %vm8954, %v8915
    %8960 = vst.msk [vmem:[#allocation7 + $0x50] sm:$0xff] %vm8954, %v8917
    %8961 = vst.msk [vmem:[#allocation7 + $0x60] sm:$0xff] %vm8954, %v8919
    %8962 = vst.msk [vmem:[#allocation7 + $0x70] sm:$0xff] %vm8954, %v8921
    %8963 = vst.msk [vmem:[#allocation7 + $0x80] sm:$0xff] %vm8954, %v8923
    %8964 = vst.msk [vmem:[#allocation7 + $0x90] sm:$0xff] %vm8954, %v8925
    %8965 = vst.msk [vmem:[#allocation7 + $0xa0] sm:$0xff] %vm8954, %v8927
    %8966 = vst.msk [vmem:[#allocation7 + $0xb0] sm:$0xff] %vm8954, %v8929
    %8967 = vst.msk [vmem:[#allocation7 + $0xc0] sm:$0xff] %vm8954, %v8931
    %8968 = vst.msk [vmem:[#allocation7 + $0xd0] sm:$0xff] %vm8954, %v8933
    %8969 = vst.msk [vmem:[#allocation7 + $0xe0] sm:$0xff] %vm8954, %v8935
    %8970 = vst.msk [vmem:[#allocation7 + $0xf0] sm:$0xff] %vm8954, %v8937
    %s8971 = scalar_lea.vmem [#allocation6], 32
    %v8972 = vld [vmem:[%s8971] sm:$0xff]
    %v8973 = vld [vmem:[%s8971 + $0x10] sm:$0xff]
    %v8974 = vld [vmem:[%s8971 + $0x20] sm:$0xff]
    %v8975 = vld [vmem:[%s8971 + $0x30] sm:$0xff]
    %v8976 = vld [vmem:[%s8971 + $0x40] sm:$0xff]
    %v8977 = vld [vmem:[%s8971 + $0x50] sm:$0xff]
    %v8978 = vld [vmem:[%s8971 + $0x60] sm:$0xff]
    %v8979 = vld [vmem:[%s8971 + $0x70] sm:$0xff]
    %v8980 = vld [vmem:[%s8971 + $0xa0] sm:$0xff]
    %v8981 = vld [vmem:[%s8971 + $0xb0] sm:$0xff]
    %v8982 = vld [vmem:[%s8971 + $0xc0] sm:$0xff]
    %v8983 = vld [vmem:[%s8971 + $0xd0] sm:$0xff]
    %v8984 = vld [vmem:[%s8971 + $0xe0] sm:$0xff]
    %v8985 = vld [vmem:[%s8971 + $0xf0] sm:$0xff]
    %v8986 = vld [vmem:[%s8971 + $0x100] sm:$0xff]
    %v8987 = vld [vmem:[%s8971 + $0x110] sm:$0xff]
    %9004 = vrot.lane.b32.xlu0 %v8972, 96
    %v9005 = vpop.permute.xlu0 %9004
    %9006 = vrot.lane.b32.xlu0 %v8973, 96
    %v9007 = vpop.permute.xlu0 %9006
    %9008 = vrot.lane.b32.xlu0 %v8974, 96
    %v9009 = vpop.permute.xlu0 %9008
    %9010 = vrot.lane.b32.xlu0 %v8975, 96
    %v9011 = vpop.permute.xlu0 %9010
    %9012 = vrot.lane.b32.xlu0 %v8976, 96
    %v9013 = vpop.permute.xlu0 %9012
    %9014 = vrot.lane.b32.xlu0 %v8977, 96
    %v9015 = vpop.permute.xlu0 %9014
    %9016 = vrot.lane.b32.xlu0 %v8978, 96
    %v9017 = vpop.permute.xlu0 %9016
    %9018 = vrot.lane.b32.xlu0 %v8979, 96
    %v9019 = vpop.permute.xlu0 %9018
    %9020 = vrot.lane.b32.xlu0 %v8980, 96
    %v9021 = vpop.permute.xlu0 %9020
    %9022 = vrot.lane.b32.xlu0 %v8981, 96
    %v9023 = vpop.permute.xlu0 %9022
    %9024 = vrot.lane.b32.xlu0 %v8982, 96
    %v9025 = vpop.permute.xlu0 %9024
    %9026 = vrot.lane.b32.xlu0 %v8983, 96
    %v9027 = vpop.permute.xlu0 %9026
    %9028 = vrot.lane.b32.xlu0 %v8984, 96
    %v9029 = vpop.permute.xlu0 %9028
    %9030 = vrot.lane.b32.xlu0 %v8985, 96
    %v9031 = vpop.permute.xlu0 %9030
    %9032 = vrot.lane.b32.xlu0 %v8986, 96
    %v9033 = vpop.permute.xlu0 %9032
    %9034 = vrot.lane.b32.xlu0 %v8987, 96
    %v9035 = vpop.permute.xlu0 %9034
    %vm9052 = vcmask 917248
    %9053 = vst.msk [vmem:[#allocation7] sm:$0xff] %vm9052, %v9005
    %9054 = vst.msk [vmem:[#allocation7 + $0x10] sm:$0xff] %vm9052, %v9007
    %9055 = vst.msk [vmem:[#allocation7 + $0x20] sm:$0xff] %vm9052, %v9009
    %9056 = vst.msk [vmem:[#allocation7 + $0x30] sm:$0xff] %vm9052, %v9011
    %9057 = vst.msk [vmem:[#allocation7 + $0x40] sm:$0xff] %vm9052, %v9013
    %9058 = vst.msk [vmem:[#allocation7 + $0x50] sm:$0xff] %vm9052, %v9015
    %9059 = vst.msk [vmem:[#allocation7 + $0x60] sm:$0xff] %vm9052, %v9017
    %9060 = vst.msk [vmem:[#allocation7 + $0x70] sm:$0xff] %vm9052, %v9019
    %9061 = vst.msk [vmem:[#allocation7 + $0x80] sm:$0xff] %vm9052, %v9021
    %9062 = vst.msk [vmem:[#allocation7 + $0x90] sm:$0xff] %vm9052, %v9023
    %9063 = vst.msk [vmem:[#allocation7 + $0xa0] sm:$0xff] %vm9052, %v9025
    %9064 = vst.msk [vmem:[#allocation7 + $0xb0] sm:$0xff] %vm9052, %v9027
    %9065 = vst.msk [vmem:[#allocation7 + $0xc0] sm:$0xff] %vm9052, %v9029
    %9066 = vst.msk [vmem:[#allocation7 + $0xd0] sm:$0xff] %vm9052, %v9031
    %9067 = vst.msk [vmem:[#allocation7 + $0xe0] sm:$0xff] %vm9052, %v9033
    %9068 = vst.msk [vmem:[#allocation7 + $0xf0] sm:$0xff] %vm9052, %v9035
    %v9069 = vld [vmem:[%s8971 + $0x1] sm:$0xff]
    %v9070 = vld [vmem:[%s8971 + $0x11] sm:$0xff]
    %v9071 = vld [vmem:[%s8971 + $0x21] sm:$0xff]
    %v9072 = vld [vmem:[%s8971 + $0x31] sm:$0xff]
    %v9073 = vld [vmem:[%s8971 + $0x41] sm:$0xff]
    %v9074 = vld [vmem:[%s8971 + $0x51] sm:$0xff]
    %v9075 = vld [vmem:[%s8971 + $0x61] sm:$0xff]
    %v9076 = vld [vmem:[%s8971 + $0x71] sm:$0xff]
    %v9077 = vld [vmem:[%s8971 + $0xa1] sm:$0xff]
    %v9078 = vld [vmem:[%s8971 + $0xb1] sm:$0xff]
    %v9079 = vld [vmem:[%s8971 + $0xc1] sm:$0xff]
    %v9080 = vld [vmem:[%s8971 + $0xd1] sm:$0xff]
    %v9081 = vld [vmem:[%s8971 + $0xe1] sm:$0xff]
    %v9082 = vld [vmem:[%s8971 + $0xf1] sm:$0xff]
    %v9083 = vld [vmem:[%s8971 + $0x101] sm:$0xff]
    %v9084 = vld [vmem:[%s8971 + $0x111] sm:$0xff]
    %9101 = vrot.lane.b32.xlu0 %v9069, 112
    %v9102 = vpop.permute.xlu0 %9101
    %9103 = vrot.lane.b32.xlu0 %v9070, 112
    %v9104 = vpop.permute.xlu0 %9103
    %9105 = vrot.lane.b32.xlu0 %v9071, 112
    %v9106 = vpop.permute.xlu0 %9105
    %9107 = vrot.lane.b32.xlu0 %v9072, 112
    %v9108 = vpop.permute.xlu0 %9107
    %9109 = vrot.lane.b32.xlu0 %v9073, 112
    %v9110 = vpop.permute.xlu0 %9109
    %9111 = vrot.lane.b32.xlu0 %v9074, 112
    %v9112 = vpop.permute.xlu0 %9111
    %9113 = vrot.lane.b32.xlu0 %v9075, 112
    %v9114 = vpop.permute.xlu0 %9113
    %9115 = vrot.lane.b32.xlu0 %v9076, 112
    %v9116 = vpop.permute.xlu0 %9115
    %9117 = vrot.lane.b32.xlu0 %v9077, 112
    %v9118 = vpop.permute.xlu0 %9117
    %9119 = vrot.lane.b32.xlu0 %v9078, 112
    %v9120 = vpop.permute.xlu0 %9119
    %9121 = vrot.lane.b32.xlu0 %v9079, 112
    %v9122 = vpop.permute.xlu0 %9121
    %9123 = vrot.lane.b32.xlu0 %v9080, 112
    %v9124 = vpop.permute.xlu0 %9123
    %9125 = vrot.lane.b32.xlu0 %v9081, 112
    %v9126 = vpop.permute.xlu0 %9125
    %9127 = vrot.lane.b32.xlu0 %v9082, 112
    %v9128 = vpop.permute.xlu0 %9127
    %9129 = vrot.lane.b32.xlu0 %v9083, 112
    %v9130 = vpop.permute.xlu0 %9129
    %9131 = vrot.lane.b32.xlu0 %v9084, 112
    %v9132 = vpop.permute.xlu0 %9131
    %vm9149 = vcmask 1048448
    %9150 = vst.msk [vmem:[#allocation7] sm:$0xff] %vm9149, %v9102
    %9151 = vst.msk [vmem:[#allocation7 + $0x10] sm:$0xff] %vm9149, %v9104
    %9152 = vst.msk [vmem:[#allocation7 + $0x20] sm:$0xff] %vm9149, %v9106
    %9153 = vst.msk [vmem:[#allocation7 + $0x30] sm:$0xff] %vm9149, %v9108
    %9154 = vst.msk [vmem:[#allocation7 + $0x40] sm:$0xff] %vm9149, %v9110
    %9155 = vst.msk [vmem:[#allocation7 + $0x50] sm:$0xff] %vm9149, %v9112
    %9156 = vst.msk [vmem:[#allocation7 + $0x60] sm:$0xff] %vm9149, %v9114
    %9157 = vst.msk [vmem:[#allocation7 + $0x70] sm:$0xff] %vm9149, %v9116
    %9158 = vst.msk [vmem:[#allocation7 + $0x80] sm:$0xff] %vm9149, %v9118
    %9159 = vst.msk [vmem:[#allocation7 + $0x90] sm:$0xff] %vm9149, %v9120
    %9160 = vst.msk [vmem:[#allocation7 + $0xa0] sm:$0xff] %vm9149, %v9122
    %9161 = vst.msk [vmem:[#allocation7 + $0xb0] sm:$0xff] %vm9149, %v9124
    %9162 = vst.msk [vmem:[#allocation7 + $0xc0] sm:$0xff] %vm9149, %v9126
    %9163 = vst.msk [vmem:[#allocation7 + $0xd0] sm:$0xff] %vm9149, %v9128
    %9164 = vst.msk [vmem:[#allocation7 + $0xe0] sm:$0xff] %vm9149, %v9130
    %9165 = vst.msk [vmem:[#allocation7 + $0xf0] sm:$0xff] %vm9149, %v9132
    %v9166 = vld [vmem:[%s8971 + $0x2] sm:$0xff]
    %v9167 = vld [vmem:[%s8971 + $0x12] sm:$0xff]
    %v9168 = vld [vmem:[%s8971 + $0x22] sm:$0xff]
    %v9169 = vld [vmem:[%s8971 + $0x32] sm:$0xff]
    %v9170 = vld [vmem:[%s8971 + $0x42] sm:$0xff]
    %v9171 = vld [vmem:[%s8971 + $0x52] sm:$0xff]
    %v9172 = vld [vmem:[%s8971 + $0x62] sm:$0xff]
    %v9173 = vld [vmem:[%s8971 + $0x72] sm:$0xff]
    %v9174 = vld [vmem:[%s8971 + $0xa2] sm:$0xff]
    %v9175 = vld [vmem:[%s8971 + $0xb2] sm:$0xff]
    %v9176 = vld [vmem:[%s8971 + $0xc2] sm:$0xff]
    %v9177 = vld [vmem:[%s8971 + $0xd2] sm:$0xff]
    %v9178 = vld [vmem:[%s8971 + $0xe2] sm:$0xff]
    %v9179 = vld [vmem:[%s8971 + $0xf2] sm:$0xff]
    %v9180 = vld [vmem:[%s8971 + $0x102] sm:$0xff]
    %v9181 = vld [vmem:[%s8971 + $0x112] sm:$0xff]
    %9182 = vst.msk [vmem:[#allocation7 + $0x8] sm:$0xff] %vm8274, %v9166
    %9183 = vst.msk [vmem:[#allocation7 + $0x18] sm:$0xff] %vm8274, %v9167
    %9184 = vst.msk [vmem:[#allocation7 + $0x28] sm:$0xff] %vm8274, %v9168
    %9185 = vst.msk [vmem:[#allocation7 + $0x38] sm:$0xff] %vm8274, %v9169
    %9186 = vst.msk [vmem:[#allocation7 + $0x48] sm:$0xff] %vm8274, %v9170
    %9187 = vst.msk [vmem:[#allocation7 + $0x58] sm:$0xff] %vm8274, %v9171
    %9188 = vst.msk [vmem:[#allocation7 + $0x68] sm:$0xff] %vm8274, %v9172
    %9189 = vst.msk [vmem:[#allocation7 + $0x78] sm:$0xff] %vm8274, %v9173
    %9190 = vst.msk [vmem:[#allocation7 + $0x88] sm:$0xff] %vm8274, %v9174
    %9191 = vst.msk [vmem:[#allocation7 + $0x98] sm:$0xff] %vm8274, %v9175
    %9192 = vst.msk [vmem:[#allocation7 + $0xa8] sm:$0xff] %vm8274, %v9176
    %9193 = vst.msk [vmem:[#allocation7 + $0xb8] sm:$0xff] %vm8274, %v9177
    %9194 = vst.msk [vmem:[#allocation7 + $0xc8] sm:$0xff] %vm8274, %v9178
    %9195 = vst.msk [vmem:[#allocation7 + $0xd8] sm:$0xff] %vm8274, %v9179
    %9196 = vst.msk [vmem:[#allocation7 + $0xe8] sm:$0xff] %vm8274, %v9180
    %9197 = vst.msk [vmem:[#allocation7 + $0xf8] sm:$0xff] %vm8274, %v9181
    %v9198 = vld [vmem:[#allocation7] sm:$0xff]
    %v9199 = vld [vmem:[#allocation7 + $0x8] sm:$0xff]
    %v9200 = vld [vmem:[#allocation7 + $0x10] sm:$0xff]
    %v9201 = vld [vmem:[#allocation7 + $0x18] sm:$0xff]
    %v9202 = vld [vmem:[#allocation7 + $0x20] sm:$0xff]
    %v9203 = vld [vmem:[#allocation7 + $0x28] sm:$0xff]
    %v9204 = vld [vmem:[#allocation7 + $0x30] sm:$0xff]
    %v9205 = vld [vmem:[#allocation7 + $0x38] sm:$0xff]
    %v9206 = vld [vmem:[#allocation7 + $0x40] sm:$0xff]
    %v9207 = vld [vmem:[#allocation7 + $0x48] sm:$0xff]
    %v9208 = vld [vmem:[#allocation7 + $0x50] sm:$0xff]
    %v9209 = vld [vmem:[#allocation7 + $0x58] sm:$0xff]
    %v9210 = vld [vmem:[#allocation7 + $0x60] sm:$0xff]
    %v9211 = vld [vmem:[#allocation7 + $0x68] sm:$0xff]
    %v9212 = vld [vmem:[#allocation7 + $0x70] sm:$0xff]
    %v9213 = vld [vmem:[#allocation7 + $0x78] sm:$0xff]
    %v9214 = vld [vmem:[#allocation7 + $0x80] sm:$0xff]
    %v9215 = vld [vmem:[#allocation7 + $0x88] sm:$0xff]
    %v9216 = vld [vmem:[#allocation7 + $0x90] sm:$0xff]
    %v9217 = vld [vmem:[#allocation7 + $0x98] sm:$0xff]
    %v9218 = vld [vmem:[#allocation7 + $0xa0] sm:$0xff]
    %v9219 = vld [vmem:[#allocation7 + $0xa8] sm:$0xff]
    %v9220 = vld [vmem:[#allocation7 + $0xb0] sm:$0xff]
    %v9221 = vld [vmem:[#allocation7 + $0xb8] sm:$0xff]
    %v9222 = vld [vmem:[#allocation7 + $0xc0] sm:$0xff]
    %v9223 = vld [vmem:[#allocation7 + $0xc8] sm:$0xff]
    %v9224 = vld [vmem:[#allocation7 + $0xd0] sm:$0xff]
    %v9225 = vld [vmem:[#allocation7 + $0xd8] sm:$0xff]
    %v9226 = vld [vmem:[#allocation7 + $0xe0] sm:$0xff]
    %v9227 = vld [vmem:[#allocation7 + $0xe8] sm:$0xff]
    %v9228 = vld [vmem:[#allocation7 + $0xf0] sm:$0xff]
    %v9229 = vld [vmem:[#allocation7 + $0xf8] sm:$0xff]
    %v9230 = vld [vmem:[%s3] sm:$0xff]
    %v9231 = vld [vmem:[%s3 + $0x8] sm:$0xff]
    %v9232 = vld [vmem:[%s3 + $0x10] sm:$0xff]
    %v9233 = vld [vmem:[%s3 + $0x18] sm:$0xff]
    %v9234 = vld [vmem:[%s3 + $0x20] sm:$0xff]
    %v9235 = vld [vmem:[%s3 + $0x28] sm:$0xff]
    %v9236 = vld [vmem:[%s3 + $0x30] sm:$0xff]
    %v9237 = vld [vmem:[%s3 + $0x38] sm:$0xff]
    %v9238 = vld [vmem:[%s3 + $0x40] sm:$0xff]
    %v9239 = vld [vmem:[%s3 + $0x48] sm:$0xff]
    %v9240 = vld [vmem:[%s3 + $0x50] sm:$0xff]
    %v9241 = vld [vmem:[%s3 + $0x58] sm:$0xff]
    %v9242 = vld [vmem:[%s3 + $0x60] sm:$0xff]
    %v9243 = vld [vmem:[%s3 + $0x68] sm:$0xff]
    %v9244 = vld [vmem:[%s3 + $0x70] sm:$0xff]
    %v9245 = vld [vmem:[%s3 + $0x78] sm:$0xff]
    %v9246 = vld [vmem:[%s3 + $0x80] sm:$0xff]
    %v9247 = vld [vmem:[%s3 + $0x88] sm:$0xff]
    %v9249 = vsel %vm8274, %v9199, 0
    %v9252 = vsel %vm8274, %v9201, 0
    %v9255 = vsel %vm8274, %v9203, 0
    %v9258 = vsel %vm8274, %v9205, 0
    %v9261 = vsel %vm8274, %v9207, 0
    %v9264 = vsel %vm8274, %v9209, 0
    %v9267 = vsel %vm8274, %v9211, 0
    %v9270 = vsel %vm8274, %v9213, 0
    %v9273 = vsel %vm8274, %v9215, 0
    %v9276 = vsel %vm8274, %v9217, 0
    %v9279 = vsel %vm8274, %v9219, 0
    %v9282 = vsel %vm8274, %v9221, 0
    %v9285 = vsel %vm8274, %v9223, 0
    %v9288 = vsel %vm8274, %v9225, 0
    %v9291 = vsel %vm8274, %v9227, 0
    %v9294 = vsel %vm8274, %v9229, 0
    %9296 = vmatprep.subr.mxu0 0.0
    %9297 = vmatpush1.msra.mxu0 %v9245
    %9298 = vmatprep.subr.mxu0 0.0
    %9299 = vmatpush1.msra.mxu0 %v9244
    %9300 = vmatprep.subr.mxu0 0.0
    %9301 = vmatpush1.msra.mxu0 %v9243
    %9302 = vmatprep.subr.mxu0 0.0
    %9303 = vmatpush1.msra.mxu0 %v9242
    %9304 = vmatprep.subr.mxu0 0.0
    %9305 = vmatpush1.msra.mxu0 %v9241
    %9306 = vmatprep.subr.mxu0 0.0
    %9307 = vmatpush1.msra.mxu0 %v9240
    %9308 = vmatprep.subr.mxu0 0.0
    %9309 = vmatpush1.msra.mxu0 %v9239
    %9310 = vmatprep.subr.mxu0 0.0
    %9311 = vmatpush1.msra.mxu0 %v9238
    %9312 = vmatprep.subr.mxu0 0.0
    %9313 = vmatpush1.msra.mxu0 %v9237
    %9314 = vmatprep.subr.mxu0 0.0
    %9315 = vmatpush1.msra.mxu0 %v9236
    %9316 = vmatprep.subr.mxu0 0.0
    %9317 = vmatpush1.msra.mxu0 %v9235
    %9318 = vmatprep.subr.mxu0 0.0
    %9319 = vmatpush1.msra.mxu0 %v9234
    %9320 = vmatprep.subr.mxu0 0.0
    %9321 = vmatpush1.msra.mxu0 %v9233
    %9322 = vmatprep.subr.mxu0 0.0
    %9323 = vmatpush1.msra.mxu0 %v9232
    %9324 = vmatprep.subr.mxu0 0.0
    %9325 = vmatpush1.msra.mxu0 %v9231
    %9326 = vmatprep.subr.mxu0 0.0
    %9327 = vmatpush1.msra.mxu0 %v9230
    %9328 = vmatprep.subr.mxu0 0.0
    %9329 = vmatpush2.msra.mxu0 0.0
    %9330 = vmatprep.subr.mxu0 0.0
    %9331 = vmatpush2.msra.mxu0 0.0
    %9332 = vmatprep.subr.mxu0 0.0
    %9333 = vmatpush2.msra.mxu0 0.0
    %9334 = vmatprep.subr.mxu0 0.0
    %9335 = vmatpush2.msra.mxu0 0.0
    %9336 = vmatprep.subr.mxu0 0.0
    %9337 = vmatpush2.msra.mxu0 0.0
    %9338 = vmatprep.subr.mxu0 0.0
    %9339 = vmatpush2.msra.mxu0 0.0
    %9340 = vmatprep.subr.mxu0 0.0
    %9341 = vmatpush2.msra.mxu0 0.0
    %9342 = vmatprep.subr.mxu0 0.0
    %9343 = vmatpush2.msra.mxu0 0.0
    %9344 = vmatprep.subr.mxu0 0.0
    %9345 = vmatpush2.msra.mxu0 0.0
    %9346 = vmatprep.subr.mxu0 0.0
    %9347 = vmatpush2.msra.mxu0 0.0
    %9348 = vmatprep.subr.mxu0 0.0
    %9349 = vmatpush2.msra.mxu0 0.0
    %9350 = vmatprep.subr.mxu0 0.0
    %9351 = vmatpush2.msra.mxu0 0.0
    %9352 = vmatprep.subr.mxu0 0.0
    %9353 = vmatpush2.msra.mxu0 0.0
    %9354 = vmatprep.subr.mxu0 0.0
    %9355 = vmatpush2.msra.mxu0 0.0
    %9356 = vmatprep.subr.mxu0 0.0
    %9357 = vmatpush2.msra.mxu0 %v9247
    %9358 = vmatprep.subr.mxu0 0.0
    %9359 = vmatpush2.msra.mxu0 %v9246
    %9360 = vmatprep.mubr.f32.mxu0 %v9249
    %9361 = vmatmul.mubr.f32.gmra.mxu0 %v9198
    %v9362 = vpop.f32.mrf.mxu0
    %v9363 = vadd.f32 0.0, %v9362
    %v9364 = vpop.f32.mrf.mxu0
    %9365 = vmatprep.mubr.f32.mxu0 %v9252
    %9366 = vmatmul.mubr.f32.gmra.mxu0 %v9200
    %v9367 = vpop.f32.mrf.mxu0
    %v9368 = vadd.f32 0.0, %v9367
    %v9369 = vpop.f32.mrf.mxu0
    %9370 = vmatprep.mubr.f32.mxu0 %v9255
    %9371 = vmatmul.mubr.f32.gmra.mxu0 %v9202
    %v9372 = vpop.f32.mrf.mxu0
    %v9373 = vadd.f32 0.0, %v9372
    %v9374 = vpop.f32.mrf.mxu0
    %9375 = vmatprep.mubr.f32.mxu0 %v9258
    %9376 = vmatmul.mubr.f32.gmra.mxu0 %v9204
    %v9377 = vpop.f32.mrf.mxu0
    %v9378 = vadd.f32 0.0, %v9377
    %v9379 = vpop.f32.mrf.mxu0
    %9380 = vmatprep.mubr.f32.mxu0 %v9261
    %9381 = vmatmul.mubr.f32.gmra.mxu0 %v9206
    %v9382 = vpop.f32.mrf.mxu0
    %v9383 = vadd.f32 0.0, %v9382
    %v9384 = vpop.f32.mrf.mxu0
    %9385 = vmatprep.mubr.f32.mxu0 %v9264
    %9386 = vmatmul.mubr.f32.gmra.mxu0 %v9208
    %v9387 = vpop.f32.mrf.mxu0
    %v9388 = vadd.f32 0.0, %v9387
    %v9389 = vpop.f32.mrf.mxu0
    %9390 = vmatprep.mubr.f32.mxu0 %v9267
    %9391 = vmatmul.mubr.f32.gmra.mxu0 %v9210
    %v9392 = vpop.f32.mrf.mxu0
    %v9393 = vadd.f32 0.0, %v9392
    %v9394 = vpop.f32.mrf.mxu0
    %9395 = vmatprep.mubr.f32.mxu0 %v9270
    %9396 = vmatmul.mubr.f32.gmra.mxu0 %v9212
    %v9397 = vpop.f32.mrf.mxu0
    %v9398 = vadd.f32 0.0, %v9397
    %v9399 = vpop.f32.mrf.mxu0
    %9400 = vmatprep.mubr.f32.mxu0 %v9273
    %9401 = vmatmul.mubr.f32.gmra.mxu0 %v9214
    %v9402 = vpop.f32.mrf.mxu0
    %v9403 = vadd.f32 0.0, %v9402
    %v9404 = vpop.f32.mrf.mxu0
    %9405 = vmatprep.mubr.f32.mxu0 %v9276
    %9406 = vmatmul.mubr.f32.gmra.mxu0 %v9216
    %v9407 = vpop.f32.mrf.mxu0
    %v9408 = vadd.f32 0.0, %v9407
    %v9409 = vpop.f32.mrf.mxu0
    %9410 = vmatprep.mubr.f32.mxu0 %v9279
    %9411 = vmatmul.mubr.f32.gmra.mxu0 %v9218
    %v9412 = vpop.f32.mrf.mxu0
    %v9413 = vadd.f32 0.0, %v9412
    %v9414 = vpop.f32.mrf.mxu0
    %9415 = vmatprep.mubr.f32.mxu0 %v9282
    %9416 = vmatmul.mubr.f32.gmra.mxu0 %v9220
    %v9417 = vpop.f32.mrf.mxu0
    %v9418 = vadd.f32 0.0, %v9417
    %v9419 = vpop.f32.mrf.mxu0
    %9420 = vmatprep.mubr.f32.mxu0 %v9285
    %9421 = vmatmul.mubr.f32.gmra.mxu0 %v9222
    %v9422 = vpop.f32.mrf.mxu0
    %v9423 = vadd.f32 0.0, %v9422
    %v9424 = vpop.f32.mrf.mxu0
    %9425 = vmatprep.mubr.f32.mxu0 %v9288
    %9426 = vmatmul.mubr.f32.gmra.mxu0 %v9224
    %v9427 = vpop.f32.mrf.mxu0
    %v9428 = vadd.f32 0.0, %v9427
    %v9429 = vpop.f32.mrf.mxu0
    %9430 = vmatprep.mubr.f32.mxu0 %v9291
    %9431 = vmatmul.mubr.f32.gmra.mxu0 %v9226
    %v9432 = vpop.f32.mrf.mxu0
    %v9433 = vadd.f32 0.0, %v9432
    %v9434 = vpop.f32.mrf.mxu0
    %9435 = vmatprep.mubr.f32.mxu0 %v9294
    %9436 = vmatmul.mubr.f32.gmra.mxu0 %v9228
    %v9437 = vpop.f32.mrf.mxu0
    %v9438 = vadd.f32 0.0, %v9437
    %v9439 = vpop.f32.mrf.mxu0
    %9440 = vdwg.mxu0
    %v9441 = vmax.f32 %v9363, 0.0
    %v9442 = vmax.f32 %v9368, 0.0
    %v9443 = vmax.f32 %v9373, 0.0
    %v9444 = vmax.f32 %v9378, 0.0
    %v9445 = vmax.f32 %v9383, 0.0
    %v9446 = vmax.f32 %v9388, 0.0
    %v9447 = vmax.f32 %v9393, 0.0
    %v9448 = vmax.f32 %v9398, 0.0
    %v9449 = vmax.f32 %v9403, 0.0
    %v9450 = vmax.f32 %v9408, 0.0
    %v9451 = vmax.f32 %v9413, 0.0
    %v9452 = vmax.f32 %v9418, 0.0
    %v9453 = vmax.f32 %v9423, 0.0
    %v9454 = vmax.f32 %v9428, 0.0
    %v9455 = vmax.f32 %v9433, 0.0
    %v9456 = vmax.f32 %v9438, 0.0
    %vm9457 = vcmask 261120
    %v9458 = vsel %vm9457, %v9441, 0.0
    %v9459 = vsel %vm9457, %v9442, 0.0
    %v9460 = vadd.f32 %v9458, %v9459
    %v9461 = vsel %vm9457, %v9443, 0.0
    %v9462 = vadd.f32 %v9460, %v9461
    %v9463 = vsel %vm9457, %v9444, 0.0
    %v9464 = vadd.f32 %v9462, %v9463
    %v9465 = vsel %vm9457, %v9445, 0.0
    %v9466 = vadd.f32 %v9464, %v9465
    %v9467 = vsel %vm9457, %v9446, 0.0
    %v9468 = vadd.f32 %v9466, %v9467
    %v9469 = vsel %vm9457, %v9447, 0.0
    %v9470 = vadd.f32 %v9468, %v9469
    %v9471 = vsel %vm9457, %v9448, 0.0
    %v9472 = vadd.f32 %v9470, %v9471
    %v9473 = vrot.slane %v9472, 4
    %v9474 = vadd.f32 %v9472, %v9473
    %v9475 = vrot.slane %v9474, 2
    %v9476 = vadd.f32 %v9474, %v9475
    %v9477 = vrot.slane %v9476, 1
    %v9478 = vadd.f32 %v9476, %v9477
    %v9479 = vsel %vm9457, %v9449, 0.0
    %v9480 = vsel %vm9457, %v9450, 0.0
    %v9481 = vadd.f32 %v9479, %v9480
    %v9482 = vsel %vm9457, %v9451, 0.0
    %v9483 = vadd.f32 %v9481, %v9482
    %v9484 = vsel %vm9457, %v9452, 0.0
    %v9485 = vadd.f32 %v9483, %v9484
    %v9486 = vsel %vm9457, %v9453, 0.0
    %v9487 = vadd.f32 %v9485, %v9486
    %v9488 = vsel %vm9457, %v9454, 0.0
    %v9489 = vadd.f32 %v9487, %v9488
    %v9490 = vsel %vm9457, %v9455, 0.0
    %v9491 = vadd.f32 %v9489, %v9490
    %v9492 = vsel %vm9457, %v9456, 0.0
    %v9493 = vadd.f32 %v9491, %v9492
    %v9494 = vrot.slane %v9493, 4
    %v9495 = vadd.f32 %v9493, %v9494
    %v9496 = vrot.slane %v9495, 2
    %v9497 = vadd.f32 %v9495, %v9496
    %v9498 = vrot.slane %v9497, 1
    %v9499 = vadd.f32 %v9497, %v9498
    %v9500 = vld [vmem:[%s4] sm:$0xff]
    %v9501 = vld [vmem:[%s4 + $0x8] sm:$0xff]
    %v9502 = vld [vmem:[%s4 + $0x10] sm:$0xff]
    %v9503 = vld [vmem:[%s4 + $0x18] sm:$0xff]
    %v9504 = vld [vmem:[%s5] sm:$0x1]
    %v9506 = vlaneseq
    %v9507 = vshrl.u32 %v9506, 7
    %v9508 = vsub.s32 0, %v9507
    %v9509 = vrot.slane %v9504, %v9508
    %vm9513 = vcmask 1041409
    %v9514 = vsel %vm9513, %v9499, %v9478
    %v9515 = vsel %vm9457, %v9514, 0
    %9517 = vmatprep.subr.mxu0 0.0
    %9518 = vmatpush1.msra.mxu0 0.0
    %9519 = vmatprep.subr.mxu0 0.0
    %9520 = vmatpush1.msra.mxu0 0.0
    %9521 = vmatprep.subr.mxu0 0.0
    %9522 = vmatpush1.msra.mxu0 0.0
    %9523 = vmatprep.subr.mxu0 0.0
    %9524 = vmatpush1.msra.mxu0 0.0
    %9525 = vmatprep.subr.mxu0 0.0
    %9526 = vmatpush1.msra.mxu0 0.0
    %9527 = vmatprep.subr.mxu0 0.0
    %9528 = vmatpush1.msra.mxu0 0.0
    %9529 = vmatprep.subr.mxu0 0.0
    %9530 = vmatpush1.msra.mxu0 0.0
    %9531 = vmatprep.subr.mxu0 0.0
    %9532 = vmatpush1.msra.mxu0 0.0
    %9533 = vmatprep.subr.mxu0 0.0
    %9534 = vmatpush1.msra.mxu0 0.0
    %9535 = vmatprep.subr.mxu0 0.0
    %9536 = vmatpush1.msra.mxu0 0.0
    %9537 = vmatprep.subr.mxu0 0.0
    %9538 = vmatpush1.msra.mxu0 0.0
    %9539 = vmatprep.subr.mxu0 0.0
    %9540 = vmatpush1.msra.mxu0 0.0
    %9541 = vmatprep.subr.mxu0 0.0
    %9542 = vmatpush1.msra.mxu0 %v9503
    %9543 = vmatprep.subr.mxu0 0.0
    %9544 = vmatpush1.msra.mxu0 %v9502
    %9545 = vmatprep.subr.mxu0 0.0
    %9546 = vmatpush1.msra.mxu0 %v9501
    %9547 = vmatprep.subr.mxu0 0.0
    %9548 = vmatpush1.msra.mxu0 %v9500
    %9549 = vmatprep.subr.mxu0 0.0
    %9550 = vmatpush2.msra.mxu0 0.0
    %9551 = vmatprep.subr.mxu0 0.0
    %9552 = vmatpush2.msra.mxu0 0.0
    %9553 = vmatprep.subr.mxu0 0.0
    %9554 = vmatpush2.msra.mxu0 0.0
    %9555 = vmatprep.subr.mxu0 0.0
    %9556 = vmatpush2.msra.mxu0 0.0
    %9557 = vmatprep.subr.mxu0 0.0
    %9558 = vmatpush2.msra.mxu0 0.0
    %9559 = vmatprep.subr.mxu0 0.0
    %9560 = vmatpush2.msra.mxu0 0.0
    %9561 = vmatprep.subr.mxu0 0.0
    %9562 = vmatpush2.msra.mxu0 0.0
    %9563 = vmatprep.subr.mxu0 0.0
    %9564 = vmatpush2.msra.mxu0 0.0
    %9565 = vmatprep.subr.mxu0 0.0
    %9566 = vmatpush2.msra.mxu0 0.0
    %9567 = vmatprep.subr.mxu0 0.0
    %9568 = vmatpush2.msra.mxu0 0.0
    %9569 = vmatprep.subr.mxu0 0.0
    %9570 = vmatpush2.msra.mxu0 0.0
    %9571 = vmatprep.subr.mxu0 0.0
    %9572 = vmatpush2.msra.mxu0 0.0
    %9573 = vmatprep.subr.mxu0 0.0
    %9574 = vmatpush2.msra.mxu0 0.0
    %9575 = vmatprep.subr.mxu0 0.0
    %9576 = vmatpush2.msra.mxu0 0.0
    %9577 = vmatprep.subr.mxu0 0.0
    %9578 = vmatpush2.msra.mxu0 0.0
    %9579 = vmatprep.subr.mxu0 0.0
    %9580 = vmatpush2.msra.mxu0 0.0
    %9581 = vmatprep.mubr.f32.mxu0 0.0
    %9582 = vmatmul.mubr.f32.gmra.mxu0 %v9515
    %v9583 = vpop.f32.mrf.mxu0
    %v9584 = vadd.f32 %v9509, %v9583
    %v9585 = vpop.f32.mrf.mxu0
    %9586 = vdwg.mxu0
    %vm9587 = vcmask 74752
    %9588 = vst.msk [vmem:[#allocation9] sm:$0x3] %vm9587, %v9584
    // Predicated region
    $region26: #{tiny_cnn_forward.1} parent=1 // pred_check
      _
    $region27: #{tiny_cnn_forward.1} parent=1 // pred_check_branch
      %9590 = sbr.rel (0) target = $region29
    $region28: #{tiny_cnn_forward.1} parent=1 // pred_region
      %s9592 = ssub.s32 32, 32
      %9593 = vsyncadd [#allocation10], %s9592
      %s9595 = sshll.u32 [#allocation9], 4
      %s9596 = int_to_ptr.vmem [resolvable:$true] %s9595
      %9598 = dma.vmem_to_hbm [thread:$0]  %s9596, 32, %s6, [#allocation10]
    $region29: #{tiny_cnn_forward.1} parent=1 // pred_fallthru
      _
    // Predicated region
    $region30: #{tiny_cnn_forward.1} parent=1 // pred_check
      _
    $region31: #{tiny_cnn_forward.1} parent=1 // pred_check_branch
      %9600 = sbr.rel (0) target = $region33
    $region32: #{tiny_cnn_forward.1} parent=1 // pred_region
      %9601 = dma.done [#allocation10], 32
    $region33: #{tiny_cnn_forward.1} parent=1 // pred_fallthru
      _
    %9602 = vsyncpa [#allocation10], 1

</llo_original>
